<compile_context>
chip_gen: v7x
topology: tpu7x:2x2x1
jax: 0.10.0
libtpu: 0.0.40
codegen_flags: <defaults>
</compile_context>

<pallas_src>
import functools

import jax
import jax.numpy as jnp
from jax.experimental import pallas as pl
from jax.experimental.pallas import tpu as pltpu

NUM_CLASSES = 219
WIDTH = 128        # backbone channel width (one full lane tile -> lane-dense)
NC_PAD = 256       # 219 classes padded to a multiple of 128 lanes


# ----------------------------------------------------------------------------
# Single fused kernel: one grid step per batch image.
# ----------------------------------------------------------------------------
def _fused_forward_kernel(x_ref, ws_ref, bs_ref, w1_ref, b1_ref,
                          w2_ref, b2_ref, wfc_ref, bfc_ref,
                          out_ref, hpad_ref, *, H, W, C):
    HW = H * W

    # Zero the padded-activation scratch once; conv3x3 rewrites only the
    # interior, the 1-pixel zero border is reused by all three convolutions.
    hpad_ref[...] = jnp.zeros_like(hpad_ref)

    def conv3x3(act, w_taps_ref, b_ref):
        """act: (HW, C) f32 -> 3x3 conv (pad=1) output (HW, C) f32."""
        # Interior at rows [1, 1+H) and sublane columns [8, 8+W): the store is
        # sublane-aligned; the 9 shifted reads (col offsets 7/8/9) are cheap.
        hpad_ref[1:1 + H, 8:8 + W, :] = act.reshape(H, W, C)
        acc = jnp.zeros((HW, C), jnp.float32) + b_ref[...]
        for dh in range(3):
            for dw in range(3):
                patch = hpad_ref[dh:dh + H, 7 + dw:7 + dw + W, :]
                patch = patch.reshape(HW, C).astype(jnp.bfloat16)
                acc = acc + jnp.dot(patch, w_taps_ref[dh * 3 + dw],
                                    preferred_element_type=jnp.float32)
        return acc

    x = x_ref[0]                                            # (HW, C) f32
    h = jnp.maximum(conv3x3(x, ws_ref, bs_ref), 0.0)        # stem conv + ReLU
    y = jnp.maximum(conv3x3(h, w1_ref, b1_ref), 0.0)        # block conv1+ReLU
    y = conv3x3(y, w2_ref, b2_ref)                          # block conv2
    res = jnp.maximum(y + h, 0.0)                           # residual + ReLU

    feat = jnp.mean(res, axis=0, keepdims=True)             # GAP -> (1, C) f32
    logits = jnp.dot(feat.astype(jnp.bfloat16), wfc_ref[...],
                     preferred_element_type=jnp.float32) + bfc_ref[...]
    out_ref[0] = logits                                     # (1, NC_PAD)


# ----------------------------------------------------------------------------
# Parameter prep (deterministic synthetic weights, matmul-friendly layout)
# ----------------------------------------------------------------------------
def _conv_to_stacked(w, c_pad):
    """(OC, IC, 3, 3) torch conv weight -> (9, c_pad, OC) bf16 per-tap stack."""
    _, ic, kh, kw = w.shape
    w = jnp.transpose(w, (2, 3, 1, 0))                      # (kh, kw, IC, OC)
    w = jnp.pad(w, ((0, 0), (0, 0), (0, c_pad - ic), (0, 0)))
    return w.reshape(kh * kw, c_pad, w.shape[-1]).astype(jnp.bfloat16)


def init_params(key, in_ch=3, width=WIDTH, num_classes=NUM_CLASSES):
    ks = jax.random.split(key, 5)

    def conv_w(k, oc, ic):
        fan_in = ic * 9
        return jax.random.normal(k, (oc, ic, 3, 3), jnp.float32) * (
            (2.0 / fan_in) ** 0.5)

    bound = 1.0 / (width ** 0.5)    # torch nn.Linear default uniform init
    fc_w = jax.random.uniform(ks[3], (num_classes, width), jnp.float32,
                              -bound, bound)
    fc_b = jax.random.uniform(ks[4], (num_classes,), jnp.float32,
                              -bound, bound)

    return {
        "w_stem": _conv_to_stacked(conv_w(ks[0], width, in_ch), width),
        "b_stem": jnp.zeros((1, width), jnp.float32),
        "w1": _conv_to_stacked(conv_w(ks[1], width, width), width),
        "b1": jnp.zeros((1, width), jnp.float32),
        "w2": _conv_to_stacked(conv_w(ks[2], width, width), width),
        "b2": jnp.zeros((1, width), jnp.float32),
        "fc_w": jnp.pad(fc_w.T, ((0, 0), (0, NC_PAD - num_classes))
                        ).astype(jnp.bfloat16),
        "fc_b": jnp.pad(fc_b[None, :], ((0, 0), (0, NC_PAD - num_classes))),
    }


# ----------------------------------------------------------------------------
# Forward pass (mirrors TrainModel.forward: backbone -> fc)
# ----------------------------------------------------------------------------
@jax.jit
def train_model_forward(x_nchw, params):
    x = jnp.transpose(x_nchw, (0, 2, 3, 1)).astype(jnp.float32)   # NHWC
    N, H, W, cin = x.shape
    C, HW = WIDTH, H * W
    x = jnp.pad(x, ((0, 0), (0, 0), (0, 0), (0, C - cin)))  # lane-dense chans
    x = x.reshape(N, HW, C)

    kernel = functools.partial(_fused_forward_kernel, H=H, W=W, C=C)

    flops = 2 * N * (3 * 9 * HW * C * C + C * NC_PAD)
    bytes_accessed = (N * HW * C * 4 + 3 * 9 * C * C * 2 + 3 * C * 4
                      + C * NC_PAD * 2 + NC_PAD * 4 + N * NC_PAD * 4)

    logits_pad = pl.pallas_call(
        kernel,
        grid=(N,),
        in_specs=[
            pl.BlockSpec((1, HW, C), lambda b: (b, 0, 0)),   # activations
            pl.BlockSpec((9, C, C), lambda b: (0, 0, 0)),    # stem conv taps
            pl.BlockSpec((1, C), lambda b: (0, 0)),          # stem bias
            pl.BlockSpec((9, C, C), lambda b: (0, 0, 0)),    # block conv1 taps
            pl.BlockSpec((1, C), lambda b: (0, 0)),
            pl.BlockSpec((9, C, C), lambda b: (0, 0, 0)),    # block conv2 taps
            pl.BlockSpec((1, C), lambda b: (0, 0)),
            pl.BlockSpec((C, NC_PAD), lambda b: (0, 0)),     # fc weight
            pl.BlockSpec((1, NC_PAD), lambda b: (0, 0)),     # fc bias
        ],
        out_specs=pl.BlockSpec((1, 1, NC_PAD), lambda b: (b, 0, 0)),
        out_shape=jax.ShapeDtypeStruct((N, 1, NC_PAD), jnp.float32),
        scratch_shapes=[pltpu.VMEM((H + 2, W + 16, C), jnp.float32)],
        compiler_params=pltpu.CompilerParams(
            dimension_semantics=("parallel",),
            vmem_limit_bytes=32 * 1024 * 1024),
        cost_estimate=pl.CostEstimate(flops=flops, transcendentals=0,
                                      bytes_accessed=bytes_accessed),
    )(x, params["w_stem"], params["b_stem"], params["w1"], params["b1"],
      params["w2"], params["b2"], params["fc_w"], params["fc_b"])

    return logits_pad.reshape(N, NC_PAD)[:, :NUM_CLASSES]


if __name__ == "__main__":
    key = jax.random.PRNGKey(0)
    k_params, k_input = jax.random.split(key)

    params = init_params(k_params, in_ch=3)
    x = jax.random.normal(k_input, (2, 3, 16, 16), jnp.float32)   # NCHW

    logits = train_model_forward(x, params)
    jax.block_until_ready(logits)

    assert logits.shape == (2, NUM_CLASSES)
    assert logits.dtype == jnp.float32
    print("KERNEL_OK")
</pallas_src>

<mosaic_0001>
module attributes {stable_mosaic.version = 11 : i64} {
  func.func @_fused_forward_kernel(%arg0: i32, %arg1: memref<1x256x128xf32, #tpu.memory_space<vmem>>, %arg2: memref<9x128x128xbf16, #tpu.memory_space<vmem>>, %arg3: memref<1x128xf32, #tpu.memory_space<vmem>>, %arg4: memref<9x128x128xbf16, #tpu.memory_space<vmem>>, %arg5: memref<1x128xf32, #tpu.memory_space<vmem>>, %arg6: memref<9x128x128xbf16, #tpu.memory_space<vmem>>, %arg7: memref<1x128xf32, #tpu.memory_space<vmem>>, %arg8: memref<128x256xbf16, #tpu.memory_space<vmem>>, %arg9: memref<1x256xf32, #tpu.memory_space<vmem>>, %arg10: memref<1x1x256xf32, #tpu.memory_space<vmem>>, %arg11: memref<18x32x128xf32, #tpu.memory_space<vmem>>) attributes {dimension_semantics = [#tpu.dimension_semantics<parallel>], iteration_bounds = array<i64: 2>, scalar_prefetch = 0 : i64, scratch_operands = 1 : i64, tpu.core_type = #tpu.core_type<tc>, window_params = [{transform_indices = @transform_0, window_bounds = array<i64: 1, 256, 128>}, {pipeline_mode = #tpu.pipeline_mode<synchronous>, transform_indices = @transform_1, window_bounds = array<i64: 9, 128, 128>}, {pipeline_mode = #tpu.pipeline_mode<synchronous>, transform_indices = @transform_2, window_bounds = array<i64: 1, 128>}, {pipeline_mode = #tpu.pipeline_mode<synchronous>, transform_indices = @transform_3, window_bounds = array<i64: 9, 128, 128>}, {pipeline_mode = #tpu.pipeline_mode<synchronous>, transform_indices = @transform_4, window_bounds = array<i64: 1, 128>}, {pipeline_mode = #tpu.pipeline_mode<synchronous>, transform_indices = @transform_5, window_bounds = array<i64: 9, 128, 128>}, {pipeline_mode = #tpu.pipeline_mode<synchronous>, transform_indices = @transform_6, window_bounds = array<i64: 1, 128>}, {pipeline_mode = #tpu.pipeline_mode<synchronous>, transform_indices = @transform_7, window_bounds = array<i64: 128, 256>}, {pipeline_mode = #tpu.pipeline_mode<synchronous>, transform_indices = @transform_8, window_bounds = array<i64: 1, 256>}, {transform_indices = @transform_9, window_bounds = array<i64: 1, 1, 256>}]} {
    %cst = arith.constant 0.000000e+00 : f32
    %0 = vector.broadcast %cst : f32 to vector<18x32x128xf32>
    %c0 = arith.constant 0 : index
    %c0_0 = arith.constant 0 : index
    %c0_1 = arith.constant 0 : index
    %1 = vector.load %arg11[%c0, %c0_0, %c0_1] : memref<18x32x128xf32, #tpu.memory_space<vmem>>, vector<18x32x128xf32>
    tpu.vector_store %arg11[%c0, %c0_0, %c0_1], %0 {strides = array<i32>} : memref<18x32x128xf32, #tpu.memory_space<vmem>>, vector<18x32x128xf32>,
    %c0_2 = arith.constant 0 : index
    %c0_3 = arith.constant 0 : index
    %c0_4 = arith.constant 0 : index
    %2 = vector.load %arg1[%c0_2, %c0_3, %c0_4] : memref<1x256x128xf32, #tpu.memory_space<vmem>>, vector<1x256x128xf32>
    %3 = vector.shape_cast %2 : vector<1x256x128xf32> to vector<256x128xf32>
    %4 = vector.shape_cast %3 : vector<256x128xf32> to vector<16x16x128xf32>
    %c1 = arith.constant 1 : index
    %c8 = arith.constant 8 : index
    %c0_5 = arith.constant 0 : index
    %5 = vector.load %arg11[%c1, %c8, %c0_5] : memref<18x32x128xf32, #tpu.memory_space<vmem>>, vector<16x16x128xf32>
    tpu.vector_store %arg11[%c1, %c8, %c0_5], %4 {strides = array<i32>} : memref<18x32x128xf32, #tpu.memory_space<vmem>>, vector<16x16x128xf32>,
    %cst_6 = arith.constant 0.000000e+00 : f32
    %6 = vector.broadcast %cst_6 : f32 to vector<256x128xf32>
    %c0_7 = arith.constant 0 : index
    %c0_8 = arith.constant 0 : index
    %7 = vector.load %arg3[%c0_7, %c0_8] : memref<1x128xf32, #tpu.memory_space<vmem>>, vector<1x128xf32>
    %8 = vector.broadcast %7 : vector<1x128xf32> to vector<256x128xf32>
    %9 = arith.addf %6, %8 : vector<256x128xf32>
    %c0_9 = arith.constant 0 : index
    %c7 = arith.constant 7 : index
    %c0_10 = arith.constant 0 : index
    %10 = vector.load %arg11[%c0_9, %c7, %c0_10] : memref<18x32x128xf32, #tpu.memory_space<vmem>>, vector<16x16x128xf32>
    %11 = vector.shape_cast %10 : vector<16x16x128xf32> to vector<256x128xf32>
    %12 = arith.truncf %11 : vector<256x128xf32> to vector<256x128xbf16>
    %c0_11 = arith.constant 0 : index
    %c0_12 = arith.constant 0 : index
    %c0_13 = arith.constant 0 : index
    %13 = vector.load %arg2[%c0_11, %c0_12, %c0_13] : memref<9x128x128xbf16, #tpu.memory_space<vmem>>, vector<1x128x128xbf16>
    %14 = vector.shape_cast %13 : vector<1x128x128xbf16> to vector<128x128xbf16>
    %cst_14 = arith.constant dense<0.000000e+00> : vector<256x128xf32>
    %15 = tpu.matmul %12, %14, %cst_14 {dimension_numbers = #tpu.dot_dimension_numbers<[1], [0], [0], [1], [0, 0, 1, 1], [], []>} : vector<256x128xbf16>, vector<128x128xbf16>, vector<256x128xf32> -> vector<256x128xf32>
    %16 = arith.addf %9, %15 : vector<256x128xf32>
    %c0_15 = arith.constant 0 : index
    %c8_16 = arith.constant 8 : index
    %c0_17 = arith.constant 0 : index
    %17 = vector.load %arg11[%c0_15, %c8_16, %c0_17] : memref<18x32x128xf32, #tpu.memory_space<vmem>>, vector<16x16x128xf32>
    %18 = vector.shape_cast %17 : vector<16x16x128xf32> to vector<256x128xf32>
    %19 = arith.truncf %18 : vector<256x128xf32> to vector<256x128xbf16>
    %c1_18 = arith.constant 1 : index
    %c0_19 = arith.constant 0 : index
    %c0_20 = arith.constant 0 : index
    %20 = vector.load %arg2[%c1_18, %c0_19, %c0_20] : memref<9x128x128xbf16, #tpu.memory_space<vmem>>, vector<1x128x128xbf16>
    %21 = vector.shape_cast %20 : vector<1x128x128xbf16> to vector<128x128xbf16>
    %cst_21 = arith.constant dense<0.000000e+00> : vector<256x128xf32>
    %22 = tpu.matmul %19, %21, %cst_21 {dimension_numbers = #tpu.dot_dimension_numbers<[1], [0], [0], [1], [0, 0, 1, 1], [], []>} : vector<256x128xbf16>, vector<128x128xbf16>, vector<256x128xf32> -> vector<256x128xf32>
    %23 = arith.addf %16, %22 : vector<256x128xf32>
    %c0_22 = arith.constant 0 : index
    %c9 = arith.constant 9 : index
    %c0_23 = arith.constant 0 : index
    %24 = vector.load %arg11[%c0_22, %c9, %c0_23] : memref<18x32x128xf32, #tpu.memory_space<vmem>>, vector<16x16x128xf32>
    %25 = vector.shape_cast %24 : vector<16x16x128xf32> to vector<256x128xf32>
    %26 = arith.truncf %25 : vector<256x128xf32> to vector<256x128xbf16>
    %c2 = arith.constant 2 : index
    %c0_24 = arith.constant 0 : index
    %c0_25 = arith.constant 0 : index
    %27 = vector.load %arg2[%c2, %c0_24, %c0_25] : memref<9x128x128xbf16, #tpu.memory_space<vmem>>, vector<1x128x128xbf16>
    %28 = vector.shape_cast %27 : vector<1x128x128xbf16> to vector<128x128xbf16>
    %cst_26 = arith.constant dense<0.000000e+00> : vector<256x128xf32>
    %29 = tpu.matmul %26, %28, %cst_26 {dimension_numbers = #tpu.dot_dimension_numbers<[1], [0], [0], [1], [0, 0, 1, 1], [], []>} : vector<256x128xbf16>, vector<128x128xbf16>, vector<256x128xf32> -> vector<256x128xf32>
    %30 = arith.addf %23, %29 : vector<256x128xf32>
    %c1_27 = arith.constant 1 : index
    %c7_28 = arith.constant 7 : index
    %c0_29 = arith.constant 0 : index
    %31 = vector.load %arg11[%c1_27, %c7_28, %c0_29] : memref<18x32x128xf32, #tpu.memory_space<vmem>>, vector<16x16x128xf32>
    %32 = vector.shape_cast %31 : vector<16x16x128xf32> to vector<256x128xf32>
    %33 = arith.truncf %32 : vector<256x128xf32> to vector<256x128xbf16>
    %c3 = arith.constant 3 : index
    %c0_30 = arith.constant 0 : index
    %c0_31 = arith.constant 0 : index
    %34 = vector.load %arg2[%c3, %c0_30, %c0_31] : memref<9x128x128xbf16, #tpu.memory_space<vmem>>, vector<1x128x128xbf16>
    %35 = vector.shape_cast %34 : vector<1x128x128xbf16> to vector<128x128xbf16>
    %cst_32 = arith.constant dense<0.000000e+00> : vector<256x128xf32>
    %36 = tpu.matmul %33, %35, %cst_32 {dimension_numbers = #tpu.dot_dimension_numbers<[1], [0], [0], [1], [0, 0, 1, 1], [], []>} : vector<256x128xbf16>, vector<128x128xbf16>, vector<256x128xf32> -> vector<256x128xf32>
    %37 = arith.addf %30, %36 : vector<256x128xf32>
    %c1_33 = arith.constant 1 : index
    %c8_34 = arith.constant 8 : index
    %c0_35 = arith.constant 0 : index
    %38 = vector.load %arg11[%c1_33, %c8_34, %c0_35] : memref<18x32x128xf32, #tpu.memory_space<vmem>>, vector<16x16x128xf32>
    %39 = vector.shape_cast %38 : vector<16x16x128xf32> to vector<256x128xf32>
    %40 = arith.truncf %39 : vector<256x128xf32> to vector<256x128xbf16>
    %c4 = arith.constant 4 : index
    %c0_36 = arith.constant 0 : index
    %c0_37 = arith.constant 0 : index
    %41 = vector.load %arg2[%c4, %c0_36, %c0_37] : memref<9x128x128xbf16, #tpu.memory_space<vmem>>, vector<1x128x128xbf16>
    %42 = vector.shape_cast %41 : vector<1x128x128xbf16> to vector<128x128xbf16>
    %cst_38 = arith.constant dense<0.000000e+00> : vector<256x128xf32>
    %43 = tpu.matmul %40, %42, %cst_38 {dimension_numbers = #tpu.dot_dimension_numbers<[1], [0], [0], [1], [0, 0, 1, 1], [], []>} : vector<256x128xbf16>, vector<128x128xbf16>, vector<256x128xf32> -> vector<256x128xf32>
    %44 = arith.addf %37, %43 : vector<256x128xf32>
    %c1_39 = arith.constant 1 : index
    %c9_40 = arith.constant 9 : index
    %c0_41 = arith.constant 0 : index
    %45 = vector.load %arg11[%c1_39, %c9_40, %c0_41] : memref<18x32x128xf32, #tpu.memory_space<vmem>>, vector<16x16x128xf32>
    %46 = vector.shape_cast %45 : vector<16x16x128xf32> to vector<256x128xf32>
    %47 = arith.truncf %46 : vector<256x128xf32> to vector<256x128xbf16>
    %c5 = arith.constant 5 : index
    %c0_42 = arith.constant 0 : index
    %c0_43 = arith.constant 0 : index
    %48 = vector.load %arg2[%c5, %c0_42, %c0_43] : memref<9x128x128xbf16, #tpu.memory_space<vmem>>, vector<1x128x128xbf16>
    %49 = vector.shape_cast %48 : vector<1x128x128xbf16> to vector<128x128xbf16>
    %cst_44 = arith.constant dense<0.000000e+00> : vector<256x128xf32>
    %50 = tpu.matmul %47, %49, %cst_44 {dimension_numbers = #tpu.dot_dimension_numbers<[1], [0], [0], [1], [0, 0, 1, 1], [], []>} : vector<256x128xbf16>, vector<128x128xbf16>, vector<256x128xf32> -> vector<256x128xf32>
    %51 = arith.addf %44, %50 : vector<256x128xf32>
    %c2_45 = arith.constant 2 : index
    %c7_46 = arith.constant 7 : index
    %c0_47 = arith.constant 0 : index
    %52 = vector.load %arg11[%c2_45, %c7_46, %c0_47] : memref<18x32x128xf32, #tpu.memory_space<vmem>>, vector<16x16x128xf32>
    %53 = vector.shape_cast %52 : vector<16x16x128xf32> to vector<256x128xf32>
    %54 = arith.truncf %53 : vector<256x128xf32> to vector<256x128xbf16>
    %c6 = arith.constant 6 : index
    %c0_48 = arith.constant 0 : index
    %c0_49 = arith.constant 0 : index
    %55 = vector.load %arg2[%c6, %c0_48, %c0_49] : memref<9x128x128xbf16, #tpu.memory_space<vmem>>, vector<1x128x128xbf16>
    %56 = vector.shape_cast %55 : vector<1x128x128xbf16> to vector<128x128xbf16>
    %cst_50 = arith.constant dense<0.000000e+00> : vector<256x128xf32>
    %57 = tpu.matmul %54, %56, %cst_50 {dimension_numbers = #tpu.dot_dimension_numbers<[1], [0], [0], [1], [0, 0, 1, 1], [], []>} : vector<256x128xbf16>, vector<128x128xbf16>, vector<256x128xf32> -> vector<256x128xf32>
    %58 = arith.addf %51, %57 : vector<256x128xf32>
    %c2_51 = arith.constant 2 : index
    %c8_52 = arith.constant 8 : index
    %c0_53 = arith.constant 0 : index
    %59 = vector.load %arg11[%c2_51, %c8_52, %c0_53] : memref<18x32x128xf32, #tpu.memory_space<vmem>>, vector<16x16x128xf32>
    %60 = vector.shape_cast %59 : vector<16x16x128xf32> to vector<256x128xf32>
    %61 = arith.truncf %60 : vector<256x128xf32> to vector<256x128xbf16>
    %c7_54 = arith.constant 7 : index
    %c0_55 = arith.constant 0 : index
    %c0_56 = arith.constant 0 : index
    %62 = vector.load %arg2[%c7_54, %c0_55, %c0_56] : memref<9x128x128xbf16, #tpu.memory_space<vmem>>, vector<1x128x128xbf16>
    %63 = vector.shape_cast %62 : vector<1x128x128xbf16> to vector<128x128xbf16>
    %cst_57 = arith.constant dense<0.000000e+00> : vector<256x128xf32>
    %64 = tpu.matmul %61, %63, %cst_57 {dimension_numbers = #tpu.dot_dimension_numbers<[1], [0], [0], [1], [0, 0, 1, 1], [], []>} : vector<256x128xbf16>, vector<128x128xbf16>, vector<256x128xf32> -> vector<256x128xf32>
    %65 = arith.addf %58, %64 : vector<256x128xf32>
    %c2_58 = arith.constant 2 : index
    %c9_59 = arith.constant 9 : index
    %c0_60 = arith.constant 0 : index
    %66 = vector.load %arg11[%c2_58, %c9_59, %c0_60] : memref<18x32x128xf32, #tpu.memory_space<vmem>>, vector<16x16x128xf32>
    %67 = vector.shape_cast %66 : vector<16x16x128xf32> to vector<256x128xf32>
    %68 = arith.truncf %67 : vector<256x128xf32> to vector<256x128xbf16>
    %c8_61 = arith.constant 8 : index
    %c0_62 = arith.constant 0 : index
    %c0_63 = arith.constant 0 : index
    %69 = vector.load %arg2[%c8_61, %c0_62, %c0_63] : memref<9x128x128xbf16, #tpu.memory_space<vmem>>, vector<1x128x128xbf16>
    %70 = vector.shape_cast %69 : vector<1x128x128xbf16> to vector<128x128xbf16>
    %cst_64 = arith.constant dense<0.000000e+00> : vector<256x128xf32>
    %71 = tpu.matmul %68, %70, %cst_64 {dimension_numbers = #tpu.dot_dimension_numbers<[1], [0], [0], [1], [0, 0, 1, 1], [], []>} : vector<256x128xbf16>, vector<128x128xbf16>, vector<256x128xf32> -> vector<256x128xf32>
    %72 = arith.addf %65, %71 : vector<256x128xf32>
    %cst_65 = arith.constant 0.000000e+00 : f32
    %73 = vector.broadcast %cst_65 : f32 to vector<256x128xf32>
    %74 = arith.maximumf %72, %73 : vector<256x128xf32>
    %75 = vector.shape_cast %74 : vector<256x128xf32> to vector<16x16x128xf32>
    %c1_66 = arith.constant 1 : index
    %c8_67 = arith.constant 8 : index
    %c0_68 = arith.constant 0 : index
    %76 = vector.load %arg11[%c1_66, %c8_67, %c0_68] : memref<18x32x128xf32, #tpu.memory_space<vmem>>, vector<16x16x128xf32>
    tpu.vector_store %arg11[%c1_66, %c8_67, %c0_68], %75 {strides = array<i32>} : memref<18x32x128xf32, #tpu.memory_space<vmem>>, vector<16x16x128xf32>,
    %cst_69 = arith.constant 0.000000e+00 : f32
    %77 = vector.broadcast %cst_69 : f32 to vector<256x128xf32>
    %c0_70 = arith.constant 0 : index
    %c0_71 = arith.constant 0 : index
    %78 = vector.load %arg5[%c0_70, %c0_71] : memref<1x128xf32, #tpu.memory_space<vmem>>, vector<1x128xf32>
    %79 = vector.broadcast %78 : vector<1x128xf32> to vector<256x128xf32>
    %80 = arith.addf %77, %79 : vector<256x128xf32>
    %c0_72 = arith.constant 0 : index
    %c7_73 = arith.constant 7 : index
    %c0_74 = arith.constant 0 : index
    %81 = vector.load %arg11[%c0_72, %c7_73, %c0_74] : memref<18x32x128xf32, #tpu.memory_space<vmem>>, vector<16x16x128xf32>
    %82 = vector.shape_cast %81 : vector<16x16x128xf32> to vector<256x128xf32>
    %83 = arith.truncf %82 : vector<256x128xf32> to vector<256x128xbf16>
    %c0_75 = arith.constant 0 : index
    %c0_76 = arith.constant 0 : index
    %c0_77 = arith.constant 0 : index
    %84 = vector.load %arg4[%c0_75, %c0_76, %c0_77] : memref<9x128x128xbf16, #tpu.memory_space<vmem>>, vector<1x128x128xbf16>
    %85 = vector.shape_cast %84 : vector<1x128x128xbf16> to vector<128x128xbf16>
    %cst_78 = arith.constant dense<0.000000e+00> : vector<256x128xf32>
    %86 = tpu.matmul %83, %85, %cst_78 {dimension_numbers = #tpu.dot_dimension_numbers<[1], [0], [0], [1], [0, 0, 1, 1], [], []>} : vector<256x128xbf16>, vector<128x128xbf16>, vector<256x128xf32> -> vector<256x128xf32>
    %87 = arith.addf %80, %86 : vector<256x128xf32>
    %c0_79 = arith.constant 0 : index
    %c8_80 = arith.constant 8 : index
    %c0_81 = arith.constant 0 : index
    %88 = vector.load %arg11[%c0_79, %c8_80, %c0_81] : memref<18x32x128xf32, #tpu.memory_space<vmem>>, vector<16x16x128xf32>
    %89 = vector.shape_cast %88 : vector<16x16x128xf32> to vector<256x128xf32>
    %90 = arith.truncf %89 : vector<256x128xf32> to vector<256x128xbf16>
    %c1_82 = arith.constant 1 : index
    %c0_83 = arith.constant 0 : index
    %c0_84 = arith.constant 0 : index
    %91 = vector.load %arg4[%c1_82, %c0_83, %c0_84] : memref<9x128x128xbf16, #tpu.memory_space<vmem>>, vector<1x128x128xbf16>
    %92 = vector.shape_cast %91 : vector<1x128x128xbf16> to vector<128x128xbf16>
    %cst_85 = arith.constant dense<0.000000e+00> : vector<256x128xf32>
    %93 = tpu.matmul %90, %92, %cst_85 {dimension_numbers = #tpu.dot_dimension_numbers<[1], [0], [0], [1], [0, 0, 1, 1], [], []>} : vector<256x128xbf16>, vector<128x128xbf16>, vector<256x128xf32> -> vector<256x128xf32>
    %94 = arith.addf %87, %93 : vector<256x128xf32>
    %c0_86 = arith.constant 0 : index
    %c9_87 = arith.constant 9 : index
    %c0_88 = arith.constant 0 : index
    %95 = vector.load %arg11[%c0_86, %c9_87, %c0_88] : memref<18x32x128xf32, #tpu.memory_space<vmem>>, vector<16x16x128xf32>
    %96 = vector.shape_cast %95 : vector<16x16x128xf32> to vector<256x128xf32>
    %97 = arith.truncf %96 : vector<256x128xf32> to vector<256x128xbf16>
    %c2_89 = arith.constant 2 : index
    %c0_90 = arith.constant 0 : index
    %c0_91 = arith.constant 0 : index
    %98 = vector.load %arg4[%c2_89, %c0_90, %c0_91] : memref<9x128x128xbf16, #tpu.memory_space<vmem>>, vector<1x128x128xbf16>
    %99 = vector.shape_cast %98 : vector<1x128x128xbf16> to vector<128x128xbf16>
    %cst_92 = arith.constant dense<0.000000e+00> : vector<256x128xf32>
    %100 = tpu.matmul %97, %99, %cst_92 {dimension_numbers = #tpu.dot_dimension_numbers<[1], [0], [0], [1], [0, 0, 1, 1], [], []>} : vector<256x128xbf16>, vector<128x128xbf16>, vector<256x128xf32> -> vector<256x128xf32>
    %101 = arith.addf %94, %100 : vector<256x128xf32>
    %c1_93 = arith.constant 1 : index
    %c7_94 = arith.constant 7 : index
    %c0_95 = arith.constant 0 : index
    %102 = vector.load %arg11[%c1_93, %c7_94, %c0_95] : memref<18x32x128xf32, #tpu.memory_space<vmem>>, vector<16x16x128xf32>
    %103 = vector.shape_cast %102 : vector<16x16x128xf32> to vector<256x128xf32>
    %104 = arith.truncf %103 : vector<256x128xf32> to vector<256x128xbf16>
    %c3_96 = arith.constant 3 : index
    %c0_97 = arith.constant 0 : index
    %c0_98 = arith.constant 0 : index
    %105 = vector.load %arg4[%c3_96, %c0_97, %c0_98] : memref<9x128x128xbf16, #tpu.memory_space<vmem>>, vector<1x128x128xbf16>
    %106 = vector.shape_cast %105 : vector<1x128x128xbf16> to vector<128x128xbf16>
    %cst_99 = arith.constant dense<0.000000e+00> : vector<256x128xf32>
    %107 = tpu.matmul %104, %106, %cst_99 {dimension_numbers = #tpu.dot_dimension_numbers<[1], [0], [0], [1], [0, 0, 1, 1], [], []>} : vector<256x128xbf16>, vector<128x128xbf16>, vector<256x128xf32> -> vector<256x128xf32>
    %108 = arith.addf %101, %107 : vector<256x128xf32>
    %c1_100 = arith.constant 1 : index
    %c8_101 = arith.constant 8 : index
    %c0_102 = arith.constant 0 : index
    %109 = vector.load %arg11[%c1_100, %c8_101, %c0_102] : memref<18x32x128xf32, #tpu.memory_space<vmem>>, vector<16x16x128xf32>
    %110 = vector.shape_cast %109 : vector<16x16x128xf32> to vector<256x128xf32>
    %111 = arith.truncf %110 : vector<256x128xf32> to vector<256x128xbf16>
    %c4_103 = arith.constant 4 : index
    %c0_104 = arith.constant 0 : index
    %c0_105 = arith.constant 0 : index
    %112 = vector.load %arg4[%c4_103, %c0_104, %c0_105] : memref<9x128x128xbf16, #tpu.memory_space<vmem>>, vector<1x128x128xbf16>
    %113 = vector.shape_cast %112 : vector<1x128x128xbf16> to vector<128x128xbf16>
    %cst_106 = arith.constant dense<0.000000e+00> : vector<256x128xf32>
    %114 = tpu.matmul %111, %113, %cst_106 {dimension_numbers = #tpu.dot_dimension_numbers<[1], [0], [0], [1], [0, 0, 1, 1], [], []>} : vector<256x128xbf16>, vector<128x128xbf16>, vector<256x128xf32> -> vector<256x128xf32>
    %115 = arith.addf %108, %114 : vector<256x128xf32>
    %c1_107 = arith.constant 1 : index
    %c9_108 = arith.constant 9 : index
    %c0_109 = arith.constant 0 : index
    %116 = vector.load %arg11[%c1_107, %c9_108, %c0_109] : memref<18x32x128xf32, #tpu.memory_space<vmem>>, vector<16x16x128xf32>
    %117 = vector.shape_cast %116 : vector<16x16x128xf32> to vector<256x128xf32>
    %118 = arith.truncf %117 : vector<256x128xf32> to vector<256x128xbf16>
    %c5_110 = arith.constant 5 : index
    %c0_111 = arith.constant 0 : index
    %c0_112 = arith.constant 0 : index
    %119 = vector.load %arg4[%c5_110, %c0_111, %c0_112] : memref<9x128x128xbf16, #tpu.memory_space<vmem>>, vector<1x128x128xbf16>
    %120 = vector.shape_cast %119 : vector<1x128x128xbf16> to vector<128x128xbf16>
    %cst_113 = arith.constant dense<0.000000e+00> : vector<256x128xf32>
    %121 = tpu.matmul %118, %120, %cst_113 {dimension_numbers = #tpu.dot_dimension_numbers<[1], [0], [0], [1], [0, 0, 1, 1], [], []>} : vector<256x128xbf16>, vector<128x128xbf16>, vector<256x128xf32> -> vector<256x128xf32>
    %122 = arith.addf %115, %121 : vector<256x128xf32>
    %c2_114 = arith.constant 2 : index
    %c7_115 = arith.constant 7 : index
    %c0_116 = arith.constant 0 : index
    %123 = vector.load %arg11[%c2_114, %c7_115, %c0_116] : memref<18x32x128xf32, #tpu.memory_space<vmem>>, vector<16x16x128xf32>
    %124 = vector.shape_cast %123 : vector<16x16x128xf32> to vector<256x128xf32>
    %125 = arith.truncf %124 : vector<256x128xf32> to vector<256x128xbf16>
    %c6_117 = arith.constant 6 : index
    %c0_118 = arith.constant 0 : index
    %c0_119 = arith.constant 0 : index
    %126 = vector.load %arg4[%c6_117, %c0_118, %c0_119] : memref<9x128x128xbf16, #tpu.memory_space<vmem>>, vector<1x128x128xbf16>
    %127 = vector.shape_cast %126 : vector<1x128x128xbf16> to vector<128x128xbf16>
    %cst_120 = arith.constant dense<0.000000e+00> : vector<256x128xf32>
    %128 = tpu.matmul %125, %127, %cst_120 {dimension_numbers = #tpu.dot_dimension_numbers<[1], [0], [0], [1], [0, 0, 1, 1], [], []>} : vector<256x128xbf16>, vector<128x128xbf16>, vector<256x128xf32> -> vector<256x128xf32>
    %129 = arith.addf %122, %128 : vector<256x128xf32>
    %c2_121 = arith.constant 2 : index
    %c8_122 = arith.constant 8 : index
    %c0_123 = arith.constant 0 : index
    %130 = vector.load %arg11[%c2_121, %c8_122, %c0_123] : memref<18x32x128xf32, #tpu.memory_space<vmem>>, vector<16x16x128xf32>
    %131 = vector.shape_cast %130 : vector<16x16x128xf32> to vector<256x128xf32>
    %132 = arith.truncf %131 : vector<256x128xf32> to vector<256x128xbf16>
    %c7_124 = arith.constant 7 : index
    %c0_125 = arith.constant 0 : index
    %c0_126 = arith.constant 0 : index
    %133 = vector.load %arg4[%c7_124, %c0_125, %c0_126] : memref<9x128x128xbf16, #tpu.memory_space<vmem>>, vector<1x128x128xbf16>
    %134 = vector.shape_cast %133 : vector<1x128x128xbf16> to vector<128x128xbf16>
    %cst_127 = arith.constant dense<0.000000e+00> : vector<256x128xf32>
    %135 = tpu.matmul %132, %134, %cst_127 {dimension_numbers = #tpu.dot_dimension_numbers<[1], [0], [0], [1], [0, 0, 1, 1], [], []>} : vector<256x128xbf16>, vector<128x128xbf16>, vector<256x128xf32> -> vector<256x128xf32>
    %136 = arith.addf %129, %135 : vector<256x128xf32>
    %c2_128 = arith.constant 2 : index
    %c9_129 = arith.constant 9 : index
    %c0_130 = arith.constant 0 : index
    %137 = vector.load %arg11[%c2_128, %c9_129, %c0_130] : memref<18x32x128xf32, #tpu.memory_space<vmem>>, vector<16x16x128xf32>
    %138 = vector.shape_cast %137 : vector<16x16x128xf32> to vector<256x128xf32>
    %139 = arith.truncf %138 : vector<256x128xf32> to vector<256x128xbf16>
    %c8_131 = arith.constant 8 : index
    %c0_132 = arith.constant 0 : index
    %c0_133 = arith.constant 0 : index
    %140 = vector.load %arg4[%c8_131, %c0_132, %c0_133] : memref<9x128x128xbf16, #tpu.memory_space<vmem>>, vector<1x128x128xbf16>
    %141 = vector.shape_cast %140 : vector<1x128x128xbf16> to vector<128x128xbf16>
    %cst_134 = arith.constant dense<0.000000e+00> : vector<256x128xf32>
    %142 = tpu.matmul %139, %141, %cst_134 {dimension_numbers = #tpu.dot_dimension_numbers<[1], [0], [0], [1], [0, 0, 1, 1], [], []>} : vector<256x128xbf16>, vector<128x128xbf16>, vector<256x128xf32> -> vector<256x128xf32>
    %143 = arith.addf %136, %142 : vector<256x128xf32>
    %cst_135 = arith.constant 0.000000e+00 : f32
    %144 = vector.broadcast %cst_135 : f32 to vector<256x128xf32>
    %145 = arith.maximumf %143, %144 : vector<256x128xf32>
    %146 = vector.shape_cast %145 : vector<256x128xf32> to vector<16x16x128xf32>
    %c1_136 = arith.constant 1 : index
    %c8_137 = arith.constant 8 : index
    %c0_138 = arith.constant 0 : index
    %147 = vector.load %arg11[%c1_136, %c8_137, %c0_138] : memref<18x32x128xf32, #tpu.memory_space<vmem>>, vector<16x16x128xf32>
    tpu.vector_store %arg11[%c1_136, %c8_137, %c0_138], %146 {strides = array<i32>} : memref<18x32x128xf32, #tpu.memory_space<vmem>>, vector<16x16x128xf32>,
    %cst_139 = arith.constant 0.000000e+00 : f32
    %148 = vector.broadcast %cst_139 : f32 to vector<256x128xf32>
    %c0_140 = arith.constant 0 : index
    %c0_141 = arith.constant 0 : index
    %149 = vector.load %arg7[%c0_140, %c0_141] : memref<1x128xf32, #tpu.memory_space<vmem>>, vector<1x128xf32>
    %150 = vector.broadcast %149 : vector<1x128xf32> to vector<256x128xf32>
    %151 = arith.addf %148, %150 : vector<256x128xf32>
    %c0_142 = arith.constant 0 : index
    %c7_143 = arith.constant 7 : index
    %c0_144 = arith.constant 0 : index
    %152 = vector.load %arg11[%c0_142, %c7_143, %c0_144] : memref<18x32x128xf32, #tpu.memory_space<vmem>>, vector<16x16x128xf32>
    %153 = vector.shape_cast %152 : vector<16x16x128xf32> to vector<256x128xf32>
    %154 = arith.truncf %153 : vector<256x128xf32> to vector<256x128xbf16>
    %c0_145 = arith.constant 0 : index
    %c0_146 = arith.constant 0 : index
    %c0_147 = arith.constant 0 : index
    %155 = vector.load %arg6[%c0_145, %c0_146, %c0_147] : memref<9x128x128xbf16, #tpu.memory_space<vmem>>, vector<1x128x128xbf16>
    %156 = vector.shape_cast %155 : vector<1x128x128xbf16> to vector<128x128xbf16>
    %cst_148 = arith.constant dense<0.000000e+00> : vector<256x128xf32>
    %157 = tpu.matmul %154, %156, %cst_148 {dimension_numbers = #tpu.dot_dimension_numbers<[1], [0], [0], [1], [0, 0, 1, 1], [], []>} : vector<256x128xbf16>, vector<128x128xbf16>, vector<256x128xf32> -> vector<256x128xf32>
    %158 = arith.addf %151, %157 : vector<256x128xf32>
    %c0_149 = arith.constant 0 : index
    %c8_150 = arith.constant 8 : index
    %c0_151 = arith.constant 0 : index
    %159 = vector.load %arg11[%c0_149, %c8_150, %c0_151] : memref<18x32x128xf32, #tpu.memory_space<vmem>>, vector<16x16x128xf32>
    %160 = vector.shape_cast %159 : vector<16x16x128xf32> to vector<256x128xf32>
    %161 = arith.truncf %160 : vector<256x128xf32> to vector<256x128xbf16>
    %c1_152 = arith.constant 1 : index
    %c0_153 = arith.constant 0 : index
    %c0_154 = arith.constant 0 : index
    %162 = vector.load %arg6[%c1_152, %c0_153, %c0_154] : memref<9x128x128xbf16, #tpu.memory_space<vmem>>, vector<1x128x128xbf16>
    %163 = vector.shape_cast %162 : vector<1x128x128xbf16> to vector<128x128xbf16>
    %cst_155 = arith.constant dense<0.000000e+00> : vector<256x128xf32>
    %164 = tpu.matmul %161, %163, %cst_155 {dimension_numbers = #tpu.dot_dimension_numbers<[1], [0], [0], [1], [0, 0, 1, 1], [], []>} : vector<256x128xbf16>, vector<128x128xbf16>, vector<256x128xf32> -> vector<256x128xf32>
    %165 = arith.addf %158, %164 : vector<256x128xf32>
    %c0_156 = arith.constant 0 : index
    %c9_157 = arith.constant 9 : index
    %c0_158 = arith.constant 0 : index
    %166 = vector.load %arg11[%c0_156, %c9_157, %c0_158] : memref<18x32x128xf32, #tpu.memory_space<vmem>>, vector<16x16x128xf32>
    %167 = vector.shape_cast %166 : vector<16x16x128xf32> to vector<256x128xf32>
    %168 = arith.truncf %167 : vector<256x128xf32> to vector<256x128xbf16>
    %c2_159 = arith.constant 2 : index
    %c0_160 = arith.constant 0 : index
    %c0_161 = arith.constant 0 : index
    %169 = vector.load %arg6[%c2_159, %c0_160, %c0_161] : memref<9x128x128xbf16, #tpu.memory_space<vmem>>, vector<1x128x128xbf16>
    %170 = vector.shape_cast %169 : vector<1x128x128xbf16> to vector<128x128xbf16>
    %cst_162 = arith.constant dense<0.000000e+00> : vector<256x128xf32>
    %171 = tpu.matmul %168, %170, %cst_162 {dimension_numbers = #tpu.dot_dimension_numbers<[1], [0], [0], [1], [0, 0, 1, 1], [], []>} : vector<256x128xbf16>, vector<128x128xbf16>, vector<256x128xf32> -> vector<256x128xf32>
    %172 = arith.addf %165, %171 : vector<256x128xf32>
    %c1_163 = arith.constant 1 : index
    %c7_164 = arith.constant 7 : index
    %c0_165 = arith.constant 0 : index
    %173 = vector.load %arg11[%c1_163, %c7_164, %c0_165] : memref<18x32x128xf32, #tpu.memory_space<vmem>>, vector<16x16x128xf32>
    %174 = vector.shape_cast %173 : vector<16x16x128xf32> to vector<256x128xf32>
    %175 = arith.truncf %174 : vector<256x128xf32> to vector<256x128xbf16>
    %c3_166 = arith.constant 3 : index
    %c0_167 = arith.constant 0 : index
    %c0_168 = arith.constant 0 : index
    %176 = vector.load %arg6[%c3_166, %c0_167, %c0_168] : memref<9x128x128xbf16, #tpu.memory_space<vmem>>, vector<1x128x128xbf16>
    %177 = vector.shape_cast %176 : vector<1x128x128xbf16> to vector<128x128xbf16>
    %cst_169 = arith.constant dense<0.000000e+00> : vector<256x128xf32>
    %178 = tpu.matmul %175, %177, %cst_169 {dimension_numbers = #tpu.dot_dimension_numbers<[1], [0], [0], [1], [0, 0, 1, 1], [], []>} : vector<256x128xbf16>, vector<128x128xbf16>, vector<256x128xf32> -> vector<256x128xf32>
    %179 = arith.addf %172, %178 : vector<256x128xf32>
    %c1_170 = arith.constant 1 : index
    %c8_171 = arith.constant 8 : index
    %c0_172 = arith.constant 0 : index
    %180 = vector.load %arg11[%c1_170, %c8_171, %c0_172] : memref<18x32x128xf32, #tpu.memory_space<vmem>>, vector<16x16x128xf32>
    %181 = vector.shape_cast %180 : vector<16x16x128xf32> to vector<256x128xf32>
    %182 = arith.truncf %181 : vector<256x128xf32> to vector<256x128xbf16>
    %c4_173 = arith.constant 4 : index
    %c0_174 = arith.constant 0 : index
    %c0_175 = arith.constant 0 : index
    %183 = vector.load %arg6[%c4_173, %c0_174, %c0_175] : memref<9x128x128xbf16, #tpu.memory_space<vmem>>, vector<1x128x128xbf16>
    %184 = vector.shape_cast %183 : vector<1x128x128xbf16> to vector<128x128xbf16>
    %cst_176 = arith.constant dense<0.000000e+00> : vector<256x128xf32>
    %185 = tpu.matmul %182, %184, %cst_176 {dimension_numbers = #tpu.dot_dimension_numbers<[1], [0], [0], [1], [0, 0, 1, 1], [], []>} : vector<256x128xbf16>, vector<128x128xbf16>, vector<256x128xf32> -> vector<256x128xf32>
    %186 = arith.addf %179, %185 : vector<256x128xf32>
    %c1_177 = arith.constant 1 : index
    %c9_178 = arith.constant 9 : index
    %c0_179 = arith.constant 0 : index
    %187 = vector.load %arg11[%c1_177, %c9_178, %c0_179] : memref<18x32x128xf32, #tpu.memory_space<vmem>>, vector<16x16x128xf32>
    %188 = vector.shape_cast %187 : vector<16x16x128xf32> to vector<256x128xf32>
    %189 = arith.truncf %188 : vector<256x128xf32> to vector<256x128xbf16>
    %c5_180 = arith.constant 5 : index
    %c0_181 = arith.constant 0 : index
    %c0_182 = arith.constant 0 : index
    %190 = vector.load %arg6[%c5_180, %c0_181, %c0_182] : memref<9x128x128xbf16, #tpu.memory_space<vmem>>, vector<1x128x128xbf16>
    %191 = vector.shape_cast %190 : vector<1x128x128xbf16> to vector<128x128xbf16>
    %cst_183 = arith.constant dense<0.000000e+00> : vector<256x128xf32>
    %192 = tpu.matmul %189, %191, %cst_183 {dimension_numbers = #tpu.dot_dimension_numbers<[1], [0], [0], [1], [0, 0, 1, 1], [], []>} : vector<256x128xbf16>, vector<128x128xbf16>, vector<256x128xf32> -> vector<256x128xf32>
    %193 = arith.addf %186, %192 : vector<256x128xf32>
    %c2_184 = arith.constant 2 : index
    %c7_185 = arith.constant 7 : index
    %c0_186 = arith.constant 0 : index
    %194 = vector.load %arg11[%c2_184, %c7_185, %c0_186] : memref<18x32x128xf32, #tpu.memory_space<vmem>>, vector<16x16x128xf32>
    %195 = vector.shape_cast %194 : vector<16x16x128xf32> to vector<256x128xf32>
    %196 = arith.truncf %195 : vector<256x128xf32> to vector<256x128xbf16>
    %c6_187 = arith.constant 6 : index
    %c0_188 = arith.constant 0 : index
    %c0_189 = arith.constant 0 : index
    %197 = vector.load %arg6[%c6_187, %c0_188, %c0_189] : memref<9x128x128xbf16, #tpu.memory_space<vmem>>, vector<1x128x128xbf16>
    %198 = vector.shape_cast %197 : vector<1x128x128xbf16> to vector<128x128xbf16>
    %cst_190 = arith.constant dense<0.000000e+00> : vector<256x128xf32>
    %199 = tpu.matmul %196, %198, %cst_190 {dimension_numbers = #tpu.dot_dimension_numbers<[1], [0], [0], [1], [0, 0, 1, 1], [], []>} : vector<256x128xbf16>, vector<128x128xbf16>, vector<256x128xf32> -> vector<256x128xf32>
    %200 = arith.addf %193, %199 : vector<256x128xf32>
    %c2_191 = arith.constant 2 : index
    %c8_192 = arith.constant 8 : index
    %c0_193 = arith.constant 0 : index
    %201 = vector.load %arg11[%c2_191, %c8_192, %c0_193] : memref<18x32x128xf32, #tpu.memory_space<vmem>>, vector<16x16x128xf32>
    %202 = vector.shape_cast %201 : vector<16x16x128xf32> to vector<256x128xf32>
    %203 = arith.truncf %202 : vector<256x128xf32> to vector<256x128xbf16>
    %c7_194 = arith.constant 7 : index
    %c0_195 = arith.constant 0 : index
    %c0_196 = arith.constant 0 : index
    %204 = vector.load %arg6[%c7_194, %c0_195, %c0_196] : memref<9x128x128xbf16, #tpu.memory_space<vmem>>, vector<1x128x128xbf16>
    %205 = vector.shape_cast %204 : vector<1x128x128xbf16> to vector<128x128xbf16>
    %cst_197 = arith.constant dense<0.000000e+00> : vector<256x128xf32>
    %206 = tpu.matmul %203, %205, %cst_197 {dimension_numbers = #tpu.dot_dimension_numbers<[1], [0], [0], [1], [0, 0, 1, 1], [], []>} : vector<256x128xbf16>, vector<128x128xbf16>, vector<256x128xf32> -> vector<256x128xf32>
    %207 = arith.addf %200, %206 : vector<256x128xf32>
    %c2_198 = arith.constant 2 : index
    %c9_199 = arith.constant 9 : index
    %c0_200 = arith.constant 0 : index
    %208 = vector.load %arg11[%c2_198, %c9_199, %c0_200] : memref<18x32x128xf32, #tpu.memory_space<vmem>>, vector<16x16x128xf32>
    %209 = vector.shape_cast %208 : vector<16x16x128xf32> to vector<256x128xf32>
    %210 = arith.truncf %209 : vector<256x128xf32> to vector<256x128xbf16>
    %c8_201 = arith.constant 8 : index
    %c0_202 = arith.constant 0 : index
    %c0_203 = arith.constant 0 : index
    %211 = vector.load %arg6[%c8_201, %c0_202, %c0_203] : memref<9x128x128xbf16, #tpu.memory_space<vmem>>, vector<1x128x128xbf16>
    %212 = vector.shape_cast %211 : vector<1x128x128xbf16> to vector<128x128xbf16>
    %cst_204 = arith.constant dense<0.000000e+00> : vector<256x128xf32>
    %213 = tpu.matmul %210, %212, %cst_204 {dimension_numbers = #tpu.dot_dimension_numbers<[1], [0], [0], [1], [0, 0, 1, 1], [], []>} : vector<256x128xbf16>, vector<128x128xbf16>, vector<256x128xf32> -> vector<256x128xf32>
    %214 = arith.addf %207, %213 : vector<256x128xf32>
    %215 = arith.addf %214, %74 : vector<256x128xf32>
    %cst_205 = arith.constant 0.000000e+00 : f32
    %216 = vector.broadcast %cst_205 : f32 to vector<256x128xf32>
    %217 = arith.maximumf %215, %216 : vector<256x128xf32>
    %cst_206 = arith.constant dense<0.000000e+00> : vector<128xf32>
    %218 = vector.multi_reduction <add>, %217, %cst_206 [0] : vector<256x128xf32> to vector<128xf32>
    %219 = vector.shape_cast %218 : vector<128xf32> to vector<1x128xf32>
    %cst_207 = arith.constant 2.560000e+02 : f32
    %220 = vector.broadcast %cst_207 : f32 to vector<1x128xf32>
    %221 = arith.divf %219, %220 : vector<1x128xf32>
    %222 = arith.truncf %221 : vector<1x128xf32> to vector<1x128xbf16>
    %c0_208 = arith.constant 0 : index
    %c0_209 = arith.constant 0 : index
    %223 = vector.load %arg8[%c0_208, %c0_209] : memref<128x256xbf16, #tpu.memory_space<vmem>>, vector<128x256xbf16>
    %cst_210 = arith.constant dense<0.000000e+00> : vector<1x256xf32>
    %224 = tpu.matmul %222, %223, %cst_210 {dimension_numbers = #tpu.dot_dimension_numbers<[1], [0], [0], [1], [0, 0, 1, 1], [], []>} : vector<1x128xbf16>, vector<128x256xbf16>, vector<1x256xf32> -> vector<1x256xf32>
    %c0_211 = arith.constant 0 : index
    %c0_212 = arith.constant 0 : index
    %225 = vector.load %arg9[%c0_211, %c0_212] : memref<1x256xf32, #tpu.memory_space<vmem>>, vector<1x256xf32>
    %226 = arith.addf %224, %225 : vector<1x256xf32>
    %c0_213 = arith.constant 0 : index
    %c0_214 = arith.constant 0 : index
    %c0_215 = arith.constant 0 : index
    %227 = vector.load %arg10[%c0_213, %c0_214, %c0_215] : memref<1x1x256xf32, #tpu.memory_space<vmem>>, vector<1x1x256xf32>
    %228 = vector.shape_cast %227 : vector<1x1x256xf32> to vector<1x256xf32>
    %229 = vector.shape_cast %226 : vector<1x256xf32> to vector<1x1x256xf32>
    tpu.vector_store %arg10[%c0_213, %c0_214, %c0_215], %229 {strides = array<i32>} : memref<1x1x256xf32, #tpu.memory_space<vmem>>, vector<1x1x256xf32>,
    return
  }
  func.func @transform_0(%arg0: i32) -> (i32, i32, i32) {
    %c0_i32 = arith.constant 0 : i32
    %c0_i32_0 = arith.constant 0 : i32
    %c0_i32_1 = arith.constant 0 : i32
    return %arg0, %c0_i32, %c0_i32_0 : i32, i32, i32
  }
  func.func @transform_1(%arg0: i32) -> (i32, i32, i32) {
    %c0_i32 = arith.constant 0 : i32
    %c0_i32_0 = arith.constant 0 : i32
    %c0_i32_1 = arith.constant 0 : i32
    %c0_i32_2 = arith.constant 0 : i32
    return %c0_i32, %c0_i32_0, %c0_i32_1 : i32, i32, i32
  }
  func.func @transform_2(%arg0: i32) -> (i32, i32) {
    %c0_i32 = arith.constant 0 : i32
    %c0_i32_0 = arith.constant 0 : i32
    %c0_i32_1 = arith.constant 0 : i32
    return %c0_i32, %c0_i32_0 : i32, i32
  }
  func.func @transform_3(%arg0: i32) -> (i32, i32, i32) {
    %c0_i32 = arith.constant 0 : i32
    %c0_i32_0 = arith.constant 0 : i32
    %c0_i32_1 = arith.constant 0 : i32
    %c0_i32_2 = arith.constant 0 : i32
    return %c0_i32, %c0_i32_0, %c0_i32_1 : i32, i32, i32
  }
  func.func @transform_4(%arg0: i32) -> (i32, i32) {
    %c0_i32 = arith.constant 0 : i32
    %c0_i32_0 = arith.constant 0 : i32
    %c0_i32_1 = arith.constant 0 : i32
    return %c0_i32, %c0_i32_0 : i32, i32
  }
  func.func @transform_5(%arg0: i32) -> (i32, i32, i32) {
    %c0_i32 = arith.constant 0 : i32
    %c0_i32_0 = arith.constant 0 : i32
    %c0_i32_1 = arith.constant 0 : i32
    %c0_i32_2 = arith.constant 0 : i32
    return %c0_i32, %c0_i32_0, %c0_i32_1 : i32, i32, i32
  }
  func.func @transform_6(%arg0: i32) -> (i32, i32) {
    %c0_i32 = arith.constant 0 : i32
    %c0_i32_0 = arith.constant 0 : i32
    %c0_i32_1 = arith.constant 0 : i32
    return %c0_i32, %c0_i32_0 : i32, i32
  }
  func.func @transform_7(%arg0: i32) -> (i32, i32) {
    %c0_i32 = arith.constant 0 : i32
    %c0_i32_0 = arith.constant 0 : i32
    %c0_i32_1 = arith.constant 0 : i32
    return %c0_i32, %c0_i32_0 : i32, i32
  }
  func.func @transform_8(%arg0: i32) -> (i32, i32) {
    %c0_i32 = arith.constant 0 : i32
    %c0_i32_0 = arith.constant 0 : i32
    %c0_i32_1 = arith.constant 0 : i32
    return %c0_i32, %c0_i32_0 : i32, i32
  }
  func.func @transform_9(%arg0: i32) -> (i32, i32, i32) {
    %c0_i32 = arith.constant 0 : i32
    %c0_i32_0 = arith.constant 0 : i32
    %c0_i32_1 = arith.constant 0 : i32
    return %arg0, %c0_i32, %c0_i32_0 : i32, i32, i32
  }
}

</mosaic_0001>

<llo_original>
// kernel: train_model_forward.1
$region0: #{train_model_forward.1}
  #allocation0 [shape = 'u32[]', space=smem, size = 0x4, offset = 0x4, fixed_abs, tag = 'smem constant byte address 0x4 - core index']
  #allocation1 [shape = 'u32[144,128]{1,0:T(1,128)}', space=vmem, size = 0x12000, scoped, tag = 'internal scratch']
  #allocation2 [shape = 'f32[18,32,128]{2,1,0:T(8,128)}', space=vmem, size = 0x48000, scoped, tag = 'scratch operand']
  %s0 = inlined_call_operand.vmem [shape: f32[2,256,128], index: 0, kind: input, shape index: {}]
  %s1 = inlined_call_operand.vmem [shape: bf16[9,128,128], index: 1, kind: input, shape index: {}]
  %s2 = inlined_call_operand.vmem [shape: f32[1,128], index: 2, kind: input, shape index: {}]
  %s3 = inlined_call_operand.vmem [shape: bf16[9,128,128], index: 3, kind: input, shape index: {}]
  %s4 = inlined_call_operand.vmem [shape: f32[1,128], index: 4, kind: input, shape index: {}]
  %s5 = inlined_call_operand.hbm [shape: bf16[9,128,128], index: 5, kind: input, shape index: {}]
  %s6 = inlined_call_operand.vmem [shape: f32[1,128], index: 6, kind: input, shape index: {}]
  %s7 = inlined_call_operand.vmem [shape: bf16[128,256], index: 7, kind: input, shape index: {}]
  %s8 = inlined_call_operand.vmem [shape: f32[1,256], index: 8, kind: input, shape index: {}]
  %s9 = inlined_call_operand.vmem [shape: f32[2,1,256], index: 9, kind: output, shape index: {}]
  %s10 = sld [smem:[#allocation0]]
  $region73: #{train_model_forward.1} parent=0
    _
  %s12 = ssub.s32 1, %s10
  %s13 = scalar_select 0, %s12, %s10
  $region1: #{train_model_forward.1} parent=0
    #allocation3 [shape = 'u8[294912]{0}', space=vmem, size = 0x48000, scoped, tag = 'input window, operand 5, single buffered']
    #allocation4 [shape = 's32[2]{0}', space=sflag, size = 0x8, scoped, tag = 'scoped memory for train_model_forward.1']
    %14 = vsyncpa [#allocation4], 0
    loop: start=0, step=1, limit=4
    $region2: #{train_model_forward.1} parent=1 // loop_pre_header
      _
    $region3: #{train_model_forward.1} parent=1 // loop_header
      %s16 = sphi 0, %s20
      %p17 = scmp.ge.s32.totalorder %s16, 4
      %s26 = sphi 0, %s28
      %s29 = sphi 0, %s26
      %s30 = sphi 0, %s29
      %s46 = sphi 0, %s30
      %s50 = sphi 0, %s50
      %s52 = sphi 0, %s50
      %s53 = sphi 0, %s52
      %s67 = sphi 0, %s53
      %s71 = sphi 0, %s71
      %s73 = sphi 0, %s71
      %s74 = sphi 0, %s73
      %s88 = sphi 0, %s74
      %s92 = sphi 0, %s92
      %s94 = sphi 0, %s92
      %s95 = sphi 0, %s94
      %s109 = sphi 0, %s95
      %s113 = sphi 0, %s113
      %s115 = sphi 0, %s113
      %s116 = sphi 0, %s115
      %s130 = sphi 0, %s116
      %s134 = sphi 0, %s134
      %s136 = sphi 0, %s134
      %s137 = sphi 0, %s136
      %s151 = sphi 0, %s137
      %s155 = sphi 0, %s155
      %s157 = sphi 0, %s155
      %s158 = sphi 0, %s157
      %s172 = sphi 0, %s158
      %s176 = sphi 0, %s176
      %s178 = sphi 0, %s176
      %s179 = sphi 0, %s178
      %s193 = sphi 0, %s179
      %s197 = sphi 0, %s197
      %s199 = sphi 0, %s197
      %s200 = sphi 0, %s199
      %s214 = sphi 0, %s200
      %s220 = sphi 0, %s222
      %s223 = sphi 0, %s220
      %s224 = sphi 0, %s223
      %s240 = sphi 0, %s224
    $region4: #{train_model_forward.1} parent=1 // loop_header_branch
      %19 = sbr.rel (%p17) target = $region8
    $region5: #{train_model_forward.1} parent=1 // loop_body
      %s21 = ssub.s32 %s16, 1
      %s22 = ssub.s32 %s16, 2
      %s23 = sadd.s32 %s16, 1
      %s24 = ssub.s32 %s16, %s23
      %p25 = scmp.eq.s32.totalorder %s24, 0
      %s27 = sadd.s32 %s26, 1
      %s28 = scalar_select %p25, %s26, %s27
      %p31 = pneg %p25
      %p32 = scmp.eq.s32.totalorder %s16, 1
      %p33 = por %p31, %p32
      %p34 = scmp.ne.s32.totalorder %s26, %s29
      %p35 = scmp.eq.s32.totalorder %s16, 0
      %p36 = por %p34, %p35
      %p37 = scmp.ne.s32.totalorder %s26, %s29
      %p38 = scmp.eq.s32.totalorder %s21, 1
      %p39 = por %p37, %p38
      %p40 = scmp.ne.s32.totalorder %s29, %s30
      %p41 = scmp.eq.s32.totalorder %s21, 0
      %p42 = por %p40, %p41
      %p43 = scmp.ne.s32.totalorder %s29, %s30
      %p44 = scmp.eq.s32.totalorder %s22, 1
      %p45 = por %p43, %p44
      %p47 = scmp.ne.s32.totalorder %s30, %s46
      %p48 = scmp.eq.s32.totalorder %s22, 0
      %p49 = por %p47, %p48
      %s51 = sadd.s32 %s50, 1
      %p54 = scmp.eq.s32.totalorder %s16, 1
      %p55 = scmp.ne.s32.totalorder %s50, %s52
      %p56 = scmp.eq.s32.totalorder %s16, 0
      %p57 = por %p55, %p56
      %p58 = scmp.ne.s32.totalorder %s50, %s52
      %p59 = scmp.eq.s32.totalorder %s21, 1
      %p60 = por %p58, %p59
      %p61 = scmp.ne.s32.totalorder %s52, %s53
      %p62 = scmp.eq.s32.totalorder %s21, 0
      %p63 = por %p61, %p62
      %p64 = scmp.ne.s32.totalorder %s52, %s53
      %p65 = scmp.eq.s32.totalorder %s22, 1
      %p66 = por %p64, %p65
      %p68 = scmp.ne.s32.totalorder %s53, %s67
      %p69 = scmp.eq.s32.totalorder %s22, 0
      %p70 = por %p68, %p69
      %s72 = sadd.s32 %s71, 1
      %p75 = scmp.eq.s32.totalorder %s16, 1
      %p76 = scmp.ne.s32.totalorder %s71, %s73
      %p77 = scmp.eq.s32.totalorder %s16, 0
      %p78 = por %p76, %p77
      %p79 = scmp.ne.s32.totalorder %s71, %s73
      %p80 = scmp.eq.s32.totalorder %s21, 1
      %p81 = por %p79, %p80
      %p82 = scmp.ne.s32.totalorder %s73, %s74
      %p83 = scmp.eq.s32.totalorder %s21, 0
      %p84 = por %p82, %p83
      %p85 = scmp.ne.s32.totalorder %s73, %s74
      %p86 = scmp.eq.s32.totalorder %s22, 1
      %p87 = por %p85, %p86
      %p89 = scmp.ne.s32.totalorder %s74, %s88
      %p90 = scmp.eq.s32.totalorder %s22, 0
      %p91 = por %p89, %p90
      %s93 = sadd.s32 %s92, 1
      %p96 = scmp.eq.s32.totalorder %s16, 1
      %p97 = scmp.ne.s32.totalorder %s92, %s94
      %p98 = scmp.eq.s32.totalorder %s16, 0
      %p99 = por %p97, %p98
      %p100 = scmp.ne.s32.totalorder %s92, %s94
      %p101 = scmp.eq.s32.totalorder %s21, 1
      %p102 = por %p100, %p101
      %p103 = scmp.ne.s32.totalorder %s94, %s95
      %p104 = scmp.eq.s32.totalorder %s21, 0
      %p105 = por %p103, %p104
      %p106 = scmp.ne.s32.totalorder %s94, %s95
      %p107 = scmp.eq.s32.totalorder %s22, 1
      %p108 = por %p106, %p107
      %p110 = scmp.ne.s32.totalorder %s95, %s109
      %p111 = scmp.eq.s32.totalorder %s22, 0
      %p112 = por %p110, %p111
      %s114 = sadd.s32 %s113, 1
      %p117 = scmp.eq.s32.totalorder %s16, 1
      %p118 = scmp.ne.s32.totalorder %s113, %s115
      %p119 = scmp.eq.s32.totalorder %s16, 0
      %p120 = por %p118, %p119
      %p121 = scmp.ne.s32.totalorder %s113, %s115
      %p122 = scmp.eq.s32.totalorder %s21, 1
      %p123 = por %p121, %p122
      %p124 = scmp.ne.s32.totalorder %s115, %s116
      %p125 = scmp.eq.s32.totalorder %s21, 0
      %p126 = por %p124, %p125
      %p127 = scmp.ne.s32.totalorder %s115, %s116
      %p128 = scmp.eq.s32.totalorder %s22, 1
      %p129 = por %p127, %p128
      %p131 = scmp.ne.s32.totalorder %s116, %s130
      %p132 = scmp.eq.s32.totalorder %s22, 0
      %p133 = por %p131, %p132
      %s135 = sadd.s32 %s134, 1
      %p138 = scmp.eq.s32.totalorder %s16, 1
      %p139 = scmp.ne.s32.totalorder %s134, %s136
      %p140 = scmp.eq.s32.totalorder %s16, 0
      %p141 = por %p139, %p140
      %p142 = scmp.ne.s32.totalorder %s134, %s136
      %p143 = scmp.eq.s32.totalorder %s21, 1
      %p144 = por %p142, %p143
      %p145 = scmp.ne.s32.totalorder %s136, %s137
      %p146 = scmp.eq.s32.totalorder %s21, 0
      %p147 = por %p145, %p146
      %p148 = scmp.ne.s32.totalorder %s136, %s137
      %p149 = scmp.eq.s32.totalorder %s22, 1
      %p150 = por %p148, %p149
      %p152 = scmp.ne.s32.totalorder %s137, %s151
      %p153 = scmp.eq.s32.totalorder %s22, 0
      %p154 = por %p152, %p153
      %s156 = sadd.s32 %s155, 1
      %p159 = scmp.eq.s32.totalorder %s16, 1
      %p160 = scmp.ne.s32.totalorder %s155, %s157
      %p161 = scmp.eq.s32.totalorder %s16, 0
      %p162 = por %p160, %p161
      %p163 = scmp.ne.s32.totalorder %s155, %s157
      %p164 = scmp.eq.s32.totalorder %s21, 1
      %p165 = por %p163, %p164
      %p166 = scmp.ne.s32.totalorder %s157, %s158
      %p167 = scmp.eq.s32.totalorder %s21, 0
      %p168 = por %p166, %p167
      %p169 = scmp.ne.s32.totalorder %s157, %s158
      %p170 = scmp.eq.s32.totalorder %s22, 1
      %p171 = por %p169, %p170
      %p173 = scmp.ne.s32.totalorder %s158, %s172
      %p174 = scmp.eq.s32.totalorder %s22, 0
      %p175 = por %p173, %p174
      %s177 = sadd.s32 %s176, 1
      %p180 = scmp.eq.s32.totalorder %s16, 1
      %p181 = scmp.ne.s32.totalorder %s176, %s178
      %p182 = scmp.eq.s32.totalorder %s16, 0
      %p183 = por %p181, %p182
      %p184 = scmp.ne.s32.totalorder %s176, %s178
      %p185 = scmp.eq.s32.totalorder %s21, 1
      %p186 = por %p184, %p185
      %p187 = scmp.ne.s32.totalorder %s178, %s179
      %p188 = scmp.eq.s32.totalorder %s21, 0
      %p189 = por %p187, %p188
      %p190 = scmp.ne.s32.totalorder %s178, %s179
      %p191 = scmp.eq.s32.totalorder %s22, 1
      %p192 = por %p190, %p191
      %p194 = scmp.ne.s32.totalorder %s179, %s193
      %p195 = scmp.eq.s32.totalorder %s22, 0
      %p196 = por %p194, %p195
      %s198 = sadd.s32 %s197, 1
      %p201 = scmp.eq.s32.totalorder %s16, 1
      %p202 = scmp.ne.s32.totalorder %s197, %s199
      %p203 = scmp.eq.s32.totalorder %s16, 0
      %p204 = por %p202, %p203
      %p205 = scmp.ne.s32.totalorder %s197, %s199
      %p206 = scmp.eq.s32.totalorder %s21, 1
      %p207 = por %p205, %p206
      %p208 = scmp.ne.s32.totalorder %s199, %s200
      %p209 = scmp.eq.s32.totalorder %s21, 0
      %p210 = por %p208, %p209
      %p211 = scmp.ne.s32.totalorder %s199, %s200
      %p212 = scmp.eq.s32.totalorder %s22, 1
      %p213 = por %p211, %p212
      %p215 = scmp.ne.s32.totalorder %s200, %s214
      %p216 = scmp.eq.s32.totalorder %s22, 0
      %p217 = por %p215, %p216
      %s218 = ssub.s32 %s16, %s23
      %p219 = scmp.eq.s32.totalorder %s218, 0
      %s221 = sadd.s32 %s220, 1
      %s222 = scalar_select %p219, %s220, %s221
      %p225 = pneg %p219
      %p226 = scmp.eq.s32.totalorder %s16, 1
      %p227 = por %p225, %p226
      %p228 = scmp.ne.s32.totalorder %s220, %s223
      %p229 = scmp.eq.s32.totalorder %s16, 0
      %p230 = por %p228, %p229
      %p231 = scmp.ne.s32.totalorder %s220, %s223
      %p232 = scmp.eq.s32.totalorder %s21, 1
      %p233 = por %p231, %p232
      %p234 = scmp.ne.s32.totalorder %s223, %s224
      %p235 = scmp.eq.s32.totalorder %s21, 0
      %p236 = por %p234, %p235
      %p237 = scmp.ne.s32.totalorder %s223, %s224
      %p238 = scmp.eq.s32.totalorder %s22, 1
      %p239 = por %p237, %p238
      %p241 = scmp.ne.s32.totalorder %s224, %s240
      %p242 = scmp.eq.s32.totalorder %s22, 0
      %p243 = por %p241, %p242
      %p244 = scmp.le.s32.totalorder 1, %s16
      %p245 = scmp.lt.s32.totalorder %s16, 3
      %p246 = pnand %p244, %p245
      %p247 = pneg %p246
      // Predicated region
      $region9: #{train_model_forward.1} parent=5 // pred_check
        _
      $region10: #{train_model_forward.1} parent=5 // pred_check_branch
        %249 = sbr.rel (%p246) target = $region12
      $region11: #{train_model_forward.1} parent=5 // pred_region
        %s250 = ssub.s32 %s16, 1
        // Predicated region
        $region13: #{train_model_forward.1} parent=11 // pred_check
          %p251 = pneg %p63
        $region14: #{train_model_forward.1} parent=11 // pred_check_branch
          %253 = sbr.rel (%p251) target = $region16
        $region15: #{train_model_forward.1} parent=11 // pred_region
          _
        $region16: #{train_model_forward.1} parent=11 // pred_fallthru
          _
        // Predicated region
        $region17: #{train_model_forward.1} parent=11 // pred_check
          %p254 = pneg %p84
        $region18: #{train_model_forward.1} parent=11 // pred_check_branch
          %256 = sbr.rel (%p254) target = $region20
        $region19: #{train_model_forward.1} parent=11 // pred_region
          _
        $region20: #{train_model_forward.1} parent=11 // pred_fallthru
          _
        // Predicated region
        $region21: #{train_model_forward.1} parent=11 // pred_check
          %p257 = pneg %p105
        $region22: #{train_model_forward.1} parent=11 // pred_check_branch
          %259 = sbr.rel (%p257) target = $region24
        $region23: #{train_model_forward.1} parent=11 // pred_region
          _
        $region24: #{train_model_forward.1} parent=11 // pred_fallthru
          _
        // Predicated region
        $region25: #{train_model_forward.1} parent=11 // pred_check
          %p260 = pneg %p126
        $region26: #{train_model_forward.1} parent=11 // pred_check_branch
          %262 = sbr.rel (%p260) target = $region28
        $region27: #{train_model_forward.1} parent=11 // pred_region
          _
        $region28: #{train_model_forward.1} parent=11 // pred_fallthru
          _
        // Predicated region
        $region29: #{train_model_forward.1} parent=11 // pred_check
          %p263 = pneg %p147
        $region30: #{train_model_forward.1} parent=11 // pred_check_branch
          %265 = sbr.rel (%p263) target = $region32
        $region31: #{train_model_forward.1} parent=11 // pred_region
          %s267 = ssub.s32 9216, 9216
          %268 = vsyncadd [#allocation4], %s267
          %s269 = sshll.u32 [#allocation3], 4
          %s270 = int_to_ptr.vmem [resolvable:$true] %s269
          %275 = dma.hbm_to_vmem [thread:$0]  %s5, 9216, %s270, [#allocation4], 64, 64, 4
        $region32: #{train_model_forward.1} parent=11 // pred_fallthru
          _
        // Predicated region
        $region33: #{train_model_forward.1} parent=11 // pred_check
          %p276 = pneg %p168
        $region34: #{train_model_forward.1} parent=11 // pred_check_branch
          %278 = sbr.rel (%p276) target = $region36
        $region35: #{train_model_forward.1} parent=11 // pred_region
          _
        $region36: #{train_model_forward.1} parent=11 // pred_fallthru
          _
        // Predicated region
        $region37: #{train_model_forward.1} parent=11 // pred_check
          %p279 = pneg %p189
        $region38: #{train_model_forward.1} parent=11 // pred_check_branch
          %281 = sbr.rel (%p279) target = $region40
        $region39: #{train_model_forward.1} parent=11 // pred_region
          _
        $region40: #{train_model_forward.1} parent=11 // pred_fallthru
          _
        // Predicated region
        $region41: #{train_model_forward.1} parent=11 // pred_check
          %p282 = pneg %p210
        $region42: #{train_model_forward.1} parent=11 // pred_check_branch
          %284 = sbr.rel (%p282) target = $region44
        $region43: #{train_model_forward.1} parent=11 // pred_region
          _
        $region44: #{train_model_forward.1} parent=11 // pred_fallthru
          _
      $region12: #{train_model_forward.1} parent=5 // pred_fallthru
        _
      %p285 = scmp.lt.s32.totalorder %s16, 2
      // Predicated region
      $region45: #{train_model_forward.1} parent=5 // pred_check
        %p286 = pneg %p285
      $region46: #{train_model_forward.1} parent=5 // pred_check_branch
        %288 = sbr.rel (%p286) target = $region48
      $region47: #{train_model_forward.1} parent=5 // pred_region
        // Predicated region
        $region49: #{train_model_forward.1} parent=47 // pred_check
          %p289 = pneg %p36
        $region50: #{train_model_forward.1} parent=47 // pred_check_branch
          %291 = sbr.rel (%p289) target = $region52
        $region51: #{train_model_forward.1} parent=47 // pred_region
          %p292 = scmp.lt.s32.totalorder %s16, 1
          %s293 = scalar_select %p292, %s16, 1
          %s294 = smul.addr %s293, 32
          %s295 = smul.addr %s294, 8
          %s296 = scalar_lea.vmem %s0, %s295
        $region52: #{train_model_forward.1} parent=47 // pred_fallthru
          _
      $region48: #{train_model_forward.1} parent=5 // pred_fallthru
        _
      %p297 = scmp.le.s32.totalorder 1, %s16
      %p298 = scmp.lt.s32.totalorder %s16, 3
      %p299 = pnand %p297, %p298
      %p300 = pneg %p299
      // Predicated region
      $region53: #{train_model_forward.1} parent=5 // pred_check
        _
      $region54: #{train_model_forward.1} parent=5 // pred_check_branch
        %302 = sbr.rel (%p299) target = $region56
      $region55: #{train_model_forward.1} parent=5 // pred_region
        %s303 = ssub.s32 %s16, 1
        // Predicated region
        $region57: #{train_model_forward.1} parent=55 // pred_check
          %p304 = pneg %p147
        $region58: #{train_model_forward.1} parent=55 // pred_check_branch
          %306 = sbr.rel (%p304) target = $region60
        $region59: #{train_model_forward.1} parent=55 // pred_region
          %307 = dma.done [#allocation4], 9216
        $region60: #{train_model_forward.1} parent=55 // pred_fallthru
          _
        %p308 = scmp.lt.s32.totalorder %s21, 1
        %s309 = scalar_select %p308, %s21, 1
        %s310 = smul.addr %s309, 32
        %s311 = smul.addr %s310, 8
        %s312 = scalar_lea.vmem %s0, %s311
        %p313 = pneg %p42
        %p314 = pneg %p39
        %p315 = pneg %p63
        %p316 = pneg %p60
        %p317 = pneg %p84
        %p318 = pneg %p81
        %p319 = pneg %p105
        %p320 = pneg %p102
        %p321 = pneg %p126
        %p322 = pneg %p123
        %p323 = pneg %p147
        %p324 = pneg %p144
        %p325 = pneg %p168
        %p326 = pneg %p165
        %p327 = pneg %p189
        %p328 = pneg %p186
        %p329 = pneg %p210
        %p330 = pneg %p207
        %p331 = pneg %p236
        %p332 = pneg %p233
        %p333 = scmp.lt.s32.totalorder %s21, 1
        %s334 = scalar_select %p333, %s21, 1
        %s335 = smul.addr %s334, 2
        %s336 = scalar_lea.vmem %s9, %s335
        %p337 = scmp.lt.s32.totalorder %s21, 1
        %s338 = scalar_select %p337, %s21, 1
        %s339 = smul.addr %s338, 32
        %s340 = smul.addr %s339, 8
        %s341 = scalar_lea.vmem %s0, %s340
        %p342 = scmp.lt.s32.totalorder %s21, 1
        %s343 = scalar_select %p342, %s21, 1
        %s344 = smul.addr %s343, 2
        %s345 = scalar_lea.vmem %s9, %s344
        %347 = vst [vmem:[#allocation2] sm:$0xff] 0.0
        %348 = vst [vmem:[#allocation2 + $0x8] sm:$0xff] 0.0
        %349 = vst [vmem:[#allocation2 + $0x10] sm:$0xff] 0.0
        %350 = vst [vmem:[#allocation2 + $0x18] sm:$0xff] 0.0
        %351 = vst [vmem:[#allocation2 + $0x20] sm:$0xff] 0.0
        %352 = vst [vmem:[#allocation2 + $0x28] sm:$0xff] 0.0
        %353 = vst [vmem:[#allocation2 + $0x30] sm:$0xff] 0.0
        %354 = vst [vmem:[#allocation2 + $0x38] sm:$0xff] 0.0
        %355 = vst [vmem:[#allocation2 + $0x40] sm:$0xff] 0.0
        %356 = vst [vmem:[#allocation2 + $0x48] sm:$0xff] 0.0
        %357 = vst [vmem:[#allocation2 + $0x50] sm:$0xff] 0.0
        %358 = vst [vmem:[#allocation2 + $0x58] sm:$0xff] 0.0
        %359 = vst [vmem:[#allocation2 + $0x60] sm:$0xff] 0.0
        %360 = vst [vmem:[#allocation2 + $0x68] sm:$0xff] 0.0
        %361 = vst [vmem:[#allocation2 + $0x70] sm:$0xff] 0.0
        %362 = vst [vmem:[#allocation2 + $0x78] sm:$0xff] 0.0
        %363 = vst [vmem:[#allocation2 + $0x80] sm:$0xff] 0.0
        %364 = vst [vmem:[#allocation2 + $0x88] sm:$0xff] 0.0
        %365 = vst [vmem:[#allocation2 + $0x90] sm:$0xff] 0.0
        %366 = vst [vmem:[#allocation2 + $0x98] sm:$0xff] 0.0
        %367 = vst [vmem:[#allocation2 + $0xa0] sm:$0xff] 0.0
        %368 = vst [vmem:[#allocation2 + $0xa8] sm:$0xff] 0.0
        %369 = vst [vmem:[#allocation2 + $0xb0] sm:$0xff] 0.0
        %370 = vst [vmem:[#allocation2 + $0xb8] sm:$0xff] 0.0
        %371 = vst [vmem:[#allocation2 + $0xc0] sm:$0xff] 0.0
        %372 = vst [vmem:[#allocation2 + $0xc8] sm:$0xff] 0.0
        %373 = vst [vmem:[#allocation2 + $0xd0] sm:$0xff] 0.0
        %374 = vst [vmem:[#allocation2 + $0xd8] sm:$0xff] 0.0
        %375 = vst [vmem:[#allocation2 + $0xe0] sm:$0xff] 0.0
        %376 = vst [vmem:[#allocation2 + $0xe8] sm:$0xff] 0.0
        %377 = vst [vmem:[#allocation2 + $0xf0] sm:$0xff] 0.0
        %378 = vst [vmem:[#allocation2 + $0xf8] sm:$0xff] 0.0
        %379 = vst [vmem:[#allocation2 + $0x100] sm:$0xff] 0.0
        %380 = vst [vmem:[#allocation2 + $0x108] sm:$0xff] 0.0
        %381 = vst [vmem:[#allocation2 + $0x110] sm:$0xff] 0.0
        %382 = vst [vmem:[#allocation2 + $0x118] sm:$0xff] 0.0
        %383 = vst [vmem:[#allocation2 + $0x120] sm:$0xff] 0.0
        %384 = vst [vmem:[#allocation2 + $0x128] sm:$0xff] 0.0
        %385 = vst [vmem:[#allocation2 + $0x130] sm:$0xff] 0.0
        %386 = vst [vmem:[#allocation2 + $0x138] sm:$0xff] 0.0
        %387 = vst [vmem:[#allocation2 + $0x140] sm:$0xff] 0.0
        %388 = vst [vmem:[#allocation2 + $0x148] sm:$0xff] 0.0
        %389 = vst [vmem:[#allocation2 + $0x150] sm:$0xff] 0.0
        %390 = vst [vmem:[#allocation2 + $0x158] sm:$0xff] 0.0
        %391 = vst [vmem:[#allocation2 + $0x160] sm:$0xff] 0.0
        %392 = vst [vmem:[#allocation2 + $0x168] sm:$0xff] 0.0
        %393 = vst [vmem:[#allocation2 + $0x170] sm:$0xff] 0.0
        %394 = vst [vmem:[#allocation2 + $0x178] sm:$0xff] 0.0
        %395 = vst [vmem:[#allocation2 + $0x180] sm:$0xff] 0.0
        %396 = vst [vmem:[#allocation2 + $0x188] sm:$0xff] 0.0
        %397 = vst [vmem:[#allocation2 + $0x190] sm:$0xff] 0.0
        %398 = vst [vmem:[#allocation2 + $0x198] sm:$0xff] 0.0
        %399 = vst [vmem:[#allocation2 + $0x1a0] sm:$0xff] 0.0
        %400 = vst [vmem:[#allocation2 + $0x1a8] sm:$0xff] 0.0
        %401 = vst [vmem:[#allocation2 + $0x1b0] sm:$0xff] 0.0
        %402 = vst [vmem:[#allocation2 + $0x1b8] sm:$0xff] 0.0
        %403 = vst [vmem:[#allocation2 + $0x1c0] sm:$0xff] 0.0
        %404 = vst [vmem:[#allocation2 + $0x1c8] sm:$0xff] 0.0
        %405 = vst [vmem:[#allocation2 + $0x1d0] sm:$0xff] 0.0
        %406 = vst [vmem:[#allocation2 + $0x1d8] sm:$0xff] 0.0
        %407 = vst [vmem:[#allocation2 + $0x1e0] sm:$0xff] 0.0
        %408 = vst [vmem:[#allocation2 + $0x1e8] sm:$0xff] 0.0
        %409 = vst [vmem:[#allocation2 + $0x1f0] sm:$0xff] 0.0
        %410 = vst [vmem:[#allocation2 + $0x1f8] sm:$0xff] 0.0
        %411 = vst [vmem:[#allocation2 + $0x200] sm:$0xff] 0.0
        %412 = vst [vmem:[#allocation2 + $0x208] sm:$0xff] 0.0
        %413 = vst [vmem:[#allocation2 + $0x210] sm:$0xff] 0.0
        %414 = vst [vmem:[#allocation2 + $0x218] sm:$0xff] 0.0
        %415 = vst [vmem:[#allocation2 + $0x220] sm:$0xff] 0.0
        %416 = vst [vmem:[#allocation2 + $0x228] sm:$0xff] 0.0
        %417 = vst [vmem:[#allocation2 + $0x230] sm:$0xff] 0.0
        %418 = vst [vmem:[#allocation2 + $0x238] sm:$0xff] 0.0
        %v419 = vld [vmem:[%s341] sm:$0xff]
        %v420 = vld [vmem:[%s341 + $0x8] sm:$0xff]
        %v421 = vld [vmem:[%s341 + $0x10] sm:$0xff]
        %v422 = vld [vmem:[%s341 + $0x18] sm:$0xff]
        %v423 = vld [vmem:[%s341 + $0x20] sm:$0xff]
        %v424 = vld [vmem:[%s341 + $0x28] sm:$0xff]
        %v425 = vld [vmem:[%s341 + $0x30] sm:$0xff]
        %v426 = vld [vmem:[%s341 + $0x38] sm:$0xff]
        %v427 = vld [vmem:[%s341 + $0x40] sm:$0xff]
        %v428 = vld [vmem:[%s341 + $0x48] sm:$0xff]
        %v429 = vld [vmem:[%s341 + $0x50] sm:$0xff]
        %v430 = vld [vmem:[%s341 + $0x58] sm:$0xff]
        %v431 = vld [vmem:[%s341 + $0x60] sm:$0xff]
        %v432 = vld [vmem:[%s341 + $0x68] sm:$0xff]
        %v433 = vld [vmem:[%s341 + $0x70] sm:$0xff]
        %v434 = vld [vmem:[%s341 + $0x78] sm:$0xff]
        %v435 = vld [vmem:[%s341 + $0x80] sm:$0xff]
        %v436 = vld [vmem:[%s341 + $0x88] sm:$0xff]
        %v437 = vld [vmem:[%s341 + $0x90] sm:$0xff]
        %v438 = vld [vmem:[%s341 + $0x98] sm:$0xff]
        %v439 = vld [vmem:[%s341 + $0xa0] sm:$0xff]
        %v440 = vld [vmem:[%s341 + $0xa8] sm:$0xff]
        %v441 = vld [vmem:[%s341 + $0xb0] sm:$0xff]
        %v442 = vld [vmem:[%s341 + $0xb8] sm:$0xff]
        %v443 = vld [vmem:[%s341 + $0xc0] sm:$0xff]
        %v444 = vld [vmem:[%s341 + $0xc8] sm:$0xff]
        %v445 = vld [vmem:[%s341 + $0xd0] sm:$0xff]
        %v446 = vld [vmem:[%s341 + $0xd8] sm:$0xff]
        %v447 = vld [vmem:[%s341 + $0xe0] sm:$0xff]
        %v448 = vld [vmem:[%s341 + $0xe8] sm:$0xff]
        %v449 = vld [vmem:[%s341 + $0xf0] sm:$0xff]
        %v450 = vld [vmem:[%s341 + $0xf8] sm:$0xff]
        %s451 = scalar_lea.vmem [#allocation2], 32
        %452 = vst [vmem:[%s451 + $0x8] sm:$0xff] %v419
        %453 = vst [vmem:[%s451 + $0x10] sm:$0xff] %v420
        %454 = vst [vmem:[%s451 + $0x28] sm:$0xff] %v421
        %455 = vst [vmem:[%s451 + $0x30] sm:$0xff] %v422
        %456 = vst [vmem:[%s451 + $0x48] sm:$0xff] %v423
        %457 = vst [vmem:[%s451 + $0x50] sm:$0xff] %v424
        %458 = vst [vmem:[%s451 + $0x68] sm:$0xff] %v425
        %459 = vst [vmem:[%s451 + $0x70] sm:$0xff] %v426
        %460 = vst [vmem:[%s451 + $0x88] sm:$0xff] %v427
        %461 = vst [vmem:[%s451 + $0x90] sm:$0xff] %v428
        %462 = vst [vmem:[%s451 + $0xa8] sm:$0xff] %v429
        %463 = vst [vmem:[%s451 + $0xb0] sm:$0xff] %v430
        %464 = vst [vmem:[%s451 + $0xc8] sm:$0xff] %v431
        %465 = vst [vmem:[%s451 + $0xd0] sm:$0xff] %v432
        %466 = vst [vmem:[%s451 + $0xe8] sm:$0xff] %v433
        %467 = vst [vmem:[%s451 + $0xf0] sm:$0xff] %v434
        %468 = vst [vmem:[%s451 + $0x108] sm:$0xff] %v435
        %469 = vst [vmem:[%s451 + $0x110] sm:$0xff] %v436
        %470 = vst [vmem:[%s451 + $0x128] sm:$0xff] %v437
        %471 = vst [vmem:[%s451 + $0x130] sm:$0xff] %v438
        %472 = vst [vmem:[%s451 + $0x148] sm:$0xff] %v439
        %473 = vst [vmem:[%s451 + $0x150] sm:$0xff] %v440
        %474 = vst [vmem:[%s451 + $0x168] sm:$0xff] %v441
        %475 = vst [vmem:[%s451 + $0x170] sm:$0xff] %v442
        %476 = vst [vmem:[%s451 + $0x188] sm:$0xff] %v443
        %477 = vst [vmem:[%s451 + $0x190] sm:$0xff] %v444
        %478 = vst [vmem:[%s451 + $0x1a8] sm:$0xff] %v445
        %479 = vst [vmem:[%s451 + $0x1b0] sm:$0xff] %v446
        %480 = vst [vmem:[%s451 + $0x1c8] sm:$0xff] %v447
        %481 = vst [vmem:[%s451 + $0x1d0] sm:$0xff] %v448
        %482 = vst [vmem:[%s451 + $0x1e8] sm:$0xff] %v449
        %483 = vst [vmem:[%s451 + $0x1f0] sm:$0xff] %v450
        %v484 = vld [vmem:[%s2] sm:$0x1]
        %v486 = vlaneseq
        %v487 = vshrl.u32 %v486, 7
        %v488 = vsub.s32 0, %v487
        %v489 = vrot.slane %v484, %v488
        %v491 = vadd.f32 %v489, 0.0
        %v492 = vld [vmem:[#allocation2 + $0x7] sm:$0xff]
        %v493 = vld [vmem:[#allocation2 + $0xf] sm:$0xff]
        %v494 = vld [vmem:[#allocation2 + $0x27] sm:$0xff]
        %v495 = vld [vmem:[#allocation2 + $0x2f] sm:$0xff]
        %v496 = vld [vmem:[#allocation2 + $0x47] sm:$0xff]
        %v497 = vld [vmem:[#allocation2 + $0x4f] sm:$0xff]
        %v498 = vld [vmem:[#allocation2 + $0x67] sm:$0xff]
        %v499 = vld [vmem:[#allocation2 + $0x6f] sm:$0xff]
        %v500 = vld [vmem:[#allocation2 + $0x87] sm:$0xff]
        %v501 = vld [vmem:[#allocation2 + $0x8f] sm:$0xff]
        %v502 = vld [vmem:[#allocation2 + $0xa7] sm:$0xff]
        %v503 = vld [vmem:[#allocation2 + $0xaf] sm:$0xff]
        %v504 = vld [vmem:[#allocation2 + $0xc7] sm:$0xff]
        %v505 = vld [vmem:[#allocation2 + $0xcf] sm:$0xff]
        %v506 = vld [vmem:[#allocation2 + $0xe7] sm:$0xff]
        %v507 = vld [vmem:[#allocation2 + $0xef] sm:$0xff]
        %v508 = vld [vmem:[#allocation2 + $0x107] sm:$0xff]
        %v509 = vld [vmem:[#allocation2 + $0x10f] sm:$0xff]
        %v510 = vld [vmem:[#allocation2 + $0x127] sm:$0xff]
        %v511 = vld [vmem:[#allocation2 + $0x12f] sm:$0xff]
        %v512 = vld [vmem:[#allocation2 + $0x147] sm:$0xff]
        %v513 = vld [vmem:[#allocation2 + $0x14f] sm:$0xff]
        %v514 = vld [vmem:[#allocation2 + $0x167] sm:$0xff]
        %v515 = vld [vmem:[#allocation2 + $0x16f] sm:$0xff]
        %v516 = vld [vmem:[#allocation2 + $0x187] sm:$0xff]
        %v517 = vld [vmem:[#allocation2 + $0x18f] sm:$0xff]
        %v518 = vld [vmem:[#allocation2 + $0x1a7] sm:$0xff]
        %v519 = vld [vmem:[#allocation2 + $0x1af] sm:$0xff]
        %v520 = vld [vmem:[#allocation2 + $0x1c7] sm:$0xff]
        %v521 = vld [vmem:[#allocation2 + $0x1cf] sm:$0xff]
        %v522 = vld [vmem:[#allocation2 + $0x1e7] sm:$0xff]
        %v523 = vld [vmem:[#allocation2 + $0x1ef] sm:$0xff]
        %v524 = vpack.c.bf16 %v493, %v492
        %v525 = vpack.c.bf16 %v495, %v494
        %v526 = vpack.c.bf16 %v497, %v496
        %v527 = vpack.c.bf16 %v499, %v498
        %v528 = vpack.c.bf16 %v501, %v500
        %v529 = vpack.c.bf16 %v503, %v502
        %v530 = vpack.c.bf16 %v505, %v504
        %v531 = vpack.c.bf16 %v507, %v506
        %v532 = vpack.c.bf16 %v509, %v508
        %v533 = vpack.c.bf16 %v511, %v510
        %v534 = vpack.c.bf16 %v513, %v512
        %v535 = vpack.c.bf16 %v515, %v514
        %v536 = vpack.c.bf16 %v517, %v516
        %v537 = vpack.c.bf16 %v519, %v518
        %v538 = vpack.c.bf16 %v521, %v520
        %v539 = vpack.c.bf16 %v523, %v522
        %v540 = vld [vmem:[%s1] sm:$0xf]
        %v541 = vld [vmem:[%s1 + $0x4] sm:$0xf]
        %v542 = vld [vmem:[%s1 + $0x8] sm:$0xf]
        %v543 = vld [vmem:[%s1 + $0xc] sm:$0xf]
        %v544 = vld [vmem:[%s1 + $0x10] sm:$0xf]
        %v545 = vld [vmem:[%s1 + $0x14] sm:$0xf]
        %v546 = vld [vmem:[%s1 + $0x18] sm:$0xf]
        %v547 = vld [vmem:[%s1 + $0x1c] sm:$0xf]
        %v548 = vld [vmem:[%s1 + $0x20] sm:$0xf]
        %v549 = vld [vmem:[%s1 + $0x24] sm:$0xf]
        %v550 = vld [vmem:[%s1 + $0x28] sm:$0xf]
        %v551 = vld [vmem:[%s1 + $0x2c] sm:$0xf]
        %v552 = vld [vmem:[%s1 + $0x30] sm:$0xf]
        %v553 = vld [vmem:[%s1 + $0x34] sm:$0xf]
        %v554 = vld [vmem:[%s1 + $0x38] sm:$0xf]
        %v555 = vld [vmem:[%s1 + $0x3c] sm:$0xf]
        %v572 = vunpack.c.l.b16 %v540
        %v573 = vunpack.c.l.b16 %v541
        %v574 = vunpack.c.l.b16 %v542
        %v575 = vunpack.c.l.b16 %v543
        %v576 = vunpack.c.l.b16 %v544
        %v577 = vunpack.c.l.b16 %v545
        %v578 = vunpack.c.l.b16 %v546
        %v579 = vunpack.c.l.b16 %v547
        %v580 = vunpack.c.l.b16 %v548
        %v581 = vunpack.c.l.b16 %v549
        %v582 = vunpack.c.l.b16 %v550
        %v583 = vunpack.c.l.b16 %v551
        %v584 = vunpack.c.l.b16 %v552
        %v585 = vunpack.c.l.b16 %v553
        %v586 = vunpack.c.l.b16 %v554
        %v587 = vunpack.c.l.b16 %v555
        %v588 = vpack.c.b16 %v573, %v572
        %v589 = vpack.c.b16 %v575, %v574
        %v590 = vpack.c.b16 %v577, %v576
        %v591 = vpack.c.b16 %v579, %v578
        %v592 = vpack.c.b16 %v581, %v580
        %v593 = vpack.c.b16 %v583, %v582
        %v594 = vpack.c.b16 %v585, %v584
        %v595 = vpack.c.b16 %v587, %v586
        %604 = vmatprep.subr.bf16.mxu0 0
        %605 = vmatpush1.bf16.msra.mxu0 %v588
        %606 = vmatprep.subr.bf16.mxu0 0
        %607 = vmatpush1.bf16.msra.mxu0 %v589
        %608 = vmatprep.subr.bf16.mxu0 0
        %609 = vmatpush1.bf16.msra.mxu0 %v590
        %610 = vmatprep.subr.bf16.mxu0 0
        %611 = vmatpush1.bf16.msra.mxu0 %v591
        %612 = vmatprep.subr.bf16.mxu0 0
        %613 = vmatpush1.bf16.msra.mxu0 %v592
        %614 = vmatprep.subr.bf16.mxu0 0
        %615 = vmatpush1.bf16.msra.mxu0 %v593
        %616 = vmatprep.subr.bf16.mxu0 0
        %617 = vmatpush1.bf16.msra.mxu0 %v594
        %618 = vmatprep.subr.bf16.mxu0 0
        %619 = vmatpush1.bf16.msra.mxu0 %v595
        %620 = vmatprep.subr.bf16.mxu0 0
        %621 = vmatpush1.bf16.msra.mxu0 0
        %622 = vmatprep.subr.bf16.mxu0 0
        %623 = vmatpush1.bf16.msra.mxu0 0
        %624 = vmatprep.subr.bf16.mxu0 0
        %625 = vmatpush1.bf16.msra.mxu0 0
        %626 = vmatprep.subr.bf16.mxu0 0
        %627 = vmatpush1.bf16.msra.mxu0 0
        %628 = vmatprep.subr.bf16.mxu0 0
        %629 = vmatpush1.bf16.msra.mxu0 0
        %630 = vmatprep.subr.bf16.mxu0 0
        %631 = vmatpush1.bf16.msra.mxu0 0
        %632 = vmatprep.subr.bf16.mxu0 0
        %633 = vmatpush1.bf16.msra.mxu0 0
        %634 = vmatprep.subr.bf16.mxu0 0
        %635 = vmatpush1.bf16.msra.mxu0 0
        %636 = vmatprep.mubr.bf16.mxu0 0
        %637 = vmatmul.mubr.bf16.gmra.mrb[0].mxu0 %v524
        %v638 = vpop.f32.mrb[0].mxu0
        %v639 = vadd.f32 0.0, %v638
        %v640 = vpop.f32.mrb[0].mxu0
        %v641 = vpop.f32.mrb[0].mxu0
        %v642 = vadd.f32 0.0, %v641
        %v643 = vpop.f32.mrb[0].mxu0
        %644 = vmatprep.mubr.bf16.mxu0 0
        %645 = vmatmul.mubr.bf16.gmra.mrb[0].mxu0 %v525
        %v646 = vpop.f32.mrb[0].mxu0
        %v647 = vadd.f32 0.0, %v646
        %v648 = vpop.f32.mrb[0].mxu0
        %v649 = vpop.f32.mrb[0].mxu0
        %v650 = vadd.f32 0.0, %v649
        %v651 = vpop.f32.mrb[0].mxu0
        %652 = vmatprep.mubr.bf16.mxu0 0
        %653 = vmatmul.mubr.bf16.gmra.mrb[0].mxu0 %v526
        %v654 = vpop.f32.mrb[0].mxu0
        %v655 = vadd.f32 0.0, %v654
        %v656 = vpop.f32.mrb[0].mxu0
        %v657 = vpop.f32.mrb[0].mxu0
        %v658 = vadd.f32 0.0, %v657
        %v659 = vpop.f32.mrb[0].mxu0
        %660 = vmatprep.mubr.bf16.mxu0 0
        %661 = vmatmul.mubr.bf16.gmra.mrb[0].mxu0 %v527
        %v662 = vpop.f32.mrb[0].mxu0
        %v663 = vadd.f32 0.0, %v662
        %v664 = vpop.f32.mrb[0].mxu0
        %v665 = vpop.f32.mrb[0].mxu0
        %v666 = vadd.f32 0.0, %v665
        %v667 = vpop.f32.mrb[0].mxu0
        %668 = vmatprep.mubr.bf16.mxu0 0
        %669 = vmatmul.mubr.bf16.gmra.mrb[0].mxu0 %v528
        %v670 = vpop.f32.mrb[0].mxu0
        %v671 = vadd.f32 0.0, %v670
        %v672 = vpop.f32.mrb[0].mxu0
        %v673 = vpop.f32.mrb[0].mxu0
        %v674 = vadd.f32 0.0, %v673
        %v675 = vpop.f32.mrb[0].mxu0
        %676 = vmatprep.mubr.bf16.mxu0 0
        %677 = vmatmul.mubr.bf16.gmra.mrb[0].mxu0 %v529
        %v678 = vpop.f32.mrb[0].mxu0
        %v679 = vadd.f32 0.0, %v678
        %v680 = vpop.f32.mrb[0].mxu0
        %v681 = vpop.f32.mrb[0].mxu0
        %v682 = vadd.f32 0.0, %v681
        %v683 = vpop.f32.mrb[0].mxu0
        %684 = vmatprep.mubr.bf16.mxu0 0
        %685 = vmatmul.mubr.bf16.gmra.mrb[0].mxu0 %v530
        %v686 = vpop.f32.mrb[0].mxu0
        %v687 = vadd.f32 0.0, %v686
        %v688 = vpop.f32.mrb[0].mxu0
        %v689 = vpop.f32.mrb[0].mxu0
        %v690 = vadd.f32 0.0, %v689
        %v691 = vpop.f32.mrb[0].mxu0
        %692 = vmatprep.mubr.bf16.mxu0 0
        %693 = vmatmul.mubr.bf16.gmra.mrb[0].mxu0 %v531
        %v694 = vpop.f32.mrb[0].mxu0
        %v695 = vadd.f32 0.0, %v694
        %v696 = vpop.f32.mrb[0].mxu0
        %v697 = vpop.f32.mrb[0].mxu0
        %v698 = vadd.f32 0.0, %v697
        %v699 = vpop.f32.mrb[0].mxu0
        %700 = vmatprep.mubr.bf16.mxu0 0
        %701 = vmatmul.mubr.bf16.gmra.mrb[0].mxu0 %v532
        %v702 = vpop.f32.mrb[0].mxu0
        %v703 = vadd.f32 0.0, %v702
        %v704 = vpop.f32.mrb[0].mxu0
        %v705 = vpop.f32.mrb[0].mxu0
        %v706 = vadd.f32 0.0, %v705
        %v707 = vpop.f32.mrb[0].mxu0
        %708 = vmatprep.mubr.bf16.mxu0 0
        %709 = vmatmul.mubr.bf16.gmra.mrb[0].mxu0 %v533
        %v710 = vpop.f32.mrb[0].mxu0
        %v711 = vadd.f32 0.0, %v710
        %v712 = vpop.f32.mrb[0].mxu0
        %v713 = vpop.f32.mrb[0].mxu0
        %v714 = vadd.f32 0.0, %v713
        %v715 = vpop.f32.mrb[0].mxu0
        %716 = vmatprep.mubr.bf16.mxu0 0
        %717 = vmatmul.mubr.bf16.gmra.mrb[0].mxu0 %v534
        %v718 = vpop.f32.mrb[0].mxu0
        %v719 = vadd.f32 0.0, %v718
        %v720 = vpop.f32.mrb[0].mxu0
        %v721 = vpop.f32.mrb[0].mxu0
        %v722 = vadd.f32 0.0, %v721
        %v723 = vpop.f32.mrb[0].mxu0
        %724 = vmatprep.mubr.bf16.mxu0 0
        %725 = vmatmul.mubr.bf16.gmra.mrb[0].mxu0 %v535
        %v726 = vpop.f32.mrb[0].mxu0
        %v727 = vadd.f32 0.0, %v726
        %v728 = vpop.f32.mrb[0].mxu0
        %v729 = vpop.f32.mrb[0].mxu0
        %v730 = vadd.f32 0.0, %v729
        %v731 = vpop.f32.mrb[0].mxu0
        %732 = vmatprep.mubr.bf16.mxu0 0
        %733 = vmatmul.mubr.bf16.gmra.mrb[0].mxu0 %v536
        %v734 = vpop.f32.mrb[0].mxu0
        %v735 = vadd.f32 0.0, %v734
        %v736 = vpop.f32.mrb[0].mxu0
        %v737 = vpop.f32.mrb[0].mxu0
        %v738 = vadd.f32 0.0, %v737
        %v739 = vpop.f32.mrb[0].mxu0
        %740 = vmatprep.mubr.bf16.mxu0 0
        %741 = vmatmul.mubr.bf16.gmra.mrb[0].mxu0 %v537
        %v742 = vpop.f32.mrb[0].mxu0
        %v743 = vadd.f32 0.0, %v742
        %v744 = vpop.f32.mrb[0].mxu0
        %v745 = vpop.f32.mrb[0].mxu0
        %v746 = vadd.f32 0.0, %v745
        %v747 = vpop.f32.mrb[0].mxu0
        %748 = vmatprep.mubr.bf16.mxu0 0
        %749 = vmatmul.mubr.bf16.gmra.mrb[0].mxu0 %v538
        %v750 = vpop.f32.mrb[0].mxu0
        %v751 = vadd.f32 0.0, %v750
        %v752 = vpop.f32.mrb[0].mxu0
        %v753 = vpop.f32.mrb[0].mxu0
        %v754 = vadd.f32 0.0, %v753
        %v755 = vpop.f32.mrb[0].mxu0
        %756 = vmatprep.mubr.bf16.mxu0 0
        %757 = vmatmul.mubr.bf16.gmra.mrb[0].mxu0 %v539
        %v758 = vpop.f32.mrb[0].mxu0
        %v759 = vadd.f32 0.0, %v758
        %v760 = vpop.f32.mrb[0].mxu0
        %v761 = vpop.f32.mrb[0].mxu0
        %v762 = vadd.f32 0.0, %v761
        %v763 = vpop.f32.mrb[0].mxu0
        %764 = vdwg.mxu0
        %v765 = vadd.f32 %v491, %v639
        %v766 = vadd.f32 %v491, %v642
        %v767 = vadd.f32 %v491, %v647
        %v768 = vadd.f32 %v491, %v650
        %v769 = vadd.f32 %v491, %v655
        %v770 = vadd.f32 %v491, %v658
        %v771 = vadd.f32 %v491, %v663
        %v772 = vadd.f32 %v491, %v666
        %v773 = vadd.f32 %v491, %v671
        %v774 = vadd.f32 %v491, %v674
        %v775 = vadd.f32 %v491, %v679
        %v776 = vadd.f32 %v491, %v682
        %v777 = vadd.f32 %v491, %v687
        %v778 = vadd.f32 %v491, %v690
        %v779 = vadd.f32 %v491, %v695
        %v780 = vadd.f32 %v491, %v698
        %v781 = vadd.f32 %v491, %v703
        %v782 = vadd.f32 %v491, %v706
        %v783 = vadd.f32 %v491, %v711
        %v784 = vadd.f32 %v491, %v714
        %v785 = vadd.f32 %v491, %v719
        %v786 = vadd.f32 %v491, %v722
        %v787 = vadd.f32 %v491, %v727
        %v788 = vadd.f32 %v491, %v730
        %v789 = vadd.f32 %v491, %v735
        %v790 = vadd.f32 %v491, %v738
        %v791 = vadd.f32 %v491, %v743
        %v792 = vadd.f32 %v491, %v746
        %v793 = vadd.f32 %v491, %v751
        %v794 = vadd.f32 %v491, %v754
        %v795 = vadd.f32 %v491, %v759
        %v796 = vadd.f32 %v491, %v762
        %v797 = vld [vmem:[#allocation2 + $0x8] sm:$0xff]
        %v798 = vld [vmem:[#allocation2 + $0x10] sm:$0xff]
        %v799 = vld [vmem:[#allocation2 + $0x28] sm:$0xff]
        %v800 = vld [vmem:[#allocation2 + $0x30] sm:$0xff]
        %v801 = vld [vmem:[#allocation2 + $0x48] sm:$0xff]
        %v802 = vld [vmem:[#allocation2 + $0x50] sm:$0xff]
        %v803 = vld [vmem:[#allocation2 + $0x68] sm:$0xff]
        %v804 = vld [vmem:[#allocation2 + $0x70] sm:$0xff]
        %v805 = vld [vmem:[#allocation2 + $0x88] sm:$0xff]
        %v806 = vld [vmem:[#allocation2 + $0x90] sm:$0xff]
        %v807 = vld [vmem:[#allocation2 + $0xa8] sm:$0xff]
        %v808 = vld [vmem:[#allocation2 + $0xb0] sm:$0xff]
        %v809 = vld [vmem:[#allocation2 + $0xc8] sm:$0xff]
        %v810 = vld [vmem:[#allocation2 + $0xd0] sm:$0xff]
        %v811 = vld [vmem:[#allocation2 + $0xe8] sm:$0xff]
        %v812 = vld [vmem:[#allocation2 + $0xf0] sm:$0xff]
        %v813 = vld [vmem:[#allocation2 + $0x108] sm:$0xff]
        %v814 = vld [vmem:[#allocation2 + $0x110] sm:$0xff]
        %v815 = vld [vmem:[#allocation2 + $0x128] sm:$0xff]
        %v816 = vld [vmem:[#allocation2 + $0x130] sm:$0xff]
        %v817 = vld [vmem:[#allocation2 + $0x148] sm:$0xff]
        %v818 = vld [vmem:[#allocation2 + $0x150] sm:$0xff]
        %v819 = vld [vmem:[#allocation2 + $0x168] sm:$0xff]
        %v820 = vld [vmem:[#allocation2 + $0x170] sm:$0xff]
        %v821 = vld [vmem:[#allocation2 + $0x188] sm:$0xff]
        %v822 = vld [vmem:[#allocation2 + $0x190] sm:$0xff]
        %v823 = vld [vmem:[#allocation2 + $0x1a8] sm:$0xff]
        %v824 = vld [vmem:[#allocation2 + $0x1b0] sm:$0xff]
        %v825 = vld [vmem:[#allocation2 + $0x1c8] sm:$0xff]
        %v826 = vld [vmem:[#allocation2 + $0x1d0] sm:$0xff]
        %v827 = vld [vmem:[#allocation2 + $0x1e8] sm:$0xff]
        %v828 = vld [vmem:[#allocation2 + $0x1f0] sm:$0xff]
        %v829 = vpack.c.bf16 %v798, %v797
        %v830 = vpack.c.bf16 %v800, %v799
        %v831 = vpack.c.bf16 %v802, %v801
        %v832 = vpack.c.bf16 %v804, %v803
        %v833 = vpack.c.bf16 %v806, %v805
        %v834 = vpack.c.bf16 %v808, %v807
        %v835 = vpack.c.bf16 %v810, %v809
        %v836 = vpack.c.bf16 %v812, %v811
        %v837 = vpack.c.bf16 %v814, %v813
        %v838 = vpack.c.bf16 %v816, %v815
        %v839 = vpack.c.bf16 %v818, %v817
        %v840 = vpack.c.bf16 %v820, %v819
        %v841 = vpack.c.bf16 %v822, %v821
        %v842 = vpack.c.bf16 %v824, %v823
        %v843 = vpack.c.bf16 %v826, %v825
        %v844 = vpack.c.bf16 %v828, %v827
        %s845 = scalar_lea.vmem %s1, 64
        %v846 = vld [vmem:[%s845] sm:$0xf]
        %v847 = vld [vmem:[%s845 + $0x4] sm:$0xf]
        %v848 = vld [vmem:[%s845 + $0x8] sm:$0xf]
        %v849 = vld [vmem:[%s845 + $0xc] sm:$0xf]
        %v850 = vld [vmem:[%s845 + $0x10] sm:$0xf]
        %v851 = vld [vmem:[%s845 + $0x14] sm:$0xf]
        %v852 = vld [vmem:[%s845 + $0x18] sm:$0xf]
        %v853 = vld [vmem:[%s845 + $0x1c] sm:$0xf]
        %v854 = vld [vmem:[%s845 + $0x20] sm:$0xf]
        %v855 = vld [vmem:[%s845 + $0x24] sm:$0xf]
        %v856 = vld [vmem:[%s845 + $0x28] sm:$0xf]
        %v857 = vld [vmem:[%s845 + $0x2c] sm:$0xf]
        %v858 = vld [vmem:[%s845 + $0x30] sm:$0xf]
        %v859 = vld [vmem:[%s845 + $0x34] sm:$0xf]
        %v860 = vld [vmem:[%s845 + $0x38] sm:$0xf]
        %v861 = vld [vmem:[%s845 + $0x3c] sm:$0xf]
        %v878 = vunpack.c.l.b16 %v846
        %v879 = vunpack.c.l.b16 %v847
        %v880 = vunpack.c.l.b16 %v848
        %v881 = vunpack.c.l.b16 %v849
        %v882 = vunpack.c.l.b16 %v850
        %v883 = vunpack.c.l.b16 %v851
        %v884 = vunpack.c.l.b16 %v852
        %v885 = vunpack.c.l.b16 %v853
        %v886 = vunpack.c.l.b16 %v854
        %v887 = vunpack.c.l.b16 %v855
        %v888 = vunpack.c.l.b16 %v856
        %v889 = vunpack.c.l.b16 %v857
        %v890 = vunpack.c.l.b16 %v858
        %v891 = vunpack.c.l.b16 %v859
        %v892 = vunpack.c.l.b16 %v860
        %v893 = vunpack.c.l.b16 %v861
        %v894 = vpack.c.b16 %v879, %v878
        %v895 = vpack.c.b16 %v881, %v880
        %v896 = vpack.c.b16 %v883, %v882
        %v897 = vpack.c.b16 %v885, %v884
        %v898 = vpack.c.b16 %v887, %v886
        %v899 = vpack.c.b16 %v889, %v888
        %v900 = vpack.c.b16 %v891, %v890
        %v901 = vpack.c.b16 %v893, %v892
        %910 = vmatprep.subr.bf16.mxu0 0
        %911 = vmatpush1.bf16.msra.mxu0 %v894
        %912 = vmatprep.subr.bf16.mxu0 0
        %913 = vmatpush1.bf16.msra.mxu0 %v895
        %914 = vmatprep.subr.bf16.mxu0 0
        %915 = vmatpush1.bf16.msra.mxu0 %v896
        %916 = vmatprep.subr.bf16.mxu0 0
        %917 = vmatpush1.bf16.msra.mxu0 %v897
        %918 = vmatprep.subr.bf16.mxu0 0
        %919 = vmatpush1.bf16.msra.mxu0 %v898
        %920 = vmatprep.subr.bf16.mxu0 0
        %921 = vmatpush1.bf16.msra.mxu0 %v899
        %922 = vmatprep.subr.bf16.mxu0 0
        %923 = vmatpush1.bf16.msra.mxu0 %v900
        %924 = vmatprep.subr.bf16.mxu0 0
        %925 = vmatpush1.bf16.msra.mxu0 %v901
        %926 = vmatprep.subr.bf16.mxu0 0
        %927 = vmatpush1.bf16.msra.mxu0 0
        %928 = vmatprep.subr.bf16.mxu0 0
        %929 = vmatpush1.bf16.msra.mxu0 0
        %930 = vmatprep.subr.bf16.mxu0 0
        %931 = vmatpush1.bf16.msra.mxu0 0
        %932 = vmatprep.subr.bf16.mxu0 0
        %933 = vmatpush1.bf16.msra.mxu0 0
        %934 = vmatprep.subr.bf16.mxu0 0
        %935 = vmatpush1.bf16.msra.mxu0 0
        %936 = vmatprep.subr.bf16.mxu0 0
        %937 = vmatpush1.bf16.msra.mxu0 0
        %938 = vmatprep.subr.bf16.mxu0 0
        %939 = vmatpush1.bf16.msra.mxu0 0
        %940 = vmatprep.subr.bf16.mxu0 0
        %941 = vmatpush1.bf16.msra.mxu0 0
        %942 = vmatprep.mubr.bf16.mxu0 0
        %943 = vmatmul.mubr.bf16.gmra.mrb[0].mxu0 %v829
        %v944 = vpop.f32.mrb[0].mxu0
        %v945 = vadd.f32 0.0, %v944
        %v946 = vpop.f32.mrb[0].mxu0
        %v947 = vpop.f32.mrb[0].mxu0
        %v948 = vadd.f32 0.0, %v947
        %v949 = vpop.f32.mrb[0].mxu0
        %950 = vmatprep.mubr.bf16.mxu0 0
        %951 = vmatmul.mubr.bf16.gmra.mrb[0].mxu0 %v830
        %v952 = vpop.f32.mrb[0].mxu0
        %v953 = vadd.f32 0.0, %v952
        %v954 = vpop.f32.mrb[0].mxu0
        %v955 = vpop.f32.mrb[0].mxu0
        %v956 = vadd.f32 0.0, %v955
        %v957 = vpop.f32.mrb[0].mxu0
        %958 = vmatprep.mubr.bf16.mxu0 0
        %959 = vmatmul.mubr.bf16.gmra.mrb[0].mxu0 %v831
        %v960 = vpop.f32.mrb[0].mxu0
        %v961 = vadd.f32 0.0, %v960
        %v962 = vpop.f32.mrb[0].mxu0
        %v963 = vpop.f32.mrb[0].mxu0
        %v964 = vadd.f32 0.0, %v963
        %v965 = vpop.f32.mrb[0].mxu0
        %966 = vmatprep.mubr.bf16.mxu0 0
        %967 = vmatmul.mubr.bf16.gmra.mrb[0].mxu0 %v832
        %v968 = vpop.f32.mrb[0].mxu0
        %v969 = vadd.f32 0.0, %v968
        %v970 = vpop.f32.mrb[0].mxu0
        %v971 = vpop.f32.mrb[0].mxu0
        %v972 = vadd.f32 0.0, %v971
        %v973 = vpop.f32.mrb[0].mxu0
        %974 = vmatprep.mubr.bf16.mxu0 0
        %975 = vmatmul.mubr.bf16.gmra.mrb[0].mxu0 %v833
        %v976 = vpop.f32.mrb[0].mxu0
        %v977 = vadd.f32 0.0, %v976
        %v978 = vpop.f32.mrb[0].mxu0
        %v979 = vpop.f32.mrb[0].mxu0
        %v980 = vadd.f32 0.0, %v979
        %v981 = vpop.f32.mrb[0].mxu0
        %982 = vmatprep.mubr.bf16.mxu0 0
        %983 = vmatmul.mubr.bf16.gmra.mrb[0].mxu0 %v834
        %v984 = vpop.f32.mrb[0].mxu0
        %v985 = vadd.f32 0.0, %v984
        %v986 = vpop.f32.mrb[0].mxu0
        %v987 = vpop.f32.mrb[0].mxu0
        %v988 = vadd.f32 0.0, %v987
        %v989 = vpop.f32.mrb[0].mxu0
        %990 = vmatprep.mubr.bf16.mxu0 0
        %991 = vmatmul.mubr.bf16.gmra.mrb[0].mxu0 %v835
        %v992 = vpop.f32.mrb[0].mxu0
        %v993 = vadd.f32 0.0, %v992
        %v994 = vpop.f32.mrb[0].mxu0
        %v995 = vpop.f32.mrb[0].mxu0
        %v996 = vadd.f32 0.0, %v995
        %v997 = vpop.f32.mrb[0].mxu0
        %998 = vmatprep.mubr.bf16.mxu0 0
        %999 = vmatmul.mubr.bf16.gmra.mrb[0].mxu0 %v836
        %v1000 = vpop.f32.mrb[0].mxu0
        %v1001 = vadd.f32 0.0, %v1000
        %v1002 = vpop.f32.mrb[0].mxu0
        %v1003 = vpop.f32.mrb[0].mxu0
        %v1004 = vadd.f32 0.0, %v1003
        %v1005 = vpop.f32.mrb[0].mxu0
        %1006 = vmatprep.mubr.bf16.mxu0 0
        %1007 = vmatmul.mubr.bf16.gmra.mrb[0].mxu0 %v837
        %v1008 = vpop.f32.mrb[0].mxu0
        %v1009 = vadd.f32 0.0, %v1008
        %v1010 = vpop.f32.mrb[0].mxu0
        %v1011 = vpop.f32.mrb[0].mxu0
        %v1012 = vadd.f32 0.0, %v1011
        %v1013 = vpop.f32.mrb[0].mxu0
        %1014 = vmatprep.mubr.bf16.mxu0 0
        %1015 = vmatmul.mubr.bf16.gmra.mrb[0].mxu0 %v838
        %v1016 = vpop.f32.mrb[0].mxu0
        %v1017 = vadd.f32 0.0, %v1016
        %v1018 = vpop.f32.mrb[0].mxu0
        %v1019 = vpop.f32.mrb[0].mxu0
        %v1020 = vadd.f32 0.0, %v1019
        %v1021 = vpop.f32.mrb[0].mxu0
        %1022 = vmatprep.mubr.bf16.mxu0 0
        %1023 = vmatmul.mubr.bf16.gmra.mrb[0].mxu0 %v839
        %v1024 = vpop.f32.mrb[0].mxu0
        %v1025 = vadd.f32 0.0, %v1024
        %v1026 = vpop.f32.mrb[0].mxu0
        %v1027 = vpop.f32.mrb[0].mxu0
        %v1028 = vadd.f32 0.0, %v1027
        %v1029 = vpop.f32.mrb[0].mxu0
        %1030 = vmatprep.mubr.bf16.mxu0 0
        %1031 = vmatmul.mubr.bf16.gmra.mrb[0].mxu0 %v840
        %v1032 = vpop.f32.mrb[0].mxu0
        %v1033 = vadd.f32 0.0, %v1032
        %v1034 = vpop.f32.mrb[0].mxu0
        %v1035 = vpop.f32.mrb[0].mxu0
        %v1036 = vadd.f32 0.0, %v1035
        %v1037 = vpop.f32.mrb[0].mxu0
        %1038 = vmatprep.mubr.bf16.mxu0 0
        %1039 = vmatmul.mubr.bf16.gmra.mrb[0].mxu0 %v841
        %v1040 = vpop.f32.mrb[0].mxu0
        %v1041 = vadd.f32 0.0, %v1040
        %v1042 = vpop.f32.mrb[0].mxu0
        %v1043 = vpop.f32.mrb[0].mxu0
        %v1044 = vadd.f32 0.0, %v1043
        %v1045 = vpop.f32.mrb[0].mxu0
        %1046 = vmatprep.mubr.bf16.mxu0 0
        %1047 = vmatmul.mubr.bf16.gmra.mrb[0].mxu0 %v842
        %v1048 = vpop.f32.mrb[0].mxu0
        %v1049 = vadd.f32 0.0, %v1048
        %v1050 = vpop.f32.mrb[0].mxu0
        %v1051 = vpop.f32.mrb[0].mxu0
        %v1052 = vadd.f32 0.0, %v1051
        %v1053 = vpop.f32.mrb[0].mxu0
        %1054 = vmatprep.mubr.bf16.mxu0 0
        %1055 = vmatmul.mubr.bf16.gmra.mrb[0].mxu0 %v843
        %v1056 = vpop.f32.mrb[0].mxu0
        %v1057 = vadd.f32 0.0, %v1056
        %v1058 = vpop.f32.mrb[0].mxu0
        %v1059 = vpop.f32.mrb[0].mxu0
        %v1060 = vadd.f32 0.0, %v1059
        %v1061 = vpop.f32.mrb[0].mxu0
        %1062 = vmatprep.mubr.bf16.mxu0 0
        %1063 = vmatmul.mubr.bf16.gmra.mrb[0].mxu0 %v844
        %v1064 = vpop.f32.mrb[0].mxu0
        %v1065 = vadd.f32 0.0, %v1064
        %v1066 = vpop.f32.mrb[0].mxu0
        %v1067 = vpop.f32.mrb[0].mxu0
        %v1068 = vadd.f32 0.0, %v1067
        %v1069 = vpop.f32.mrb[0].mxu0
        %1070 = vdwg.mxu0
        %v1071 = vadd.f32 %v765, %v945
        %v1072 = vadd.f32 %v766, %v948
        %v1073 = vadd.f32 %v767, %v953
        %v1074 = vadd.f32 %v768, %v956
        %v1075 = vadd.f32 %v769, %v961
        %v1076 = vadd.f32 %v770, %v964
        %v1077 = vadd.f32 %v771, %v969
        %v1078 = vadd.f32 %v772, %v972
        %v1079 = vadd.f32 %v773, %v977
        %v1080 = vadd.f32 %v774, %v980
        %v1081 = vadd.f32 %v775, %v985
        %v1082 = vadd.f32 %v776, %v988
        %v1083 = vadd.f32 %v777, %v993
        %v1084 = vadd.f32 %v778, %v996
        %v1085 = vadd.f32 %v779, %v1001
        %v1086 = vadd.f32 %v780, %v1004
        %v1087 = vadd.f32 %v781, %v1009
        %v1088 = vadd.f32 %v782, %v1012
        %v1089 = vadd.f32 %v783, %v1017
        %v1090 = vadd.f32 %v784, %v1020
        %v1091 = vadd.f32 %v785, %v1025
        %v1092 = vadd.f32 %v786, %v1028
        %v1093 = vadd.f32 %v787, %v1033
        %v1094 = vadd.f32 %v788, %v1036
        %v1095 = vadd.f32 %v789, %v1041
        %v1096 = vadd.f32 %v790, %v1044
        %v1097 = vadd.f32 %v791, %v1049
        %v1098 = vadd.f32 %v792, %v1052
        %v1099 = vadd.f32 %v793, %v1057
        %v1100 = vadd.f32 %v794, %v1060
        %v1101 = vadd.f32 %v795, %v1065
        %v1102 = vadd.f32 %v796, %v1068
        %v1103 = vld [vmem:[#allocation2 + $0x9] sm:$0xff]
        %v1104 = vld [vmem:[#allocation2 + $0x11] sm:$0xff]
        %v1105 = vld [vmem:[#allocation2 + $0x29] sm:$0xff]
        %v1106 = vld [vmem:[#allocation2 + $0x31] sm:$0xff]
        %v1107 = vld [vmem:[#allocation2 + $0x49] sm:$0xff]
        %v1108 = vld [vmem:[#allocation2 + $0x51] sm:$0xff]
        %v1109 = vld [vmem:[#allocation2 + $0x69] sm:$0xff]
        %v1110 = vld [vmem:[#allocation2 + $0x71] sm:$0xff]
        %v1111 = vld [vmem:[#allocation2 + $0x89] sm:$0xff]
        %v1112 = vld [vmem:[#allocation2 + $0x91] sm:$0xff]
        %v1113 = vld [vmem:[#allocation2 + $0xa9] sm:$0xff]
        %v1114 = vld [vmem:[#allocation2 + $0xb1] sm:$0xff]
        %v1115 = vld [vmem:[#allocation2 + $0xc9] sm:$0xff]
        %v1116 = vld [vmem:[#allocation2 + $0xd1] sm:$0xff]
        %v1117 = vld [vmem:[#allocation2 + $0xe9] sm:$0xff]
        %v1118 = vld [vmem:[#allocation2 + $0xf1] sm:$0xff]
        %v1119 = vld [vmem:[#allocation2 + $0x109] sm:$0xff]
        %v1120 = vld [vmem:[#allocation2 + $0x111] sm:$0xff]
        %v1121 = vld [vmem:[#allocation2 + $0x129] sm:$0xff]
        %v1122 = vld [vmem:[#allocation2 + $0x131] sm:$0xff]
        %v1123 = vld [vmem:[#allocation2 + $0x149] sm:$0xff]
        %v1124 = vld [vmem:[#allocation2 + $0x151] sm:$0xff]
        %v1125 = vld [vmem:[#allocation2 + $0x169] sm:$0xff]
        %v1126 = vld [vmem:[#allocation2 + $0x171] sm:$0xff]
        %v1127 = vld [vmem:[#allocation2 + $0x189] sm:$0xff]
        %v1128 = vld [vmem:[#allocation2 + $0x191] sm:$0xff]
        %v1129 = vld [vmem:[#allocation2 + $0x1a9] sm:$0xff]
        %v1130 = vld [vmem:[#allocation2 + $0x1b1] sm:$0xff]
        %v1131 = vld [vmem:[#allocation2 + $0x1c9] sm:$0xff]
        %v1132 = vld [vmem:[#allocation2 + $0x1d1] sm:$0xff]
        %v1133 = vld [vmem:[#allocation2 + $0x1e9] sm:$0xff]
        %v1134 = vld [vmem:[#allocation2 + $0x1f1] sm:$0xff]
        %v1135 = vpack.c.bf16 %v1104, %v1103
        %v1136 = vpack.c.bf16 %v1106, %v1105
        %v1137 = vpack.c.bf16 %v1108, %v1107
        %v1138 = vpack.c.bf16 %v1110, %v1109
        %v1139 = vpack.c.bf16 %v1112, %v1111
        %v1140 = vpack.c.bf16 %v1114, %v1113
        %v1141 = vpack.c.bf16 %v1116, %v1115
        %v1142 = vpack.c.bf16 %v1118, %v1117
        %v1143 = vpack.c.bf16 %v1120, %v1119
        %v1144 = vpack.c.bf16 %v1122, %v1121
        %v1145 = vpack.c.bf16 %v1124, %v1123
        %v1146 = vpack.c.bf16 %v1126, %v1125
        %v1147 = vpack.c.bf16 %v1128, %v1127
        %v1148 = vpack.c.bf16 %v1130, %v1129
        %v1149 = vpack.c.bf16 %v1132, %v1131
        %v1150 = vpack.c.bf16 %v1134, %v1133
        %s1151 = scalar_lea.vmem %s1, 128
        %v1152 = vld [vmem:[%s1151] sm:$0xf]
        %v1153 = vld [vmem:[%s1151 + $0x4] sm:$0xf]
        %v1154 = vld [vmem:[%s1151 + $0x8] sm:$0xf]
        %v1155 = vld [vmem:[%s1151 + $0xc] sm:$0xf]
        %v1156 = vld [vmem:[%s1151 + $0x10] sm:$0xf]
        %v1157 = vld [vmem:[%s1151 + $0x14] sm:$0xf]
        %v1158 = vld [vmem:[%s1151 + $0x18] sm:$0xf]
        %v1159 = vld [vmem:[%s1151 + $0x1c] sm:$0xf]
        %v1160 = vld [vmem:[%s1151 + $0x20] sm:$0xf]
        %v1161 = vld [vmem:[%s1151 + $0x24] sm:$0xf]
        %v1162 = vld [vmem:[%s1151 + $0x28] sm:$0xf]
        %v1163 = vld [vmem:[%s1151 + $0x2c] sm:$0xf]
        %v1164 = vld [vmem:[%s1151 + $0x30] sm:$0xf]
        %v1165 = vld [vmem:[%s1151 + $0x34] sm:$0xf]
        %v1166 = vld [vmem:[%s1151 + $0x38] sm:$0xf]
        %v1167 = vld [vmem:[%s1151 + $0x3c] sm:$0xf]
        %v1184 = vunpack.c.l.b16 %v1152
        %v1185 = vunpack.c.l.b16 %v1153
        %v1186 = vunpack.c.l.b16 %v1154
        %v1187 = vunpack.c.l.b16 %v1155
        %v1188 = vunpack.c.l.b16 %v1156
        %v1189 = vunpack.c.l.b16 %v1157
        %v1190 = vunpack.c.l.b16 %v1158
        %v1191 = vunpack.c.l.b16 %v1159
        %v1192 = vunpack.c.l.b16 %v1160
        %v1193 = vunpack.c.l.b16 %v1161
        %v1194 = vunpack.c.l.b16 %v1162
        %v1195 = vunpack.c.l.b16 %v1163
        %v1196 = vunpack.c.l.b16 %v1164
        %v1197 = vunpack.c.l.b16 %v1165
        %v1198 = vunpack.c.l.b16 %v1166
        %v1199 = vunpack.c.l.b16 %v1167
        %v1200 = vpack.c.b16 %v1185, %v1184
        %v1201 = vpack.c.b16 %v1187, %v1186
        %v1202 = vpack.c.b16 %v1189, %v1188
        %v1203 = vpack.c.b16 %v1191, %v1190
        %v1204 = vpack.c.b16 %v1193, %v1192
        %v1205 = vpack.c.b16 %v1195, %v1194
        %v1206 = vpack.c.b16 %v1197, %v1196
        %v1207 = vpack.c.b16 %v1199, %v1198
        %1216 = vmatprep.subr.bf16.mxu0 0
        %1217 = vmatpush1.bf16.msra.mxu0 %v1200
        %1218 = vmatprep.subr.bf16.mxu0 0
        %1219 = vmatpush1.bf16.msra.mxu0 %v1201
        %1220 = vmatprep.subr.bf16.mxu0 0
        %1221 = vmatpush1.bf16.msra.mxu0 %v1202
        %1222 = vmatprep.subr.bf16.mxu0 0
        %1223 = vmatpush1.bf16.msra.mxu0 %v1203
        %1224 = vmatprep.subr.bf16.mxu0 0
        %1225 = vmatpush1.bf16.msra.mxu0 %v1204
        %1226 = vmatprep.subr.bf16.mxu0 0
        %1227 = vmatpush1.bf16.msra.mxu0 %v1205
        %1228 = vmatprep.subr.bf16.mxu0 0
        %1229 = vmatpush1.bf16.msra.mxu0 %v1206
        %1230 = vmatprep.subr.bf16.mxu0 0
        %1231 = vmatpush1.bf16.msra.mxu0 %v1207
        %1232 = vmatprep.subr.bf16.mxu0 0
        %1233 = vmatpush1.bf16.msra.mxu0 0
        %1234 = vmatprep.subr.bf16.mxu0 0
        %1235 = vmatpush1.bf16.msra.mxu0 0
        %1236 = vmatprep.subr.bf16.mxu0 0
        %1237 = vmatpush1.bf16.msra.mxu0 0
        %1238 = vmatprep.subr.bf16.mxu0 0
        %1239 = vmatpush1.bf16.msra.mxu0 0
        %1240 = vmatprep.subr.bf16.mxu0 0
        %1241 = vmatpush1.bf16.msra.mxu0 0
        %1242 = vmatprep.subr.bf16.mxu0 0
        %1243 = vmatpush1.bf16.msra.mxu0 0
        %1244 = vmatprep.subr.bf16.mxu0 0
        %1245 = vmatpush1.bf16.msra.mxu0 0
        %1246 = vmatprep.subr.bf16.mxu0 0
        %1247 = vmatpush1.bf16.msra.mxu0 0
        %1248 = vmatprep.mubr.bf16.mxu0 0
        %1249 = vmatmul.mubr.bf16.gmra.mrb[0].mxu0 %v1135
        %v1250 = vpop.f32.mrb[0].mxu0
        %v1251 = vadd.f32 0.0, %v1250
        %v1252 = vpop.f32.mrb[0].mxu0
        %v1253 = vpop.f32.mrb[0].mxu0
        %v1254 = vadd.f32 0.0, %v1253
        %v1255 = vpop.f32.mrb[0].mxu0
        %1256 = vmatprep.mubr.bf16.mxu0 0
        %1257 = vmatmul.mubr.bf16.gmra.mrb[0].mxu0 %v1136
        %v1258 = vpop.f32.mrb[0].mxu0
        %v1259 = vadd.f32 0.0, %v1258
        %v1260 = vpop.f32.mrb[0].mxu0
        %v1261 = vpop.f32.mrb[0].mxu0
        %v1262 = vadd.f32 0.0, %v1261
        %v1263 = vpop.f32.mrb[0].mxu0
        %1264 = vmatprep.mubr.bf16.mxu0 0
        %1265 = vmatmul.mubr.bf16.gmra.mrb[0].mxu0 %v1137
        %v1266 = vpop.f32.mrb[0].mxu0
        %v1267 = vadd.f32 0.0, %v1266
        %v1268 = vpop.f32.mrb[0].mxu0
        %v1269 = vpop.f32.mrb[0].mxu0
        %v1270 = vadd.f32 0.0, %v1269
        %v1271 = vpop.f32.mrb[0].mxu0
        %1272 = vmatprep.mubr.bf16.mxu0 0
        %1273 = vmatmul.mubr.bf16.gmra.mrb[0].mxu0 %v1138
        %v1274 = vpop.f32.mrb[0].mxu0
        %v1275 = vadd.f32 0.0, %v1274
        %v1276 = vpop.f32.mrb[0].mxu0
        %v1277 = vpop.f32.mrb[0].mxu0
        %v1278 = vadd.f32 0.0, %v1277
        %v1279 = vpop.f32.mrb[0].mxu0
        %1280 = vmatprep.mubr.bf16.mxu0 0
        %1281 = vmatmul.mubr.bf16.gmra.mrb[0].mxu0 %v1139
        %v1282 = vpop.f32.mrb[0].mxu0
        %v1283 = vadd.f32 0.0, %v1282
        %v1284 = vpop.f32.mrb[0].mxu0
        %v1285 = vpop.f32.mrb[0].mxu0
        %v1286 = vadd.f32 0.0, %v1285
        %v1287 = vpop.f32.mrb[0].mxu0
        %1288 = vmatprep.mubr.bf16.mxu0 0
        %1289 = vmatmul.mubr.bf16.gmra.mrb[0].mxu0 %v1140
        %v1290 = vpop.f32.mrb[0].mxu0
        %v1291 = vadd.f32 0.0, %v1290
        %v1292 = vpop.f32.mrb[0].mxu0
        %v1293 = vpop.f32.mrb[0].mxu0
        %v1294 = vadd.f32 0.0, %v1293
        %v1295 = vpop.f32.mrb[0].mxu0
        %1296 = vmatprep.mubr.bf16.mxu0 0
        %1297 = vmatmul.mubr.bf16.gmra.mrb[0].mxu0 %v1141
        %v1298 = vpop.f32.mrb[0].mxu0
        %v1299 = vadd.f32 0.0, %v1298
        %v1300 = vpop.f32.mrb[0].mxu0
        %v1301 = vpop.f32.mrb[0].mxu0
        %v1302 = vadd.f32 0.0, %v1301
        %v1303 = vpop.f32.mrb[0].mxu0
        %1304 = vmatprep.mubr.bf16.mxu0 0
        %1305 = vmatmul.mubr.bf16.gmra.mrb[0].mxu0 %v1142
        %v1306 = vpop.f32.mrb[0].mxu0
        %v1307 = vadd.f32 0.0, %v1306
        %v1308 = vpop.f32.mrb[0].mxu0
        %v1309 = vpop.f32.mrb[0].mxu0
        %v1310 = vadd.f32 0.0, %v1309
        %v1311 = vpop.f32.mrb[0].mxu0
        %1312 = vmatprep.mubr.bf16.mxu0 0
        %1313 = vmatmul.mubr.bf16.gmra.mrb[0].mxu0 %v1143
        %v1314 = vpop.f32.mrb[0].mxu0
        %v1315 = vadd.f32 0.0, %v1314
        %v1316 = vpop.f32.mrb[0].mxu0
        %v1317 = vpop.f32.mrb[0].mxu0
        %v1318 = vadd.f32 0.0, %v1317
        %v1319 = vpop.f32.mrb[0].mxu0
        %1320 = vmatprep.mubr.bf16.mxu0 0
        %1321 = vmatmul.mubr.bf16.gmra.mrb[0].mxu0 %v1144
        %v1322 = vpop.f32.mrb[0].mxu0
        %v1323 = vadd.f32 0.0, %v1322
        %v1324 = vpop.f32.mrb[0].mxu0
        %v1325 = vpop.f32.mrb[0].mxu0
        %v1326 = vadd.f32 0.0, %v1325
        %v1327 = vpop.f32.mrb[0].mxu0
        %1328 = vmatprep.mubr.bf16.mxu0 0
        %1329 = vmatmul.mubr.bf16.gmra.mrb[0].mxu0 %v1145
        %v1330 = vpop.f32.mrb[0].mxu0
        %v1331 = vadd.f32 0.0, %v1330
        %v1332 = vpop.f32.mrb[0].mxu0
        %v1333 = vpop.f32.mrb[0].mxu0
        %v1334 = vadd.f32 0.0, %v1333
        %v1335 = vpop.f32.mrb[0].mxu0
        %1336 = vmatprep.mubr.bf16.mxu0 0
        %1337 = vmatmul.mubr.bf16.gmra.mrb[0].mxu0 %v1146
        %v1338 = vpop.f32.mrb[0].mxu0
        %v1339 = vadd.f32 0.0, %v1338
        %v1340 = vpop.f32.mrb[0].mxu0
        %v1341 = vpop.f32.mrb[0].mxu0
        %v1342 = vadd.f32 0.0, %v1341
        %v1343 = vpop.f32.mrb[0].mxu0
        %1344 = vmatprep.mubr.bf16.mxu0 0
        %1345 = vmatmul.mubr.bf16.gmra.mrb[0].mxu0 %v1147
        %v1346 = vpop.f32.mrb[0].mxu0
        %v1347 = vadd.f32 0.0, %v1346
        %v1348 = vpop.f32.mrb[0].mxu0
        %v1349 = vpop.f32.mrb[0].mxu0
        %v1350 = vadd.f32 0.0, %v1349
        %v1351 = vpop.f32.mrb[0].mxu0
        %1352 = vmatprep.mubr.bf16.mxu0 0
        %1353 = vmatmul.mubr.bf16.gmra.mrb[0].mxu0 %v1148
        %v1354 = vpop.f32.mrb[0].mxu0
        %v1355 = vadd.f32 0.0, %v1354
        %v1356 = vpop.f32.mrb[0].mxu0
        %v1357 = vpop.f32.mrb[0].mxu0
        %v1358 = vadd.f32 0.0, %v1357
        %v1359 = vpop.f32.mrb[0].mxu0
        %1360 = vmatprep.mubr.bf16.mxu0 0
        %1361 = vmatmul.mubr.bf16.gmra.mrb[0].mxu0 %v1149
        %v1362 = vpop.f32.mrb[0].mxu0
        %v1363 = vadd.f32 0.0, %v1362
        %v1364 = vpop.f32.mrb[0].mxu0
        %v1365 = vpop.f32.mrb[0].mxu0
        %v1366 = vadd.f32 0.0, %v1365
        %v1367 = vpop.f32.mrb[0].mxu0
        %1368 = vmatprep.mubr.bf16.mxu0 0
        %1369 = vmatmul.mubr.bf16.gmra.mrb[0].mxu0 %v1150
        %v1370 = vpop.f32.mrb[0].mxu0
        %v1371 = vadd.f32 0.0, %v1370
        %v1372 = vpop.f32.mrb[0].mxu0
        %v1373 = vpop.f32.mrb[0].mxu0
        %v1374 = vadd.f32 0.0, %v1373
        %v1375 = vpop.f32.mrb[0].mxu0
        %1376 = vdwg.mxu0
        %v1377 = vadd.f32 %v1071, %v1251
        %v1378 = vadd.f32 %v1072, %v1254
        %v1379 = vadd.f32 %v1073, %v1259
        %v1380 = vadd.f32 %v1074, %v1262
        %v1381 = vadd.f32 %v1075, %v1267
        %v1382 = vadd.f32 %v1076, %v1270
        %v1383 = vadd.f32 %v1077, %v1275
        %v1384 = vadd.f32 %v1078, %v1278
        %v1385 = vadd.f32 %v1079, %v1283
        %v1386 = vadd.f32 %v1080, %v1286
        %v1387 = vadd.f32 %v1081, %v1291
        %v1388 = vadd.f32 %v1082, %v1294
        %v1389 = vadd.f32 %v1083, %v1299
        %v1390 = vadd.f32 %v1084, %v1302
        %v1391 = vadd.f32 %v1085, %v1307
        %v1392 = vadd.f32 %v1086, %v1310
        %v1393 = vadd.f32 %v1087, %v1315
        %v1394 = vadd.f32 %v1088, %v1318
        %v1395 = vadd.f32 %v1089, %v1323
        %v1396 = vadd.f32 %v1090, %v1326
        %v1397 = vadd.f32 %v1091, %v1331
        %v1398 = vadd.f32 %v1092, %v1334
        %v1399 = vadd.f32 %v1093, %v1339
        %v1400 = vadd.f32 %v1094, %v1342
        %v1401 = vadd.f32 %v1095, %v1347
        %v1402 = vadd.f32 %v1096, %v1350
        %v1403 = vadd.f32 %v1097, %v1355
        %v1404 = vadd.f32 %v1098, %v1358
        %v1405 = vadd.f32 %v1099, %v1363
        %v1406 = vadd.f32 %v1100, %v1366
        %v1407 = vadd.f32 %v1101, %v1371
        %v1408 = vadd.f32 %v1102, %v1374
        %v1409 = vld [vmem:[%s451 + $0x7] sm:$0xff]
        %v1410 = vld [vmem:[%s451 + $0xf] sm:$0xff]
        %v1411 = vld [vmem:[%s451 + $0x27] sm:$0xff]
        %v1412 = vld [vmem:[%s451 + $0x2f] sm:$0xff]
        %v1413 = vld [vmem:[%s451 + $0x47] sm:$0xff]
        %v1414 = vld [vmem:[%s451 + $0x4f] sm:$0xff]
        %v1415 = vld [vmem:[%s451 + $0x67] sm:$0xff]
        %v1416 = vld [vmem:[%s451 + $0x6f] sm:$0xff]
        %v1417 = vld [vmem:[%s451 + $0x87] sm:$0xff]
        %v1418 = vld [vmem:[%s451 + $0x8f] sm:$0xff]
        %v1419 = vld [vmem:[%s451 + $0xa7] sm:$0xff]
        %v1420 = vld [vmem:[%s451 + $0xaf] sm:$0xff]
        %v1421 = vld [vmem:[%s451 + $0xc7] sm:$0xff]
        %v1422 = vld [vmem:[%s451 + $0xcf] sm:$0xff]
        %v1423 = vld [vmem:[%s451 + $0xe7] sm:$0xff]
        %v1424 = vld [vmem:[%s451 + $0xef] sm:$0xff]
        %v1425 = vld [vmem:[%s451 + $0x107] sm:$0xff]
        %v1426 = vld [vmem:[%s451 + $0x10f] sm:$0xff]
        %v1427 = vld [vmem:[%s451 + $0x127] sm:$0xff]
        %v1428 = vld [vmem:[%s451 + $0x12f] sm:$0xff]
        %v1429 = vld [vmem:[%s451 + $0x147] sm:$0xff]
        %v1430 = vld [vmem:[%s451 + $0x14f] sm:$0xff]
        %v1431 = vld [vmem:[%s451 + $0x167] sm:$0xff]
        %v1432 = vld [vmem:[%s451 + $0x16f] sm:$0xff]
        %v1433 = vld [vmem:[%s451 + $0x187] sm:$0xff]
        %v1434 = vld [vmem:[%s451 + $0x18f] sm:$0xff]
        %v1435 = vld [vmem:[%s451 + $0x1a7] sm:$0xff]
        %v1436 = vld [vmem:[%s451 + $0x1af] sm:$0xff]
        %v1437 = vld [vmem:[%s451 + $0x1c7] sm:$0xff]
        %v1438 = vld [vmem:[%s451 + $0x1cf] sm:$0xff]
        %v1439 = vld [vmem:[%s451 + $0x1e7] sm:$0xff]
        %v1440 = vld [vmem:[%s451 + $0x1ef] sm:$0xff]
        %v1441 = vpack.c.bf16 %v1410, %v1409
        %v1442 = vpack.c.bf16 %v1412, %v1411
        %v1443 = vpack.c.bf16 %v1414, %v1413
        %v1444 = vpack.c.bf16 %v1416, %v1415
        %v1445 = vpack.c.bf16 %v1418, %v1417
        %v1446 = vpack.c.bf16 %v1420, %v1419
        %v1447 = vpack.c.bf16 %v1422, %v1421
        %v1448 = vpack.c.bf16 %v1424, %v1423
        %v1449 = vpack.c.bf16 %v1426, %v1425
        %v1450 = vpack.c.bf16 %v1428, %v1427
        %v1451 = vpack.c.bf16 %v1430, %v1429
        %v1452 = vpack.c.bf16 %v1432, %v1431
        %v1453 = vpack.c.bf16 %v1434, %v1433
        %v1454 = vpack.c.bf16 %v1436, %v1435
        %v1455 = vpack.c.bf16 %v1438, %v1437
        %v1456 = vpack.c.bf16 %v1440, %v1439
        %s1457 = scalar_lea.vmem %s1, 192
        %v1458 = vld [vmem:[%s1457] sm:$0xf]
        %v1459 = vld [vmem:[%s1457 + $0x4] sm:$0xf]
        %v1460 = vld [vmem:[%s1457 + $0x8] sm:$0xf]
        %v1461 = vld [vmem:[%s1457 + $0xc] sm:$0xf]
        %v1462 = vld [vmem:[%s1457 + $0x10] sm:$0xf]
        %v1463 = vld [vmem:[%s1457 + $0x14] sm:$0xf]
        %v1464 = vld [vmem:[%s1457 + $0x18] sm:$0xf]
        %v1465 = vld [vmem:[%s1457 + $0x1c] sm:$0xf]
        %v1466 = vld [vmem:[%s1457 + $0x20] sm:$0xf]
        %v1467 = vld [vmem:[%s1457 + $0x24] sm:$0xf]
        %v1468 = vld [vmem:[%s1457 + $0x28] sm:$0xf]
        %v1469 = vld [vmem:[%s1457 + $0x2c] sm:$0xf]
        %v1470 = vld [vmem:[%s1457 + $0x30] sm:$0xf]
        %v1471 = vld [vmem:[%s1457 + $0x34] sm:$0xf]
        %v1472 = vld [vmem:[%s1457 + $0x38] sm:$0xf]
        %v1473 = vld [vmem:[%s1457 + $0x3c] sm:$0xf]
        %v1490 = vunpack.c.l.b16 %v1458
        %v1491 = vunpack.c.l.b16 %v1459
        %v1492 = vunpack.c.l.b16 %v1460
        %v1493 = vunpack.c.l.b16 %v1461
        %v1494 = vunpack.c.l.b16 %v1462
        %v1495 = vunpack.c.l.b16 %v1463
        %v1496 = vunpack.c.l.b16 %v1464
        %v1497 = vunpack.c.l.b16 %v1465
        %v1498 = vunpack.c.l.b16 %v1466
        %v1499 = vunpack.c.l.b16 %v1467
        %v1500 = vunpack.c.l.b16 %v1468
        %v1501 = vunpack.c.l.b16 %v1469
        %v1502 = vunpack.c.l.b16 %v1470
        %v1503 = vunpack.c.l.b16 %v1471
        %v1504 = vunpack.c.l.b16 %v1472
        %v1505 = vunpack.c.l.b16 %v1473
        %v1506 = vpack.c.b16 %v1491, %v1490
        %v1507 = vpack.c.b16 %v1493, %v1492
        %v1508 = vpack.c.b16 %v1495, %v1494
        %v1509 = vpack.c.b16 %v1497, %v1496
        %v1510 = vpack.c.b16 %v1499, %v1498
        %v1511 = vpack.c.b16 %v1501, %v1500
        %v1512 = vpack.c.b16 %v1503, %v1502
        %v1513 = vpack.c.b16 %v1505, %v1504
        %1522 = vmatprep.subr.bf16.mxu0 0
        %1523 = vmatpush1.bf16.msra.mxu0 %v1506
        %1524 = vmatprep.subr.bf16.mxu0 0
        %1525 = vmatpush1.bf16.msra.mxu0 %v1507
        %1526 = vmatprep.subr.bf16.mxu0 0
        %1527 = vmatpush1.bf16.msra.mxu0 %v1508
        %1528 = vmatprep.subr.bf16.mxu0 0
        %1529 = vmatpush1.bf16.msra.mxu0 %v1509
        %1530 = vmatprep.subr.bf16.mxu0 0
        %1531 = vmatpush1.bf16.msra.mxu0 %v1510
        %1532 = vmatprep.subr.bf16.mxu0 0
        %1533 = vmatpush1.bf16.msra.mxu0 %v1511
        %1534 = vmatprep.subr.bf16.mxu0 0
        %1535 = vmatpush1.bf16.msra.mxu0 %v1512
        %1536 = vmatprep.subr.bf16.mxu0 0
        %1537 = vmatpush1.bf16.msra.mxu0 %v1513
        %1538 = vmatprep.subr.bf16.mxu0 0
        %1539 = vmatpush1.bf16.msra.mxu0 0
        %1540 = vmatprep.subr.bf16.mxu0 0
        %1541 = vmatpush1.bf16.msra.mxu0 0
        %1542 = vmatprep.subr.bf16.mxu0 0
        %1543 = vmatpush1.bf16.msra.mxu0 0
        %1544 = vmatprep.subr.bf16.mxu0 0
        %1545 = vmatpush1.bf16.msra.mxu0 0
        %1546 = vmatprep.subr.bf16.mxu0 0
        %1547 = vmatpush1.bf16.msra.mxu0 0
        %1548 = vmatprep.subr.bf16.mxu0 0
        %1549 = vmatpush1.bf16.msra.mxu0 0
        %1550 = vmatprep.subr.bf16.mxu0 0
        %1551 = vmatpush1.bf16.msra.mxu0 0
        %1552 = vmatprep.subr.bf16.mxu0 0
        %1553 = vmatpush1.bf16.msra.mxu0 0
        %1554 = vmatprep.mubr.bf16.mxu0 0
        %1555 = vmatmul.mubr.bf16.gmra.mrb[0].mxu0 %v1441
        %v1556 = vpop.f32.mrb[0].mxu0
        %v1557 = vadd.f32 0.0, %v1556
        %v1558 = vpop.f32.mrb[0].mxu0
        %v1559 = vpop.f32.mrb[0].mxu0
        %v1560 = vadd.f32 0.0, %v1559
        %v1561 = vpop.f32.mrb[0].mxu0
        %1562 = vmatprep.mubr.bf16.mxu0 0
        %1563 = vmatmul.mubr.bf16.gmra.mrb[0].mxu0 %v1442
        %v1564 = vpop.f32.mrb[0].mxu0
        %v1565 = vadd.f32 0.0, %v1564
        %v1566 = vpop.f32.mrb[0].mxu0
        %v1567 = vpop.f32.mrb[0].mxu0
        %v1568 = vadd.f32 0.0, %v1567
        %v1569 = vpop.f32.mrb[0].mxu0
        %1570 = vmatprep.mubr.bf16.mxu0 0
        %1571 = vmatmul.mubr.bf16.gmra.mrb[0].mxu0 %v1443
        %v1572 = vpop.f32.mrb[0].mxu0
        %v1573 = vadd.f32 0.0, %v1572
        %v1574 = vpop.f32.mrb[0].mxu0
        %v1575 = vpop.f32.mrb[0].mxu0
        %v1576 = vadd.f32 0.0, %v1575
        %v1577 = vpop.f32.mrb[0].mxu0
        %1578 = vmatprep.mubr.bf16.mxu0 0
        %1579 = vmatmul.mubr.bf16.gmra.mrb[0].mxu0 %v1444
        %v1580 = vpop.f32.mrb[0].mxu0
        %v1581 = vadd.f32 0.0, %v1580
        %v1582 = vpop.f32.mrb[0].mxu0
        %v1583 = vpop.f32.mrb[0].mxu0
        %v1584 = vadd.f32 0.0, %v1583
        %v1585 = vpop.f32.mrb[0].mxu0
        %1586 = vmatprep.mubr.bf16.mxu0 0
        %1587 = vmatmul.mubr.bf16.gmra.mrb[0].mxu0 %v1445
        %v1588 = vpop.f32.mrb[0].mxu0
        %v1589 = vadd.f32 0.0, %v1588
        %v1590 = vpop.f32.mrb[0].mxu0
        %v1591 = vpop.f32.mrb[0].mxu0
        %v1592 = vadd.f32 0.0, %v1591
        %v1593 = vpop.f32.mrb[0].mxu0
        %1594 = vmatprep.mubr.bf16.mxu0 0
        %1595 = vmatmul.mubr.bf16.gmra.mrb[0].mxu0 %v1446
        %v1596 = vpop.f32.mrb[0].mxu0
        %v1597 = vadd.f32 0.0, %v1596
        %v1598 = vpop.f32.mrb[0].mxu0
        %v1599 = vpop.f32.mrb[0].mxu0
        %v1600 = vadd.f32 0.0, %v1599
        %v1601 = vpop.f32.mrb[0].mxu0
        %1602 = vmatprep.mubr.bf16.mxu0 0
        %1603 = vmatmul.mubr.bf16.gmra.mrb[0].mxu0 %v1447
        %v1604 = vpop.f32.mrb[0].mxu0
        %v1605 = vadd.f32 0.0, %v1604
        %v1606 = vpop.f32.mrb[0].mxu0
        %v1607 = vpop.f32.mrb[0].mxu0
        %v1608 = vadd.f32 0.0, %v1607
        %v1609 = vpop.f32.mrb[0].mxu0
        %1610 = vmatprep.mubr.bf16.mxu0 0
        %1611 = vmatmul.mubr.bf16.gmra.mrb[0].mxu0 %v1448
        %v1612 = vpop.f32.mrb[0].mxu0
        %v1613 = vadd.f32 0.0, %v1612
        %v1614 = vpop.f32.mrb[0].mxu0
        %v1615 = vpop.f32.mrb[0].mxu0
        %v1616 = vadd.f32 0.0, %v1615
        %v1617 = vpop.f32.mrb[0].mxu0
        %1618 = vmatprep.mubr.bf16.mxu0 0
        %1619 = vmatmul.mubr.bf16.gmra.mrb[0].mxu0 %v1449
        %v1620 = vpop.f32.mrb[0].mxu0
        %v1621 = vadd.f32 0.0, %v1620
        %v1622 = vpop.f32.mrb[0].mxu0
        %v1623 = vpop.f32.mrb[0].mxu0
        %v1624 = vadd.f32 0.0, %v1623
        %v1625 = vpop.f32.mrb[0].mxu0
        %1626 = vmatprep.mubr.bf16.mxu0 0
        %1627 = vmatmul.mubr.bf16.gmra.mrb[0].mxu0 %v1450
        %v1628 = vpop.f32.mrb[0].mxu0
        %v1629 = vadd.f32 0.0, %v1628
        %v1630 = vpop.f32.mrb[0].mxu0
        %v1631 = vpop.f32.mrb[0].mxu0
        %v1632 = vadd.f32 0.0, %v1631
        %v1633 = vpop.f32.mrb[0].mxu0
        %1634 = vmatprep.mubr.bf16.mxu0 0
        %1635 = vmatmul.mubr.bf16.gmra.mrb[0].mxu0 %v1451
        %v1636 = vpop.f32.mrb[0].mxu0
        %v1637 = vadd.f32 0.0, %v1636
        %v1638 = vpop.f32.mrb[0].mxu0
        %v1639 = vpop.f32.mrb[0].mxu0
        %v1640 = vadd.f32 0.0, %v1639
        %v1641 = vpop.f32.mrb[0].mxu0
        %1642 = vmatprep.mubr.bf16.mxu0 0
        %1643 = vmatmul.mubr.bf16.gmra.mrb[0].mxu0 %v1452
        %v1644 = vpop.f32.mrb[0].mxu0
        %v1645 = vadd.f32 0.0, %v1644
        %v1646 = vpop.f32.mrb[0].mxu0
        %v1647 = vpop.f32.mrb[0].mxu0
        %v1648 = vadd.f32 0.0, %v1647
        %v1649 = vpop.f32.mrb[0].mxu0
        %1650 = vmatprep.mubr.bf16.mxu0 0
        %1651 = vmatmul.mubr.bf16.gmra.mrb[0].mxu0 %v1453
        %v1652 = vpop.f32.mrb[0].mxu0
        %v1653 = vadd.f32 0.0, %v1652
        %v1654 = vpop.f32.mrb[0].mxu0
        %v1655 = vpop.f32.mrb[0].mxu0
        %v1656 = vadd.f32 0.0, %v1655
        %v1657 = vpop.f32.mrb[0].mxu0
        %1658 = vmatprep.mubr.bf16.mxu0 0
        %1659 = vmatmul.mubr.bf16.gmra.mrb[0].mxu0 %v1454
        %v1660 = vpop.f32.mrb[0].mxu0
        %v1661 = vadd.f32 0.0, %v1660
        %v1662 = vpop.f32.mrb[0].mxu0
        %v1663 = vpop.f32.mrb[0].mxu0
        %v1664 = vadd.f32 0.0, %v1663
        %v1665 = vpop.f32.mrb[0].mxu0
        %1666 = vmatprep.mubr.bf16.mxu0 0
        %1667 = vmatmul.mubr.bf16.gmra.mrb[0].mxu0 %v1455
        %v1668 = vpop.f32.mrb[0].mxu0
        %v1669 = vadd.f32 0.0, %v1668
        %v1670 = vpop.f32.mrb[0].mxu0
        %v1671 = vpop.f32.mrb[0].mxu0
        %v1672 = vadd.f32 0.0, %v1671
        %v1673 = vpop.f32.mrb[0].mxu0
        %1674 = vmatprep.mubr.bf16.mxu0 0
        %1675 = vmatmul.mubr.bf16.gmra.mrb[0].mxu0 %v1456
        %v1676 = vpop.f32.mrb[0].mxu0
        %v1677 = vadd.f32 0.0, %v1676
        %v1678 = vpop.f32.mrb[0].mxu0
        %v1679 = vpop.f32.mrb[0].mxu0
        %v1680 = vadd.f32 0.0, %v1679
        %v1681 = vpop.f32.mrb[0].mxu0
        %1682 = vdwg.mxu0
        %v1683 = vadd.f32 %v1377, %v1557
        %v1684 = vadd.f32 %v1378, %v1560
        %v1685 = vadd.f32 %v1379, %v1565
        %v1686 = vadd.f32 %v1380, %v1568
        %v1687 = vadd.f32 %v1381, %v1573
        %v1688 = vadd.f32 %v1382, %v1576
        %v1689 = vadd.f32 %v1383, %v1581
        %v1690 = vadd.f32 %v1384, %v1584
        %v1691 = vadd.f32 %v1385, %v1589
        %v1692 = vadd.f32 %v1386, %v1592
        %v1693 = vadd.f32 %v1387, %v1597
        %v1694 = vadd.f32 %v1388, %v1600
        %v1695 = vadd.f32 %v1389, %v1605
        %v1696 = vadd.f32 %v1390, %v1608
        %v1697 = vadd.f32 %v1391, %v1613
        %v1698 = vadd.f32 %v1392, %v1616
        %v1699 = vadd.f32 %v1393, %v1621
        %v1700 = vadd.f32 %v1394, %v1624
        %v1701 = vadd.f32 %v1395, %v1629
        %v1702 = vadd.f32 %v1396, %v1632
        %v1703 = vadd.f32 %v1397, %v1637
        %v1704 = vadd.f32 %v1398, %v1640
        %v1705 = vadd.f32 %v1399, %v1645
        %v1706 = vadd.f32 %v1400, %v1648
        %v1707 = vadd.f32 %v1401, %v1653
        %v1708 = vadd.f32 %v1402, %v1656
        %v1709 = vadd.f32 %v1403, %v1661
        %v1710 = vadd.f32 %v1404, %v1664
        %v1711 = vadd.f32 %v1405, %v1669
        %v1712 = vadd.f32 %v1406, %v1672
        %v1713 = vadd.f32 %v1407, %v1677
        %v1714 = vadd.f32 %v1408, %v1680
        %v1715 = vld [vmem:[%s451 + $0x8] sm:$0xff]
        %v1716 = vld [vmem:[%s451 + $0x10] sm:$0xff]
        %v1717 = vld [vmem:[%s451 + $0x28] sm:$0xff]
        %v1718 = vld [vmem:[%s451 + $0x30] sm:$0xff]
        %v1719 = vld [vmem:[%s451 + $0x48] sm:$0xff]
        %v1720 = vld [vmem:[%s451 + $0x50] sm:$0xff]
        %v1721 = vld [vmem:[%s451 + $0x68] sm:$0xff]
        %v1722 = vld [vmem:[%s451 + $0x70] sm:$0xff]
        %v1723 = vld [vmem:[%s451 + $0x88] sm:$0xff]
        %v1724 = vld [vmem:[%s451 + $0x90] sm:$0xff]
        %v1725 = vld [vmem:[%s451 + $0xa8] sm:$0xff]
        %v1726 = vld [vmem:[%s451 + $0xb0] sm:$0xff]
        %v1727 = vld [vmem:[%s451 + $0xc8] sm:$0xff]
        %v1728 = vld [vmem:[%s451 + $0xd0] sm:$0xff]
        %v1729 = vld [vmem:[%s451 + $0xe8] sm:$0xff]
        %v1730 = vld [vmem:[%s451 + $0xf0] sm:$0xff]
        %v1731 = vld [vmem:[%s451 + $0x108] sm:$0xff]
        %v1732 = vld [vmem:[%s451 + $0x110] sm:$0xff]
        %v1733 = vld [vmem:[%s451 + $0x128] sm:$0xff]
        %v1734 = vld [vmem:[%s451 + $0x130] sm:$0xff]
        %v1735 = vld [vmem:[%s451 + $0x148] sm:$0xff]
        %v1736 = vld [vmem:[%s451 + $0x150] sm:$0xff]
        %v1737 = vld [vmem:[%s451 + $0x168] sm:$0xff]
        %v1738 = vld [vmem:[%s451 + $0x170] sm:$0xff]
        %v1739 = vld [vmem:[%s451 + $0x188] sm:$0xff]
        %v1740 = vld [vmem:[%s451 + $0x190] sm:$0xff]
        %v1741 = vld [vmem:[%s451 + $0x1a8] sm:$0xff]
        %v1742 = vld [vmem:[%s451 + $0x1b0] sm:$0xff]
        %v1743 = vld [vmem:[%s451 + $0x1c8] sm:$0xff]
        %v1744 = vld [vmem:[%s451 + $0x1d0] sm:$0xff]
        %v1745 = vld [vmem:[%s451 + $0x1e8] sm:$0xff]
        %v1746 = vld [vmem:[%s451 + $0x1f0] sm:$0xff]
        %v1747 = vpack.c.bf16 %v1716, %v1715
        %v1748 = vpack.c.bf16 %v1718, %v1717
        %v1749 = vpack.c.bf16 %v1720, %v1719
        %v1750 = vpack.c.bf16 %v1722, %v1721
        %v1751 = vpack.c.bf16 %v1724, %v1723
        %v1752 = vpack.c.bf16 %v1726, %v1725
        %v1753 = vpack.c.bf16 %v1728, %v1727
        %v1754 = vpack.c.bf16 %v1730, %v1729
        %v1755 = vpack.c.bf16 %v1732, %v1731
        %v1756 = vpack.c.bf16 %v1734, %v1733
        %v1757 = vpack.c.bf16 %v1736, %v1735
        %v1758 = vpack.c.bf16 %v1738, %v1737
        %v1759 = vpack.c.bf16 %v1740, %v1739
        %v1760 = vpack.c.bf16 %v1742, %v1741
        %v1761 = vpack.c.bf16 %v1744, %v1743
        %v1762 = vpack.c.bf16 %v1746, %v1745
        %s1763 = scalar_lea.vmem %s1, 256
        %v1764 = vld [vmem:[%s1763] sm:$0xf]
        %v1765 = vld [vmem:[%s1763 + $0x4] sm:$0xf]
        %v1766 = vld [vmem:[%s1763 + $0x8] sm:$0xf]
        %v1767 = vld [vmem:[%s1763 + $0xc] sm:$0xf]
        %v1768 = vld [vmem:[%s1763 + $0x10] sm:$0xf]
        %v1769 = vld [vmem:[%s1763 + $0x14] sm:$0xf]
        %v1770 = vld [vmem:[%s1763 + $0x18] sm:$0xf]
        %v1771 = vld [vmem:[%s1763 + $0x1c] sm:$0xf]
        %v1772 = vld [vmem:[%s1763 + $0x20] sm:$0xf]
        %v1773 = vld [vmem:[%s1763 + $0x24] sm:$0xf]
        %v1774 = vld [vmem:[%s1763 + $0x28] sm:$0xf]
        %v1775 = vld [vmem:[%s1763 + $0x2c] sm:$0xf]
        %v1776 = vld [vmem:[%s1763 + $0x30] sm:$0xf]
        %v1777 = vld [vmem:[%s1763 + $0x34] sm:$0xf]
        %v1778 = vld [vmem:[%s1763 + $0x38] sm:$0xf]
        %v1779 = vld [vmem:[%s1763 + $0x3c] sm:$0xf]
        %v1796 = vunpack.c.l.b16 %v1764
        %v1797 = vunpack.c.l.b16 %v1765
        %v1798 = vunpack.c.l.b16 %v1766
        %v1799 = vunpack.c.l.b16 %v1767
        %v1800 = vunpack.c.l.b16 %v1768
        %v1801 = vunpack.c.l.b16 %v1769
        %v1802 = vunpack.c.l.b16 %v1770
        %v1803 = vunpack.c.l.b16 %v1771
        %v1804 = vunpack.c.l.b16 %v1772
        %v1805 = vunpack.c.l.b16 %v1773
        %v1806 = vunpack.c.l.b16 %v1774
        %v1807 = vunpack.c.l.b16 %v1775
        %v1808 = vunpack.c.l.b16 %v1776
        %v1809 = vunpack.c.l.b16 %v1777
        %v1810 = vunpack.c.l.b16 %v1778
        %v1811 = vunpack.c.l.b16 %v1779
        %v1812 = vpack.c.b16 %v1797, %v1796
        %v1813 = vpack.c.b16 %v1799, %v1798
        %v1814 = vpack.c.b16 %v1801, %v1800
        %v1815 = vpack.c.b16 %v1803, %v1802
        %v1816 = vpack.c.b16 %v1805, %v1804
        %v1817 = vpack.c.b16 %v1807, %v1806
        %v1818 = vpack.c.b16 %v1809, %v1808
        %v1819 = vpack.c.b16 %v1811, %v1810
        %1828 = vmatprep.subr.bf16.mxu0 0
        %1829 = vmatpush1.bf16.msra.mxu0 %v1812
        %1830 = vmatprep.subr.bf16.mxu0 0
        %1831 = vmatpush1.bf16.msra.mxu0 %v1813
        %1832 = vmatprep.subr.bf16.mxu0 0
        %1833 = vmatpush1.bf16.msra.mxu0 %v1814
        %1834 = vmatprep.subr.bf16.mxu0 0
        %1835 = vmatpush1.bf16.msra.mxu0 %v1815
        %1836 = vmatprep.subr.bf16.mxu0 0
        %1837 = vmatpush1.bf16.msra.mxu0 %v1816
        %1838 = vmatprep.subr.bf16.mxu0 0
        %1839 = vmatpush1.bf16.msra.mxu0 %v1817
        %1840 = vmatprep.subr.bf16.mxu0 0
        %1841 = vmatpush1.bf16.msra.mxu0 %v1818
        %1842 = vmatprep.subr.bf16.mxu0 0
        %1843 = vmatpush1.bf16.msra.mxu0 %v1819
        %1844 = vmatprep.subr.bf16.mxu0 0
        %1845 = vmatpush1.bf16.msra.mxu0 0
        %1846 = vmatprep.subr.bf16.mxu0 0
        %1847 = vmatpush1.bf16.msra.mxu0 0
        %1848 = vmatprep.subr.bf16.mxu0 0
        %1849 = vmatpush1.bf16.msra.mxu0 0
        %1850 = vmatprep.subr.bf16.mxu0 0
        %1851 = vmatpush1.bf16.msra.mxu0 0
        %1852 = vmatprep.subr.bf16.mxu0 0
        %1853 = vmatpush1.bf16.msra.mxu0 0
        %1854 = vmatprep.subr.bf16.mxu0 0
        %1855 = vmatpush1.bf16.msra.mxu0 0
        %1856 = vmatprep.subr.bf16.mxu0 0
        %1857 = vmatpush1.bf16.msra.mxu0 0
        %1858 = vmatprep.subr.bf16.mxu0 0
        %1859 = vmatpush1.bf16.msra.mxu0 0
        %1860 = vmatprep.mubr.bf16.mxu0 0
        %1861 = vmatmul.mubr.bf16.gmra.mrb[0].mxu0 %v1747
        %v1862 = vpop.f32.mrb[0].mxu0
        %v1863 = vadd.f32 0.0, %v1862
        %v1864 = vpop.f32.mrb[0].mxu0
        %v1865 = vpop.f32.mrb[0].mxu0
        %v1866 = vadd.f32 0.0, %v1865
        %v1867 = vpop.f32.mrb[0].mxu0
        %1868 = vmatprep.mubr.bf16.mxu0 0
        %1869 = vmatmul.mubr.bf16.gmra.mrb[0].mxu0 %v1748
        %v1870 = vpop.f32.mrb[0].mxu0
        %v1871 = vadd.f32 0.0, %v1870
        %v1872 = vpop.f32.mrb[0].mxu0
        %v1873 = vpop.f32.mrb[0].mxu0
        %v1874 = vadd.f32 0.0, %v1873
        %v1875 = vpop.f32.mrb[0].mxu0
        %1876 = vmatprep.mubr.bf16.mxu0 0
        %1877 = vmatmul.mubr.bf16.gmra.mrb[0].mxu0 %v1749
        %v1878 = vpop.f32.mrb[0].mxu0
        %v1879 = vadd.f32 0.0, %v1878
        %v1880 = vpop.f32.mrb[0].mxu0
        %v1881 = vpop.f32.mrb[0].mxu0
        %v1882 = vadd.f32 0.0, %v1881
        %v1883 = vpop.f32.mrb[0].mxu0
        %1884 = vmatprep.mubr.bf16.mxu0 0
        %1885 = vmatmul.mubr.bf16.gmra.mrb[0].mxu0 %v1750
        %v1886 = vpop.f32.mrb[0].mxu0
        %v1887 = vadd.f32 0.0, %v1886
        %v1888 = vpop.f32.mrb[0].mxu0
        %v1889 = vpop.f32.mrb[0].mxu0
        %v1890 = vadd.f32 0.0, %v1889
        %v1891 = vpop.f32.mrb[0].mxu0
        %1892 = vmatprep.mubr.bf16.mxu0 0
        %1893 = vmatmul.mubr.bf16.gmra.mrb[0].mxu0 %v1751
        %v1894 = vpop.f32.mrb[0].mxu0
        %v1895 = vadd.f32 0.0, %v1894
        %v1896 = vpop.f32.mrb[0].mxu0
        %v1897 = vpop.f32.mrb[0].mxu0
        %v1898 = vadd.f32 0.0, %v1897
        %v1899 = vpop.f32.mrb[0].mxu0
        %1900 = vmatprep.mubr.bf16.mxu0 0
        %1901 = vmatmul.mubr.bf16.gmra.mrb[0].mxu0 %v1752
        %v1902 = vpop.f32.mrb[0].mxu0
        %v1903 = vadd.f32 0.0, %v1902
        %v1904 = vpop.f32.mrb[0].mxu0
        %v1905 = vpop.f32.mrb[0].mxu0
        %v1906 = vadd.f32 0.0, %v1905
        %v1907 = vpop.f32.mrb[0].mxu0
        %1908 = vmatprep.mubr.bf16.mxu0 0
        %1909 = vmatmul.mubr.bf16.gmra.mrb[0].mxu0 %v1753
        %v1910 = vpop.f32.mrb[0].mxu0
        %v1911 = vadd.f32 0.0, %v1910
        %v1912 = vpop.f32.mrb[0].mxu0
        %v1913 = vpop.f32.mrb[0].mxu0
        %v1914 = vadd.f32 0.0, %v1913
        %v1915 = vpop.f32.mrb[0].mxu0
        %1916 = vmatprep.mubr.bf16.mxu0 0
        %1917 = vmatmul.mubr.bf16.gmra.mrb[0].mxu0 %v1754
        %v1918 = vpop.f32.mrb[0].mxu0
        %v1919 = vadd.f32 0.0, %v1918
        %v1920 = vpop.f32.mrb[0].mxu0
        %v1921 = vpop.f32.mrb[0].mxu0
        %v1922 = vadd.f32 0.0, %v1921
        %v1923 = vpop.f32.mrb[0].mxu0
        %1924 = vmatprep.mubr.bf16.mxu0 0
        %1925 = vmatmul.mubr.bf16.gmra.mrb[0].mxu0 %v1755
        %v1926 = vpop.f32.mrb[0].mxu0
        %v1927 = vadd.f32 0.0, %v1926
        %v1928 = vpop.f32.mrb[0].mxu0
        %v1929 = vpop.f32.mrb[0].mxu0
        %v1930 = vadd.f32 0.0, %v1929
        %v1931 = vpop.f32.mrb[0].mxu0
        %1932 = vmatprep.mubr.bf16.mxu0 0
        %1933 = vmatmul.mubr.bf16.gmra.mrb[0].mxu0 %v1756
        %v1934 = vpop.f32.mrb[0].mxu0
        %v1935 = vadd.f32 0.0, %v1934
        %v1936 = vpop.f32.mrb[0].mxu0
        %v1937 = vpop.f32.mrb[0].mxu0
        %v1938 = vadd.f32 0.0, %v1937
        %v1939 = vpop.f32.mrb[0].mxu0
        %1940 = vmatprep.mubr.bf16.mxu0 0
        %1941 = vmatmul.mubr.bf16.gmra.mrb[0].mxu0 %v1757
        %v1942 = vpop.f32.mrb[0].mxu0
        %v1943 = vadd.f32 0.0, %v1942
        %v1944 = vpop.f32.mrb[0].mxu0
        %v1945 = vpop.f32.mrb[0].mxu0
        %v1946 = vadd.f32 0.0, %v1945
        %v1947 = vpop.f32.mrb[0].mxu0
        %1948 = vmatprep.mubr.bf16.mxu0 0
        %1949 = vmatmul.mubr.bf16.gmra.mrb[0].mxu0 %v1758
        %v1950 = vpop.f32.mrb[0].mxu0
        %v1951 = vadd.f32 0.0, %v1950
        %v1952 = vpop.f32.mrb[0].mxu0
        %v1953 = vpop.f32.mrb[0].mxu0
        %v1954 = vadd.f32 0.0, %v1953
        %v1955 = vpop.f32.mrb[0].mxu0
        %1956 = vmatprep.mubr.bf16.mxu0 0
        %1957 = vmatmul.mubr.bf16.gmra.mrb[0].mxu0 %v1759
        %v1958 = vpop.f32.mrb[0].mxu0
        %v1959 = vadd.f32 0.0, %v1958
        %v1960 = vpop.f32.mrb[0].mxu0
        %v1961 = vpop.f32.mrb[0].mxu0
        %v1962 = vadd.f32 0.0, %v1961
        %v1963 = vpop.f32.mrb[0].mxu0
        %1964 = vmatprep.mubr.bf16.mxu0 0
        %1965 = vmatmul.mubr.bf16.gmra.mrb[0].mxu0 %v1760
        %v1966 = vpop.f32.mrb[0].mxu0
        %v1967 = vadd.f32 0.0, %v1966
        %v1968 = vpop.f32.mrb[0].mxu0
        %v1969 = vpop.f32.mrb[0].mxu0
        %v1970 = vadd.f32 0.0, %v1969
        %v1971 = vpop.f32.mrb[0].mxu0
        %1972 = vmatprep.mubr.bf16.mxu0 0
        %1973 = vmatmul.mubr.bf16.gmra.mrb[0].mxu0 %v1761
        %v1974 = vpop.f32.mrb[0].mxu0
        %v1975 = vadd.f32 0.0, %v1974
        %v1976 = vpop.f32.mrb[0].mxu0
        %v1977 = vpop.f32.mrb[0].mxu0
        %v1978 = vadd.f32 0.0, %v1977
        %v1979 = vpop.f32.mrb[0].mxu0
        %1980 = vmatprep.mubr.bf16.mxu0 0
        %1981 = vmatmul.mubr.bf16.gmra.mrb[0].mxu0 %v1762
        %v1982 = vpop.f32.mrb[0].mxu0
        %v1983 = vadd.f32 0.0, %v1982
        %v1984 = vpop.f32.mrb[0].mxu0
        %v1985 = vpop.f32.mrb[0].mxu0
        %v1986 = vadd.f32 0.0, %v1985
        %v1987 = vpop.f32.mrb[0].mxu0
        %1988 = vdwg.mxu0
        %v1989 = vadd.f32 %v1683, %v1863
        %v1990 = vadd.f32 %v1684, %v1866
        %v1991 = vadd.f32 %v1685, %v1871
        %v1992 = vadd.f32 %v1686, %v1874
        %v1993 = vadd.f32 %v1687, %v1879
        %v1994 = vadd.f32 %v1688, %v1882
        %v1995 = vadd.f32 %v1689, %v1887
        %v1996 = vadd.f32 %v1690, %v1890
        %v1997 = vadd.f32 %v1691, %v1895
        %v1998 = vadd.f32 %v1692, %v1898
        %v1999 = vadd.f32 %v1693, %v1903
        %v2000 = vadd.f32 %v1694, %v1906
        %v2001 = vadd.f32 %v1695, %v1911
        %v2002 = vadd.f32 %v1696, %v1914
        %v2003 = vadd.f32 %v1697, %v1919
        %v2004 = vadd.f32 %v1698, %v1922
        %v2005 = vadd.f32 %v1699, %v1927
        %v2006 = vadd.f32 %v1700, %v1930
        %v2007 = vadd.f32 %v1701, %v1935
        %v2008 = vadd.f32 %v1702, %v1938
        %v2009 = vadd.f32 %v1703, %v1943
        %v2010 = vadd.f32 %v1704, %v1946
        %v2011 = vadd.f32 %v1705, %v1951
        %v2012 = vadd.f32 %v1706, %v1954
        %v2013 = vadd.f32 %v1707, %v1959
        %v2014 = vadd.f32 %v1708, %v1962
        %v2015 = vadd.f32 %v1709, %v1967
        %v2016 = vadd.f32 %v1710, %v1970
        %v2017 = vadd.f32 %v1711, %v1975
        %v2018 = vadd.f32 %v1712, %v1978
        %v2019 = vadd.f32 %v1713, %v1983
        %v2020 = vadd.f32 %v1714, %v1986
        %v2021 = vld [vmem:[%s451 + $0x9] sm:$0xff]
        %v2022 = vld [vmem:[%s451 + $0x11] sm:$0xff]
        %v2023 = vld [vmem:[%s451 + $0x29] sm:$0xff]
        %v2024 = vld [vmem:[%s451 + $0x31] sm:$0xff]
        %v2025 = vld [vmem:[%s451 + $0x49] sm:$0xff]
        %v2026 = vld [vmem:[%s451 + $0x51] sm:$0xff]
        %v2027 = vld [vmem:[%s451 + $0x69] sm:$0xff]
        %v2028 = vld [vmem:[%s451 + $0x71] sm:$0xff]
        %v2029 = vld [vmem:[%s451 + $0x89] sm:$0xff]
        %v2030 = vld [vmem:[%s451 + $0x91] sm:$0xff]
        %v2031 = vld [vmem:[%s451 + $0xa9] sm:$0xff]
        %v2032 = vld [vmem:[%s451 + $0xb1] sm:$0xff]
        %v2033 = vld [vmem:[%s451 + $0xc9] sm:$0xff]
        %v2034 = vld [vmem:[%s451 + $0xd1] sm:$0xff]
        %v2035 = vld [vmem:[%s451 + $0xe9] sm:$0xff]
        %v2036 = vld [vmem:[%s451 + $0xf1] sm:$0xff]
        %v2037 = vld [vmem:[%s451 + $0x109] sm:$0xff]
        %v2038 = vld [vmem:[%s451 + $0x111] sm:$0xff]
        %v2039 = vld [vmem:[%s451 + $0x129] sm:$0xff]
        %v2040 = vld [vmem:[%s451 + $0x131] sm:$0xff]
        %v2041 = vld [vmem:[%s451 + $0x149] sm:$0xff]
        %v2042 = vld [vmem:[%s451 + $0x151] sm:$0xff]
        %v2043 = vld [vmem:[%s451 + $0x169] sm:$0xff]
        %v2044 = vld [vmem:[%s451 + $0x171] sm:$0xff]
        %v2045 = vld [vmem:[%s451 + $0x189] sm:$0xff]
        %v2046 = vld [vmem:[%s451 + $0x191] sm:$0xff]
        %v2047 = vld [vmem:[%s451 + $0x1a9] sm:$0xff]
        %v2048 = vld [vmem:[%s451 + $0x1b1] sm:$0xff]
        %v2049 = vld [vmem:[%s451 + $0x1c9] sm:$0xff]
        %v2050 = vld [vmem:[%s451 + $0x1d1] sm:$0xff]
        %v2051 = vld [vmem:[%s451 + $0x1e9] sm:$0xff]
        %v2052 = vld [vmem:[%s451 + $0x1f1] sm:$0xff]
        %v2053 = vpack.c.bf16 %v2022, %v2021
        %v2054 = vpack.c.bf16 %v2024, %v2023
        %v2055 = vpack.c.bf16 %v2026, %v2025
        %v2056 = vpack.c.bf16 %v2028, %v2027
        %v2057 = vpack.c.bf16 %v2030, %v2029
        %v2058 = vpack.c.bf16 %v2032, %v2031
        %v2059 = vpack.c.bf16 %v2034, %v2033
        %v2060 = vpack.c.bf16 %v2036, %v2035
        %v2061 = vpack.c.bf16 %v2038, %v2037
        %v2062 = vpack.c.bf16 %v2040, %v2039
        %v2063 = vpack.c.bf16 %v2042, %v2041
        %v2064 = vpack.c.bf16 %v2044, %v2043
        %v2065 = vpack.c.bf16 %v2046, %v2045
        %v2066 = vpack.c.bf16 %v2048, %v2047
        %v2067 = vpack.c.bf16 %v2050, %v2049
        %v2068 = vpack.c.bf16 %v2052, %v2051
        %s2069 = scalar_lea.vmem %s1, 320
        %v2070 = vld [vmem:[%s2069] sm:$0xf]
        %v2071 = vld [vmem:[%s2069 + $0x4] sm:$0xf]
        %v2072 = vld [vmem:[%s2069 + $0x8] sm:$0xf]
        %v2073 = vld [vmem:[%s2069 + $0xc] sm:$0xf]
        %v2074 = vld [vmem:[%s2069 + $0x10] sm:$0xf]
        %v2075 = vld [vmem:[%s2069 + $0x14] sm:$0xf]
        %v2076 = vld [vmem:[%s2069 + $0x18] sm:$0xf]
        %v2077 = vld [vmem:[%s2069 + $0x1c] sm:$0xf]
        %v2078 = vld [vmem:[%s2069 + $0x20] sm:$0xf]
        %v2079 = vld [vmem:[%s2069 + $0x24] sm:$0xf]
        %v2080 = vld [vmem:[%s2069 + $0x28] sm:$0xf]
        %v2081 = vld [vmem:[%s2069 + $0x2c] sm:$0xf]
        %v2082 = vld [vmem:[%s2069 + $0x30] sm:$0xf]
        %v2083 = vld [vmem:[%s2069 + $0x34] sm:$0xf]
        %v2084 = vld [vmem:[%s2069 + $0x38] sm:$0xf]
        %v2085 = vld [vmem:[%s2069 + $0x3c] sm:$0xf]
        %v2102 = vunpack.c.l.b16 %v2070
        %v2103 = vunpack.c.l.b16 %v2071
        %v2104 = vunpack.c.l.b16 %v2072
        %v2105 = vunpack.c.l.b16 %v2073
        %v2106 = vunpack.c.l.b16 %v2074
        %v2107 = vunpack.c.l.b16 %v2075
        %v2108 = vunpack.c.l.b16 %v2076
        %v2109 = vunpack.c.l.b16 %v2077
        %v2110 = vunpack.c.l.b16 %v2078
        %v2111 = vunpack.c.l.b16 %v2079
        %v2112 = vunpack.c.l.b16 %v2080
        %v2113 = vunpack.c.l.b16 %v2081
        %v2114 = vunpack.c.l.b16 %v2082
        %v2115 = vunpack.c.l.b16 %v2083
        %v2116 = vunpack.c.l.b16 %v2084
        %v2117 = vunpack.c.l.b16 %v2085
        %v2118 = vpack.c.b16 %v2103, %v2102
        %v2119 = vpack.c.b16 %v2105, %v2104
        %v2120 = vpack.c.b16 %v2107, %v2106
        %v2121 = vpack.c.b16 %v2109, %v2108
        %v2122 = vpack.c.b16 %v2111, %v2110
        %v2123 = vpack.c.b16 %v2113, %v2112
        %v2124 = vpack.c.b16 %v2115, %v2114
        %v2125 = vpack.c.b16 %v2117, %v2116
        %2134 = vmatprep.subr.bf16.mxu0 0
        %2135 = vmatpush1.bf16.msra.mxu0 %v2118
        %2136 = vmatprep.subr.bf16.mxu0 0
        %2137 = vmatpush1.bf16.msra.mxu0 %v2119
        %2138 = vmatprep.subr.bf16.mxu0 0
        %2139 = vmatpush1.bf16.msra.mxu0 %v2120
        %2140 = vmatprep.subr.bf16.mxu0 0
        %2141 = vmatpush1.bf16.msra.mxu0 %v2121
        %2142 = vmatprep.subr.bf16.mxu0 0
        %2143 = vmatpush1.bf16.msra.mxu0 %v2122
        %2144 = vmatprep.subr.bf16.mxu0 0
        %2145 = vmatpush1.bf16.msra.mxu0 %v2123
        %2146 = vmatprep.subr.bf16.mxu0 0
        %2147 = vmatpush1.bf16.msra.mxu0 %v2124
        %2148 = vmatprep.subr.bf16.mxu0 0
        %2149 = vmatpush1.bf16.msra.mxu0 %v2125
        %2150 = vmatprep.subr.bf16.mxu0 0
        %2151 = vmatpush1.bf16.msra.mxu0 0
        %2152 = vmatprep.subr.bf16.mxu0 0
        %2153 = vmatpush1.bf16.msra.mxu0 0
        %2154 = vmatprep.subr.bf16.mxu0 0
        %2155 = vmatpush1.bf16.msra.mxu0 0
        %2156 = vmatprep.subr.bf16.mxu0 0
        %2157 = vmatpush1.bf16.msra.mxu0 0
        %2158 = vmatprep.subr.bf16.mxu0 0
        %2159 = vmatpush1.bf16.msra.mxu0 0
        %2160 = vmatprep.subr.bf16.mxu0 0
        %2161 = vmatpush1.bf16.msra.mxu0 0
        %2162 = vmatprep.subr.bf16.mxu0 0
        %2163 = vmatpush1.bf16.msra.mxu0 0
        %2164 = vmatprep.subr.bf16.mxu0 0
        %2165 = vmatpush1.bf16.msra.mxu0 0
        %2166 = vmatprep.mubr.bf16.mxu0 0
        %2167 = vmatmul.mubr.bf16.gmra.mrb[0].mxu0 %v2053
        %v2168 = vpop.f32.mrb[0].mxu0
        %v2169 = vadd.f32 0.0, %v2168
        %v2170 = vpop.f32.mrb[0].mxu0
        %v2171 = vpop.f32.mrb[0].mxu0
        %v2172 = vadd.f32 0.0, %v2171
        %v2173 = vpop.f32.mrb[0].mxu0
        %2174 = vmatprep.mubr.bf16.mxu0 0
        %2175 = vmatmul.mubr.bf16.gmra.mrb[0].mxu0 %v2054
        %v2176 = vpop.f32.mrb[0].mxu0
        %v2177 = vadd.f32 0.0, %v2176
        %v2178 = vpop.f32.mrb[0].mxu0
        %v2179 = vpop.f32.mrb[0].mxu0
        %v2180 = vadd.f32 0.0, %v2179
        %v2181 = vpop.f32.mrb[0].mxu0
        %2182 = vmatprep.mubr.bf16.mxu0 0
        %2183 = vmatmul.mubr.bf16.gmra.mrb[0].mxu0 %v2055
        %v2184 = vpop.f32.mrb[0].mxu0
        %v2185 = vadd.f32 0.0, %v2184
        %v2186 = vpop.f32.mrb[0].mxu0
        %v2187 = vpop.f32.mrb[0].mxu0
        %v2188 = vadd.f32 0.0, %v2187
        %v2189 = vpop.f32.mrb[0].mxu0
        %2190 = vmatprep.mubr.bf16.mxu0 0
        %2191 = vmatmul.mubr.bf16.gmra.mrb[0].mxu0 %v2056
        %v2192 = vpop.f32.mrb[0].mxu0
        %v2193 = vadd.f32 0.0, %v2192
        %v2194 = vpop.f32.mrb[0].mxu0
        %v2195 = vpop.f32.mrb[0].mxu0
        %v2196 = vadd.f32 0.0, %v2195
        %v2197 = vpop.f32.mrb[0].mxu0
        %2198 = vmatprep.mubr.bf16.mxu0 0
        %2199 = vmatmul.mubr.bf16.gmra.mrb[0].mxu0 %v2057
        %v2200 = vpop.f32.mrb[0].mxu0
        %v2201 = vadd.f32 0.0, %v2200
        %v2202 = vpop.f32.mrb[0].mxu0
        %v2203 = vpop.f32.mrb[0].mxu0
        %v2204 = vadd.f32 0.0, %v2203
        %v2205 = vpop.f32.mrb[0].mxu0
        %2206 = vmatprep.mubr.bf16.mxu0 0
        %2207 = vmatmul.mubr.bf16.gmra.mrb[0].mxu0 %v2058
        %v2208 = vpop.f32.mrb[0].mxu0
        %v2209 = vadd.f32 0.0, %v2208
        %v2210 = vpop.f32.mrb[0].mxu0
        %v2211 = vpop.f32.mrb[0].mxu0
        %v2212 = vadd.f32 0.0, %v2211
        %v2213 = vpop.f32.mrb[0].mxu0
        %2214 = vmatprep.mubr.bf16.mxu0 0
        %2215 = vmatmul.mubr.bf16.gmra.mrb[0].mxu0 %v2059
        %v2216 = vpop.f32.mrb[0].mxu0
        %v2217 = vadd.f32 0.0, %v2216
        %v2218 = vpop.f32.mrb[0].mxu0
        %v2219 = vpop.f32.mrb[0].mxu0
        %v2220 = vadd.f32 0.0, %v2219
        %v2221 = vpop.f32.mrb[0].mxu0
        %2222 = vmatprep.mubr.bf16.mxu0 0
        %2223 = vmatmul.mubr.bf16.gmra.mrb[0].mxu0 %v2060
        %v2224 = vpop.f32.mrb[0].mxu0
        %v2225 = vadd.f32 0.0, %v2224
        %v2226 = vpop.f32.mrb[0].mxu0
        %v2227 = vpop.f32.mrb[0].mxu0
        %v2228 = vadd.f32 0.0, %v2227
        %v2229 = vpop.f32.mrb[0].mxu0
        %2230 = vmatprep.mubr.bf16.mxu0 0
        %2231 = vmatmul.mubr.bf16.gmra.mrb[0].mxu0 %v2061
        %v2232 = vpop.f32.mrb[0].mxu0
        %v2233 = vadd.f32 0.0, %v2232
        %v2234 = vpop.f32.mrb[0].mxu0
        %v2235 = vpop.f32.mrb[0].mxu0
        %v2236 = vadd.f32 0.0, %v2235
        %v2237 = vpop.f32.mrb[0].mxu0
        %2238 = vmatprep.mubr.bf16.mxu0 0
        %2239 = vmatmul.mubr.bf16.gmra.mrb[0].mxu0 %v2062
        %v2240 = vpop.f32.mrb[0].mxu0
        %v2241 = vadd.f32 0.0, %v2240
        %v2242 = vpop.f32.mrb[0].mxu0
        %v2243 = vpop.f32.mrb[0].mxu0
        %v2244 = vadd.f32 0.0, %v2243
        %v2245 = vpop.f32.mrb[0].mxu0
        %2246 = vmatprep.mubr.bf16.mxu0 0
        %2247 = vmatmul.mubr.bf16.gmra.mrb[0].mxu0 %v2063
        %v2248 = vpop.f32.mrb[0].mxu0
        %v2249 = vadd.f32 0.0, %v2248
        %v2250 = vpop.f32.mrb[0].mxu0
        %v2251 = vpop.f32.mrb[0].mxu0
        %v2252 = vadd.f32 0.0, %v2251
        %v2253 = vpop.f32.mrb[0].mxu0
        %2254 = vmatprep.mubr.bf16.mxu0 0
        %2255 = vmatmul.mubr.bf16.gmra.mrb[0].mxu0 %v2064
        %v2256 = vpop.f32.mrb[0].mxu0
        %v2257 = vadd.f32 0.0, %v2256
        %v2258 = vpop.f32.mrb[0].mxu0
        %v2259 = vpop.f32.mrb[0].mxu0
        %v2260 = vadd.f32 0.0, %v2259
        %v2261 = vpop.f32.mrb[0].mxu0
        %2262 = vmatprep.mubr.bf16.mxu0 0
        %2263 = vmatmul.mubr.bf16.gmra.mrb[0].mxu0 %v2065
        %v2264 = vpop.f32.mrb[0].mxu0
        %v2265 = vadd.f32 0.0, %v2264
        %v2266 = vpop.f32.mrb[0].mxu0
        %v2267 = vpop.f32.mrb[0].mxu0
        %v2268 = vadd.f32 0.0, %v2267
        %v2269 = vpop.f32.mrb[0].mxu0
        %2270 = vmatprep.mubr.bf16.mxu0 0
        %2271 = vmatmul.mubr.bf16.gmra.mrb[0].mxu0 %v2066
        %v2272 = vpop.f32.mrb[0].mxu0
        %v2273 = vadd.f32 0.0, %v2272
        %v2274 = vpop.f32.mrb[0].mxu0
        %v2275 = vpop.f32.mrb[0].mxu0
        %v2276 = vadd.f32 0.0, %v2275
        %v2277 = vpop.f32.mrb[0].mxu0
        %2278 = vmatprep.mubr.bf16.mxu0 0
        %2279 = vmatmul.mubr.bf16.gmra.mrb[0].mxu0 %v2067
        %v2280 = vpop.f32.mrb[0].mxu0
        %v2281 = vadd.f32 0.0, %v2280
        %v2282 = vpop.f32.mrb[0].mxu0
        %v2283 = vpop.f32.mrb[0].mxu0
        %v2284 = vadd.f32 0.0, %v2283
        %v2285 = vpop.f32.mrb[0].mxu0
        %2286 = vmatprep.mubr.bf16.mxu0 0
        %2287 = vmatmul.mubr.bf16.gmra.mrb[0].mxu0 %v2068
        %v2288 = vpop.f32.mrb[0].mxu0
        %v2289 = vadd.f32 0.0, %v2288
        %v2290 = vpop.f32.mrb[0].mxu0
        %v2291 = vpop.f32.mrb[0].mxu0
        %v2292 = vadd.f32 0.0, %v2291
        %v2293 = vpop.f32.mrb[0].mxu0
        %2294 = vdwg.mxu0
        %v2295 = vadd.f32 %v1989, %v2169
        %v2296 = vadd.f32 %v1990, %v2172
        %v2297 = vadd.f32 %v1991, %v2177
        %v2298 = vadd.f32 %v1992, %v2180
        %v2299 = vadd.f32 %v1993, %v2185
        %v2300 = vadd.f32 %v1994, %v2188
        %v2301 = vadd.f32 %v1995, %v2193
        %v2302 = vadd.f32 %v1996, %v2196
        %v2303 = vadd.f32 %v1997, %v2201
        %v2304 = vadd.f32 %v1998, %v2204
        %v2305 = vadd.f32 %v1999, %v2209
        %v2306 = vadd.f32 %v2000, %v2212
        %v2307 = vadd.f32 %v2001, %v2217
        %v2308 = vadd.f32 %v2002, %v2220
        %v2309 = vadd.f32 %v2003, %v2225
        %v2310 = vadd.f32 %v2004, %v2228
        %v2311 = vadd.f32 %v2005, %v2233
        %v2312 = vadd.f32 %v2006, %v2236
        %v2313 = vadd.f32 %v2007, %v2241
        %v2314 = vadd.f32 %v2008, %v2244
        %v2315 = vadd.f32 %v2009, %v2249
        %v2316 = vadd.f32 %v2010, %v2252
        %v2317 = vadd.f32 %v2011, %v2257
        %v2318 = vadd.f32 %v2012, %v2260
        %v2319 = vadd.f32 %v2013, %v2265
        %v2320 = vadd.f32 %v2014, %v2268
        %v2321 = vadd.f32 %v2015, %v2273
        %v2322 = vadd.f32 %v2016, %v2276
        %v2323 = vadd.f32 %v2017, %v2281
        %v2324 = vadd.f32 %v2018, %v2284
        %v2325 = vadd.f32 %v2019, %v2289
        %v2326 = vadd.f32 %v2020, %v2292
        %s2327 = scalar_lea.vmem [#allocation2], 64
        %v2328 = vld [vmem:[%s2327 + $0x7] sm:$0xff]
        %v2329 = vld [vmem:[%s2327 + $0xf] sm:$0xff]
        %v2330 = vld [vmem:[%s2327 + $0x27] sm:$0xff]
        %v2331 = vld [vmem:[%s2327 + $0x2f] sm:$0xff]
        %v2332 = vld [vmem:[%s2327 + $0x47] sm:$0xff]
        %v2333 = vld [vmem:[%s2327 + $0x4f] sm:$0xff]
        %v2334 = vld [vmem:[%s2327 + $0x67] sm:$0xff]
        %v2335 = vld [vmem:[%s2327 + $0x6f] sm:$0xff]
        %v2336 = vld [vmem:[%s2327 + $0x87] sm:$0xff]
        %v2337 = vld [vmem:[%s2327 + $0x8f] sm:$0xff]
        %v2338 = vld [vmem:[%s2327 + $0xa7] sm:$0xff]
        %v2339 = vld [vmem:[%s2327 + $0xaf] sm:$0xff]
        %v2340 = vld [vmem:[%s2327 + $0xc7] sm:$0xff]
        %v2341 = vld [vmem:[%s2327 + $0xcf] sm:$0xff]
        %v2342 = vld [vmem:[%s2327 + $0xe7] sm:$0xff]
        %v2343 = vld [vmem:[%s2327 + $0xef] sm:$0xff]
        %v2344 = vld [vmem:[%s2327 + $0x107] sm:$0xff]
        %v2345 = vld [vmem:[%s2327 + $0x10f] sm:$0xff]
        %v2346 = vld [vmem:[%s2327 + $0x127] sm:$0xff]
        %v2347 = vld [vmem:[%s2327 + $0x12f] sm:$0xff]
        %v2348 = vld [vmem:[%s2327 + $0x147] sm:$0xff]
        %v2349 = vld [vmem:[%s2327 + $0x14f] sm:$0xff]
        %v2350 = vld [vmem:[%s2327 + $0x167] sm:$0xff]
        %v2351 = vld [vmem:[%s2327 + $0x16f] sm:$0xff]
        %v2352 = vld [vmem:[%s2327 + $0x187] sm:$0xff]
        %v2353 = vld [vmem:[%s2327 + $0x18f] sm:$0xff]
        %v2354 = vld [vmem:[%s2327 + $0x1a7] sm:$0xff]
        %v2355 = vld [vmem:[%s2327 + $0x1af] sm:$0xff]
        %v2356 = vld [vmem:[%s2327 + $0x1c7] sm:$0xff]
        %v2357 = vld [vmem:[%s2327 + $0x1cf] sm:$0xff]
        %v2358 = vld [vmem:[%s2327 + $0x1e7] sm:$0xff]
        %v2359 = vld [vmem:[%s2327 + $0x1ef] sm:$0xff]
        %v2360 = vpack.c.bf16 %v2329, %v2328
        %v2361 = vpack.c.bf16 %v2331, %v2330
        %v2362 = vpack.c.bf16 %v2333, %v2332
        %v2363 = vpack.c.bf16 %v2335, %v2334
        %v2364 = vpack.c.bf16 %v2337, %v2336
        %v2365 = vpack.c.bf16 %v2339, %v2338
        %v2366 = vpack.c.bf16 %v2341, %v2340
        %v2367 = vpack.c.bf16 %v2343, %v2342
        %v2368 = vpack.c.bf16 %v2345, %v2344
        %v2369 = vpack.c.bf16 %v2347, %v2346
        %v2370 = vpack.c.bf16 %v2349, %v2348
        %v2371 = vpack.c.bf16 %v2351, %v2350
        %v2372 = vpack.c.bf16 %v2353, %v2352
        %v2373 = vpack.c.bf16 %v2355, %v2354
        %v2374 = vpack.c.bf16 %v2357, %v2356
        %v2375 = vpack.c.bf16 %v2359, %v2358
        %s2376 = scalar_lea.vmem %s1, 384
        %v2377 = vld [vmem:[%s2376] sm:$0xf]
        %v2378 = vld [vmem:[%s2376 + $0x4] sm:$0xf]
        %v2379 = vld [vmem:[%s2376 + $0x8] sm:$0xf]
        %v2380 = vld [vmem:[%s2376 + $0xc] sm:$0xf]
        %v2381 = vld [vmem:[%s2376 + $0x10] sm:$0xf]
        %v2382 = vld [vmem:[%s2376 + $0x14] sm:$0xf]
        %v2383 = vld [vmem:[%s2376 + $0x18] sm:$0xf]
        %v2384 = vld [vmem:[%s2376 + $0x1c] sm:$0xf]
        %v2385 = vld [vmem:[%s2376 + $0x20] sm:$0xf]
        %v2386 = vld [vmem:[%s2376 + $0x24] sm:$0xf]
        %v2387 = vld [vmem:[%s2376 + $0x28] sm:$0xf]
        %v2388 = vld [vmem:[%s2376 + $0x2c] sm:$0xf]
        %v2389 = vld [vmem:[%s2376 + $0x30] sm:$0xf]
        %v2390 = vld [vmem:[%s2376 + $0x34] sm:$0xf]
        %v2391 = vld [vmem:[%s2376 + $0x38] sm:$0xf]
        %v2392 = vld [vmem:[%s2376 + $0x3c] sm:$0xf]
        %v2409 = vunpack.c.l.b16 %v2377
        %v2410 = vunpack.c.l.b16 %v2378
        %v2411 = vunpack.c.l.b16 %v2379
        %v2412 = vunpack.c.l.b16 %v2380
        %v2413 = vunpack.c.l.b16 %v2381
        %v2414 = vunpack.c.l.b16 %v2382
        %v2415 = vunpack.c.l.b16 %v2383
        %v2416 = vunpack.c.l.b16 %v2384
        %v2417 = vunpack.c.l.b16 %v2385
        %v2418 = vunpack.c.l.b16 %v2386
        %v2419 = vunpack.c.l.b16 %v2387
        %v2420 = vunpack.c.l.b16 %v2388
        %v2421 = vunpack.c.l.b16 %v2389
        %v2422 = vunpack.c.l.b16 %v2390
        %v2423 = vunpack.c.l.b16 %v2391
        %v2424 = vunpack.c.l.b16 %v2392
        %v2425 = vpack.c.b16 %v2410, %v2409
        %v2426 = vpack.c.b16 %v2412, %v2411
        %v2427 = vpack.c.b16 %v2414, %v2413
        %v2428 = vpack.c.b16 %v2416, %v2415
        %v2429 = vpack.c.b16 %v2418, %v2417
        %v2430 = vpack.c.b16 %v2420, %v2419
        %v2431 = vpack.c.b16 %v2422, %v2421
        %v2432 = vpack.c.b16 %v2424, %v2423
        %2441 = vmatprep.subr.bf16.mxu0 0
        %2442 = vmatpush1.bf16.msra.mxu0 %v2425
        %2443 = vmatprep.subr.bf16.mxu0 0
        %2444 = vmatpush1.bf16.msra.mxu0 %v2426
        %2445 = vmatprep.subr.bf16.mxu0 0
        %2446 = vmatpush1.bf16.msra.mxu0 %v2427
        %2447 = vmatprep.subr.bf16.mxu0 0
        %2448 = vmatpush1.bf16.msra.mxu0 %v2428
        %2449 = vmatprep.subr.bf16.mxu0 0
        %2450 = vmatpush1.bf16.msra.mxu0 %v2429
        %2451 = vmatprep.subr.bf16.mxu0 0
        %2452 = vmatpush1.bf16.msra.mxu0 %v2430
        %2453 = vmatprep.subr.bf16.mxu0 0
        %2454 = vmatpush1.bf16.msra.mxu0 %v2431
        %2455 = vmatprep.subr.bf16.mxu0 0
        %2456 = vmatpush1.bf16.msra.mxu0 %v2432
        %2457 = vmatprep.subr.bf16.mxu0 0
        %2458 = vmatpush1.bf16.msra.mxu0 0
        %2459 = vmatprep.subr.bf16.mxu0 0
        %2460 = vmatpush1.bf16.msra.mxu0 0
        %2461 = vmatprep.subr.bf16.mxu0 0
        %2462 = vmatpush1.bf16.msra.mxu0 0
        %2463 = vmatprep.subr.bf16.mxu0 0
        %2464 = vmatpush1.bf16.msra.mxu0 0
        %2465 = vmatprep.subr.bf16.mxu0 0
        %2466 = vmatpush1.bf16.msra.mxu0 0
        %2467 = vmatprep.subr.bf16.mxu0 0
        %2468 = vmatpush1.bf16.msra.mxu0 0
        %2469 = vmatprep.subr.bf16.mxu0 0
        %2470 = vmatpush1.bf16.msra.mxu0 0
        %2471 = vmatprep.subr.bf16.mxu0 0
        %2472 = vmatpush1.bf16.msra.mxu0 0
        %2473 = vmatprep.mubr.bf16.mxu0 0
        %2474 = vmatmul.mubr.bf16.gmra.mrb[0].mxu0 %v2360
        %v2475 = vpop.f32.mrb[0].mxu0
        %v2476 = vadd.f32 0.0, %v2475
        %v2477 = vpop.f32.mrb[0].mxu0
        %v2478 = vpop.f32.mrb[0].mxu0
        %v2479 = vadd.f32 0.0, %v2478
        %v2480 = vpop.f32.mrb[0].mxu0
        %2481 = vmatprep.mubr.bf16.mxu0 0
        %2482 = vmatmul.mubr.bf16.gmra.mrb[0].mxu0 %v2361
        %v2483 = vpop.f32.mrb[0].mxu0
        %v2484 = vadd.f32 0.0, %v2483
        %v2485 = vpop.f32.mrb[0].mxu0
        %v2486 = vpop.f32.mrb[0].mxu0
        %v2487 = vadd.f32 0.0, %v2486
        %v2488 = vpop.f32.mrb[0].mxu0
        %2489 = vmatprep.mubr.bf16.mxu0 0
        %2490 = vmatmul.mubr.bf16.gmra.mrb[0].mxu0 %v2362
        %v2491 = vpop.f32.mrb[0].mxu0
        %v2492 = vadd.f32 0.0, %v2491
        %v2493 = vpop.f32.mrb[0].mxu0
        %v2494 = vpop.f32.mrb[0].mxu0
        %v2495 = vadd.f32 0.0, %v2494
        %v2496 = vpop.f32.mrb[0].mxu0
        %2497 = vmatprep.mubr.bf16.mxu0 0
        %2498 = vmatmul.mubr.bf16.gmra.mrb[0].mxu0 %v2363
        %v2499 = vpop.f32.mrb[0].mxu0
        %v2500 = vadd.f32 0.0, %v2499
        %v2501 = vpop.f32.mrb[0].mxu0
        %v2502 = vpop.f32.mrb[0].mxu0
        %v2503 = vadd.f32 0.0, %v2502
        %v2504 = vpop.f32.mrb[0].mxu0
        %2505 = vmatprep.mubr.bf16.mxu0 0
        %2506 = vmatmul.mubr.bf16.gmra.mrb[0].mxu0 %v2364
        %v2507 = vpop.f32.mrb[0].mxu0
        %v2508 = vadd.f32 0.0, %v2507
        %v2509 = vpop.f32.mrb[0].mxu0
        %v2510 = vpop.f32.mrb[0].mxu0
        %v2511 = vadd.f32 0.0, %v2510
        %v2512 = vpop.f32.mrb[0].mxu0
        %2513 = vmatprep.mubr.bf16.mxu0 0
        %2514 = vmatmul.mubr.bf16.gmra.mrb[0].mxu0 %v2365
        %v2515 = vpop.f32.mrb[0].mxu0
        %v2516 = vadd.f32 0.0, %v2515
        %v2517 = vpop.f32.mrb[0].mxu0
        %v2518 = vpop.f32.mrb[0].mxu0
        %v2519 = vadd.f32 0.0, %v2518
        %v2520 = vpop.f32.mrb[0].mxu0
        %2521 = vmatprep.mubr.bf16.mxu0 0
        %2522 = vmatmul.mubr.bf16.gmra.mrb[0].mxu0 %v2366
        %v2523 = vpop.f32.mrb[0].mxu0
        %v2524 = vadd.f32 0.0, %v2523
        %v2525 = vpop.f32.mrb[0].mxu0
        %v2526 = vpop.f32.mrb[0].mxu0
        %v2527 = vadd.f32 0.0, %v2526
        %v2528 = vpop.f32.mrb[0].mxu0
        %2529 = vmatprep.mubr.bf16.mxu0 0
        %2530 = vmatmul.mubr.bf16.gmra.mrb[0].mxu0 %v2367
        %v2531 = vpop.f32.mrb[0].mxu0
        %v2532 = vadd.f32 0.0, %v2531
        %v2533 = vpop.f32.mrb[0].mxu0
        %v2534 = vpop.f32.mrb[0].mxu0
        %v2535 = vadd.f32 0.0, %v2534
        %v2536 = vpop.f32.mrb[0].mxu0
        %2537 = vmatprep.mubr.bf16.mxu0 0
        %2538 = vmatmul.mubr.bf16.gmra.mrb[0].mxu0 %v2368
        %v2539 = vpop.f32.mrb[0].mxu0
        %v2540 = vadd.f32 0.0, %v2539
        %v2541 = vpop.f32.mrb[0].mxu0
        %v2542 = vpop.f32.mrb[0].mxu0
        %v2543 = vadd.f32 0.0, %v2542
        %v2544 = vpop.f32.mrb[0].mxu0
        %2545 = vmatprep.mubr.bf16.mxu0 0
        %2546 = vmatmul.mubr.bf16.gmra.mrb[0].mxu0 %v2369
        %v2547 = vpop.f32.mrb[0].mxu0
        %v2548 = vadd.f32 0.0, %v2547
        %v2549 = vpop.f32.mrb[0].mxu0
        %v2550 = vpop.f32.mrb[0].mxu0
        %v2551 = vadd.f32 0.0, %v2550
        %v2552 = vpop.f32.mrb[0].mxu0
        %2553 = vmatprep.mubr.bf16.mxu0 0
        %2554 = vmatmul.mubr.bf16.gmra.mrb[0].mxu0 %v2370
        %v2555 = vpop.f32.mrb[0].mxu0
        %v2556 = vadd.f32 0.0, %v2555
        %v2557 = vpop.f32.mrb[0].mxu0
        %v2558 = vpop.f32.mrb[0].mxu0
        %v2559 = vadd.f32 0.0, %v2558
        %v2560 = vpop.f32.mrb[0].mxu0
        %2561 = vmatprep.mubr.bf16.mxu0 0
        %2562 = vmatmul.mubr.bf16.gmra.mrb[0].mxu0 %v2371
        %v2563 = vpop.f32.mrb[0].mxu0
        %v2564 = vadd.f32 0.0, %v2563
        %v2565 = vpop.f32.mrb[0].mxu0
        %v2566 = vpop.f32.mrb[0].mxu0
        %v2567 = vadd.f32 0.0, %v2566
        %v2568 = vpop.f32.mrb[0].mxu0
        %2569 = vmatprep.mubr.bf16.mxu0 0
        %2570 = vmatmul.mubr.bf16.gmra.mrb[0].mxu0 %v2372
        %v2571 = vpop.f32.mrb[0].mxu0
        %v2572 = vadd.f32 0.0, %v2571
        %v2573 = vpop.f32.mrb[0].mxu0
        %v2574 = vpop.f32.mrb[0].mxu0
        %v2575 = vadd.f32 0.0, %v2574
        %v2576 = vpop.f32.mrb[0].mxu0
        %2577 = vmatprep.mubr.bf16.mxu0 0
        %2578 = vmatmul.mubr.bf16.gmra.mrb[0].mxu0 %v2373
        %v2579 = vpop.f32.mrb[0].mxu0
        %v2580 = vadd.f32 0.0, %v2579
        %v2581 = vpop.f32.mrb[0].mxu0
        %v2582 = vpop.f32.mrb[0].mxu0
        %v2583 = vadd.f32 0.0, %v2582
        %v2584 = vpop.f32.mrb[0].mxu0
        %2585 = vmatprep.mubr.bf16.mxu0 0
        %2586 = vmatmul.mubr.bf16.gmra.mrb[0].mxu0 %v2374
        %v2587 = vpop.f32.mrb[0].mxu0
        %v2588 = vadd.f32 0.0, %v2587
        %v2589 = vpop.f32.mrb[0].mxu0
        %v2590 = vpop.f32.mrb[0].mxu0
        %v2591 = vadd.f32 0.0, %v2590
        %v2592 = vpop.f32.mrb[0].mxu0
        %2593 = vmatprep.mubr.bf16.mxu0 0
        %2594 = vmatmul.mubr.bf16.gmra.mrb[0].mxu0 %v2375
        %v2595 = vpop.f32.mrb[0].mxu0
        %v2596 = vadd.f32 0.0, %v2595
        %v2597 = vpop.f32.mrb[0].mxu0
        %v2598 = vpop.f32.mrb[0].mxu0
        %v2599 = vadd.f32 0.0, %v2598
        %v2600 = vpop.f32.mrb[0].mxu0
        %2601 = vdwg.mxu0
        %v2602 = vadd.f32 %v2295, %v2476
        %v2603 = vadd.f32 %v2296, %v2479
        %v2604 = vadd.f32 %v2297, %v2484
        %v2605 = vadd.f32 %v2298, %v2487
        %v2606 = vadd.f32 %v2299, %v2492
        %v2607 = vadd.f32 %v2300, %v2495
        %v2608 = vadd.f32 %v2301, %v2500
        %v2609 = vadd.f32 %v2302, %v2503
        %v2610 = vadd.f32 %v2303, %v2508
        %v2611 = vadd.f32 %v2304, %v2511
        %v2612 = vadd.f32 %v2305, %v2516
        %v2613 = vadd.f32 %v2306, %v2519
        %v2614 = vadd.f32 %v2307, %v2524
        %v2615 = vadd.f32 %v2308, %v2527
        %v2616 = vadd.f32 %v2309, %v2532
        %v2617 = vadd.f32 %v2310, %v2535
        %v2618 = vadd.f32 %v2311, %v2540
        %v2619 = vadd.f32 %v2312, %v2543
        %v2620 = vadd.f32 %v2313, %v2548
        %v2621 = vadd.f32 %v2314, %v2551
        %v2622 = vadd.f32 %v2315, %v2556
        %v2623 = vadd.f32 %v2316, %v2559
        %v2624 = vadd.f32 %v2317, %v2564
        %v2625 = vadd.f32 %v2318, %v2567
        %v2626 = vadd.f32 %v2319, %v2572
        %v2627 = vadd.f32 %v2320, %v2575
        %v2628 = vadd.f32 %v2321, %v2580
        %v2629 = vadd.f32 %v2322, %v2583
        %v2630 = vadd.f32 %v2323, %v2588
        %v2631 = vadd.f32 %v2324, %v2591
        %v2632 = vadd.f32 %v2325, %v2596
        %v2633 = vadd.f32 %v2326, %v2599
        %v2634 = vld [vmem:[%s2327 + $0x8] sm:$0xff]
        %v2635 = vld [vmem:[%s2327 + $0x10] sm:$0xff]
        %v2636 = vld [vmem:[%s2327 + $0x28] sm:$0xff]
        %v2637 = vld [vmem:[%s2327 + $0x30] sm:$0xff]
        %v2638 = vld [vmem:[%s2327 + $0x48] sm:$0xff]
        %v2639 = vld [vmem:[%s2327 + $0x50] sm:$0xff]
        %v2640 = vld [vmem:[%s2327 + $0x68] sm:$0xff]
        %v2641 = vld [vmem:[%s2327 + $0x70] sm:$0xff]
        %v2642 = vld [vmem:[%s2327 + $0x88] sm:$0xff]
        %v2643 = vld [vmem:[%s2327 + $0x90] sm:$0xff]
        %v2644 = vld [vmem:[%s2327 + $0xa8] sm:$0xff]
        %v2645 = vld [vmem:[%s2327 + $0xb0] sm:$0xff]
        %v2646 = vld [vmem:[%s2327 + $0xc8] sm:$0xff]
        %v2647 = vld [vmem:[%s2327 + $0xd0] sm:$0xff]
        %v2648 = vld [vmem:[%s2327 + $0xe8] sm:$0xff]
        %v2649 = vld [vmem:[%s2327 + $0xf0] sm:$0xff]
        %v2650 = vld [vmem:[%s2327 + $0x108] sm:$0xff]
        %v2651 = vld [vmem:[%s2327 + $0x110] sm:$0xff]
        %v2652 = vld [vmem:[%s2327 + $0x128] sm:$0xff]
        %v2653 = vld [vmem:[%s2327 + $0x130] sm:$0xff]
        %v2654 = vld [vmem:[%s2327 + $0x148] sm:$0xff]
        %v2655 = vld [vmem:[%s2327 + $0x150] sm:$0xff]
        %v2656 = vld [vmem:[%s2327 + $0x168] sm:$0xff]
        %v2657 = vld [vmem:[%s2327 + $0x170] sm:$0xff]
        %v2658 = vld [vmem:[%s2327 + $0x188] sm:$0xff]
        %v2659 = vld [vmem:[%s2327 + $0x190] sm:$0xff]
        %v2660 = vld [vmem:[%s2327 + $0x1a8] sm:$0xff]
        %v2661 = vld [vmem:[%s2327 + $0x1b0] sm:$0xff]
        %v2662 = vld [vmem:[%s2327 + $0x1c8] sm:$0xff]
        %v2663 = vld [vmem:[%s2327 + $0x1d0] sm:$0xff]
        %v2664 = vld [vmem:[%s2327 + $0x1e8] sm:$0xff]
        %v2665 = vld [vmem:[%s2327 + $0x1f0] sm:$0xff]
        %v2666 = vpack.c.bf16 %v2635, %v2634
        %v2667 = vpack.c.bf16 %v2637, %v2636
        %v2668 = vpack.c.bf16 %v2639, %v2638
        %v2669 = vpack.c.bf16 %v2641, %v2640
        %v2670 = vpack.c.bf16 %v2643, %v2642
        %v2671 = vpack.c.bf16 %v2645, %v2644
        %v2672 = vpack.c.bf16 %v2647, %v2646
        %v2673 = vpack.c.bf16 %v2649, %v2648
        %v2674 = vpack.c.bf16 %v2651, %v2650
        %v2675 = vpack.c.bf16 %v2653, %v2652
        %v2676 = vpack.c.bf16 %v2655, %v2654
        %v2677 = vpack.c.bf16 %v2657, %v2656
        %v2678 = vpack.c.bf16 %v2659, %v2658
        %v2679 = vpack.c.bf16 %v2661, %v2660
        %v2680 = vpack.c.bf16 %v2663, %v2662
        %v2681 = vpack.c.bf16 %v2665, %v2664
        %s2682 = scalar_lea.vmem %s1, 448
        %v2683 = vld [vmem:[%s2682] sm:$0xf]
        %v2684 = vld [vmem:[%s2682 + $0x4] sm:$0xf]
        %v2685 = vld [vmem:[%s2682 + $0x8] sm:$0xf]
        %v2686 = vld [vmem:[%s2682 + $0xc] sm:$0xf]
        %v2687 = vld [vmem:[%s2682 + $0x10] sm:$0xf]
        %v2688 = vld [vmem:[%s2682 + $0x14] sm:$0xf]
        %v2689 = vld [vmem:[%s2682 + $0x18] sm:$0xf]
        %v2690 = vld [vmem:[%s2682 + $0x1c] sm:$0xf]
        %v2691 = vld [vmem:[%s2682 + $0x20] sm:$0xf]
        %v2692 = vld [vmem:[%s2682 + $0x24] sm:$0xf]
        %v2693 = vld [vmem:[%s2682 + $0x28] sm:$0xf]
        %v2694 = vld [vmem:[%s2682 + $0x2c] sm:$0xf]
        %v2695 = vld [vmem:[%s2682 + $0x30] sm:$0xf]
        %v2696 = vld [vmem:[%s2682 + $0x34] sm:$0xf]
        %v2697 = vld [vmem:[%s2682 + $0x38] sm:$0xf]
        %v2698 = vld [vmem:[%s2682 + $0x3c] sm:$0xf]
        %v2715 = vunpack.c.l.b16 %v2683
        %v2716 = vunpack.c.l.b16 %v2684
        %v2717 = vunpack.c.l.b16 %v2685
        %v2718 = vunpack.c.l.b16 %v2686
        %v2719 = vunpack.c.l.b16 %v2687
        %v2720 = vunpack.c.l.b16 %v2688
        %v2721 = vunpack.c.l.b16 %v2689
        %v2722 = vunpack.c.l.b16 %v2690
        %v2723 = vunpack.c.l.b16 %v2691
        %v2724 = vunpack.c.l.b16 %v2692
        %v2725 = vunpack.c.l.b16 %v2693
        %v2726 = vunpack.c.l.b16 %v2694
        %v2727 = vunpack.c.l.b16 %v2695
        %v2728 = vunpack.c.l.b16 %v2696
        %v2729 = vunpack.c.l.b16 %v2697
        %v2730 = vunpack.c.l.b16 %v2698
        %v2731 = vpack.c.b16 %v2716, %v2715
        %v2732 = vpack.c.b16 %v2718, %v2717
        %v2733 = vpack.c.b16 %v2720, %v2719
        %v2734 = vpack.c.b16 %v2722, %v2721
        %v2735 = vpack.c.b16 %v2724, %v2723
        %v2736 = vpack.c.b16 %v2726, %v2725
        %v2737 = vpack.c.b16 %v2728, %v2727
        %v2738 = vpack.c.b16 %v2730, %v2729
        %2747 = vmatprep.subr.bf16.mxu0 0
        %2748 = vmatpush1.bf16.msra.mxu0 %v2731
        %2749 = vmatprep.subr.bf16.mxu0 0
        %2750 = vmatpush1.bf16.msra.mxu0 %v2732
        %2751 = vmatprep.subr.bf16.mxu0 0
        %2752 = vmatpush1.bf16.msra.mxu0 %v2733
        %2753 = vmatprep.subr.bf16.mxu0 0
        %2754 = vmatpush1.bf16.msra.mxu0 %v2734
        %2755 = vmatprep.subr.bf16.mxu0 0
        %2756 = vmatpush1.bf16.msra.mxu0 %v2735
        %2757 = vmatprep.subr.bf16.mxu0 0
        %2758 = vmatpush1.bf16.msra.mxu0 %v2736
        %2759 = vmatprep.subr.bf16.mxu0 0
        %2760 = vmatpush1.bf16.msra.mxu0 %v2737
        %2761 = vmatprep.subr.bf16.mxu0 0
        %2762 = vmatpush1.bf16.msra.mxu0 %v2738
        %2763 = vmatprep.subr.bf16.mxu0 0
        %2764 = vmatpush1.bf16.msra.mxu0 0
        %2765 = vmatprep.subr.bf16.mxu0 0
        %2766 = vmatpush1.bf16.msra.mxu0 0
        %2767 = vmatprep.subr.bf16.mxu0 0
        %2768 = vmatpush1.bf16.msra.mxu0 0
        %2769 = vmatprep.subr.bf16.mxu0 0
        %2770 = vmatpush1.bf16.msra.mxu0 0
        %2771 = vmatprep.subr.bf16.mxu0 0
        %2772 = vmatpush1.bf16.msra.mxu0 0
        %2773 = vmatprep.subr.bf16.mxu0 0
        %2774 = vmatpush1.bf16.msra.mxu0 0
        %2775 = vmatprep.subr.bf16.mxu0 0
        %2776 = vmatpush1.bf16.msra.mxu0 0
        %2777 = vmatprep.subr.bf16.mxu0 0
        %2778 = vmatpush1.bf16.msra.mxu0 0
        %2779 = vmatprep.mubr.bf16.mxu0 0
        %2780 = vmatmul.mubr.bf16.gmra.mrb[0].mxu0 %v2666
        %v2781 = vpop.f32.mrb[0].mxu0
        %v2782 = vadd.f32 0.0, %v2781
        %v2783 = vpop.f32.mrb[0].mxu0
        %v2784 = vpop.f32.mrb[0].mxu0
        %v2785 = vadd.f32 0.0, %v2784
        %v2786 = vpop.f32.mrb[0].mxu0
        %2787 = vmatprep.mubr.bf16.mxu0 0
        %2788 = vmatmul.mubr.bf16.gmra.mrb[0].mxu0 %v2667
        %v2789 = vpop.f32.mrb[0].mxu0
        %v2790 = vadd.f32 0.0, %v2789
        %v2791 = vpop.f32.mrb[0].mxu0
        %v2792 = vpop.f32.mrb[0].mxu0
        %v2793 = vadd.f32 0.0, %v2792
        %v2794 = vpop.f32.mrb[0].mxu0
        %2795 = vmatprep.mubr.bf16.mxu0 0
        %2796 = vmatmul.mubr.bf16.gmra.mrb[0].mxu0 %v2668
        %v2797 = vpop.f32.mrb[0].mxu0
        %v2798 = vadd.f32 0.0, %v2797
        %v2799 = vpop.f32.mrb[0].mxu0
        %v2800 = vpop.f32.mrb[0].mxu0
        %v2801 = vadd.f32 0.0, %v2800
        %v2802 = vpop.f32.mrb[0].mxu0
        %2803 = vmatprep.mubr.bf16.mxu0 0
        %2804 = vmatmul.mubr.bf16.gmra.mrb[0].mxu0 %v2669
        %v2805 = vpop.f32.mrb[0].mxu0
        %v2806 = vadd.f32 0.0, %v2805
        %v2807 = vpop.f32.mrb[0].mxu0
        %v2808 = vpop.f32.mrb[0].mxu0
        %v2809 = vadd.f32 0.0, %v2808
        %v2810 = vpop.f32.mrb[0].mxu0
        %2811 = vmatprep.mubr.bf16.mxu0 0
        %2812 = vmatmul.mubr.bf16.gmra.mrb[0].mxu0 %v2670
        %v2813 = vpop.f32.mrb[0].mxu0
        %v2814 = vadd.f32 0.0, %v2813
        %v2815 = vpop.f32.mrb[0].mxu0
        %v2816 = vpop.f32.mrb[0].mxu0
        %v2817 = vadd.f32 0.0, %v2816
        %v2818 = vpop.f32.mrb[0].mxu0
        %2819 = vmatprep.mubr.bf16.mxu0 0
        %2820 = vmatmul.mubr.bf16.gmra.mrb[0].mxu0 %v2671
        %v2821 = vpop.f32.mrb[0].mxu0
        %v2822 = vadd.f32 0.0, %v2821
        %v2823 = vpop.f32.mrb[0].mxu0
        %v2824 = vpop.f32.mrb[0].mxu0
        %v2825 = vadd.f32 0.0, %v2824
        %v2826 = vpop.f32.mrb[0].mxu0
        %2827 = vmatprep.mubr.bf16.mxu0 0
        %2828 = vmatmul.mubr.bf16.gmra.mrb[0].mxu0 %v2672
        %v2829 = vpop.f32.mrb[0].mxu0
        %v2830 = vadd.f32 0.0, %v2829
        %v2831 = vpop.f32.mrb[0].mxu0
        %v2832 = vpop.f32.mrb[0].mxu0
        %v2833 = vadd.f32 0.0, %v2832
        %v2834 = vpop.f32.mrb[0].mxu0
        %2835 = vmatprep.mubr.bf16.mxu0 0
        %2836 = vmatmul.mubr.bf16.gmra.mrb[0].mxu0 %v2673
        %v2837 = vpop.f32.mrb[0].mxu0
        %v2838 = vadd.f32 0.0, %v2837
        %v2839 = vpop.f32.mrb[0].mxu0
        %v2840 = vpop.f32.mrb[0].mxu0
        %v2841 = vadd.f32 0.0, %v2840
        %v2842 = vpop.f32.mrb[0].mxu0
        %2843 = vmatprep.mubr.bf16.mxu0 0
        %2844 = vmatmul.mubr.bf16.gmra.mrb[0].mxu0 %v2674
        %v2845 = vpop.f32.mrb[0].mxu0
        %v2846 = vadd.f32 0.0, %v2845
        %v2847 = vpop.f32.mrb[0].mxu0
        %v2848 = vpop.f32.mrb[0].mxu0
        %v2849 = vadd.f32 0.0, %v2848
        %v2850 = vpop.f32.mrb[0].mxu0
        %2851 = vmatprep.mubr.bf16.mxu0 0
        %2852 = vmatmul.mubr.bf16.gmra.mrb[0].mxu0 %v2675
        %v2853 = vpop.f32.mrb[0].mxu0
        %v2854 = vadd.f32 0.0, %v2853
        %v2855 = vpop.f32.mrb[0].mxu0
        %v2856 = vpop.f32.mrb[0].mxu0
        %v2857 = vadd.f32 0.0, %v2856
        %v2858 = vpop.f32.mrb[0].mxu0
        %2859 = vmatprep.mubr.bf16.mxu0 0
        %2860 = vmatmul.mubr.bf16.gmra.mrb[0].mxu0 %v2676
        %v2861 = vpop.f32.mrb[0].mxu0
        %v2862 = vadd.f32 0.0, %v2861
        %v2863 = vpop.f32.mrb[0].mxu0
        %v2864 = vpop.f32.mrb[0].mxu0
        %v2865 = vadd.f32 0.0, %v2864
        %v2866 = vpop.f32.mrb[0].mxu0
        %2867 = vmatprep.mubr.bf16.mxu0 0
        %2868 = vmatmul.mubr.bf16.gmra.mrb[0].mxu0 %v2677
        %v2869 = vpop.f32.mrb[0].mxu0
        %v2870 = vadd.f32 0.0, %v2869
        %v2871 = vpop.f32.mrb[0].mxu0
        %v2872 = vpop.f32.mrb[0].mxu0
        %v2873 = vadd.f32 0.0, %v2872
        %v2874 = vpop.f32.mrb[0].mxu0
        %2875 = vmatprep.mubr.bf16.mxu0 0
        %2876 = vmatmul.mubr.bf16.gmra.mrb[0].mxu0 %v2678
        %v2877 = vpop.f32.mrb[0].mxu0
        %v2878 = vadd.f32 0.0, %v2877
        %v2879 = vpop.f32.mrb[0].mxu0
        %v2880 = vpop.f32.mrb[0].mxu0
        %v2881 = vadd.f32 0.0, %v2880
        %v2882 = vpop.f32.mrb[0].mxu0
        %2883 = vmatprep.mubr.bf16.mxu0 0
        %2884 = vmatmul.mubr.bf16.gmra.mrb[0].mxu0 %v2679
        %v2885 = vpop.f32.mrb[0].mxu0
        %v2886 = vadd.f32 0.0, %v2885
        %v2887 = vpop.f32.mrb[0].mxu0
        %v2888 = vpop.f32.mrb[0].mxu0
        %v2889 = vadd.f32 0.0, %v2888
        %v2890 = vpop.f32.mrb[0].mxu0
        %2891 = vmatprep.mubr.bf16.mxu0 0
        %2892 = vmatmul.mubr.bf16.gmra.mrb[0].mxu0 %v2680
        %v2893 = vpop.f32.mrb[0].mxu0
        %v2894 = vadd.f32 0.0, %v2893
        %v2895 = vpop.f32.mrb[0].mxu0
        %v2896 = vpop.f32.mrb[0].mxu0
        %v2897 = vadd.f32 0.0, %v2896
        %v2898 = vpop.f32.mrb[0].mxu0
        %2899 = vmatprep.mubr.bf16.mxu0 0
        %2900 = vmatmul.mubr.bf16.gmra.mrb[0].mxu0 %v2681
        %v2901 = vpop.f32.mrb[0].mxu0
        %v2902 = vadd.f32 0.0, %v2901
        %v2903 = vpop.f32.mrb[0].mxu0
        %v2904 = vpop.f32.mrb[0].mxu0
        %v2905 = vadd.f32 0.0, %v2904
        %v2906 = vpop.f32.mrb[0].mxu0
        %2907 = vdwg.mxu0
        %v2908 = vadd.f32 %v2602, %v2782
        %v2909 = vadd.f32 %v2603, %v2785
        %v2910 = vadd.f32 %v2604, %v2790
        %v2911 = vadd.f32 %v2605, %v2793
        %v2912 = vadd.f32 %v2606, %v2798
        %v2913 = vadd.f32 %v2607, %v2801
        %v2914 = vadd.f32 %v2608, %v2806
        %v2915 = vadd.f32 %v2609, %v2809
        %v2916 = vadd.f32 %v2610, %v2814
        %v2917 = vadd.f32 %v2611, %v2817
        %v2918 = vadd.f32 %v2612, %v2822
        %v2919 = vadd.f32 %v2613, %v2825
        %v2920 = vadd.f32 %v2614, %v2830
        %v2921 = vadd.f32 %v2615, %v2833
        %v2922 = vadd.f32 %v2616, %v2838
        %v2923 = vadd.f32 %v2617, %v2841
        %v2924 = vadd.f32 %v2618, %v2846
        %v2925 = vadd.f32 %v2619, %v2849
        %v2926 = vadd.f32 %v2620, %v2854
        %v2927 = vadd.f32 %v2621, %v2857
        %v2928 = vadd.f32 %v2622, %v2862
        %v2929 = vadd.f32 %v2623, %v2865
        %v2930 = vadd.f32 %v2624, %v2870
        %v2931 = vadd.f32 %v2625, %v2873
        %v2932 = vadd.f32 %v2626, %v2878
        %v2933 = vadd.f32 %v2627, %v2881
        %v2934 = vadd.f32 %v2628, %v2886
        %v2935 = vadd.f32 %v2629, %v2889
        %v2936 = vadd.f32 %v2630, %v2894
        %v2937 = vadd.f32 %v2631, %v2897
        %v2938 = vadd.f32 %v2632, %v2902
        %v2939 = vadd.f32 %v2633, %v2905
        %v2940 = vld [vmem:[%s2327 + $0x9] sm:$0xff]
        %v2941 = vld [vmem:[%s2327 + $0x11] sm:$0xff]
        %v2942 = vld [vmem:[%s2327 + $0x29] sm:$0xff]
        %v2943 = vld [vmem:[%s2327 + $0x31] sm:$0xff]
        %v2944 = vld [vmem:[%s2327 + $0x49] sm:$0xff]
        %v2945 = vld [vmem:[%s2327 + $0x51] sm:$0xff]
        %v2946 = vld [vmem:[%s2327 + $0x69] sm:$0xff]
        %v2947 = vld [vmem:[%s2327 + $0x71] sm:$0xff]
        %v2948 = vld [vmem:[%s2327 + $0x89] sm:$0xff]
        %v2949 = vld [vmem:[%s2327 + $0x91] sm:$0xff]
        %v2950 = vld [vmem:[%s2327 + $0xa9] sm:$0xff]
        %v2951 = vld [vmem:[%s2327 + $0xb1] sm:$0xff]
        %v2952 = vld [vmem:[%s2327 + $0xc9] sm:$0xff]
        %v2953 = vld [vmem:[%s2327 + $0xd1] sm:$0xff]
        %v2954 = vld [vmem:[%s2327 + $0xe9] sm:$0xff]
        %v2955 = vld [vmem:[%s2327 + $0xf1] sm:$0xff]
        %v2956 = vld [vmem:[%s2327 + $0x109] sm:$0xff]
        %v2957 = vld [vmem:[%s2327 + $0x111] sm:$0xff]
        %v2958 = vld [vmem:[%s2327 + $0x129] sm:$0xff]
        %v2959 = vld [vmem:[%s2327 + $0x131] sm:$0xff]
        %v2960 = vld [vmem:[%s2327 + $0x149] sm:$0xff]
        %v2961 = vld [vmem:[%s2327 + $0x151] sm:$0xff]
        %v2962 = vld [vmem:[%s2327 + $0x169] sm:$0xff]
        %v2963 = vld [vmem:[%s2327 + $0x171] sm:$0xff]
        %v2964 = vld [vmem:[%s2327 + $0x189] sm:$0xff]
        %v2965 = vld [vmem:[%s2327 + $0x191] sm:$0xff]
        %v2966 = vld [vmem:[%s2327 + $0x1a9] sm:$0xff]
        %v2967 = vld [vmem:[%s2327 + $0x1b1] sm:$0xff]
        %v2968 = vld [vmem:[%s2327 + $0x1c9] sm:$0xff]
        %v2969 = vld [vmem:[%s2327 + $0x1d1] sm:$0xff]
        %v2970 = vld [vmem:[%s2327 + $0x1e9] sm:$0xff]
        %v2971 = vld [vmem:[%s2327 + $0x1f1] sm:$0xff]
        %v2972 = vpack.c.bf16 %v2941, %v2940
        %v2973 = vpack.c.bf16 %v2943, %v2942
        %v2974 = vpack.c.bf16 %v2945, %v2944
        %v2975 = vpack.c.bf16 %v2947, %v2946
        %v2976 = vpack.c.bf16 %v2949, %v2948
        %v2977 = vpack.c.bf16 %v2951, %v2950
        %v2978 = vpack.c.bf16 %v2953, %v2952
        %v2979 = vpack.c.bf16 %v2955, %v2954
        %v2980 = vpack.c.bf16 %v2957, %v2956
        %v2981 = vpack.c.bf16 %v2959, %v2958
        %v2982 = vpack.c.bf16 %v2961, %v2960
        %v2983 = vpack.c.bf16 %v2963, %v2962
        %v2984 = vpack.c.bf16 %v2965, %v2964
        %v2985 = vpack.c.bf16 %v2967, %v2966
        %v2986 = vpack.c.bf16 %v2969, %v2968
        %v2987 = vpack.c.bf16 %v2971, %v2970
        %s2988 = scalar_lea.vmem %s1, 512
        %v2989 = vld [vmem:[%s2988] sm:$0xf]
        %v2990 = vld [vmem:[%s2988 + $0x4] sm:$0xf]
        %v2991 = vld [vmem:[%s2988 + $0x8] sm:$0xf]
        %v2992 = vld [vmem:[%s2988 + $0xc] sm:$0xf]
        %v2993 = vld [vmem:[%s2988 + $0x10] sm:$0xf]
        %v2994 = vld [vmem:[%s2988 + $0x14] sm:$0xf]
        %v2995 = vld [vmem:[%s2988 + $0x18] sm:$0xf]
        %v2996 = vld [vmem:[%s2988 + $0x1c] sm:$0xf]
        %v2997 = vld [vmem:[%s2988 + $0x20] sm:$0xf]
        %v2998 = vld [vmem:[%s2988 + $0x24] sm:$0xf]
        %v2999 = vld [vmem:[%s2988 + $0x28] sm:$0xf]
        %v3000 = vld [vmem:[%s2988 + $0x2c] sm:$0xf]
        %v3001 = vld [vmem:[%s2988 + $0x30] sm:$0xf]
        %v3002 = vld [vmem:[%s2988 + $0x34] sm:$0xf]
        %v3003 = vld [vmem:[%s2988 + $0x38] sm:$0xf]
        %v3004 = vld [vmem:[%s2988 + $0x3c] sm:$0xf]
        %v3021 = vunpack.c.l.b16 %v2989
        %v3022 = vunpack.c.l.b16 %v2990
        %v3023 = vunpack.c.l.b16 %v2991
        %v3024 = vunpack.c.l.b16 %v2992
        %v3025 = vunpack.c.l.b16 %v2993
        %v3026 = vunpack.c.l.b16 %v2994
        %v3027 = vunpack.c.l.b16 %v2995
        %v3028 = vunpack.c.l.b16 %v2996
        %v3029 = vunpack.c.l.b16 %v2997
        %v3030 = vunpack.c.l.b16 %v2998
        %v3031 = vunpack.c.l.b16 %v2999
        %v3032 = vunpack.c.l.b16 %v3000
        %v3033 = vunpack.c.l.b16 %v3001
        %v3034 = vunpack.c.l.b16 %v3002
        %v3035 = vunpack.c.l.b16 %v3003
        %v3036 = vunpack.c.l.b16 %v3004
        %v3037 = vpack.c.b16 %v3022, %v3021
        %v3038 = vpack.c.b16 %v3024, %v3023
        %v3039 = vpack.c.b16 %v3026, %v3025
        %v3040 = vpack.c.b16 %v3028, %v3027
        %v3041 = vpack.c.b16 %v3030, %v3029
        %v3042 = vpack.c.b16 %v3032, %v3031
        %v3043 = vpack.c.b16 %v3034, %v3033
        %v3044 = vpack.c.b16 %v3036, %v3035
        %3053 = vmatprep.subr.bf16.mxu0 0
        %3054 = vmatpush1.bf16.msra.mxu0 %v3037
        %3055 = vmatprep.subr.bf16.mxu0 0
        %3056 = vmatpush1.bf16.msra.mxu0 %v3038
        %3057 = vmatprep.subr.bf16.mxu0 0
        %3058 = vmatpush1.bf16.msra.mxu0 %v3039
        %3059 = vmatprep.subr.bf16.mxu0 0
        %3060 = vmatpush1.bf16.msra.mxu0 %v3040
        %3061 = vmatprep.subr.bf16.mxu0 0
        %3062 = vmatpush1.bf16.msra.mxu0 %v3041
        %3063 = vmatprep.subr.bf16.mxu0 0
        %3064 = vmatpush1.bf16.msra.mxu0 %v3042
        %3065 = vmatprep.subr.bf16.mxu0 0
        %3066 = vmatpush1.bf16.msra.mxu0 %v3043
        %3067 = vmatprep.subr.bf16.mxu0 0
        %3068 = vmatpush1.bf16.msra.mxu0 %v3044
        %3069 = vmatprep.subr.bf16.mxu0 0
        %3070 = vmatpush1.bf16.msra.mxu0 0
        %3071 = vmatprep.subr.bf16.mxu0 0
        %3072 = vmatpush1.bf16.msra.mxu0 0
        %3073 = vmatprep.subr.bf16.mxu0 0
        %3074 = vmatpush1.bf16.msra.mxu0 0
        %3075 = vmatprep.subr.bf16.mxu0 0
        %3076 = vmatpush1.bf16.msra.mxu0 0
        %3077 = vmatprep.subr.bf16.mxu0 0
        %3078 = vmatpush1.bf16.msra.mxu0 0
        %3079 = vmatprep.subr.bf16.mxu0 0
        %3080 = vmatpush1.bf16.msra.mxu0 0
        %3081 = vmatprep.subr.bf16.mxu0 0
        %3082 = vmatpush1.bf16.msra.mxu0 0
        %3083 = vmatprep.subr.bf16.mxu0 0
        %3084 = vmatpush1.bf16.msra.mxu0 0
        %3085 = vmatprep.mubr.bf16.mxu0 0
        %3086 = vmatmul.mubr.bf16.gmra.mrb[0].mxu0 %v2972
        %v3087 = vpop.f32.mrb[0].mxu0
        %v3088 = vadd.f32 0.0, %v3087
        %v3089 = vpop.f32.mrb[0].mxu0
        %v3090 = vpop.f32.mrb[0].mxu0
        %v3091 = vadd.f32 0.0, %v3090
        %v3092 = vpop.f32.mrb[0].mxu0
        %3093 = vmatprep.mubr.bf16.mxu0 0
        %3094 = vmatmul.mubr.bf16.gmra.mrb[0].mxu0 %v2973
        %v3095 = vpop.f32.mrb[0].mxu0
        %v3096 = vadd.f32 0.0, %v3095
        %v3097 = vpop.f32.mrb[0].mxu0
        %v3098 = vpop.f32.mrb[0].mxu0
        %v3099 = vadd.f32 0.0, %v3098
        %v3100 = vpop.f32.mrb[0].mxu0
        %3101 = vmatprep.mubr.bf16.mxu0 0
        %3102 = vmatmul.mubr.bf16.gmra.mrb[0].mxu0 %v2974
        %v3103 = vpop.f32.mrb[0].mxu0
        %v3104 = vadd.f32 0.0, %v3103
        %v3105 = vpop.f32.mrb[0].mxu0
        %v3106 = vpop.f32.mrb[0].mxu0
        %v3107 = vadd.f32 0.0, %v3106
        %v3108 = vpop.f32.mrb[0].mxu0
        %3109 = vmatprep.mubr.bf16.mxu0 0
        %3110 = vmatmul.mubr.bf16.gmra.mrb[0].mxu0 %v2975
        %v3111 = vpop.f32.mrb[0].mxu0
        %v3112 = vadd.f32 0.0, %v3111
        %v3113 = vpop.f32.mrb[0].mxu0
        %v3114 = vpop.f32.mrb[0].mxu0
        %v3115 = vadd.f32 0.0, %v3114
        %v3116 = vpop.f32.mrb[0].mxu0
        %3117 = vmatprep.mubr.bf16.mxu0 0
        %3118 = vmatmul.mubr.bf16.gmra.mrb[0].mxu0 %v2976
        %v3119 = vpop.f32.mrb[0].mxu0
        %v3120 = vadd.f32 0.0, %v3119
        %v3121 = vpop.f32.mrb[0].mxu0
        %v3122 = vpop.f32.mrb[0].mxu0
        %v3123 = vadd.f32 0.0, %v3122
        %v3124 = vpop.f32.mrb[0].mxu0
        %3125 = vmatprep.mubr.bf16.mxu0 0
        %3126 = vmatmul.mubr.bf16.gmra.mrb[0].mxu0 %v2977
        %v3127 = vpop.f32.mrb[0].mxu0
        %v3128 = vadd.f32 0.0, %v3127
        %v3129 = vpop.f32.mrb[0].mxu0
        %v3130 = vpop.f32.mrb[0].mxu0
        %v3131 = vadd.f32 0.0, %v3130
        %v3132 = vpop.f32.mrb[0].mxu0
        %3133 = vmatprep.mubr.bf16.mxu0 0
        %3134 = vmatmul.mubr.bf16.gmra.mrb[0].mxu0 %v2978
        %v3135 = vpop.f32.mrb[0].mxu0
        %v3136 = vadd.f32 0.0, %v3135
        %v3137 = vpop.f32.mrb[0].mxu0
        %v3138 = vpop.f32.mrb[0].mxu0
        %v3139 = vadd.f32 0.0, %v3138
        %v3140 = vpop.f32.mrb[0].mxu0
        %3141 = vmatprep.mubr.bf16.mxu0 0
        %3142 = vmatmul.mubr.bf16.gmra.mrb[0].mxu0 %v2979
        %v3143 = vpop.f32.mrb[0].mxu0
        %v3144 = vadd.f32 0.0, %v3143
        %v3145 = vpop.f32.mrb[0].mxu0
        %v3146 = vpop.f32.mrb[0].mxu0
        %v3147 = vadd.f32 0.0, %v3146
        %v3148 = vpop.f32.mrb[0].mxu0
        %3149 = vmatprep.mubr.bf16.mxu0 0
        %3150 = vmatmul.mubr.bf16.gmra.mrb[0].mxu0 %v2980
        %v3151 = vpop.f32.mrb[0].mxu0
        %v3152 = vadd.f32 0.0, %v3151
        %v3153 = vpop.f32.mrb[0].mxu0
        %v3154 = vpop.f32.mrb[0].mxu0
        %v3155 = vadd.f32 0.0, %v3154
        %v3156 = vpop.f32.mrb[0].mxu0
        %3157 = vmatprep.mubr.bf16.mxu0 0
        %3158 = vmatmul.mubr.bf16.gmra.mrb[0].mxu0 %v2981
        %v3159 = vpop.f32.mrb[0].mxu0
        %v3160 = vadd.f32 0.0, %v3159
        %v3161 = vpop.f32.mrb[0].mxu0
        %v3162 = vpop.f32.mrb[0].mxu0
        %v3163 = vadd.f32 0.0, %v3162
        %v3164 = vpop.f32.mrb[0].mxu0
        %3165 = vmatprep.mubr.bf16.mxu0 0
        %3166 = vmatmul.mubr.bf16.gmra.mrb[0].mxu0 %v2982
        %v3167 = vpop.f32.mrb[0].mxu0
        %v3168 = vadd.f32 0.0, %v3167
        %v3169 = vpop.f32.mrb[0].mxu0
        %v3170 = vpop.f32.mrb[0].mxu0
        %v3171 = vadd.f32 0.0, %v3170
        %v3172 = vpop.f32.mrb[0].mxu0
        %3173 = vmatprep.mubr.bf16.mxu0 0
        %3174 = vmatmul.mubr.bf16.gmra.mrb[0].mxu0 %v2983
        %v3175 = vpop.f32.mrb[0].mxu0
        %v3176 = vadd.f32 0.0, %v3175
        %v3177 = vpop.f32.mrb[0].mxu0
        %v3178 = vpop.f32.mrb[0].mxu0
        %v3179 = vadd.f32 0.0, %v3178
        %v3180 = vpop.f32.mrb[0].mxu0
        %3181 = vmatprep.mubr.bf16.mxu0 0
        %3182 = vmatmul.mubr.bf16.gmra.mrb[0].mxu0 %v2984
        %v3183 = vpop.f32.mrb[0].mxu0
        %v3184 = vadd.f32 0.0, %v3183
        %v3185 = vpop.f32.mrb[0].mxu0
        %v3186 = vpop.f32.mrb[0].mxu0
        %v3187 = vadd.f32 0.0, %v3186
        %v3188 = vpop.f32.mrb[0].mxu0
        %3189 = vmatprep.mubr.bf16.mxu0 0
        %3190 = vmatmul.mubr.bf16.gmra.mrb[0].mxu0 %v2985
        %v3191 = vpop.f32.mrb[0].mxu0
        %v3192 = vadd.f32 0.0, %v3191
        %v3193 = vpop.f32.mrb[0].mxu0
        %v3194 = vpop.f32.mrb[0].mxu0
        %v3195 = vadd.f32 0.0, %v3194
        %v3196 = vpop.f32.mrb[0].mxu0
        %3197 = vmatprep.mubr.bf16.mxu0 0
        %3198 = vmatmul.mubr.bf16.gmra.mrb[0].mxu0 %v2986
        %v3199 = vpop.f32.mrb[0].mxu0
        %v3200 = vadd.f32 0.0, %v3199
        %v3201 = vpop.f32.mrb[0].mxu0
        %v3202 = vpop.f32.mrb[0].mxu0
        %v3203 = vadd.f32 0.0, %v3202
        %v3204 = vpop.f32.mrb[0].mxu0
        %3205 = vmatprep.mubr.bf16.mxu0 0
        %3206 = vmatmul.mubr.bf16.gmra.mrb[0].mxu0 %v2987
        %v3207 = vpop.f32.mrb[0].mxu0
        %v3208 = vadd.f32 0.0, %v3207
        %v3209 = vpop.f32.mrb[0].mxu0
        %v3210 = vpop.f32.mrb[0].mxu0
        %v3211 = vadd.f32 0.0, %v3210
        %v3212 = vpop.f32.mrb[0].mxu0
        %3213 = vdwg.mxu0
        %v3214 = vadd.f32 %v2908, %v3088
        %v3215 = vadd.f32 %v2909, %v3091
        %v3216 = vadd.f32 %v2910, %v3096
        %v3217 = vadd.f32 %v2911, %v3099
        %v3218 = vadd.f32 %v2912, %v3104
        %v3219 = vadd.f32 %v2913, %v3107
        %v3220 = vadd.f32 %v2914, %v3112
        %v3221 = vadd.f32 %v2915, %v3115
        %v3222 = vadd.f32 %v2916, %v3120
        %v3223 = vadd.f32 %v2917, %v3123
        %v3224 = vadd.f32 %v2918, %v3128
        %v3225 = vadd.f32 %v2919, %v3131
        %v3226 = vadd.f32 %v2920, %v3136
        %v3227 = vadd.f32 %v2921, %v3139
        %v3228 = vadd.f32 %v2922, %v3144
        %v3229 = vadd.f32 %v2923, %v3147
        %v3230 = vadd.f32 %v2924, %v3152
        %v3231 = vadd.f32 %v2925, %v3155
        %v3232 = vadd.f32 %v2926, %v3160
        %v3233 = vadd.f32 %v2927, %v3163
        %v3234 = vadd.f32 %v2928, %v3168
        %v3235 = vadd.f32 %v2929, %v3171
        %v3236 = vadd.f32 %v2930, %v3176
        %v3237 = vadd.f32 %v2931, %v3179
        %v3238 = vadd.f32 %v2932, %v3184
        %v3239 = vadd.f32 %v2933, %v3187
        %v3240 = vadd.f32 %v2934, %v3192
        %v3241 = vadd.f32 %v2935, %v3195
        %v3242 = vadd.f32 %v2936, %v3200
        %v3243 = vadd.f32 %v2937, %v3203
        %v3244 = vadd.f32 %v2938, %v3208
        %v3245 = vadd.f32 %v2939, %v3211
        %v3246 = vmax.f32 %v3214, 0.0
        %v3247 = vmax.f32 %v3215, 0.0
        %v3248 = vmax.f32 %v3216, 0.0
        %v3249 = vmax.f32 %v3217, 0.0
        %v3250 = vmax.f32 %v3218, 0.0
        %v3251 = vmax.f32 %v3219, 0.0
        %v3252 = vmax.f32 %v3220, 0.0
        %v3253 = vmax.f32 %v3221, 0.0
        %v3254 = vmax.f32 %v3222, 0.0
        %v3255 = vmax.f32 %v3223, 0.0
        %v3256 = vmax.f32 %v3224, 0.0
        %v3257 = vmax.f32 %v3225, 0.0
        %v3258 = vmax.f32 %v3226, 0.0
        %v3259 = vmax.f32 %v3227, 0.0
        %v3260 = vmax.f32 %v3228, 0.0
        %v3261 = vmax.f32 %v3229, 0.0
        %v3262 = vmax.f32 %v3230, 0.0
        %v3263 = vmax.f32 %v3231, 0.0
        %v3264 = vmax.f32 %v3232, 0.0
        %v3265 = vmax.f32 %v3233, 0.0
        %v3266 = vmax.f32 %v3234, 0.0
        %v3267 = vmax.f32 %v3235, 0.0
        %v3268 = vmax.f32 %v3236, 0.0
        %v3269 = vmax.f32 %v3237, 0.0
        %v3270 = vmax.f32 %v3238, 0.0
        %v3271 = vmax.f32 %v3239, 0.0
        %v3272 = vmax.f32 %v3240, 0.0
        %v3273 = vmax.f32 %v3241, 0.0
        %v3274 = vmax.f32 %v3242, 0.0
        %v3275 = vmax.f32 %v3243, 0.0
        %v3276 = vmax.f32 %v3244, 0.0
        %v3277 = vmax.f32 %v3245, 0.0
        %3278 = vst [vmem:[%s451 + $0x8] sm:$0xff] %v3246
        %3279 = vst [vmem:[%s451 + $0x10] sm:$0xff] %v3247
        %3280 = vst [vmem:[%s451 + $0x28] sm:$0xff] %v3248
        %3281 = vst [vmem:[%s451 + $0x30] sm:$0xff] %v3249
        %3282 = vst [vmem:[%s451 + $0x48] sm:$0xff] %v3250
        %3283 = vst [vmem:[%s451 + $0x50] sm:$0xff] %v3251
        %3284 = vst [vmem:[%s451 + $0x68] sm:$0xff] %v3252
        %3285 = vst [vmem:[%s451 + $0x70] sm:$0xff] %v3253
        %3286 = vst [vmem:[%s451 + $0x88] sm:$0xff] %v3254
        %3287 = vst [vmem:[%s451 + $0x90] sm:$0xff] %v3255
        %3288 = vst [vmem:[%s451 + $0xa8] sm:$0xff] %v3256
        %3289 = vst [vmem:[%s451 + $0xb0] sm:$0xff] %v3257
        %3290 = vst [vmem:[%s451 + $0xc8] sm:$0xff] %v3258
        %3291 = vst [vmem:[%s451 + $0xd0] sm:$0xff] %v3259
        %3292 = vst [vmem:[%s451 + $0xe8] sm:$0xff] %v3260
        %3293 = vst [vmem:[%s451 + $0xf0] sm:$0xff] %v3261
        %3294 = vst [vmem:[%s451 + $0x108] sm:$0xff] %v3262
        %3295 = vst [vmem:[%s451 + $0x110] sm:$0xff] %v3263
        %3296 = vst [vmem:[%s451 + $0x128] sm:$0xff] %v3264
        %3297 = vst [vmem:[%s451 + $0x130] sm:$0xff] %v3265
        %3298 = vst [vmem:[%s451 + $0x148] sm:$0xff] %v3266
        %3299 = vst [vmem:[%s451 + $0x150] sm:$0xff] %v3267
        %3300 = vst [vmem:[%s451 + $0x168] sm:$0xff] %v3268
        %3301 = vst [vmem:[%s451 + $0x170] sm:$0xff] %v3269
        %3302 = vst [vmem:[%s451 + $0x188] sm:$0xff] %v3270
        %3303 = vst [vmem:[%s451 + $0x190] sm:$0xff] %v3271
        %3304 = vst [vmem:[%s451 + $0x1a8] sm:$0xff] %v3272
        %3305 = vst [vmem:[%s451 + $0x1b0] sm:$0xff] %v3273
        %3306 = vst [vmem:[%s451 + $0x1c8] sm:$0xff] %v3274
        %3307 = vst [vmem:[%s451 + $0x1d0] sm:$0xff] %v3275
        %3308 = vst [vmem:[%s451 + $0x1e8] sm:$0xff] %v3276
        %3309 = vst [vmem:[%s451 + $0x1f0] sm:$0xff] %v3277
        %v3310 = vld [vmem:[%s4] sm:$0x1]
        %v3312 = vlaneseq
        %v3313 = vshrl.u32 %v3312, 7
        %v3314 = vsub.s32 0, %v3313
        %v3315 = vrot.slane %v3310, %v3314
        %v3317 = vadd.f32 %v3315, 0.0
        %v3318 = vld [vmem:[#allocation2 + $0x7] sm:$0xff]
        %v3319 = vld [vmem:[#allocation2 + $0xf] sm:$0xff]
        %v3320 = vld [vmem:[#allocation2 + $0x27] sm:$0xff]
        %v3321 = vld [vmem:[#allocation2 + $0x2f] sm:$0xff]
        %v3322 = vld [vmem:[#allocation2 + $0x47] sm:$0xff]
        %v3323 = vld [vmem:[#allocation2 + $0x4f] sm:$0xff]
        %v3324 = vld [vmem:[#allocation2 + $0x67] sm:$0xff]
        %v3325 = vld [vmem:[#allocation2 + $0x6f] sm:$0xff]
        %v3326 = vld [vmem:[#allocation2 + $0x87] sm:$0xff]
        %v3327 = vld [vmem:[#allocation2 + $0x8f] sm:$0xff]
        %v3328 = vld [vmem:[#allocation2 + $0xa7] sm:$0xff]
        %v3329 = vld [vmem:[#allocation2 + $0xaf] sm:$0xff]
        %v3330 = vld [vmem:[#allocation2 + $0xc7] sm:$0xff]
        %v3331 = vld [vmem:[#allocation2 + $0xcf] sm:$0xff]
        %v3332 = vld [vmem:[#allocation2 + $0xe7] sm:$0xff]
        %v3333 = vld [vmem:[#allocation2 + $0xef] sm:$0xff]
        %v3334 = vld [vmem:[#allocation2 + $0x107] sm:$0xff]
        %v3335 = vld [vmem:[#allocation2 + $0x10f] sm:$0xff]
        %v3336 = vld [vmem:[#allocation2 + $0x127] sm:$0xff]
        %v3337 = vld [vmem:[#allocation2 + $0x12f] sm:$0xff]
        %v3338 = vld [vmem:[#allocation2 + $0x147] sm:$0xff]
        %v3339 = vld [vmem:[#allocation2 + $0x14f] sm:$0xff]
        %v3340 = vld [vmem:[#allocation2 + $0x167] sm:$0xff]
        %v3341 = vld [vmem:[#allocation2 + $0x16f] sm:$0xff]
        %v3342 = vld [vmem:[#allocation2 + $0x187] sm:$0xff]
        %v3343 = vld [vmem:[#allocation2 + $0x18f] sm:$0xff]
        %v3344 = vld [vmem:[#allocation2 + $0x1a7] sm:$0xff]
        %v3345 = vld [vmem:[#allocation2 + $0x1af] sm:$0xff]
        %v3346 = vld [vmem:[#allocation2 + $0x1c7] sm:$0xff]
        %v3347 = vld [vmem:[#allocation2 + $0x1cf] sm:$0xff]
        %v3348 = vld [vmem:[#allocation2 + $0x1e7] sm:$0xff]
        %v3349 = vld [vmem:[#allocation2 + $0x1ef] sm:$0xff]
        %v3350 = vpack.c.bf16 %v3319, %v3318
        %v3351 = vpack.c.bf16 %v3321, %v3320
        %v3352 = vpack.c.bf16 %v3323, %v3322
        %v3353 = vpack.c.bf16 %v3325, %v3324
        %v3354 = vpack.c.bf16 %v3327, %v3326
        %v3355 = vpack.c.bf16 %v3329, %v3328
        %v3356 = vpack.c.bf16 %v3331, %v3330
        %v3357 = vpack.c.bf16 %v3333, %v3332
        %v3358 = vpack.c.bf16 %v3335, %v3334
        %v3359 = vpack.c.bf16 %v3337, %v3336
        %v3360 = vpack.c.bf16 %v3339, %v3338
        %v3361 = vpack.c.bf16 %v3341, %v3340
        %v3362 = vpack.c.bf16 %v3343, %v3342
        %v3363 = vpack.c.bf16 %v3345, %v3344
        %v3364 = vpack.c.bf16 %v3347, %v3346
        %v3365 = vpack.c.bf16 %v3349, %v3348
        %v3366 = vld [vmem:[%s3] sm:$0xf]
        %v3367 = vld [vmem:[%s3 + $0x4] sm:$0xf]
        %v3368 = vld [vmem:[%s3 + $0x8] sm:$0xf]
        %v3369 = vld [vmem:[%s3 + $0xc] sm:$0xf]
        %v3370 = vld [vmem:[%s3 + $0x10] sm:$0xf]
        %v3371 = vld [vmem:[%s3 + $0x14] sm:$0xf]
        %v3372 = vld [vmem:[%s3 + $0x18] sm:$0xf]
        %v3373 = vld [vmem:[%s3 + $0x1c] sm:$0xf]
        %v3374 = vld [vmem:[%s3 + $0x20] sm:$0xf]
        %v3375 = vld [vmem:[%s3 + $0x24] sm:$0xf]
        %v3376 = vld [vmem:[%s3 + $0x28] sm:$0xf]
        %v3377 = vld [vmem:[%s3 + $0x2c] sm:$0xf]
        %v3378 = vld [vmem:[%s3 + $0x30] sm:$0xf]
        %v3379 = vld [vmem:[%s3 + $0x34] sm:$0xf]
        %v3380 = vld [vmem:[%s3 + $0x38] sm:$0xf]
        %v3381 = vld [vmem:[%s3 + $0x3c] sm:$0xf]
        %v3398 = vunpack.c.l.b16 %v3366
        %v3399 = vunpack.c.l.b16 %v3367
        %v3400 = vunpack.c.l.b16 %v3368
        %v3401 = vunpack.c.l.b16 %v3369
        %v3402 = vunpack.c.l.b16 %v3370
        %v3403 = vunpack.c.l.b16 %v3371
        %v3404 = vunpack.c.l.b16 %v3372
        %v3405 = vunpack.c.l.b16 %v3373
        %v3406 = vunpack.c.l.b16 %v3374
        %v3407 = vunpack.c.l.b16 %v3375
        %v3408 = vunpack.c.l.b16 %v3376
        %v3409 = vunpack.c.l.b16 %v3377
        %v3410 = vunpack.c.l.b16 %v3378
        %v3411 = vunpack.c.l.b16 %v3379
        %v3412 = vunpack.c.l.b16 %v3380
        %v3413 = vunpack.c.l.b16 %v3381
        %v3414 = vpack.c.b16 %v3399, %v3398
        %v3415 = vpack.c.b16 %v3401, %v3400
        %v3416 = vpack.c.b16 %v3403, %v3402
        %v3417 = vpack.c.b16 %v3405, %v3404
        %v3418 = vpack.c.b16 %v3407, %v3406
        %v3419 = vpack.c.b16 %v3409, %v3408
        %v3420 = vpack.c.b16 %v3411, %v3410
        %v3421 = vpack.c.b16 %v3413, %v3412
        %3430 = vmatprep.subr.bf16.mxu0 0
        %3431 = vmatpush1.bf16.msra.mxu0 %v3414
        %3432 = vmatprep.subr.bf16.mxu0 0
        %3433 = vmatpush1.bf16.msra.mxu0 %v3415
        %3434 = vmatprep.subr.bf16.mxu0 0
        %3435 = vmatpush1.bf16.msra.mxu0 %v3416
        %3436 = vmatprep.subr.bf16.mxu0 0
        %3437 = vmatpush1.bf16.msra.mxu0 %v3417
        %3438 = vmatprep.subr.bf16.mxu0 0
        %3439 = vmatpush1.bf16.msra.mxu0 %v3418
        %3440 = vmatprep.subr.bf16.mxu0 0
        %3441 = vmatpush1.bf16.msra.mxu0 %v3419
        %3442 = vmatprep.subr.bf16.mxu0 0
        %3443 = vmatpush1.bf16.msra.mxu0 %v3420
        %3444 = vmatprep.subr.bf16.mxu0 0
        %3445 = vmatpush1.bf16.msra.mxu0 %v3421
        %3446 = vmatprep.subr.bf16.mxu0 0
        %3447 = vmatpush1.bf16.msra.mxu0 0
        %3448 = vmatprep.subr.bf16.mxu0 0
        %3449 = vmatpush1.bf16.msra.mxu0 0
        %3450 = vmatprep.subr.bf16.mxu0 0
        %3451 = vmatpush1.bf16.msra.mxu0 0
        %3452 = vmatprep.subr.bf16.mxu0 0
        %3453 = vmatpush1.bf16.msra.mxu0 0
        %3454 = vmatprep.subr.bf16.mxu0 0
        %3455 = vmatpush1.bf16.msra.mxu0 0
        %3456 = vmatprep.subr.bf16.mxu0 0
        %3457 = vmatpush1.bf16.msra.mxu0 0
        %3458 = vmatprep.subr.bf16.mxu0 0
        %3459 = vmatpush1.bf16.msra.mxu0 0
        %3460 = vmatprep.subr.bf16.mxu0 0
        %3461 = vmatpush1.bf16.msra.mxu0 0
        %3462 = vmatprep.mubr.bf16.mxu0 0
        %3463 = vmatmul.mubr.bf16.gmra.mrb[0].mxu0 %v3350
        %v3464 = vpop.f32.mrb[0].mxu0
        %v3465 = vadd.f32 0.0, %v3464
        %v3466 = vpop.f32.mrb[0].mxu0
        %v3467 = vpop.f32.mrb[0].mxu0
        %v3468 = vadd.f32 0.0, %v3467
        %v3469 = vpop.f32.mrb[0].mxu0
        %3470 = vmatprep.mubr.bf16.mxu0 0
        %3471 = vmatmul.mubr.bf16.gmra.mrb[0].mxu0 %v3351
        %v3472 = vpop.f32.mrb[0].mxu0
        %v3473 = vadd.f32 0.0, %v3472
        %v3474 = vpop.f32.mrb[0].mxu0
        %v3475 = vpop.f32.mrb[0].mxu0
        %v3476 = vadd.f32 0.0, %v3475
        %v3477 = vpop.f32.mrb[0].mxu0
        %3478 = vmatprep.mubr.bf16.mxu0 0
        %3479 = vmatmul.mubr.bf16.gmra.mrb[0].mxu0 %v3352
        %v3480 = vpop.f32.mrb[0].mxu0
        %v3481 = vadd.f32 0.0, %v3480
        %v3482 = vpop.f32.mrb[0].mxu0
        %v3483 = vpop.f32.mrb[0].mxu0
        %v3484 = vadd.f32 0.0, %v3483
        %v3485 = vpop.f32.mrb[0].mxu0
        %3486 = vmatprep.mubr.bf16.mxu0 0
        %3487 = vmatmul.mubr.bf16.gmra.mrb[0].mxu0 %v3353
        %v3488 = vpop.f32.mrb[0].mxu0
        %v3489 = vadd.f32 0.0, %v3488
        %v3490 = vpop.f32.mrb[0].mxu0
        %v3491 = vpop.f32.mrb[0].mxu0
        %v3492 = vadd.f32 0.0, %v3491
        %v3493 = vpop.f32.mrb[0].mxu0
        %3494 = vmatprep.mubr.bf16.mxu0 0
        %3495 = vmatmul.mubr.bf16.gmra.mrb[0].mxu0 %v3354
        %v3496 = vpop.f32.mrb[0].mxu0
        %v3497 = vadd.f32 0.0, %v3496
        %v3498 = vpop.f32.mrb[0].mxu0
        %v3499 = vpop.f32.mrb[0].mxu0
        %v3500 = vadd.f32 0.0, %v3499
        %v3501 = vpop.f32.mrb[0].mxu0
        %3502 = vmatprep.mubr.bf16.mxu0 0
        %3503 = vmatmul.mubr.bf16.gmra.mrb[0].mxu0 %v3355
        %v3504 = vpop.f32.mrb[0].mxu0
        %v3505 = vadd.f32 0.0, %v3504
        %v3506 = vpop.f32.mrb[0].mxu0
        %v3507 = vpop.f32.mrb[0].mxu0
        %v3508 = vadd.f32 0.0, %v3507
        %v3509 = vpop.f32.mrb[0].mxu0
        %3510 = vmatprep.mubr.bf16.mxu0 0
        %3511 = vmatmul.mubr.bf16.gmra.mrb[0].mxu0 %v3356
        %v3512 = vpop.f32.mrb[0].mxu0
        %v3513 = vadd.f32 0.0, %v3512
        %v3514 = vpop.f32.mrb[0].mxu0
        %v3515 = vpop.f32.mrb[0].mxu0
        %v3516 = vadd.f32 0.0, %v3515
        %v3517 = vpop.f32.mrb[0].mxu0
        %3518 = vmatprep.mubr.bf16.mxu0 0
        %3519 = vmatmul.mubr.bf16.gmra.mrb[0].mxu0 %v3357
        %v3520 = vpop.f32.mrb[0].mxu0
        %v3521 = vadd.f32 0.0, %v3520
        %v3522 = vpop.f32.mrb[0].mxu0
        %v3523 = vpop.f32.mrb[0].mxu0
        %v3524 = vadd.f32 0.0, %v3523
        %v3525 = vpop.f32.mrb[0].mxu0
        %3526 = vmatprep.mubr.bf16.mxu0 0
        %3527 = vmatmul.mubr.bf16.gmra.mrb[0].mxu0 %v3358
        %v3528 = vpop.f32.mrb[0].mxu0
        %v3529 = vadd.f32 0.0, %v3528
        %v3530 = vpop.f32.mrb[0].mxu0
        %v3531 = vpop.f32.mrb[0].mxu0
        %v3532 = vadd.f32 0.0, %v3531
        %v3533 = vpop.f32.mrb[0].mxu0
        %3534 = vmatprep.mubr.bf16.mxu0 0
        %3535 = vmatmul.mubr.bf16.gmra.mrb[0].mxu0 %v3359
        %v3536 = vpop.f32.mrb[0].mxu0
        %v3537 = vadd.f32 0.0, %v3536
        %v3538 = vpop.f32.mrb[0].mxu0
        %v3539 = vpop.f32.mrb[0].mxu0
        %v3540 = vadd.f32 0.0, %v3539
        %v3541 = vpop.f32.mrb[0].mxu0
        %3542 = vmatprep.mubr.bf16.mxu0 0
        %3543 = vmatmul.mubr.bf16.gmra.mrb[0].mxu0 %v3360
        %v3544 = vpop.f32.mrb[0].mxu0
        %v3545 = vadd.f32 0.0, %v3544
        %v3546 = vpop.f32.mrb[0].mxu0
        %v3547 = vpop.f32.mrb[0].mxu0
        %v3548 = vadd.f32 0.0, %v3547
        %v3549 = vpop.f32.mrb[0].mxu0
        %3550 = vmatprep.mubr.bf16.mxu0 0
        %3551 = vmatmul.mubr.bf16.gmra.mrb[0].mxu0 %v3361
        %v3552 = vpop.f32.mrb[0].mxu0
        %v3553 = vadd.f32 0.0, %v3552
        %v3554 = vpop.f32.mrb[0].mxu0
        %v3555 = vpop.f32.mrb[0].mxu0
        %v3556 = vadd.f32 0.0, %v3555
        %v3557 = vpop.f32.mrb[0].mxu0
        %3558 = vmatprep.mubr.bf16.mxu0 0
        %3559 = vmatmul.mubr.bf16.gmra.mrb[0].mxu0 %v3362
        %v3560 = vpop.f32.mrb[0].mxu0
        %v3561 = vadd.f32 0.0, %v3560
        %v3562 = vpop.f32.mrb[0].mxu0
        %v3563 = vpop.f32.mrb[0].mxu0
        %v3564 = vadd.f32 0.0, %v3563
        %v3565 = vpop.f32.mrb[0].mxu0
        %3566 = vmatprep.mubr.bf16.mxu0 0
        %3567 = vmatmul.mubr.bf16.gmra.mrb[0].mxu0 %v3363
        %v3568 = vpop.f32.mrb[0].mxu0
        %v3569 = vadd.f32 0.0, %v3568
        %v3570 = vpop.f32.mrb[0].mxu0
        %v3571 = vpop.f32.mrb[0].mxu0
        %v3572 = vadd.f32 0.0, %v3571
        %v3573 = vpop.f32.mrb[0].mxu0
        %3574 = vmatprep.mubr.bf16.mxu0 0
        %3575 = vmatmul.mubr.bf16.gmra.mrb[0].mxu0 %v3364
        %v3576 = vpop.f32.mrb[0].mxu0
        %v3577 = vadd.f32 0.0, %v3576
        %v3578 = vpop.f32.mrb[0].mxu0
        %v3579 = vpop.f32.mrb[0].mxu0
        %v3580 = vadd.f32 0.0, %v3579
        %v3581 = vpop.f32.mrb[0].mxu0
        %3582 = vmatprep.mubr.bf16.mxu0 0
        %3583 = vmatmul.mubr.bf16.gmra.mrb[0].mxu0 %v3365
        %v3584 = vpop.f32.mrb[0].mxu0
        %v3585 = vadd.f32 0.0, %v3584
        %v3586 = vpop.f32.mrb[0].mxu0
        %v3587 = vpop.f32.mrb[0].mxu0
        %v3588 = vadd.f32 0.0, %v3587
        %v3589 = vpop.f32.mrb[0].mxu0
        %3590 = vdwg.mxu0
        %v3591 = vadd.f32 %v3317, %v3465
        %v3592 = vadd.f32 %v3317, %v3468
        %v3593 = vadd.f32 %v3317, %v3473
        %v3594 = vadd.f32 %v3317, %v3476
        %v3595 = vadd.f32 %v3317, %v3481
        %v3596 = vadd.f32 %v3317, %v3484
        %v3597 = vadd.f32 %v3317, %v3489
        %v3598 = vadd.f32 %v3317, %v3492
        %v3599 = vadd.f32 %v3317, %v3497
        %v3600 = vadd.f32 %v3317, %v3500
        %v3601 = vadd.f32 %v3317, %v3505
        %v3602 = vadd.f32 %v3317, %v3508
        %v3603 = vadd.f32 %v3317, %v3513
        %v3604 = vadd.f32 %v3317, %v3516
        %v3605 = vadd.f32 %v3317, %v3521
        %v3606 = vadd.f32 %v3317, %v3524
        %v3607 = vadd.f32 %v3317, %v3529
        %v3608 = vadd.f32 %v3317, %v3532
        %v3609 = vadd.f32 %v3317, %v3537
        %v3610 = vadd.f32 %v3317, %v3540
        %v3611 = vadd.f32 %v3317, %v3545
        %v3612 = vadd.f32 %v3317, %v3548
        %v3613 = vadd.f32 %v3317, %v3553
        %v3614 = vadd.f32 %v3317, %v3556
        %v3615 = vadd.f32 %v3317, %v3561
        %v3616 = vadd.f32 %v3317, %v3564
        %v3617 = vadd.f32 %v3317, %v3569
        %v3618 = vadd.f32 %v3317, %v3572
        %v3619 = vadd.f32 %v3317, %v3577
        %v3620 = vadd.f32 %v3317, %v3580
        %v3621 = vadd.f32 %v3317, %v3585
        %v3622 = vadd.f32 %v3317, %v3588
        %v3623 = vld [vmem:[#allocation2 + $0x8] sm:$0xff]
        %v3624 = vld [vmem:[#allocation2 + $0x10] sm:$0xff]
        %v3625 = vld [vmem:[#allocation2 + $0x28] sm:$0xff]
        %v3626 = vld [vmem:[#allocation2 + $0x30] sm:$0xff]
        %v3627 = vld [vmem:[#allocation2 + $0x48] sm:$0xff]
        %v3628 = vld [vmem:[#allocation2 + $0x50] sm:$0xff]
        %v3629 = vld [vmem:[#allocation2 + $0x68] sm:$0xff]
        %v3630 = vld [vmem:[#allocation2 + $0x70] sm:$0xff]
        %v3631 = vld [vmem:[#allocation2 + $0x88] sm:$0xff]
        %v3632 = vld [vmem:[#allocation2 + $0x90] sm:$0xff]
        %v3633 = vld [vmem:[#allocation2 + $0xa8] sm:$0xff]
        %v3634 = vld [vmem:[#allocation2 + $0xb0] sm:$0xff]
        %v3635 = vld [vmem:[#allocation2 + $0xc8] sm:$0xff]
        %v3636 = vld [vmem:[#allocation2 + $0xd0] sm:$0xff]
        %v3637 = vld [vmem:[#allocation2 + $0xe8] sm:$0xff]
        %v3638 = vld [vmem:[#allocation2 + $0xf0] sm:$0xff]
        %v3639 = vld [vmem:[#allocation2 + $0x108] sm:$0xff]
        %v3640 = vld [vmem:[#allocation2 + $0x110] sm:$0xff]
        %v3641 = vld [vmem:[#allocation2 + $0x128] sm:$0xff]
        %v3642 = vld [vmem:[#allocation2 + $0x130] sm:$0xff]
        %v3643 = vld [vmem:[#allocation2 + $0x148] sm:$0xff]
        %v3644 = vld [vmem:[#allocation2 + $0x150] sm:$0xff]
        %v3645 = vld [vmem:[#allocation2 + $0x168] sm:$0xff]
        %v3646 = vld [vmem:[#allocation2 + $0x170] sm:$0xff]
        %v3647 = vld [vmem:[#allocation2 + $0x188] sm:$0xff]
        %v3648 = vld [vmem:[#allocation2 + $0x190] sm:$0xff]
        %v3649 = vld [vmem:[#allocation2 + $0x1a8] sm:$0xff]
        %v3650 = vld [vmem:[#allocation2 + $0x1b0] sm:$0xff]
        %v3651 = vld [vmem:[#allocation2 + $0x1c8] sm:$0xff]
        %v3652 = vld [vmem:[#allocation2 + $0x1d0] sm:$0xff]
        %v3653 = vld [vmem:[#allocation2 + $0x1e8] sm:$0xff]
        %v3654 = vld [vmem:[#allocation2 + $0x1f0] sm:$0xff]
        %v3655 = vpack.c.bf16 %v3624, %v3623
        %v3656 = vpack.c.bf16 %v3626, %v3625
        %v3657 = vpack.c.bf16 %v3628, %v3627
        %v3658 = vpack.c.bf16 %v3630, %v3629
        %v3659 = vpack.c.bf16 %v3632, %v3631
        %v3660 = vpack.c.bf16 %v3634, %v3633
        %v3661 = vpack.c.bf16 %v3636, %v3635
        %v3662 = vpack.c.bf16 %v3638, %v3637
        %v3663 = vpack.c.bf16 %v3640, %v3639
        %v3664 = vpack.c.bf16 %v3642, %v3641
        %v3665 = vpack.c.bf16 %v3644, %v3643
        %v3666 = vpack.c.bf16 %v3646, %v3645
        %v3667 = vpack.c.bf16 %v3648, %v3647
        %v3668 = vpack.c.bf16 %v3650, %v3649
        %v3669 = vpack.c.bf16 %v3652, %v3651
        %v3670 = vpack.c.bf16 %v3654, %v3653
        %s3671 = scalar_lea.vmem %s3, 64
        %v3672 = vld [vmem:[%s3671] sm:$0xf]
        %v3673 = vld [vmem:[%s3671 + $0x4] sm:$0xf]
        %v3674 = vld [vmem:[%s3671 + $0x8] sm:$0xf]
        %v3675 = vld [vmem:[%s3671 + $0xc] sm:$0xf]
        %v3676 = vld [vmem:[%s3671 + $0x10] sm:$0xf]
        %v3677 = vld [vmem:[%s3671 + $0x14] sm:$0xf]
        %v3678 = vld [vmem:[%s3671 + $0x18] sm:$0xf]
        %v3679 = vld [vmem:[%s3671 + $0x1c] sm:$0xf]
        %v3680 = vld [vmem:[%s3671 + $0x20] sm:$0xf]
        %v3681 = vld [vmem:[%s3671 + $0x24] sm:$0xf]
        %v3682 = vld [vmem:[%s3671 + $0x28] sm:$0xf]
        %v3683 = vld [vmem:[%s3671 + $0x2c] sm:$0xf]
        %v3684 = vld [vmem:[%s3671 + $0x30] sm:$0xf]
        %v3685 = vld [vmem:[%s3671 + $0x34] sm:$0xf]
        %v3686 = vld [vmem:[%s3671 + $0x38] sm:$0xf]
        %v3687 = vld [vmem:[%s3671 + $0x3c] sm:$0xf]
        %v3704 = vunpack.c.l.b16 %v3672
        %v3705 = vunpack.c.l.b16 %v3673
        %v3706 = vunpack.c.l.b16 %v3674
        %v3707 = vunpack.c.l.b16 %v3675
        %v3708 = vunpack.c.l.b16 %v3676
        %v3709 = vunpack.c.l.b16 %v3677
        %v3710 = vunpack.c.l.b16 %v3678
        %v3711 = vunpack.c.l.b16 %v3679
        %v3712 = vunpack.c.l.b16 %v3680
        %v3713 = vunpack.c.l.b16 %v3681
        %v3714 = vunpack.c.l.b16 %v3682
        %v3715 = vunpack.c.l.b16 %v3683
        %v3716 = vunpack.c.l.b16 %v3684
        %v3717 = vunpack.c.l.b16 %v3685
        %v3718 = vunpack.c.l.b16 %v3686
        %v3719 = vunpack.c.l.b16 %v3687
        %v3720 = vpack.c.b16 %v3705, %v3704
        %v3721 = vpack.c.b16 %v3707, %v3706
        %v3722 = vpack.c.b16 %v3709, %v3708
        %v3723 = vpack.c.b16 %v3711, %v3710
        %v3724 = vpack.c.b16 %v3713, %v3712
        %v3725 = vpack.c.b16 %v3715, %v3714
        %v3726 = vpack.c.b16 %v3717, %v3716
        %v3727 = vpack.c.b16 %v3719, %v3718
        %3736 = vmatprep.subr.bf16.mxu0 0
        %3737 = vmatpush1.bf16.msra.mxu0 %v3720
        %3738 = vmatprep.subr.bf16.mxu0 0
        %3739 = vmatpush1.bf16.msra.mxu0 %v3721
        %3740 = vmatprep.subr.bf16.mxu0 0
        %3741 = vmatpush1.bf16.msra.mxu0 %v3722
        %3742 = vmatprep.subr.bf16.mxu0 0
        %3743 = vmatpush1.bf16.msra.mxu0 %v3723
        %3744 = vmatprep.subr.bf16.mxu0 0
        %3745 = vmatpush1.bf16.msra.mxu0 %v3724
        %3746 = vmatprep.subr.bf16.mxu0 0
        %3747 = vmatpush1.bf16.msra.mxu0 %v3725
        %3748 = vmatprep.subr.bf16.mxu0 0
        %3749 = vmatpush1.bf16.msra.mxu0 %v3726
        %3750 = vmatprep.subr.bf16.mxu0 0
        %3751 = vmatpush1.bf16.msra.mxu0 %v3727
        %3752 = vmatprep.subr.bf16.mxu0 0
        %3753 = vmatpush1.bf16.msra.mxu0 0
        %3754 = vmatprep.subr.bf16.mxu0 0
        %3755 = vmatpush1.bf16.msra.mxu0 0
        %3756 = vmatprep.subr.bf16.mxu0 0
        %3757 = vmatpush1.bf16.msra.mxu0 0
        %3758 = vmatprep.subr.bf16.mxu0 0
        %3759 = vmatpush1.bf16.msra.mxu0 0
        %3760 = vmatprep.subr.bf16.mxu0 0
        %3761 = vmatpush1.bf16.msra.mxu0 0
        %3762 = vmatprep.subr.bf16.mxu0 0
        %3763 = vmatpush1.bf16.msra.mxu0 0
        %3764 = vmatprep.subr.bf16.mxu0 0
        %3765 = vmatpush1.bf16.msra.mxu0 0
        %3766 = vmatprep.subr.bf16.mxu0 0
        %3767 = vmatpush1.bf16.msra.mxu0 0
        %3768 = vmatprep.mubr.bf16.mxu0 0
        %3769 = vmatmul.mubr.bf16.gmra.mrb[0].mxu0 %v3655
        %v3770 = vpop.f32.mrb[0].mxu0
        %v3771 = vadd.f32 0.0, %v3770
        %v3772 = vpop.f32.mrb[0].mxu0
        %v3773 = vpop.f32.mrb[0].mxu0
        %v3774 = vadd.f32 0.0, %v3773
        %v3775 = vpop.f32.mrb[0].mxu0
        %3776 = vmatprep.mubr.bf16.mxu0 0
        %3777 = vmatmul.mubr.bf16.gmra.mrb[0].mxu0 %v3656
        %v3778 = vpop.f32.mrb[0].mxu0
        %v3779 = vadd.f32 0.0, %v3778
        %v3780 = vpop.f32.mrb[0].mxu0
        %v3781 = vpop.f32.mrb[0].mxu0
        %v3782 = vadd.f32 0.0, %v3781
        %v3783 = vpop.f32.mrb[0].mxu0
        %3784 = vmatprep.mubr.bf16.mxu0 0
        %3785 = vmatmul.mubr.bf16.gmra.mrb[0].mxu0 %v3657
        %v3786 = vpop.f32.mrb[0].mxu0
        %v3787 = vadd.f32 0.0, %v3786
        %v3788 = vpop.f32.mrb[0].mxu0
        %v3789 = vpop.f32.mrb[0].mxu0
        %v3790 = vadd.f32 0.0, %v3789
        %v3791 = vpop.f32.mrb[0].mxu0
        %3792 = vmatprep.mubr.bf16.mxu0 0
        %3793 = vmatmul.mubr.bf16.gmra.mrb[0].mxu0 %v3658
        %v3794 = vpop.f32.mrb[0].mxu0
        %v3795 = vadd.f32 0.0, %v3794
        %v3796 = vpop.f32.mrb[0].mxu0
        %v3797 = vpop.f32.mrb[0].mxu0
        %v3798 = vadd.f32 0.0, %v3797
        %v3799 = vpop.f32.mrb[0].mxu0
        %3800 = vmatprep.mubr.bf16.mxu0 0
        %3801 = vmatmul.mubr.bf16.gmra.mrb[0].mxu0 %v3659
        %v3802 = vpop.f32.mrb[0].mxu0
        %v3803 = vadd.f32 0.0, %v3802
        %v3804 = vpop.f32.mrb[0].mxu0
        %v3805 = vpop.f32.mrb[0].mxu0
        %v3806 = vadd.f32 0.0, %v3805
        %v3807 = vpop.f32.mrb[0].mxu0
        %3808 = vmatprep.mubr.bf16.mxu0 0
        %3809 = vmatmul.mubr.bf16.gmra.mrb[0].mxu0 %v3660
        %v3810 = vpop.f32.mrb[0].mxu0
        %v3811 = vadd.f32 0.0, %v3810
        %v3812 = vpop.f32.mrb[0].mxu0
        %v3813 = vpop.f32.mrb[0].mxu0
        %v3814 = vadd.f32 0.0, %v3813
        %v3815 = vpop.f32.mrb[0].mxu0
        %3816 = vmatprep.mubr.bf16.mxu0 0
        %3817 = vmatmul.mubr.bf16.gmra.mrb[0].mxu0 %v3661
        %v3818 = vpop.f32.mrb[0].mxu0
        %v3819 = vadd.f32 0.0, %v3818
        %v3820 = vpop.f32.mrb[0].mxu0
        %v3821 = vpop.f32.mrb[0].mxu0
        %v3822 = vadd.f32 0.0, %v3821
        %v3823 = vpop.f32.mrb[0].mxu0
        %3824 = vmatprep.mubr.bf16.mxu0 0
        %3825 = vmatmul.mubr.bf16.gmra.mrb[0].mxu0 %v3662
        %v3826 = vpop.f32.mrb[0].mxu0
        %v3827 = vadd.f32 0.0, %v3826
        %v3828 = vpop.f32.mrb[0].mxu0
        %v3829 = vpop.f32.mrb[0].mxu0
        %v3830 = vadd.f32 0.0, %v3829
        %v3831 = vpop.f32.mrb[0].mxu0
        %3832 = vmatprep.mubr.bf16.mxu0 0
        %3833 = vmatmul.mubr.bf16.gmra.mrb[0].mxu0 %v3663
        %v3834 = vpop.f32.mrb[0].mxu0
        %v3835 = vadd.f32 0.0, %v3834
        %v3836 = vpop.f32.mrb[0].mxu0
        %v3837 = vpop.f32.mrb[0].mxu0
        %v3838 = vadd.f32 0.0, %v3837
        %v3839 = vpop.f32.mrb[0].mxu0
        %3840 = vmatprep.mubr.bf16.mxu0 0
        %3841 = vmatmul.mubr.bf16.gmra.mrb[0].mxu0 %v3664
        %v3842 = vpop.f32.mrb[0].mxu0
        %v3843 = vadd.f32 0.0, %v3842
        %v3844 = vpop.f32.mrb[0].mxu0
        %v3845 = vpop.f32.mrb[0].mxu0
        %v3846 = vadd.f32 0.0, %v3845
        %v3847 = vpop.f32.mrb[0].mxu0
        %3848 = vmatprep.mubr.bf16.mxu0 0
        %3849 = vmatmul.mubr.bf16.gmra.mrb[0].mxu0 %v3665
        %v3850 = vpop.f32.mrb[0].mxu0
        %v3851 = vadd.f32 0.0, %v3850
        %v3852 = vpop.f32.mrb[0].mxu0
        %v3853 = vpop.f32.mrb[0].mxu0
        %v3854 = vadd.f32 0.0, %v3853
        %v3855 = vpop.f32.mrb[0].mxu0
        %3856 = vmatprep.mubr.bf16.mxu0 0
        %3857 = vmatmul.mubr.bf16.gmra.mrb[0].mxu0 %v3666
        %v3858 = vpop.f32.mrb[0].mxu0
        %v3859 = vadd.f32 0.0, %v3858
        %v3860 = vpop.f32.mrb[0].mxu0
        %v3861 = vpop.f32.mrb[0].mxu0
        %v3862 = vadd.f32 0.0, %v3861
        %v3863 = vpop.f32.mrb[0].mxu0
        %3864 = vmatprep.mubr.bf16.mxu0 0
        %3865 = vmatmul.mubr.bf16.gmra.mrb[0].mxu0 %v3667
        %v3866 = vpop.f32.mrb[0].mxu0
        %v3867 = vadd.f32 0.0, %v3866
        %v3868 = vpop.f32.mrb[0].mxu0
        %v3869 = vpop.f32.mrb[0].mxu0
        %v3870 = vadd.f32 0.0, %v3869
        %v3871 = vpop.f32.mrb[0].mxu0
        %3872 = vmatprep.mubr.bf16.mxu0 0
        %3873 = vmatmul.mubr.bf16.gmra.mrb[0].mxu0 %v3668
        %v3874 = vpop.f32.mrb[0].mxu0
        %v3875 = vadd.f32 0.0, %v3874
        %v3876 = vpop.f32.mrb[0].mxu0
        %v3877 = vpop.f32.mrb[0].mxu0
        %v3878 = vadd.f32 0.0, %v3877
        %v3879 = vpop.f32.mrb[0].mxu0
        %3880 = vmatprep.mubr.bf16.mxu0 0
        %3881 = vmatmul.mubr.bf16.gmra.mrb[0].mxu0 %v3669
        %v3882 = vpop.f32.mrb[0].mxu0
        %v3883 = vadd.f32 0.0, %v3882
        %v3884 = vpop.f32.mrb[0].mxu0
        %v3885 = vpop.f32.mrb[0].mxu0
        %v3886 = vadd.f32 0.0, %v3885
        %v3887 = vpop.f32.mrb[0].mxu0
        %3888 = vmatprep.mubr.bf16.mxu0 0
        %3889 = vmatmul.mubr.bf16.gmra.mrb[0].mxu0 %v3670
        %v3890 = vpop.f32.mrb[0].mxu0
        %v3891 = vadd.f32 0.0, %v3890
        %v3892 = vpop.f32.mrb[0].mxu0
        %v3893 = vpop.f32.mrb[0].mxu0
        %v3894 = vadd.f32 0.0, %v3893
        %v3895 = vpop.f32.mrb[0].mxu0
        %3896 = vdwg.mxu0
        %v3897 = vadd.f32 %v3591, %v3771
        %v3898 = vadd.f32 %v3592, %v3774
        %v3899 = vadd.f32 %v3593, %v3779
        %v3900 = vadd.f32 %v3594, %v3782
        %v3901 = vadd.f32 %v3595, %v3787
        %v3902 = vadd.f32 %v3596, %v3790
        %v3903 = vadd.f32 %v3597, %v3795
        %v3904 = vadd.f32 %v3598, %v3798
        %v3905 = vadd.f32 %v3599, %v3803
        %v3906 = vadd.f32 %v3600, %v3806
        %v3907 = vadd.f32 %v3601, %v3811
        %v3908 = vadd.f32 %v3602, %v3814
        %v3909 = vadd.f32 %v3603, %v3819
        %v3910 = vadd.f32 %v3604, %v3822
        %v3911 = vadd.f32 %v3605, %v3827
        %v3912 = vadd.f32 %v3606, %v3830
        %v3913 = vadd.f32 %v3607, %v3835
        %v3914 = vadd.f32 %v3608, %v3838
        %v3915 = vadd.f32 %v3609, %v3843
        %v3916 = vadd.f32 %v3610, %v3846
        %v3917 = vadd.f32 %v3611, %v3851
        %v3918 = vadd.f32 %v3612, %v3854
        %v3919 = vadd.f32 %v3613, %v3859
        %v3920 = vadd.f32 %v3614, %v3862
        %v3921 = vadd.f32 %v3615, %v3867
        %v3922 = vadd.f32 %v3616, %v3870
        %v3923 = vadd.f32 %v3617, %v3875
        %v3924 = vadd.f32 %v3618, %v3878
        %v3925 = vadd.f32 %v3619, %v3883
        %v3926 = vadd.f32 %v3620, %v3886
        %v3927 = vadd.f32 %v3621, %v3891
        %v3928 = vadd.f32 %v3622, %v3894
        %v3929 = vld [vmem:[#allocation2 + $0x9] sm:$0xff]
        %v3930 = vld [vmem:[#allocation2 + $0x11] sm:$0xff]
        %v3931 = vld [vmem:[#allocation2 + $0x29] sm:$0xff]
        %v3932 = vld [vmem:[#allocation2 + $0x31] sm:$0xff]
        %v3933 = vld [vmem:[#allocation2 + $0x49] sm:$0xff]
        %v3934 = vld [vmem:[#allocation2 + $0x51] sm:$0xff]
        %v3935 = vld [vmem:[#allocation2 + $0x69] sm:$0xff]
        %v3936 = vld [vmem:[#allocation2 + $0x71] sm:$0xff]
        %v3937 = vld [vmem:[#allocation2 + $0x89] sm:$0xff]
        %v3938 = vld [vmem:[#allocation2 + $0x91] sm:$0xff]
        %v3939 = vld [vmem:[#allocation2 + $0xa9] sm:$0xff]
        %v3940 = vld [vmem:[#allocation2 + $0xb1] sm:$0xff]
        %v3941 = vld [vmem:[#allocation2 + $0xc9] sm:$0xff]
        %v3942 = vld [vmem:[#allocation2 + $0xd1] sm:$0xff]
        %v3943 = vld [vmem:[#allocation2 + $0xe9] sm:$0xff]
        %v3944 = vld [vmem:[#allocation2 + $0xf1] sm:$0xff]
        %v3945 = vld [vmem:[#allocation2 + $0x109] sm:$0xff]
        %v3946 = vld [vmem:[#allocation2 + $0x111] sm:$0xff]
        %v3947 = vld [vmem:[#allocation2 + $0x129] sm:$0xff]
        %v3948 = vld [vmem:[#allocation2 + $0x131] sm:$0xff]
        %v3949 = vld [vmem:[#allocation2 + $0x149] sm:$0xff]
        %v3950 = vld [vmem:[#allocation2 + $0x151] sm:$0xff]
        %v3951 = vld [vmem:[#allocation2 + $0x169] sm:$0xff]
        %v3952 = vld [vmem:[#allocation2 + $0x171] sm:$0xff]
        %v3953 = vld [vmem:[#allocation2 + $0x189] sm:$0xff]
        %v3954 = vld [vmem:[#allocation2 + $0x191] sm:$0xff]
        %v3955 = vld [vmem:[#allocation2 + $0x1a9] sm:$0xff]
        %v3956 = vld [vmem:[#allocation2 + $0x1b1] sm:$0xff]
        %v3957 = vld [vmem:[#allocation2 + $0x1c9] sm:$0xff]
        %v3958 = vld [vmem:[#allocation2 + $0x1d1] sm:$0xff]
        %v3959 = vld [vmem:[#allocation2 + $0x1e9] sm:$0xff]
        %v3960 = vld [vmem:[#allocation2 + $0x1f1] sm:$0xff]
        %v3961 = vpack.c.bf16 %v3930, %v3929
        %v3962 = vpack.c.bf16 %v3932, %v3931
        %v3963 = vpack.c.bf16 %v3934, %v3933
        %v3964 = vpack.c.bf16 %v3936, %v3935
        %v3965 = vpack.c.bf16 %v3938, %v3937
        %v3966 = vpack.c.bf16 %v3940, %v3939
        %v3967 = vpack.c.bf16 %v3942, %v3941
        %v3968 = vpack.c.bf16 %v3944, %v3943
        %v3969 = vpack.c.bf16 %v3946, %v3945
        %v3970 = vpack.c.bf16 %v3948, %v3947
        %v3971 = vpack.c.bf16 %v3950, %v3949
        %v3972 = vpack.c.bf16 %v3952, %v3951
        %v3973 = vpack.c.bf16 %v3954, %v3953
        %v3974 = vpack.c.bf16 %v3956, %v3955
        %v3975 = vpack.c.bf16 %v3958, %v3957
        %v3976 = vpack.c.bf16 %v3960, %v3959
        %s3977 = scalar_lea.vmem %s3, 128
        %v3978 = vld [vmem:[%s3977] sm:$0xf]
        %v3979 = vld [vmem:[%s3977 + $0x4] sm:$0xf]
        %v3980 = vld [vmem:[%s3977 + $0x8] sm:$0xf]
        %v3981 = vld [vmem:[%s3977 + $0xc] sm:$0xf]
        %v3982 = vld [vmem:[%s3977 + $0x10] sm:$0xf]
        %v3983 = vld [vmem:[%s3977 + $0x14] sm:$0xf]
        %v3984 = vld [vmem:[%s3977 + $0x18] sm:$0xf]
        %v3985 = vld [vmem:[%s3977 + $0x1c] sm:$0xf]
        %v3986 = vld [vmem:[%s3977 + $0x20] sm:$0xf]
        %v3987 = vld [vmem:[%s3977 + $0x24] sm:$0xf]
        %v3988 = vld [vmem:[%s3977 + $0x28] sm:$0xf]
        %v3989 = vld [vmem:[%s3977 + $0x2c] sm:$0xf]
        %v3990 = vld [vmem:[%s3977 + $0x30] sm:$0xf]
        %v3991 = vld [vmem:[%s3977 + $0x34] sm:$0xf]
        %v3992 = vld [vmem:[%s3977 + $0x38] sm:$0xf]
        %v3993 = vld [vmem:[%s3977 + $0x3c] sm:$0xf]
        %v4010 = vunpack.c.l.b16 %v3978
        %v4011 = vunpack.c.l.b16 %v3979
        %v4012 = vunpack.c.l.b16 %v3980
        %v4013 = vunpack.c.l.b16 %v3981
        %v4014 = vunpack.c.l.b16 %v3982
        %v4015 = vunpack.c.l.b16 %v3983
        %v4016 = vunpack.c.l.b16 %v3984
        %v4017 = vunpack.c.l.b16 %v3985
        %v4018 = vunpack.c.l.b16 %v3986
        %v4019 = vunpack.c.l.b16 %v3987
        %v4020 = vunpack.c.l.b16 %v3988
        %v4021 = vunpack.c.l.b16 %v3989
        %v4022 = vunpack.c.l.b16 %v3990
        %v4023 = vunpack.c.l.b16 %v3991
        %v4024 = vunpack.c.l.b16 %v3992
        %v4025 = vunpack.c.l.b16 %v3993
        %v4026 = vpack.c.b16 %v4011, %v4010
        %v4027 = vpack.c.b16 %v4013, %v4012
        %v4028 = vpack.c.b16 %v4015, %v4014
        %v4029 = vpack.c.b16 %v4017, %v4016
        %v4030 = vpack.c.b16 %v4019, %v4018
        %v4031 = vpack.c.b16 %v4021, %v4020
        %v4032 = vpack.c.b16 %v4023, %v4022
        %v4033 = vpack.c.b16 %v4025, %v4024
        %4042 = vmatprep.subr.bf16.mxu0 0
        %4043 = vmatpush1.bf16.msra.mxu0 %v4026
        %4044 = vmatprep.subr.bf16.mxu0 0
        %4045 = vmatpush1.bf16.msra.mxu0 %v4027
        %4046 = vmatprep.subr.bf16.mxu0 0
        %4047 = vmatpush1.bf16.msra.mxu0 %v4028
        %4048 = vmatprep.subr.bf16.mxu0 0
        %4049 = vmatpush1.bf16.msra.mxu0 %v4029
        %4050 = vmatprep.subr.bf16.mxu0 0
        %4051 = vmatpush1.bf16.msra.mxu0 %v4030
        %4052 = vmatprep.subr.bf16.mxu0 0
        %4053 = vmatpush1.bf16.msra.mxu0 %v4031
        %4054 = vmatprep.subr.bf16.mxu0 0
        %4055 = vmatpush1.bf16.msra.mxu0 %v4032
        %4056 = vmatprep.subr.bf16.mxu0 0
        %4057 = vmatpush1.bf16.msra.mxu0 %v4033
        %4058 = vmatprep.subr.bf16.mxu0 0
        %4059 = vmatpush1.bf16.msra.mxu0 0
        %4060 = vmatprep.subr.bf16.mxu0 0
        %4061 = vmatpush1.bf16.msra.mxu0 0
        %4062 = vmatprep.subr.bf16.mxu0 0
        %4063 = vmatpush1.bf16.msra.mxu0 0
        %4064 = vmatprep.subr.bf16.mxu0 0
        %4065 = vmatpush1.bf16.msra.mxu0 0
        %4066 = vmatprep.subr.bf16.mxu0 0
        %4067 = vmatpush1.bf16.msra.mxu0 0
        %4068 = vmatprep.subr.bf16.mxu0 0
        %4069 = vmatpush1.bf16.msra.mxu0 0
        %4070 = vmatprep.subr.bf16.mxu0 0
        %4071 = vmatpush1.bf16.msra.mxu0 0
        %4072 = vmatprep.subr.bf16.mxu0 0
        %4073 = vmatpush1.bf16.msra.mxu0 0
        %4074 = vmatprep.mubr.bf16.mxu0 0
        %4075 = vmatmul.mubr.bf16.gmra.mrb[0].mxu0 %v3961
        %v4076 = vpop.f32.mrb[0].mxu0
        %v4077 = vadd.f32 0.0, %v4076
        %v4078 = vpop.f32.mrb[0].mxu0
        %v4079 = vpop.f32.mrb[0].mxu0
        %v4080 = vadd.f32 0.0, %v4079
        %v4081 = vpop.f32.mrb[0].mxu0
        %4082 = vmatprep.mubr.bf16.mxu0 0
        %4083 = vmatmul.mubr.bf16.gmra.mrb[0].mxu0 %v3962
        %v4084 = vpop.f32.mrb[0].mxu0
        %v4085 = vadd.f32 0.0, %v4084
        %v4086 = vpop.f32.mrb[0].mxu0
        %v4087 = vpop.f32.mrb[0].mxu0
        %v4088 = vadd.f32 0.0, %v4087
        %v4089 = vpop.f32.mrb[0].mxu0
        %4090 = vmatprep.mubr.bf16.mxu0 0
        %4091 = vmatmul.mubr.bf16.gmra.mrb[0].mxu0 %v3963
        %v4092 = vpop.f32.mrb[0].mxu0
        %v4093 = vadd.f32 0.0, %v4092
        %v4094 = vpop.f32.mrb[0].mxu0
        %v4095 = vpop.f32.mrb[0].mxu0
        %v4096 = vadd.f32 0.0, %v4095
        %v4097 = vpop.f32.mrb[0].mxu0
        %4098 = vmatprep.mubr.bf16.mxu0 0
        %4099 = vmatmul.mubr.bf16.gmra.mrb[0].mxu0 %v3964
        %v4100 = vpop.f32.mrb[0].mxu0
        %v4101 = vadd.f32 0.0, %v4100
        %v4102 = vpop.f32.mrb[0].mxu0
        %v4103 = vpop.f32.mrb[0].mxu0
        %v4104 = vadd.f32 0.0, %v4103
        %v4105 = vpop.f32.mrb[0].mxu0
        %4106 = vmatprep.mubr.bf16.mxu0 0
        %4107 = vmatmul.mubr.bf16.gmra.mrb[0].mxu0 %v3965
        %v4108 = vpop.f32.mrb[0].mxu0
        %v4109 = vadd.f32 0.0, %v4108
        %v4110 = vpop.f32.mrb[0].mxu0
        %v4111 = vpop.f32.mrb[0].mxu0
        %v4112 = vadd.f32 0.0, %v4111
        %v4113 = vpop.f32.mrb[0].mxu0
        %4114 = vmatprep.mubr.bf16.mxu0 0
        %4115 = vmatmul.mubr.bf16.gmra.mrb[0].mxu0 %v3966
        %v4116 = vpop.f32.mrb[0].mxu0
        %v4117 = vadd.f32 0.0, %v4116
        %v4118 = vpop.f32.mrb[0].mxu0
        %v4119 = vpop.f32.mrb[0].mxu0
        %v4120 = vadd.f32 0.0, %v4119
        %v4121 = vpop.f32.mrb[0].mxu0
        %4122 = vmatprep.mubr.bf16.mxu0 0
        %4123 = vmatmul.mubr.bf16.gmra.mrb[0].mxu0 %v3967
        %v4124 = vpop.f32.mrb[0].mxu0
        %v4125 = vadd.f32 0.0, %v4124
        %v4126 = vpop.f32.mrb[0].mxu0
        %v4127 = vpop.f32.mrb[0].mxu0
        %v4128 = vadd.f32 0.0, %v4127
        %v4129 = vpop.f32.mrb[0].mxu0
        %4130 = vmatprep.mubr.bf16.mxu0 0
        %4131 = vmatmul.mubr.bf16.gmra.mrb[0].mxu0 %v3968
        %v4132 = vpop.f32.mrb[0].mxu0
        %v4133 = vadd.f32 0.0, %v4132
        %v4134 = vpop.f32.mrb[0].mxu0
        %v4135 = vpop.f32.mrb[0].mxu0
        %v4136 = vadd.f32 0.0, %v4135
        %v4137 = vpop.f32.mrb[0].mxu0
        %4138 = vmatprep.mubr.bf16.mxu0 0
        %4139 = vmatmul.mubr.bf16.gmra.mrb[0].mxu0 %v3969
        %v4140 = vpop.f32.mrb[0].mxu0
        %v4141 = vadd.f32 0.0, %v4140
        %v4142 = vpop.f32.mrb[0].mxu0
        %v4143 = vpop.f32.mrb[0].mxu0
        %v4144 = vadd.f32 0.0, %v4143
        %v4145 = vpop.f32.mrb[0].mxu0
        %4146 = vmatprep.mubr.bf16.mxu0 0
        %4147 = vmatmul.mubr.bf16.gmra.mrb[0].mxu0 %v3970
        %v4148 = vpop.f32.mrb[0].mxu0
        %v4149 = vadd.f32 0.0, %v4148
        %v4150 = vpop.f32.mrb[0].mxu0
        %v4151 = vpop.f32.mrb[0].mxu0
        %v4152 = vadd.f32 0.0, %v4151
        %v4153 = vpop.f32.mrb[0].mxu0
        %4154 = vmatprep.mubr.bf16.mxu0 0
        %4155 = vmatmul.mubr.bf16.gmra.mrb[0].mxu0 %v3971
        %v4156 = vpop.f32.mrb[0].mxu0
        %v4157 = vadd.f32 0.0, %v4156
        %v4158 = vpop.f32.mrb[0].mxu0
        %v4159 = vpop.f32.mrb[0].mxu0
        %v4160 = vadd.f32 0.0, %v4159
        %v4161 = vpop.f32.mrb[0].mxu0
        %4162 = vmatprep.mubr.bf16.mxu0 0
        %4163 = vmatmul.mubr.bf16.gmra.mrb[0].mxu0 %v3972
        %v4164 = vpop.f32.mrb[0].mxu0
        %v4165 = vadd.f32 0.0, %v4164
        %v4166 = vpop.f32.mrb[0].mxu0
        %v4167 = vpop.f32.mrb[0].mxu0
        %v4168 = vadd.f32 0.0, %v4167
        %v4169 = vpop.f32.mrb[0].mxu0
        %4170 = vmatprep.mubr.bf16.mxu0 0
        %4171 = vmatmul.mubr.bf16.gmra.mrb[0].mxu0 %v3973
        %v4172 = vpop.f32.mrb[0].mxu0
        %v4173 = vadd.f32 0.0, %v4172
        %v4174 = vpop.f32.mrb[0].mxu0
        %v4175 = vpop.f32.mrb[0].mxu0
        %v4176 = vadd.f32 0.0, %v4175
        %v4177 = vpop.f32.mrb[0].mxu0
        %4178 = vmatprep.mubr.bf16.mxu0 0
        %4179 = vmatmul.mubr.bf16.gmra.mrb[0].mxu0 %v3974
        %v4180 = vpop.f32.mrb[0].mxu0
        %v4181 = vadd.f32 0.0, %v4180
        %v4182 = vpop.f32.mrb[0].mxu0
        %v4183 = vpop.f32.mrb[0].mxu0
        %v4184 = vadd.f32 0.0, %v4183
        %v4185 = vpop.f32.mrb[0].mxu0
        %4186 = vmatprep.mubr.bf16.mxu0 0
        %4187 = vmatmul.mubr.bf16.gmra.mrb[0].mxu0 %v3975
        %v4188 = vpop.f32.mrb[0].mxu0
        %v4189 = vadd.f32 0.0, %v4188
        %v4190 = vpop.f32.mrb[0].mxu0
        %v4191 = vpop.f32.mrb[0].mxu0
        %v4192 = vadd.f32 0.0, %v4191
        %v4193 = vpop.f32.mrb[0].mxu0
        %4194 = vmatprep.mubr.bf16.mxu0 0
        %4195 = vmatmul.mubr.bf16.gmra.mrb[0].mxu0 %v3976
        %v4196 = vpop.f32.mrb[0].mxu0
        %v4197 = vadd.f32 0.0, %v4196
        %v4198 = vpop.f32.mrb[0].mxu0
        %v4199 = vpop.f32.mrb[0].mxu0
        %v4200 = vadd.f32 0.0, %v4199
        %v4201 = vpop.f32.mrb[0].mxu0
        %4202 = vdwg.mxu0
        %v4203 = vadd.f32 %v3897, %v4077
        %v4204 = vadd.f32 %v3898, %v4080
        %v4205 = vadd.f32 %v3899, %v4085
        %v4206 = vadd.f32 %v3900, %v4088
        %v4207 = vadd.f32 %v3901, %v4093
        %v4208 = vadd.f32 %v3902, %v4096
        %v4209 = vadd.f32 %v3903, %v4101
        %v4210 = vadd.f32 %v3904, %v4104
        %v4211 = vadd.f32 %v3905, %v4109
        %v4212 = vadd.f32 %v3906, %v4112
        %v4213 = vadd.f32 %v3907, %v4117
        %v4214 = vadd.f32 %v3908, %v4120
        %v4215 = vadd.f32 %v3909, %v4125
        %v4216 = vadd.f32 %v3910, %v4128
        %v4217 = vadd.f32 %v3911, %v4133
        %v4218 = vadd.f32 %v3912, %v4136
        %v4219 = vadd.f32 %v3913, %v4141
        %v4220 = vadd.f32 %v3914, %v4144
        %v4221 = vadd.f32 %v3915, %v4149
        %v4222 = vadd.f32 %v3916, %v4152
        %v4223 = vadd.f32 %v3917, %v4157
        %v4224 = vadd.f32 %v3918, %v4160
        %v4225 = vadd.f32 %v3919, %v4165
        %v4226 = vadd.f32 %v3920, %v4168
        %v4227 = vadd.f32 %v3921, %v4173
        %v4228 = vadd.f32 %v3922, %v4176
        %v4229 = vadd.f32 %v3923, %v4181
        %v4230 = vadd.f32 %v3924, %v4184
        %v4231 = vadd.f32 %v3925, %v4189
        %v4232 = vadd.f32 %v3926, %v4192
        %v4233 = vadd.f32 %v3927, %v4197
        %v4234 = vadd.f32 %v3928, %v4200
        %v4235 = vld [vmem:[%s451 + $0x7] sm:$0xff]
        %v4236 = vld [vmem:[%s451 + $0xf] sm:$0xff]
        %v4237 = vld [vmem:[%s451 + $0x27] sm:$0xff]
        %v4238 = vld [vmem:[%s451 + $0x2f] sm:$0xff]
        %v4239 = vld [vmem:[%s451 + $0x47] sm:$0xff]
        %v4240 = vld [vmem:[%s451 + $0x4f] sm:$0xff]
        %v4241 = vld [vmem:[%s451 + $0x67] sm:$0xff]
        %v4242 = vld [vmem:[%s451 + $0x6f] sm:$0xff]
        %v4243 = vld [vmem:[%s451 + $0x87] sm:$0xff]
        %v4244 = vld [vmem:[%s451 + $0x8f] sm:$0xff]
        %v4245 = vld [vmem:[%s451 + $0xa7] sm:$0xff]
        %v4246 = vld [vmem:[%s451 + $0xaf] sm:$0xff]
        %v4247 = vld [vmem:[%s451 + $0xc7] sm:$0xff]
        %v4248 = vld [vmem:[%s451 + $0xcf] sm:$0xff]
        %v4249 = vld [vmem:[%s451 + $0xe7] sm:$0xff]
        %v4250 = vld [vmem:[%s451 + $0xef] sm:$0xff]
        %v4251 = vld [vmem:[%s451 + $0x107] sm:$0xff]
        %v4252 = vld [vmem:[%s451 + $0x10f] sm:$0xff]
        %v4253 = vld [vmem:[%s451 + $0x127] sm:$0xff]
        %v4254 = vld [vmem:[%s451 + $0x12f] sm:$0xff]
        %v4255 = vld [vmem:[%s451 + $0x147] sm:$0xff]
        %v4256 = vld [vmem:[%s451 + $0x14f] sm:$0xff]
        %v4257 = vld [vmem:[%s451 + $0x167] sm:$0xff]
        %v4258 = vld [vmem:[%s451 + $0x16f] sm:$0xff]
        %v4259 = vld [vmem:[%s451 + $0x187] sm:$0xff]
        %v4260 = vld [vmem:[%s451 + $0x18f] sm:$0xff]
        %v4261 = vld [vmem:[%s451 + $0x1a7] sm:$0xff]
        %v4262 = vld [vmem:[%s451 + $0x1af] sm:$0xff]
        %v4263 = vld [vmem:[%s451 + $0x1c7] sm:$0xff]
        %v4264 = vld [vmem:[%s451 + $0x1cf] sm:$0xff]
        %v4265 = vld [vmem:[%s451 + $0x1e7] sm:$0xff]
        %v4266 = vld [vmem:[%s451 + $0x1ef] sm:$0xff]
        %v4267 = vpack.c.bf16 %v4236, %v4235
        %v4268 = vpack.c.bf16 %v4238, %v4237
        %v4269 = vpack.c.bf16 %v4240, %v4239
        %v4270 = vpack.c.bf16 %v4242, %v4241
        %v4271 = vpack.c.bf16 %v4244, %v4243
        %v4272 = vpack.c.bf16 %v4246, %v4245
        %v4273 = vpack.c.bf16 %v4248, %v4247
        %v4274 = vpack.c.bf16 %v4250, %v4249
        %v4275 = vpack.c.bf16 %v4252, %v4251
        %v4276 = vpack.c.bf16 %v4254, %v4253
        %v4277 = vpack.c.bf16 %v4256, %v4255
        %v4278 = vpack.c.bf16 %v4258, %v4257
        %v4279 = vpack.c.bf16 %v4260, %v4259
        %v4280 = vpack.c.bf16 %v4262, %v4261
        %v4281 = vpack.c.bf16 %v4264, %v4263
        %v4282 = vpack.c.bf16 %v4266, %v4265
        %s4283 = scalar_lea.vmem %s3, 192
        %v4284 = vld [vmem:[%s4283] sm:$0xf]
        %v4285 = vld [vmem:[%s4283 + $0x4] sm:$0xf]
        %v4286 = vld [vmem:[%s4283 + $0x8] sm:$0xf]
        %v4287 = vld [vmem:[%s4283 + $0xc] sm:$0xf]
        %v4288 = vld [vmem:[%s4283 + $0x10] sm:$0xf]
        %v4289 = vld [vmem:[%s4283 + $0x14] sm:$0xf]
        %v4290 = vld [vmem:[%s4283 + $0x18] sm:$0xf]
        %v4291 = vld [vmem:[%s4283 + $0x1c] sm:$0xf]
        %v4292 = vld [vmem:[%s4283 + $0x20] sm:$0xf]
        %v4293 = vld [vmem:[%s4283 + $0x24] sm:$0xf]
        %v4294 = vld [vmem:[%s4283 + $0x28] sm:$0xf]
        %v4295 = vld [vmem:[%s4283 + $0x2c] sm:$0xf]
        %v4296 = vld [vmem:[%s4283 + $0x30] sm:$0xf]
        %v4297 = vld [vmem:[%s4283 + $0x34] sm:$0xf]
        %v4298 = vld [vmem:[%s4283 + $0x38] sm:$0xf]
        %v4299 = vld [vmem:[%s4283 + $0x3c] sm:$0xf]
        %v4316 = vunpack.c.l.b16 %v4284
        %v4317 = vunpack.c.l.b16 %v4285
        %v4318 = vunpack.c.l.b16 %v4286
        %v4319 = vunpack.c.l.b16 %v4287
        %v4320 = vunpack.c.l.b16 %v4288
        %v4321 = vunpack.c.l.b16 %v4289
        %v4322 = vunpack.c.l.b16 %v4290
        %v4323 = vunpack.c.l.b16 %v4291
        %v4324 = vunpack.c.l.b16 %v4292
        %v4325 = vunpack.c.l.b16 %v4293
        %v4326 = vunpack.c.l.b16 %v4294
        %v4327 = vunpack.c.l.b16 %v4295
        %v4328 = vunpack.c.l.b16 %v4296
        %v4329 = vunpack.c.l.b16 %v4297
        %v4330 = vunpack.c.l.b16 %v4298
        %v4331 = vunpack.c.l.b16 %v4299
        %v4332 = vpack.c.b16 %v4317, %v4316
        %v4333 = vpack.c.b16 %v4319, %v4318
        %v4334 = vpack.c.b16 %v4321, %v4320
        %v4335 = vpack.c.b16 %v4323, %v4322
        %v4336 = vpack.c.b16 %v4325, %v4324
        %v4337 = vpack.c.b16 %v4327, %v4326
        %v4338 = vpack.c.b16 %v4329, %v4328
        %v4339 = vpack.c.b16 %v4331, %v4330
        %4348 = vmatprep.subr.bf16.mxu0 0
        %4349 = vmatpush1.bf16.msra.mxu0 %v4332
        %4350 = vmatprep.subr.bf16.mxu0 0
        %4351 = vmatpush1.bf16.msra.mxu0 %v4333
        %4352 = vmatprep.subr.bf16.mxu0 0
        %4353 = vmatpush1.bf16.msra.mxu0 %v4334
        %4354 = vmatprep.subr.bf16.mxu0 0
        %4355 = vmatpush1.bf16.msra.mxu0 %v4335
        %4356 = vmatprep.subr.bf16.mxu0 0
        %4357 = vmatpush1.bf16.msra.mxu0 %v4336
        %4358 = vmatprep.subr.bf16.mxu0 0
        %4359 = vmatpush1.bf16.msra.mxu0 %v4337
        %4360 = vmatprep.subr.bf16.mxu0 0
        %4361 = vmatpush1.bf16.msra.mxu0 %v4338
        %4362 = vmatprep.subr.bf16.mxu0 0
        %4363 = vmatpush1.bf16.msra.mxu0 %v4339
        %4364 = vmatprep.subr.bf16.mxu0 0
        %4365 = vmatpush1.bf16.msra.mxu0 0
        %4366 = vmatprep.subr.bf16.mxu0 0
        %4367 = vmatpush1.bf16.msra.mxu0 0
        %4368 = vmatprep.subr.bf16.mxu0 0
        %4369 = vmatpush1.bf16.msra.mxu0 0
        %4370 = vmatprep.subr.bf16.mxu0 0
        %4371 = vmatpush1.bf16.msra.mxu0 0
        %4372 = vmatprep.subr.bf16.mxu0 0
        %4373 = vmatpush1.bf16.msra.mxu0 0
        %4374 = vmatprep.subr.bf16.mxu0 0
        %4375 = vmatpush1.bf16.msra.mxu0 0
        %4376 = vmatprep.subr.bf16.mxu0 0
        %4377 = vmatpush1.bf16.msra.mxu0 0
        %4378 = vmatprep.subr.bf16.mxu0 0
        %4379 = vmatpush1.bf16.msra.mxu0 0
        %4380 = vmatprep.mubr.bf16.mxu0 0
        %4381 = vmatmul.mubr.bf16.gmra.mrb[0].mxu0 %v4267
        %v4382 = vpop.f32.mrb[0].mxu0
        %v4383 = vadd.f32 0.0, %v4382
        %v4384 = vpop.f32.mrb[0].mxu0
        %v4385 = vpop.f32.mrb[0].mxu0
        %v4386 = vadd.f32 0.0, %v4385
        %v4387 = vpop.f32.mrb[0].mxu0
        %4388 = vmatprep.mubr.bf16.mxu0 0
        %4389 = vmatmul.mubr.bf16.gmra.mrb[0].mxu0 %v4268
        %v4390 = vpop.f32.mrb[0].mxu0
        %v4391 = vadd.f32 0.0, %v4390
        %v4392 = vpop.f32.mrb[0].mxu0
        %v4393 = vpop.f32.mrb[0].mxu0
        %v4394 = vadd.f32 0.0, %v4393
        %v4395 = vpop.f32.mrb[0].mxu0
        %4396 = vmatprep.mubr.bf16.mxu0 0
        %4397 = vmatmul.mubr.bf16.gmra.mrb[0].mxu0 %v4269
        %v4398 = vpop.f32.mrb[0].mxu0
        %v4399 = vadd.f32 0.0, %v4398
        %v4400 = vpop.f32.mrb[0].mxu0
        %v4401 = vpop.f32.mrb[0].mxu0
        %v4402 = vadd.f32 0.0, %v4401
        %v4403 = vpop.f32.mrb[0].mxu0
        %4404 = vmatprep.mubr.bf16.mxu0 0
        %4405 = vmatmul.mubr.bf16.gmra.mrb[0].mxu0 %v4270
        %v4406 = vpop.f32.mrb[0].mxu0
        %v4407 = vadd.f32 0.0, %v4406
        %v4408 = vpop.f32.mrb[0].mxu0
        %v4409 = vpop.f32.mrb[0].mxu0
        %v4410 = vadd.f32 0.0, %v4409
        %v4411 = vpop.f32.mrb[0].mxu0
        %4412 = vmatprep.mubr.bf16.mxu0 0
        %4413 = vmatmul.mubr.bf16.gmra.mrb[0].mxu0 %v4271
        %v4414 = vpop.f32.mrb[0].mxu0
        %v4415 = vadd.f32 0.0, %v4414
        %v4416 = vpop.f32.mrb[0].mxu0
        %v4417 = vpop.f32.mrb[0].mxu0
        %v4418 = vadd.f32 0.0, %v4417
        %v4419 = vpop.f32.mrb[0].mxu0
        %4420 = vmatprep.mubr.bf16.mxu0 0
        %4421 = vmatmul.mubr.bf16.gmra.mrb[0].mxu0 %v4272
        %v4422 = vpop.f32.mrb[0].mxu0
        %v4423 = vadd.f32 0.0, %v4422
        %v4424 = vpop.f32.mrb[0].mxu0
        %v4425 = vpop.f32.mrb[0].mxu0
        %v4426 = vadd.f32 0.0, %v4425
        %v4427 = vpop.f32.mrb[0].mxu0
        %4428 = vmatprep.mubr.bf16.mxu0 0
        %4429 = vmatmul.mubr.bf16.gmra.mrb[0].mxu0 %v4273
        %v4430 = vpop.f32.mrb[0].mxu0
        %v4431 = vadd.f32 0.0, %v4430
        %v4432 = vpop.f32.mrb[0].mxu0
        %v4433 = vpop.f32.mrb[0].mxu0
        %v4434 = vadd.f32 0.0, %v4433
        %v4435 = vpop.f32.mrb[0].mxu0
        %4436 = vmatprep.mubr.bf16.mxu0 0
        %4437 = vmatmul.mubr.bf16.gmra.mrb[0].mxu0 %v4274
        %v4438 = vpop.f32.mrb[0].mxu0
        %v4439 = vadd.f32 0.0, %v4438
        %v4440 = vpop.f32.mrb[0].mxu0
        %v4441 = vpop.f32.mrb[0].mxu0
        %v4442 = vadd.f32 0.0, %v4441
        %v4443 = vpop.f32.mrb[0].mxu0
        %4444 = vmatprep.mubr.bf16.mxu0 0
        %4445 = vmatmul.mubr.bf16.gmra.mrb[0].mxu0 %v4275
        %v4446 = vpop.f32.mrb[0].mxu0
        %v4447 = vadd.f32 0.0, %v4446
        %v4448 = vpop.f32.mrb[0].mxu0
        %v4449 = vpop.f32.mrb[0].mxu0
        %v4450 = vadd.f32 0.0, %v4449
        %v4451 = vpop.f32.mrb[0].mxu0
        %4452 = vmatprep.mubr.bf16.mxu0 0
        %4453 = vmatmul.mubr.bf16.gmra.mrb[0].mxu0 %v4276
        %v4454 = vpop.f32.mrb[0].mxu0
        %v4455 = vadd.f32 0.0, %v4454
        %v4456 = vpop.f32.mrb[0].mxu0
        %v4457 = vpop.f32.mrb[0].mxu0
        %v4458 = vadd.f32 0.0, %v4457
        %v4459 = vpop.f32.mrb[0].mxu0
        %4460 = vmatprep.mubr.bf16.mxu0 0
        %4461 = vmatmul.mubr.bf16.gmra.mrb[0].mxu0 %v4277
        %v4462 = vpop.f32.mrb[0].mxu0
        %v4463 = vadd.f32 0.0, %v4462
        %v4464 = vpop.f32.mrb[0].mxu0
        %v4465 = vpop.f32.mrb[0].mxu0
        %v4466 = vadd.f32 0.0, %v4465
        %v4467 = vpop.f32.mrb[0].mxu0
        %4468 = vmatprep.mubr.bf16.mxu0 0
        %4469 = vmatmul.mubr.bf16.gmra.mrb[0].mxu0 %v4278
        %v4470 = vpop.f32.mrb[0].mxu0
        %v4471 = vadd.f32 0.0, %v4470
        %v4472 = vpop.f32.mrb[0].mxu0
        %v4473 = vpop.f32.mrb[0].mxu0
        %v4474 = vadd.f32 0.0, %v4473
        %v4475 = vpop.f32.mrb[0].mxu0
        %4476 = vmatprep.mubr.bf16.mxu0 0
        %4477 = vmatmul.mubr.bf16.gmra.mrb[0].mxu0 %v4279
        %v4478 = vpop.f32.mrb[0].mxu0
        %v4479 = vadd.f32 0.0, %v4478
        %v4480 = vpop.f32.mrb[0].mxu0
        %v4481 = vpop.f32.mrb[0].mxu0
        %v4482 = vadd.f32 0.0, %v4481
        %v4483 = vpop.f32.mrb[0].mxu0
        %4484 = vmatprep.mubr.bf16.mxu0 0
        %4485 = vmatmul.mubr.bf16.gmra.mrb[0].mxu0 %v4280
        %v4486 = vpop.f32.mrb[0].mxu0
        %v4487 = vadd.f32 0.0, %v4486
        %v4488 = vpop.f32.mrb[0].mxu0
        %v4489 = vpop.f32.mrb[0].mxu0
        %v4490 = vadd.f32 0.0, %v4489
        %v4491 = vpop.f32.mrb[0].mxu0
        %4492 = vmatprep.mubr.bf16.mxu0 0
        %4493 = vmatmul.mubr.bf16.gmra.mrb[0].mxu0 %v4281
        %v4494 = vpop.f32.mrb[0].mxu0
        %v4495 = vadd.f32 0.0, %v4494
        %v4496 = vpop.f32.mrb[0].mxu0
        %v4497 = vpop.f32.mrb[0].mxu0
        %v4498 = vadd.f32 0.0, %v4497
        %v4499 = vpop.f32.mrb[0].mxu0
        %4500 = vmatprep.mubr.bf16.mxu0 0
        %4501 = vmatmul.mubr.bf16.gmra.mrb[0].mxu0 %v4282
        %v4502 = vpop.f32.mrb[0].mxu0
        %v4503 = vadd.f32 0.0, %v4502
        %v4504 = vpop.f32.mrb[0].mxu0
        %v4505 = vpop.f32.mrb[0].mxu0
        %v4506 = vadd.f32 0.0, %v4505
        %v4507 = vpop.f32.mrb[0].mxu0
        %4508 = vdwg.mxu0
        %v4509 = vadd.f32 %v4203, %v4383
        %v4510 = vadd.f32 %v4204, %v4386
        %v4511 = vadd.f32 %v4205, %v4391
        %v4512 = vadd.f32 %v4206, %v4394
        %v4513 = vadd.f32 %v4207, %v4399
        %v4514 = vadd.f32 %v4208, %v4402
        %v4515 = vadd.f32 %v4209, %v4407
        %v4516 = vadd.f32 %v4210, %v4410
        %v4517 = vadd.f32 %v4211, %v4415
        %v4518 = vadd.f32 %v4212, %v4418
        %v4519 = vadd.f32 %v4213, %v4423
        %v4520 = vadd.f32 %v4214, %v4426
        %v4521 = vadd.f32 %v4215, %v4431
        %v4522 = vadd.f32 %v4216, %v4434
        %v4523 = vadd.f32 %v4217, %v4439
        %v4524 = vadd.f32 %v4218, %v4442
        %v4525 = vadd.f32 %v4219, %v4447
        %v4526 = vadd.f32 %v4220, %v4450
        %v4527 = vadd.f32 %v4221, %v4455
        %v4528 = vadd.f32 %v4222, %v4458
        %v4529 = vadd.f32 %v4223, %v4463
        %v4530 = vadd.f32 %v4224, %v4466
        %v4531 = vadd.f32 %v4225, %v4471
        %v4532 = vadd.f32 %v4226, %v4474
        %v4533 = vadd.f32 %v4227, %v4479
        %v4534 = vadd.f32 %v4228, %v4482
        %v4535 = vadd.f32 %v4229, %v4487
        %v4536 = vadd.f32 %v4230, %v4490
        %v4537 = vadd.f32 %v4231, %v4495
        %v4538 = vadd.f32 %v4232, %v4498
        %v4539 = vadd.f32 %v4233, %v4503
        %v4540 = vadd.f32 %v4234, %v4506
        %v4541 = vld [vmem:[%s451 + $0x8] sm:$0xff]
        %v4542 = vld [vmem:[%s451 + $0x10] sm:$0xff]
        %v4543 = vld [vmem:[%s451 + $0x28] sm:$0xff]
        %v4544 = vld [vmem:[%s451 + $0x30] sm:$0xff]
        %v4545 = vld [vmem:[%s451 + $0x48] sm:$0xff]
        %v4546 = vld [vmem:[%s451 + $0x50] sm:$0xff]
        %v4547 = vld [vmem:[%s451 + $0x68] sm:$0xff]
        %v4548 = vld [vmem:[%s451 + $0x70] sm:$0xff]
        %v4549 = vld [vmem:[%s451 + $0x88] sm:$0xff]
        %v4550 = vld [vmem:[%s451 + $0x90] sm:$0xff]
        %v4551 = vld [vmem:[%s451 + $0xa8] sm:$0xff]
        %v4552 = vld [vmem:[%s451 + $0xb0] sm:$0xff]
        %v4553 = vld [vmem:[%s451 + $0xc8] sm:$0xff]
        %v4554 = vld [vmem:[%s451 + $0xd0] sm:$0xff]
        %v4555 = vld [vmem:[%s451 + $0xe8] sm:$0xff]
        %v4556 = vld [vmem:[%s451 + $0xf0] sm:$0xff]
        %v4557 = vld [vmem:[%s451 + $0x108] sm:$0xff]
        %v4558 = vld [vmem:[%s451 + $0x110] sm:$0xff]
        %v4559 = vld [vmem:[%s451 + $0x128] sm:$0xff]
        %v4560 = vld [vmem:[%s451 + $0x130] sm:$0xff]
        %v4561 = vld [vmem:[%s451 + $0x148] sm:$0xff]
        %v4562 = vld [vmem:[%s451 + $0x150] sm:$0xff]
        %v4563 = vld [vmem:[%s451 + $0x168] sm:$0xff]
        %v4564 = vld [vmem:[%s451 + $0x170] sm:$0xff]
        %v4565 = vld [vmem:[%s451 + $0x188] sm:$0xff]
        %v4566 = vld [vmem:[%s451 + $0x190] sm:$0xff]
        %v4567 = vld [vmem:[%s451 + $0x1a8] sm:$0xff]
        %v4568 = vld [vmem:[%s451 + $0x1b0] sm:$0xff]
        %v4569 = vld [vmem:[%s451 + $0x1c8] sm:$0xff]
        %v4570 = vld [vmem:[%s451 + $0x1d0] sm:$0xff]
        %v4571 = vld [vmem:[%s451 + $0x1e8] sm:$0xff]
        %v4572 = vld [vmem:[%s451 + $0x1f0] sm:$0xff]
        %v4573 = vpack.c.bf16 %v4542, %v4541
        %v4574 = vpack.c.bf16 %v4544, %v4543
        %v4575 = vpack.c.bf16 %v4546, %v4545
        %v4576 = vpack.c.bf16 %v4548, %v4547
        %v4577 = vpack.c.bf16 %v4550, %v4549
        %v4578 = vpack.c.bf16 %v4552, %v4551
        %v4579 = vpack.c.bf16 %v4554, %v4553
        %v4580 = vpack.c.bf16 %v4556, %v4555
        %v4581 = vpack.c.bf16 %v4558, %v4557
        %v4582 = vpack.c.bf16 %v4560, %v4559
        %v4583 = vpack.c.bf16 %v4562, %v4561
        %v4584 = vpack.c.bf16 %v4564, %v4563
        %v4585 = vpack.c.bf16 %v4566, %v4565
        %v4586 = vpack.c.bf16 %v4568, %v4567
        %v4587 = vpack.c.bf16 %v4570, %v4569
        %v4588 = vpack.c.bf16 %v4572, %v4571
        %s4589 = scalar_lea.vmem %s3, 256
        %v4590 = vld [vmem:[%s4589] sm:$0xf]
        %v4591 = vld [vmem:[%s4589 + $0x4] sm:$0xf]
        %v4592 = vld [vmem:[%s4589 + $0x8] sm:$0xf]
        %v4593 = vld [vmem:[%s4589 + $0xc] sm:$0xf]
        %v4594 = vld [vmem:[%s4589 + $0x10] sm:$0xf]
        %v4595 = vld [vmem:[%s4589 + $0x14] sm:$0xf]
        %v4596 = vld [vmem:[%s4589 + $0x18] sm:$0xf]
        %v4597 = vld [vmem:[%s4589 + $0x1c] sm:$0xf]
        %v4598 = vld [vmem:[%s4589 + $0x20] sm:$0xf]
        %v4599 = vld [vmem:[%s4589 + $0x24] sm:$0xf]
        %v4600 = vld [vmem:[%s4589 + $0x28] sm:$0xf]
        %v4601 = vld [vmem:[%s4589 + $0x2c] sm:$0xf]
        %v4602 = vld [vmem:[%s4589 + $0x30] sm:$0xf]
        %v4603 = vld [vmem:[%s4589 + $0x34] sm:$0xf]
        %v4604 = vld [vmem:[%s4589 + $0x38] sm:$0xf]
        %v4605 = vld [vmem:[%s4589 + $0x3c] sm:$0xf]
        %v4622 = vunpack.c.l.b16 %v4590
        %v4623 = vunpack.c.l.b16 %v4591
        %v4624 = vunpack.c.l.b16 %v4592
        %v4625 = vunpack.c.l.b16 %v4593
        %v4626 = vunpack.c.l.b16 %v4594
        %v4627 = vunpack.c.l.b16 %v4595
        %v4628 = vunpack.c.l.b16 %v4596
        %v4629 = vunpack.c.l.b16 %v4597
        %v4630 = vunpack.c.l.b16 %v4598
        %v4631 = vunpack.c.l.b16 %v4599
        %v4632 = vunpack.c.l.b16 %v4600
        %v4633 = vunpack.c.l.b16 %v4601
        %v4634 = vunpack.c.l.b16 %v4602
        %v4635 = vunpack.c.l.b16 %v4603
        %v4636 = vunpack.c.l.b16 %v4604
        %v4637 = vunpack.c.l.b16 %v4605
        %v4638 = vpack.c.b16 %v4623, %v4622
        %v4639 = vpack.c.b16 %v4625, %v4624
        %v4640 = vpack.c.b16 %v4627, %v4626
        %v4641 = vpack.c.b16 %v4629, %v4628
        %v4642 = vpack.c.b16 %v4631, %v4630
        %v4643 = vpack.c.b16 %v4633, %v4632
        %v4644 = vpack.c.b16 %v4635, %v4634
        %v4645 = vpack.c.b16 %v4637, %v4636
        %4654 = vmatprep.subr.bf16.mxu0 0
        %4655 = vmatpush1.bf16.msra.mxu0 %v4638
        %4656 = vmatprep.subr.bf16.mxu0 0
        %4657 = vmatpush1.bf16.msra.mxu0 %v4639
        %4658 = vmatprep.subr.bf16.mxu0 0
        %4659 = vmatpush1.bf16.msra.mxu0 %v4640
        %4660 = vmatprep.subr.bf16.mxu0 0
        %4661 = vmatpush1.bf16.msra.mxu0 %v4641
        %4662 = vmatprep.subr.bf16.mxu0 0
        %4663 = vmatpush1.bf16.msra.mxu0 %v4642
        %4664 = vmatprep.subr.bf16.mxu0 0
        %4665 = vmatpush1.bf16.msra.mxu0 %v4643
        %4666 = vmatprep.subr.bf16.mxu0 0
        %4667 = vmatpush1.bf16.msra.mxu0 %v4644
        %4668 = vmatprep.subr.bf16.mxu0 0
        %4669 = vmatpush1.bf16.msra.mxu0 %v4645
        %4670 = vmatprep.subr.bf16.mxu0 0
        %4671 = vmatpush1.bf16.msra.mxu0 0
        %4672 = vmatprep.subr.bf16.mxu0 0
        %4673 = vmatpush1.bf16.msra.mxu0 0
        %4674 = vmatprep.subr.bf16.mxu0 0
        %4675 = vmatpush1.bf16.msra.mxu0 0
        %4676 = vmatprep.subr.bf16.mxu0 0
        %4677 = vmatpush1.bf16.msra.mxu0 0
        %4678 = vmatprep.subr.bf16.mxu0 0
        %4679 = vmatpush1.bf16.msra.mxu0 0
        %4680 = vmatprep.subr.bf16.mxu0 0
        %4681 = vmatpush1.bf16.msra.mxu0 0
        %4682 = vmatprep.subr.bf16.mxu0 0
        %4683 = vmatpush1.bf16.msra.mxu0 0
        %4684 = vmatprep.subr.bf16.mxu0 0
        %4685 = vmatpush1.bf16.msra.mxu0 0
        %4686 = vmatprep.mubr.bf16.mxu0 0
        %4687 = vmatmul.mubr.bf16.gmra.mrb[0].mxu0 %v4573
        %v4688 = vpop.f32.mrb[0].mxu0
        %v4689 = vadd.f32 0.0, %v4688
        %v4690 = vpop.f32.mrb[0].mxu0
        %v4691 = vpop.f32.mrb[0].mxu0
        %v4692 = vadd.f32 0.0, %v4691
        %v4693 = vpop.f32.mrb[0].mxu0
        %4694 = vmatprep.mubr.bf16.mxu0 0
        %4695 = vmatmul.mubr.bf16.gmra.mrb[0].mxu0 %v4574
        %v4696 = vpop.f32.mrb[0].mxu0
        %v4697 = vadd.f32 0.0, %v4696
        %v4698 = vpop.f32.mrb[0].mxu0
        %v4699 = vpop.f32.mrb[0].mxu0
        %v4700 = vadd.f32 0.0, %v4699
        %v4701 = vpop.f32.mrb[0].mxu0
        %4702 = vmatprep.mubr.bf16.mxu0 0
        %4703 = vmatmul.mubr.bf16.gmra.mrb[0].mxu0 %v4575
        %v4704 = vpop.f32.mrb[0].mxu0
        %v4705 = vadd.f32 0.0, %v4704
        %v4706 = vpop.f32.mrb[0].mxu0
        %v4707 = vpop.f32.mrb[0].mxu0
        %v4708 = vadd.f32 0.0, %v4707
        %v4709 = vpop.f32.mrb[0].mxu0
        %4710 = vmatprep.mubr.bf16.mxu0 0
        %4711 = vmatmul.mubr.bf16.gmra.mrb[0].mxu0 %v4576
        %v4712 = vpop.f32.mrb[0].mxu0
        %v4713 = vadd.f32 0.0, %v4712
        %v4714 = vpop.f32.mrb[0].mxu0
        %v4715 = vpop.f32.mrb[0].mxu0
        %v4716 = vadd.f32 0.0, %v4715
        %v4717 = vpop.f32.mrb[0].mxu0
        %4718 = vmatprep.mubr.bf16.mxu0 0
        %4719 = vmatmul.mubr.bf16.gmra.mrb[0].mxu0 %v4577
        %v4720 = vpop.f32.mrb[0].mxu0
        %v4721 = vadd.f32 0.0, %v4720
        %v4722 = vpop.f32.mrb[0].mxu0
        %v4723 = vpop.f32.mrb[0].mxu0
        %v4724 = vadd.f32 0.0, %v4723
        %v4725 = vpop.f32.mrb[0].mxu0
        %4726 = vmatprep.mubr.bf16.mxu0 0
        %4727 = vmatmul.mubr.bf16.gmra.mrb[0].mxu0 %v4578
        %v4728 = vpop.f32.mrb[0].mxu0
        %v4729 = vadd.f32 0.0, %v4728
        %v4730 = vpop.f32.mrb[0].mxu0
        %v4731 = vpop.f32.mrb[0].mxu0
        %v4732 = vadd.f32 0.0, %v4731
        %v4733 = vpop.f32.mrb[0].mxu0
        %4734 = vmatprep.mubr.bf16.mxu0 0
        %4735 = vmatmul.mubr.bf16.gmra.mrb[0].mxu0 %v4579
        %v4736 = vpop.f32.mrb[0].mxu0
        %v4737 = vadd.f32 0.0, %v4736
        %v4738 = vpop.f32.mrb[0].mxu0
        %v4739 = vpop.f32.mrb[0].mxu0
        %v4740 = vadd.f32 0.0, %v4739
        %v4741 = vpop.f32.mrb[0].mxu0
        %4742 = vmatprep.mubr.bf16.mxu0 0
        %4743 = vmatmul.mubr.bf16.gmra.mrb[0].mxu0 %v4580
        %v4744 = vpop.f32.mrb[0].mxu0
        %v4745 = vadd.f32 0.0, %v4744
        %v4746 = vpop.f32.mrb[0].mxu0
        %v4747 = vpop.f32.mrb[0].mxu0
        %v4748 = vadd.f32 0.0, %v4747
        %v4749 = vpop.f32.mrb[0].mxu0
        %4750 = vmatprep.mubr.bf16.mxu0 0
        %4751 = vmatmul.mubr.bf16.gmra.mrb[0].mxu0 %v4581
        %v4752 = vpop.f32.mrb[0].mxu0
        %v4753 = vadd.f32 0.0, %v4752
        %v4754 = vpop.f32.mrb[0].mxu0
        %v4755 = vpop.f32.mrb[0].mxu0
        %v4756 = vadd.f32 0.0, %v4755
        %v4757 = vpop.f32.mrb[0].mxu0
        %4758 = vmatprep.mubr.bf16.mxu0 0
        %4759 = vmatmul.mubr.bf16.gmra.mrb[0].mxu0 %v4582
        %v4760 = vpop.f32.mrb[0].mxu0
        %v4761 = vadd.f32 0.0, %v4760
        %v4762 = vpop.f32.mrb[0].mxu0
        %v4763 = vpop.f32.mrb[0].mxu0
        %v4764 = vadd.f32 0.0, %v4763
        %v4765 = vpop.f32.mrb[0].mxu0
        %4766 = vmatprep.mubr.bf16.mxu0 0
        %4767 = vmatmul.mubr.bf16.gmra.mrb[0].mxu0 %v4583
        %v4768 = vpop.f32.mrb[0].mxu0
        %v4769 = vadd.f32 0.0, %v4768
        %v4770 = vpop.f32.mrb[0].mxu0
        %v4771 = vpop.f32.mrb[0].mxu0
        %v4772 = vadd.f32 0.0, %v4771
        %v4773 = vpop.f32.mrb[0].mxu0
        %4774 = vmatprep.mubr.bf16.mxu0 0
        %4775 = vmatmul.mubr.bf16.gmra.mrb[0].mxu0 %v4584
        %v4776 = vpop.f32.mrb[0].mxu0
        %v4777 = vadd.f32 0.0, %v4776
        %v4778 = vpop.f32.mrb[0].mxu0
        %v4779 = vpop.f32.mrb[0].mxu0
        %v4780 = vadd.f32 0.0, %v4779
        %v4781 = vpop.f32.mrb[0].mxu0
        %4782 = vmatprep.mubr.bf16.mxu0 0
        %4783 = vmatmul.mubr.bf16.gmra.mrb[0].mxu0 %v4585
        %v4784 = vpop.f32.mrb[0].mxu0
        %v4785 = vadd.f32 0.0, %v4784
        %v4786 = vpop.f32.mrb[0].mxu0
        %v4787 = vpop.f32.mrb[0].mxu0
        %v4788 = vadd.f32 0.0, %v4787
        %v4789 = vpop.f32.mrb[0].mxu0
        %4790 = vmatprep.mubr.bf16.mxu0 0
        %4791 = vmatmul.mubr.bf16.gmra.mrb[0].mxu0 %v4586
        %v4792 = vpop.f32.mrb[0].mxu0
        %v4793 = vadd.f32 0.0, %v4792
        %v4794 = vpop.f32.mrb[0].mxu0
        %v4795 = vpop.f32.mrb[0].mxu0
        %v4796 = vadd.f32 0.0, %v4795
        %v4797 = vpop.f32.mrb[0].mxu0
        %4798 = vmatprep.mubr.bf16.mxu0 0
        %4799 = vmatmul.mubr.bf16.gmra.mrb[0].mxu0 %v4587
        %v4800 = vpop.f32.mrb[0].mxu0
        %v4801 = vadd.f32 0.0, %v4800
        %v4802 = vpop.f32.mrb[0].mxu0
        %v4803 = vpop.f32.mrb[0].mxu0
        %v4804 = vadd.f32 0.0, %v4803
        %v4805 = vpop.f32.mrb[0].mxu0
        %4806 = vmatprep.mubr.bf16.mxu0 0
        %4807 = vmatmul.mubr.bf16.gmra.mrb[0].mxu0 %v4588
        %v4808 = vpop.f32.mrb[0].mxu0
        %v4809 = vadd.f32 0.0, %v4808
        %v4810 = vpop.f32.mrb[0].mxu0
        %v4811 = vpop.f32.mrb[0].mxu0
        %v4812 = vadd.f32 0.0, %v4811
        %v4813 = vpop.f32.mrb[0].mxu0
        %4814 = vdwg.mxu0
        %v4815 = vadd.f32 %v4509, %v4689
        %v4816 = vadd.f32 %v4510, %v4692
        %v4817 = vadd.f32 %v4511, %v4697
        %v4818 = vadd.f32 %v4512, %v4700
        %v4819 = vadd.f32 %v4513, %v4705
        %v4820 = vadd.f32 %v4514, %v4708
        %v4821 = vadd.f32 %v4515, %v4713
        %v4822 = vadd.f32 %v4516, %v4716
        %v4823 = vadd.f32 %v4517, %v4721
        %v4824 = vadd.f32 %v4518, %v4724
        %v4825 = vadd.f32 %v4519, %v4729
        %v4826 = vadd.f32 %v4520, %v4732
        %v4827 = vadd.f32 %v4521, %v4737
        %v4828 = vadd.f32 %v4522, %v4740
        %v4829 = vadd.f32 %v4523, %v4745
        %v4830 = vadd.f32 %v4524, %v4748
        %v4831 = vadd.f32 %v4525, %v4753
        %v4832 = vadd.f32 %v4526, %v4756
        %v4833 = vadd.f32 %v4527, %v4761
        %v4834 = vadd.f32 %v4528, %v4764
        %v4835 = vadd.f32 %v4529, %v4769
        %v4836 = vadd.f32 %v4530, %v4772
        %v4837 = vadd.f32 %v4531, %v4777
        %v4838 = vadd.f32 %v4532, %v4780
        %v4839 = vadd.f32 %v4533, %v4785
        %v4840 = vadd.f32 %v4534, %v4788
        %v4841 = vadd.f32 %v4535, %v4793
        %v4842 = vadd.f32 %v4536, %v4796
        %v4843 = vadd.f32 %v4537, %v4801
        %v4844 = vadd.f32 %v4538, %v4804
        %v4845 = vadd.f32 %v4539, %v4809
        %v4846 = vadd.f32 %v4540, %v4812
        %v4847 = vld [vmem:[%s451 + $0x9] sm:$0xff]
        %v4848 = vld [vmem:[%s451 + $0x11] sm:$0xff]
        %v4849 = vld [vmem:[%s451 + $0x29] sm:$0xff]
        %v4850 = vld [vmem:[%s451 + $0x31] sm:$0xff]
        %v4851 = vld [vmem:[%s451 + $0x49] sm:$0xff]
        %v4852 = vld [vmem:[%s451 + $0x51] sm:$0xff]
        %v4853 = vld [vmem:[%s451 + $0x69] sm:$0xff]
        %v4854 = vld [vmem:[%s451 + $0x71] sm:$0xff]
        %v4855 = vld [vmem:[%s451 + $0x89] sm:$0xff]
        %v4856 = vld [vmem:[%s451 + $0x91] sm:$0xff]
        %v4857 = vld [vmem:[%s451 + $0xa9] sm:$0xff]
        %v4858 = vld [vmem:[%s451 + $0xb1] sm:$0xff]
        %v4859 = vld [vmem:[%s451 + $0xc9] sm:$0xff]
        %v4860 = vld [vmem:[%s451 + $0xd1] sm:$0xff]
        %v4861 = vld [vmem:[%s451 + $0xe9] sm:$0xff]
        %v4862 = vld [vmem:[%s451 + $0xf1] sm:$0xff]
        %v4863 = vld [vmem:[%s451 + $0x109] sm:$0xff]
        %v4864 = vld [vmem:[%s451 + $0x111] sm:$0xff]
        %v4865 = vld [vmem:[%s451 + $0x129] sm:$0xff]
        %v4866 = vld [vmem:[%s451 + $0x131] sm:$0xff]
        %v4867 = vld [vmem:[%s451 + $0x149] sm:$0xff]
        %v4868 = vld [vmem:[%s451 + $0x151] sm:$0xff]
        %v4869 = vld [vmem:[%s451 + $0x169] sm:$0xff]
        %v4870 = vld [vmem:[%s451 + $0x171] sm:$0xff]
        %v4871 = vld [vmem:[%s451 + $0x189] sm:$0xff]
        %v4872 = vld [vmem:[%s451 + $0x191] sm:$0xff]
        %v4873 = vld [vmem:[%s451 + $0x1a9] sm:$0xff]
        %v4874 = vld [vmem:[%s451 + $0x1b1] sm:$0xff]
        %v4875 = vld [vmem:[%s451 + $0x1c9] sm:$0xff]
        %v4876 = vld [vmem:[%s451 + $0x1d1] sm:$0xff]
        %v4877 = vld [vmem:[%s451 + $0x1e9] sm:$0xff]
        %v4878 = vld [vmem:[%s451 + $0x1f1] sm:$0xff]
        %v4879 = vpack.c.bf16 %v4848, %v4847
        %v4880 = vpack.c.bf16 %v4850, %v4849
        %v4881 = vpack.c.bf16 %v4852, %v4851
        %v4882 = vpack.c.bf16 %v4854, %v4853
        %v4883 = vpack.c.bf16 %v4856, %v4855
        %v4884 = vpack.c.bf16 %v4858, %v4857
        %v4885 = vpack.c.bf16 %v4860, %v4859
        %v4886 = vpack.c.bf16 %v4862, %v4861
        %v4887 = vpack.c.bf16 %v4864, %v4863
        %v4888 = vpack.c.bf16 %v4866, %v4865
        %v4889 = vpack.c.bf16 %v4868, %v4867
        %v4890 = vpack.c.bf16 %v4870, %v4869
        %v4891 = vpack.c.bf16 %v4872, %v4871
        %v4892 = vpack.c.bf16 %v4874, %v4873
        %v4893 = vpack.c.bf16 %v4876, %v4875
        %v4894 = vpack.c.bf16 %v4878, %v4877
        %s4895 = scalar_lea.vmem %s3, 320
        %v4896 = vld [vmem:[%s4895] sm:$0xf]
        %v4897 = vld [vmem:[%s4895 + $0x4] sm:$0xf]
        %v4898 = vld [vmem:[%s4895 + $0x8] sm:$0xf]
        %v4899 = vld [vmem:[%s4895 + $0xc] sm:$0xf]
        %v4900 = vld [vmem:[%s4895 + $0x10] sm:$0xf]
        %v4901 = vld [vmem:[%s4895 + $0x14] sm:$0xf]
        %v4902 = vld [vmem:[%s4895 + $0x18] sm:$0xf]
        %v4903 = vld [vmem:[%s4895 + $0x1c] sm:$0xf]
        %v4904 = vld [vmem:[%s4895 + $0x20] sm:$0xf]
        %v4905 = vld [vmem:[%s4895 + $0x24] sm:$0xf]
        %v4906 = vld [vmem:[%s4895 + $0x28] sm:$0xf]
        %v4907 = vld [vmem:[%s4895 + $0x2c] sm:$0xf]
        %v4908 = vld [vmem:[%s4895 + $0x30] sm:$0xf]
        %v4909 = vld [vmem:[%s4895 + $0x34] sm:$0xf]
        %v4910 = vld [vmem:[%s4895 + $0x38] sm:$0xf]
        %v4911 = vld [vmem:[%s4895 + $0x3c] sm:$0xf]
        %v4928 = vunpack.c.l.b16 %v4896
        %v4929 = vunpack.c.l.b16 %v4897
        %v4930 = vunpack.c.l.b16 %v4898
        %v4931 = vunpack.c.l.b16 %v4899
        %v4932 = vunpack.c.l.b16 %v4900
        %v4933 = vunpack.c.l.b16 %v4901
        %v4934 = vunpack.c.l.b16 %v4902
        %v4935 = vunpack.c.l.b16 %v4903
        %v4936 = vunpack.c.l.b16 %v4904
        %v4937 = vunpack.c.l.b16 %v4905
        %v4938 = vunpack.c.l.b16 %v4906
        %v4939 = vunpack.c.l.b16 %v4907
        %v4940 = vunpack.c.l.b16 %v4908
        %v4941 = vunpack.c.l.b16 %v4909
        %v4942 = vunpack.c.l.b16 %v4910
        %v4943 = vunpack.c.l.b16 %v4911
        %v4944 = vpack.c.b16 %v4929, %v4928
        %v4945 = vpack.c.b16 %v4931, %v4930
        %v4946 = vpack.c.b16 %v4933, %v4932
        %v4947 = vpack.c.b16 %v4935, %v4934
        %v4948 = vpack.c.b16 %v4937, %v4936
        %v4949 = vpack.c.b16 %v4939, %v4938
        %v4950 = vpack.c.b16 %v4941, %v4940
        %v4951 = vpack.c.b16 %v4943, %v4942
        %4960 = vmatprep.subr.bf16.mxu0 0
        %4961 = vmatpush1.bf16.msra.mxu0 %v4944
        %4962 = vmatprep.subr.bf16.mxu0 0
        %4963 = vmatpush1.bf16.msra.mxu0 %v4945
        %4964 = vmatprep.subr.bf16.mxu0 0
        %4965 = vmatpush1.bf16.msra.mxu0 %v4946
        %4966 = vmatprep.subr.bf16.mxu0 0
        %4967 = vmatpush1.bf16.msra.mxu0 %v4947
        %4968 = vmatprep.subr.bf16.mxu0 0
        %4969 = vmatpush1.bf16.msra.mxu0 %v4948
        %4970 = vmatprep.subr.bf16.mxu0 0
        %4971 = vmatpush1.bf16.msra.mxu0 %v4949
        %4972 = vmatprep.subr.bf16.mxu0 0
        %4973 = vmatpush1.bf16.msra.mxu0 %v4950
        %4974 = vmatprep.subr.bf16.mxu0 0
        %4975 = vmatpush1.bf16.msra.mxu0 %v4951
        %4976 = vmatprep.subr.bf16.mxu0 0
        %4977 = vmatpush1.bf16.msra.mxu0 0
        %4978 = vmatprep.subr.bf16.mxu0 0
        %4979 = vmatpush1.bf16.msra.mxu0 0
        %4980 = vmatprep.subr.bf16.mxu0 0
        %4981 = vmatpush1.bf16.msra.mxu0 0
        %4982 = vmatprep.subr.bf16.mxu0 0
        %4983 = vmatpush1.bf16.msra.mxu0 0
        %4984 = vmatprep.subr.bf16.mxu0 0
        %4985 = vmatpush1.bf16.msra.mxu0 0
        %4986 = vmatprep.subr.bf16.mxu0 0
        %4987 = vmatpush1.bf16.msra.mxu0 0
        %4988 = vmatprep.subr.bf16.mxu0 0
        %4989 = vmatpush1.bf16.msra.mxu0 0
        %4990 = vmatprep.subr.bf16.mxu0 0
        %4991 = vmatpush1.bf16.msra.mxu0 0
        %4992 = vmatprep.mubr.bf16.mxu0 0
        %4993 = vmatmul.mubr.bf16.gmra.mrb[0].mxu0 %v4879
        %v4994 = vpop.f32.mrb[0].mxu0
        %v4995 = vadd.f32 0.0, %v4994
        %v4996 = vpop.f32.mrb[0].mxu0
        %v4997 = vpop.f32.mrb[0].mxu0
        %v4998 = vadd.f32 0.0, %v4997
        %v4999 = vpop.f32.mrb[0].mxu0
        %5000 = vmatprep.mubr.bf16.mxu0 0
        %5001 = vmatmul.mubr.bf16.gmra.mrb[0].mxu0 %v4880
        %v5002 = vpop.f32.mrb[0].mxu0
        %v5003 = vadd.f32 0.0, %v5002
        %v5004 = vpop.f32.mrb[0].mxu0
        %v5005 = vpop.f32.mrb[0].mxu0
        %v5006 = vadd.f32 0.0, %v5005
        %v5007 = vpop.f32.mrb[0].mxu0
        %5008 = vmatprep.mubr.bf16.mxu0 0
        %5009 = vmatmul.mubr.bf16.gmra.mrb[0].mxu0 %v4881
        %v5010 = vpop.f32.mrb[0].mxu0
        %v5011 = vadd.f32 0.0, %v5010
        %v5012 = vpop.f32.mrb[0].mxu0
        %v5013 = vpop.f32.mrb[0].mxu0
        %v5014 = vadd.f32 0.0, %v5013
        %v5015 = vpop.f32.mrb[0].mxu0
        %5016 = vmatprep.mubr.bf16.mxu0 0
        %5017 = vmatmul.mubr.bf16.gmra.mrb[0].mxu0 %v4882
        %v5018 = vpop.f32.mrb[0].mxu0
        %v5019 = vadd.f32 0.0, %v5018
        %v5020 = vpop.f32.mrb[0].mxu0
        %v5021 = vpop.f32.mrb[0].mxu0
        %v5022 = vadd.f32 0.0, %v5021
        %v5023 = vpop.f32.mrb[0].mxu0
        %5024 = vmatprep.mubr.bf16.mxu0 0
        %5025 = vmatmul.mubr.bf16.gmra.mrb[0].mxu0 %v4883
        %v5026 = vpop.f32.mrb[0].mxu0
        %v5027 = vadd.f32 0.0, %v5026
        %v5028 = vpop.f32.mrb[0].mxu0
        %v5029 = vpop.f32.mrb[0].mxu0
        %v5030 = vadd.f32 0.0, %v5029
        %v5031 = vpop.f32.mrb[0].mxu0
        %5032 = vmatprep.mubr.bf16.mxu0 0
        %5033 = vmatmul.mubr.bf16.gmra.mrb[0].mxu0 %v4884
        %v5034 = vpop.f32.mrb[0].mxu0
        %v5035 = vadd.f32 0.0, %v5034
        %v5036 = vpop.f32.mrb[0].mxu0
        %v5037 = vpop.f32.mrb[0].mxu0
        %v5038 = vadd.f32 0.0, %v5037
        %v5039 = vpop.f32.mrb[0].mxu0
        %5040 = vmatprep.mubr.bf16.mxu0 0
        %5041 = vmatmul.mubr.bf16.gmra.mrb[0].mxu0 %v4885
        %v5042 = vpop.f32.mrb[0].mxu0
        %v5043 = vadd.f32 0.0, %v5042
        %v5044 = vpop.f32.mrb[0].mxu0
        %v5045 = vpop.f32.mrb[0].mxu0
        %v5046 = vadd.f32 0.0, %v5045
        %v5047 = vpop.f32.mrb[0].mxu0
        %5048 = vmatprep.mubr.bf16.mxu0 0
        %5049 = vmatmul.mubr.bf16.gmra.mrb[0].mxu0 %v4886
        %v5050 = vpop.f32.mrb[0].mxu0
        %v5051 = vadd.f32 0.0, %v5050
        %v5052 = vpop.f32.mrb[0].mxu0
        %v5053 = vpop.f32.mrb[0].mxu0
        %v5054 = vadd.f32 0.0, %v5053
        %v5055 = vpop.f32.mrb[0].mxu0
        %5056 = vmatprep.mubr.bf16.mxu0 0
        %5057 = vmatmul.mubr.bf16.gmra.mrb[0].mxu0 %v4887
        %v5058 = vpop.f32.mrb[0].mxu0
        %v5059 = vadd.f32 0.0, %v5058
        %v5060 = vpop.f32.mrb[0].mxu0
        %v5061 = vpop.f32.mrb[0].mxu0
        %v5062 = vadd.f32 0.0, %v5061
        %v5063 = vpop.f32.mrb[0].mxu0
        %5064 = vmatprep.mubr.bf16.mxu0 0
        %5065 = vmatmul.mubr.bf16.gmra.mrb[0].mxu0 %v4888
        %v5066 = vpop.f32.mrb[0].mxu0
        %v5067 = vadd.f32 0.0, %v5066
        %v5068 = vpop.f32.mrb[0].mxu0
        %v5069 = vpop.f32.mrb[0].mxu0
        %v5070 = vadd.f32 0.0, %v5069
        %v5071 = vpop.f32.mrb[0].mxu0
        %5072 = vmatprep.mubr.bf16.mxu0 0
        %5073 = vmatmul.mubr.bf16.gmra.mrb[0].mxu0 %v4889
        %v5074 = vpop.f32.mrb[0].mxu0
        %v5075 = vadd.f32 0.0, %v5074
        %v5076 = vpop.f32.mrb[0].mxu0
        %v5077 = vpop.f32.mrb[0].mxu0
        %v5078 = vadd.f32 0.0, %v5077
        %v5079 = vpop.f32.mrb[0].mxu0
        %5080 = vmatprep.mubr.bf16.mxu0 0
        %5081 = vmatmul.mubr.bf16.gmra.mrb[0].mxu0 %v4890
        %v5082 = vpop.f32.mrb[0].mxu0
        %v5083 = vadd.f32 0.0, %v5082
        %v5084 = vpop.f32.mrb[0].mxu0
        %v5085 = vpop.f32.mrb[0].mxu0
        %v5086 = vadd.f32 0.0, %v5085
        %v5087 = vpop.f32.mrb[0].mxu0
        %5088 = vmatprep.mubr.bf16.mxu0 0
        %5089 = vmatmul.mubr.bf16.gmra.mrb[0].mxu0 %v4891
        %v5090 = vpop.f32.mrb[0].mxu0
        %v5091 = vadd.f32 0.0, %v5090
        %v5092 = vpop.f32.mrb[0].mxu0
        %v5093 = vpop.f32.mrb[0].mxu0
        %v5094 = vadd.f32 0.0, %v5093
        %v5095 = vpop.f32.mrb[0].mxu0
        %5096 = vmatprep.mubr.bf16.mxu0 0
        %5097 = vmatmul.mubr.bf16.gmra.mrb[0].mxu0 %v4892
        %v5098 = vpop.f32.mrb[0].mxu0
        %v5099 = vadd.f32 0.0, %v5098
        %v5100 = vpop.f32.mrb[0].mxu0
        %v5101 = vpop.f32.mrb[0].mxu0
        %v5102 = vadd.f32 0.0, %v5101
        %v5103 = vpop.f32.mrb[0].mxu0
        %5104 = vmatprep.mubr.bf16.mxu0 0
        %5105 = vmatmul.mubr.bf16.gmra.mrb[0].mxu0 %v4893
        %v5106 = vpop.f32.mrb[0].mxu0
        %v5107 = vadd.f32 0.0, %v5106
        %v5108 = vpop.f32.mrb[0].mxu0
        %v5109 = vpop.f32.mrb[0].mxu0
        %v5110 = vadd.f32 0.0, %v5109
        %v5111 = vpop.f32.mrb[0].mxu0
        %5112 = vmatprep.mubr.bf16.mxu0 0
        %5113 = vmatmul.mubr.bf16.gmra.mrb[0].mxu0 %v4894
        %v5114 = vpop.f32.mrb[0].mxu0
        %v5115 = vadd.f32 0.0, %v5114
        %v5116 = vpop.f32.mrb[0].mxu0
        %v5117 = vpop.f32.mrb[0].mxu0
        %v5118 = vadd.f32 0.0, %v5117
        %v5119 = vpop.f32.mrb[0].mxu0
        %5120 = vdwg.mxu0
        %v5121 = vadd.f32 %v4815, %v4995
        %v5122 = vadd.f32 %v4816, %v4998
        %v5123 = vadd.f32 %v4817, %v5003
        %v5124 = vadd.f32 %v4818, %v5006
        %v5125 = vadd.f32 %v4819, %v5011
        %v5126 = vadd.f32 %v4820, %v5014
        %v5127 = vadd.f32 %v4821, %v5019
        %v5128 = vadd.f32 %v4822, %v5022
        %v5129 = vadd.f32 %v4823, %v5027
        %v5130 = vadd.f32 %v4824, %v5030
        %v5131 = vadd.f32 %v4825, %v5035
        %v5132 = vadd.f32 %v4826, %v5038
        %v5133 = vadd.f32 %v4827, %v5043
        %v5134 = vadd.f32 %v4828, %v5046
        %v5135 = vadd.f32 %v4829, %v5051
        %v5136 = vadd.f32 %v4830, %v5054
        %v5137 = vadd.f32 %v4831, %v5059
        %v5138 = vadd.f32 %v4832, %v5062
        %v5139 = vadd.f32 %v4833, %v5067
        %v5140 = vadd.f32 %v4834, %v5070
        %v5141 = vadd.f32 %v4835, %v5075
        %v5142 = vadd.f32 %v4836, %v5078
        %v5143 = vadd.f32 %v4837, %v5083
        %v5144 = vadd.f32 %v4838, %v5086
        %v5145 = vadd.f32 %v4839, %v5091
        %v5146 = vadd.f32 %v4840, %v5094
        %v5147 = vadd.f32 %v4841, %v5099
        %v5148 = vadd.f32 %v4842, %v5102
        %v5149 = vadd.f32 %v4843, %v5107
        %v5150 = vadd.f32 %v4844, %v5110
        %v5151 = vadd.f32 %v4845, %v5115
        %v5152 = vadd.f32 %v4846, %v5118
        %v5153 = vld [vmem:[%s2327 + $0x7] sm:$0xff]
        %v5154 = vld [vmem:[%s2327 + $0xf] sm:$0xff]
        %v5155 = vld [vmem:[%s2327 + $0x27] sm:$0xff]
        %v5156 = vld [vmem:[%s2327 + $0x2f] sm:$0xff]
        %v5157 = vld [vmem:[%s2327 + $0x47] sm:$0xff]
        %v5158 = vld [vmem:[%s2327 + $0x4f] sm:$0xff]
        %v5159 = vld [vmem:[%s2327 + $0x67] sm:$0xff]
        %v5160 = vld [vmem:[%s2327 + $0x6f] sm:$0xff]
        %v5161 = vld [vmem:[%s2327 + $0x87] sm:$0xff]
        %v5162 = vld [vmem:[%s2327 + $0x8f] sm:$0xff]
        %v5163 = vld [vmem:[%s2327 + $0xa7] sm:$0xff]
        %v5164 = vld [vmem:[%s2327 + $0xaf] sm:$0xff]
        %v5165 = vld [vmem:[%s2327 + $0xc7] sm:$0xff]
        %v5166 = vld [vmem:[%s2327 + $0xcf] sm:$0xff]
        %v5167 = vld [vmem:[%s2327 + $0xe7] sm:$0xff]
        %v5168 = vld [vmem:[%s2327 + $0xef] sm:$0xff]
        %v5169 = vld [vmem:[%s2327 + $0x107] sm:$0xff]
        %v5170 = vld [vmem:[%s2327 + $0x10f] sm:$0xff]
        %v5171 = vld [vmem:[%s2327 + $0x127] sm:$0xff]
        %v5172 = vld [vmem:[%s2327 + $0x12f] sm:$0xff]
        %v5173 = vld [vmem:[%s2327 + $0x147] sm:$0xff]
        %v5174 = vld [vmem:[%s2327 + $0x14f] sm:$0xff]
        %v5175 = vld [vmem:[%s2327 + $0x167] sm:$0xff]
        %v5176 = vld [vmem:[%s2327 + $0x16f] sm:$0xff]
        %v5177 = vld [vmem:[%s2327 + $0x187] sm:$0xff]
        %v5178 = vld [vmem:[%s2327 + $0x18f] sm:$0xff]
        %v5179 = vld [vmem:[%s2327 + $0x1a7] sm:$0xff]
        %v5180 = vld [vmem:[%s2327 + $0x1af] sm:$0xff]
        %v5181 = vld [vmem:[%s2327 + $0x1c7] sm:$0xff]
        %v5182 = vld [vmem:[%s2327 + $0x1cf] sm:$0xff]
        %v5183 = vld [vmem:[%s2327 + $0x1e7] sm:$0xff]
        %v5184 = vld [vmem:[%s2327 + $0x1ef] sm:$0xff]
        %v5185 = vpack.c.bf16 %v5154, %v5153
        %v5186 = vpack.c.bf16 %v5156, %v5155
        %v5187 = vpack.c.bf16 %v5158, %v5157
        %v5188 = vpack.c.bf16 %v5160, %v5159
        %v5189 = vpack.c.bf16 %v5162, %v5161
        %v5190 = vpack.c.bf16 %v5164, %v5163
        %v5191 = vpack.c.bf16 %v5166, %v5165
        %v5192 = vpack.c.bf16 %v5168, %v5167
        %v5193 = vpack.c.bf16 %v5170, %v5169
        %v5194 = vpack.c.bf16 %v5172, %v5171
        %v5195 = vpack.c.bf16 %v5174, %v5173
        %v5196 = vpack.c.bf16 %v5176, %v5175
        %v5197 = vpack.c.bf16 %v5178, %v5177
        %v5198 = vpack.c.bf16 %v5180, %v5179
        %v5199 = vpack.c.bf16 %v5182, %v5181
        %v5200 = vpack.c.bf16 %v5184, %v5183
        %s5201 = scalar_lea.vmem %s3, 384
        %v5202 = vld [vmem:[%s5201] sm:$0xf]
        %v5203 = vld [vmem:[%s5201 + $0x4] sm:$0xf]
        %v5204 = vld [vmem:[%s5201 + $0x8] sm:$0xf]
        %v5205 = vld [vmem:[%s5201 + $0xc] sm:$0xf]
        %v5206 = vld [vmem:[%s5201 + $0x10] sm:$0xf]
        %v5207 = vld [vmem:[%s5201 + $0x14] sm:$0xf]
        %v5208 = vld [vmem:[%s5201 + $0x18] sm:$0xf]
        %v5209 = vld [vmem:[%s5201 + $0x1c] sm:$0xf]
        %v5210 = vld [vmem:[%s5201 + $0x20] sm:$0xf]
        %v5211 = vld [vmem:[%s5201 + $0x24] sm:$0xf]
        %v5212 = vld [vmem:[%s5201 + $0x28] sm:$0xf]
        %v5213 = vld [vmem:[%s5201 + $0x2c] sm:$0xf]
        %v5214 = vld [vmem:[%s5201 + $0x30] sm:$0xf]
        %v5215 = vld [vmem:[%s5201 + $0x34] sm:$0xf]
        %v5216 = vld [vmem:[%s5201 + $0x38] sm:$0xf]
        %v5217 = vld [vmem:[%s5201 + $0x3c] sm:$0xf]
        %v5234 = vunpack.c.l.b16 %v5202
        %v5235 = vunpack.c.l.b16 %v5203
        %v5236 = vunpack.c.l.b16 %v5204
        %v5237 = vunpack.c.l.b16 %v5205
        %v5238 = vunpack.c.l.b16 %v5206
        %v5239 = vunpack.c.l.b16 %v5207
        %v5240 = vunpack.c.l.b16 %v5208
        %v5241 = vunpack.c.l.b16 %v5209
        %v5242 = vunpack.c.l.b16 %v5210
        %v5243 = vunpack.c.l.b16 %v5211
        %v5244 = vunpack.c.l.b16 %v5212
        %v5245 = vunpack.c.l.b16 %v5213
        %v5246 = vunpack.c.l.b16 %v5214
        %v5247 = vunpack.c.l.b16 %v5215
        %v5248 = vunpack.c.l.b16 %v5216
        %v5249 = vunpack.c.l.b16 %v5217
        %v5250 = vpack.c.b16 %v5235, %v5234
        %v5251 = vpack.c.b16 %v5237, %v5236
        %v5252 = vpack.c.b16 %v5239, %v5238
        %v5253 = vpack.c.b16 %v5241, %v5240
        %v5254 = vpack.c.b16 %v5243, %v5242
        %v5255 = vpack.c.b16 %v5245, %v5244
        %v5256 = vpack.c.b16 %v5247, %v5246
        %v5257 = vpack.c.b16 %v5249, %v5248
        %5266 = vmatprep.subr.bf16.mxu0 0
        %5267 = vmatpush1.bf16.msra.mxu0 %v5250
        %5268 = vmatprep.subr.bf16.mxu0 0
        %5269 = vmatpush1.bf16.msra.mxu0 %v5251
        %5270 = vmatprep.subr.bf16.mxu0 0
        %5271 = vmatpush1.bf16.msra.mxu0 %v5252
        %5272 = vmatprep.subr.bf16.mxu0 0
        %5273 = vmatpush1.bf16.msra.mxu0 %v5253
        %5274 = vmatprep.subr.bf16.mxu0 0
        %5275 = vmatpush1.bf16.msra.mxu0 %v5254
        %5276 = vmatprep.subr.bf16.mxu0 0
        %5277 = vmatpush1.bf16.msra.mxu0 %v5255
        %5278 = vmatprep.subr.bf16.mxu0 0
        %5279 = vmatpush1.bf16.msra.mxu0 %v5256
        %5280 = vmatprep.subr.bf16.mxu0 0
        %5281 = vmatpush1.bf16.msra.mxu0 %v5257
        %5282 = vmatprep.subr.bf16.mxu0 0
        %5283 = vmatpush1.bf16.msra.mxu0 0
        %5284 = vmatprep.subr.bf16.mxu0 0
        %5285 = vmatpush1.bf16.msra.mxu0 0
        %5286 = vmatprep.subr.bf16.mxu0 0
        %5287 = vmatpush1.bf16.msra.mxu0 0
        %5288 = vmatprep.subr.bf16.mxu0 0
        %5289 = vmatpush1.bf16.msra.mxu0 0
        %5290 = vmatprep.subr.bf16.mxu0 0
        %5291 = vmatpush1.bf16.msra.mxu0 0
        %5292 = vmatprep.subr.bf16.mxu0 0
        %5293 = vmatpush1.bf16.msra.mxu0 0
        %5294 = vmatprep.subr.bf16.mxu0 0
        %5295 = vmatpush1.bf16.msra.mxu0 0
        %5296 = vmatprep.subr.bf16.mxu0 0
        %5297 = vmatpush1.bf16.msra.mxu0 0
        %5298 = vmatprep.mubr.bf16.mxu0 0
        %5299 = vmatmul.mubr.bf16.gmra.mrb[0].mxu0 %v5185
        %v5300 = vpop.f32.mrb[0].mxu0
        %v5301 = vadd.f32 0.0, %v5300
        %v5302 = vpop.f32.mrb[0].mxu0
        %v5303 = vpop.f32.mrb[0].mxu0
        %v5304 = vadd.f32 0.0, %v5303
        %v5305 = vpop.f32.mrb[0].mxu0
        %5306 = vmatprep.mubr.bf16.mxu0 0
        %5307 = vmatmul.mubr.bf16.gmra.mrb[0].mxu0 %v5186
        %v5308 = vpop.f32.mrb[0].mxu0
        %v5309 = vadd.f32 0.0, %v5308
        %v5310 = vpop.f32.mrb[0].mxu0
        %v5311 = vpop.f32.mrb[0].mxu0
        %v5312 = vadd.f32 0.0, %v5311
        %v5313 = vpop.f32.mrb[0].mxu0
        %5314 = vmatprep.mubr.bf16.mxu0 0
        %5315 = vmatmul.mubr.bf16.gmra.mrb[0].mxu0 %v5187
        %v5316 = vpop.f32.mrb[0].mxu0
        %v5317 = vadd.f32 0.0, %v5316
        %v5318 = vpop.f32.mrb[0].mxu0
        %v5319 = vpop.f32.mrb[0].mxu0
        %v5320 = vadd.f32 0.0, %v5319
        %v5321 = vpop.f32.mrb[0].mxu0
        %5322 = vmatprep.mubr.bf16.mxu0 0
        %5323 = vmatmul.mubr.bf16.gmra.mrb[0].mxu0 %v5188
        %v5324 = vpop.f32.mrb[0].mxu0
        %v5325 = vadd.f32 0.0, %v5324
        %v5326 = vpop.f32.mrb[0].mxu0
        %v5327 = vpop.f32.mrb[0].mxu0
        %v5328 = vadd.f32 0.0, %v5327
        %v5329 = vpop.f32.mrb[0].mxu0
        %5330 = vmatprep.mubr.bf16.mxu0 0
        %5331 = vmatmul.mubr.bf16.gmra.mrb[0].mxu0 %v5189
        %v5332 = vpop.f32.mrb[0].mxu0
        %v5333 = vadd.f32 0.0, %v5332
        %v5334 = vpop.f32.mrb[0].mxu0
        %v5335 = vpop.f32.mrb[0].mxu0
        %v5336 = vadd.f32 0.0, %v5335
        %v5337 = vpop.f32.mrb[0].mxu0
        %5338 = vmatprep.mubr.bf16.mxu0 0
        %5339 = vmatmul.mubr.bf16.gmra.mrb[0].mxu0 %v5190
        %v5340 = vpop.f32.mrb[0].mxu0
        %v5341 = vadd.f32 0.0, %v5340
        %v5342 = vpop.f32.mrb[0].mxu0
        %v5343 = vpop.f32.mrb[0].mxu0
        %v5344 = vadd.f32 0.0, %v5343
        %v5345 = vpop.f32.mrb[0].mxu0
        %5346 = vmatprep.mubr.bf16.mxu0 0
        %5347 = vmatmul.mubr.bf16.gmra.mrb[0].mxu0 %v5191
        %v5348 = vpop.f32.mrb[0].mxu0
        %v5349 = vadd.f32 0.0, %v5348
        %v5350 = vpop.f32.mrb[0].mxu0
        %v5351 = vpop.f32.mrb[0].mxu0
        %v5352 = vadd.f32 0.0, %v5351
        %v5353 = vpop.f32.mrb[0].mxu0
        %5354 = vmatprep.mubr.bf16.mxu0 0
        %5355 = vmatmul.mubr.bf16.gmra.mrb[0].mxu0 %v5192
        %v5356 = vpop.f32.mrb[0].mxu0
        %v5357 = vadd.f32 0.0, %v5356
        %v5358 = vpop.f32.mrb[0].mxu0
        %v5359 = vpop.f32.mrb[0].mxu0
        %v5360 = vadd.f32 0.0, %v5359
        %v5361 = vpop.f32.mrb[0].mxu0
        %5362 = vmatprep.mubr.bf16.mxu0 0
        %5363 = vmatmul.mubr.bf16.gmra.mrb[0].mxu0 %v5193
        %v5364 = vpop.f32.mrb[0].mxu0
        %v5365 = vadd.f32 0.0, %v5364
        %v5366 = vpop.f32.mrb[0].mxu0
        %v5367 = vpop.f32.mrb[0].mxu0
        %v5368 = vadd.f32 0.0, %v5367
        %v5369 = vpop.f32.mrb[0].mxu0
        %5370 = vmatprep.mubr.bf16.mxu0 0
        %5371 = vmatmul.mubr.bf16.gmra.mrb[0].mxu0 %v5194
        %v5372 = vpop.f32.mrb[0].mxu0
        %v5373 = vadd.f32 0.0, %v5372
        %v5374 = vpop.f32.mrb[0].mxu0
        %v5375 = vpop.f32.mrb[0].mxu0
        %v5376 = vadd.f32 0.0, %v5375
        %v5377 = vpop.f32.mrb[0].mxu0
        %5378 = vmatprep.mubr.bf16.mxu0 0
        %5379 = vmatmul.mubr.bf16.gmra.mrb[0].mxu0 %v5195
        %v5380 = vpop.f32.mrb[0].mxu0
        %v5381 = vadd.f32 0.0, %v5380
        %v5382 = vpop.f32.mrb[0].mxu0
        %v5383 = vpop.f32.mrb[0].mxu0
        %v5384 = vadd.f32 0.0, %v5383
        %v5385 = vpop.f32.mrb[0].mxu0
        %5386 = vmatprep.mubr.bf16.mxu0 0
        %5387 = vmatmul.mubr.bf16.gmra.mrb[0].mxu0 %v5196
        %v5388 = vpop.f32.mrb[0].mxu0
        %v5389 = vadd.f32 0.0, %v5388
        %v5390 = vpop.f32.mrb[0].mxu0
        %v5391 = vpop.f32.mrb[0].mxu0
        %v5392 = vadd.f32 0.0, %v5391
        %v5393 = vpop.f32.mrb[0].mxu0
        %5394 = vmatprep.mubr.bf16.mxu0 0
        %5395 = vmatmul.mubr.bf16.gmra.mrb[0].mxu0 %v5197
        %v5396 = vpop.f32.mrb[0].mxu0
        %v5397 = vadd.f32 0.0, %v5396
        %v5398 = vpop.f32.mrb[0].mxu0
        %v5399 = vpop.f32.mrb[0].mxu0
        %v5400 = vadd.f32 0.0, %v5399
        %v5401 = vpop.f32.mrb[0].mxu0
        %5402 = vmatprep.mubr.bf16.mxu0 0
        %5403 = vmatmul.mubr.bf16.gmra.mrb[0].mxu0 %v5198
        %v5404 = vpop.f32.mrb[0].mxu0
        %v5405 = vadd.f32 0.0, %v5404
        %v5406 = vpop.f32.mrb[0].mxu0
        %v5407 = vpop.f32.mrb[0].mxu0
        %v5408 = vadd.f32 0.0, %v5407
        %v5409 = vpop.f32.mrb[0].mxu0
        %5410 = vmatprep.mubr.bf16.mxu0 0
        %5411 = vmatmul.mubr.bf16.gmra.mrb[0].mxu0 %v5199
        %v5412 = vpop.f32.mrb[0].mxu0
        %v5413 = vadd.f32 0.0, %v5412
        %v5414 = vpop.f32.mrb[0].mxu0
        %v5415 = vpop.f32.mrb[0].mxu0
        %v5416 = vadd.f32 0.0, %v5415
        %v5417 = vpop.f32.mrb[0].mxu0
        %5418 = vmatprep.mubr.bf16.mxu0 0
        %5419 = vmatmul.mubr.bf16.gmra.mrb[0].mxu0 %v5200
        %v5420 = vpop.f32.mrb[0].mxu0
        %v5421 = vadd.f32 0.0, %v5420
        %v5422 = vpop.f32.mrb[0].mxu0
        %v5423 = vpop.f32.mrb[0].mxu0
        %v5424 = vadd.f32 0.0, %v5423
        %v5425 = vpop.f32.mrb[0].mxu0
        %5426 = vdwg.mxu0
        %v5427 = vadd.f32 %v5121, %v5301
        %v5428 = vadd.f32 %v5122, %v5304
        %v5429 = vadd.f32 %v5123, %v5309
        %v5430 = vadd.f32 %v5124, %v5312
        %v5431 = vadd.f32 %v5125, %v5317
        %v5432 = vadd.f32 %v5126, %v5320
        %v5433 = vadd.f32 %v5127, %v5325
        %v5434 = vadd.f32 %v5128, %v5328
        %v5435 = vadd.f32 %v5129, %v5333
        %v5436 = vadd.f32 %v5130, %v5336
        %v5437 = vadd.f32 %v5131, %v5341
        %v5438 = vadd.f32 %v5132, %v5344
        %v5439 = vadd.f32 %v5133, %v5349
        %v5440 = vadd.f32 %v5134, %v5352
        %v5441 = vadd.f32 %v5135, %v5357
        %v5442 = vadd.f32 %v5136, %v5360
        %v5443 = vadd.f32 %v5137, %v5365
        %v5444 = vadd.f32 %v5138, %v5368
        %v5445 = vadd.f32 %v5139, %v5373
        %v5446 = vadd.f32 %v5140, %v5376
        %v5447 = vadd.f32 %v5141, %v5381
        %v5448 = vadd.f32 %v5142, %v5384
        %v5449 = vadd.f32 %v5143, %v5389
        %v5450 = vadd.f32 %v5144, %v5392
        %v5451 = vadd.f32 %v5145, %v5397
        %v5452 = vadd.f32 %v5146, %v5400
        %v5453 = vadd.f32 %v5147, %v5405
        %v5454 = vadd.f32 %v5148, %v5408
        %v5455 = vadd.f32 %v5149, %v5413
        %v5456 = vadd.f32 %v5150, %v5416
        %v5457 = vadd.f32 %v5151, %v5421
        %v5458 = vadd.f32 %v5152, %v5424
        %v5459 = vld [vmem:[%s2327 + $0x8] sm:$0xff]
        %v5460 = vld [vmem:[%s2327 + $0x10] sm:$0xff]
        %v5461 = vld [vmem:[%s2327 + $0x28] sm:$0xff]
        %v5462 = vld [vmem:[%s2327 + $0x30] sm:$0xff]
        %v5463 = vld [vmem:[%s2327 + $0x48] sm:$0xff]
        %v5464 = vld [vmem:[%s2327 + $0x50] sm:$0xff]
        %v5465 = vld [vmem:[%s2327 + $0x68] sm:$0xff]
        %v5466 = vld [vmem:[%s2327 + $0x70] sm:$0xff]
        %v5467 = vld [vmem:[%s2327 + $0x88] sm:$0xff]
        %v5468 = vld [vmem:[%s2327 + $0x90] sm:$0xff]
        %v5469 = vld [vmem:[%s2327 + $0xa8] sm:$0xff]
        %v5470 = vld [vmem:[%s2327 + $0xb0] sm:$0xff]
        %v5471 = vld [vmem:[%s2327 + $0xc8] sm:$0xff]
        %v5472 = vld [vmem:[%s2327 + $0xd0] sm:$0xff]
        %v5473 = vld [vmem:[%s2327 + $0xe8] sm:$0xff]
        %v5474 = vld [vmem:[%s2327 + $0xf0] sm:$0xff]
        %v5475 = vld [vmem:[%s2327 + $0x108] sm:$0xff]
        %v5476 = vld [vmem:[%s2327 + $0x110] sm:$0xff]
        %v5477 = vld [vmem:[%s2327 + $0x128] sm:$0xff]
        %v5478 = vld [vmem:[%s2327 + $0x130] sm:$0xff]
        %v5479 = vld [vmem:[%s2327 + $0x148] sm:$0xff]
        %v5480 = vld [vmem:[%s2327 + $0x150] sm:$0xff]
        %v5481 = vld [vmem:[%s2327 + $0x168] sm:$0xff]
        %v5482 = vld [vmem:[%s2327 + $0x170] sm:$0xff]
        %v5483 = vld [vmem:[%s2327 + $0x188] sm:$0xff]
        %v5484 = vld [vmem:[%s2327 + $0x190] sm:$0xff]
        %v5485 = vld [vmem:[%s2327 + $0x1a8] sm:$0xff]
        %v5486 = vld [vmem:[%s2327 + $0x1b0] sm:$0xff]
        %v5487 = vld [vmem:[%s2327 + $0x1c8] sm:$0xff]
        %v5488 = vld [vmem:[%s2327 + $0x1d0] sm:$0xff]
        %v5489 = vld [vmem:[%s2327 + $0x1e8] sm:$0xff]
        %v5490 = vld [vmem:[%s2327 + $0x1f0] sm:$0xff]
        %v5491 = vpack.c.bf16 %v5460, %v5459
        %v5492 = vpack.c.bf16 %v5462, %v5461
        %v5493 = vpack.c.bf16 %v5464, %v5463
        %v5494 = vpack.c.bf16 %v5466, %v5465
        %v5495 = vpack.c.bf16 %v5468, %v5467
        %v5496 = vpack.c.bf16 %v5470, %v5469
        %v5497 = vpack.c.bf16 %v5472, %v5471
        %v5498 = vpack.c.bf16 %v5474, %v5473
        %v5499 = vpack.c.bf16 %v5476, %v5475
        %v5500 = vpack.c.bf16 %v5478, %v5477
        %v5501 = vpack.c.bf16 %v5480, %v5479
        %v5502 = vpack.c.bf16 %v5482, %v5481
        %v5503 = vpack.c.bf16 %v5484, %v5483
        %v5504 = vpack.c.bf16 %v5486, %v5485
        %v5505 = vpack.c.bf16 %v5488, %v5487
        %v5506 = vpack.c.bf16 %v5490, %v5489
        %s5507 = scalar_lea.vmem %s3, 448
        %v5508 = vld [vmem:[%s5507] sm:$0xf]
        %v5509 = vld [vmem:[%s5507 + $0x4] sm:$0xf]
        %v5510 = vld [vmem:[%s5507 + $0x8] sm:$0xf]
        %v5511 = vld [vmem:[%s5507 + $0xc] sm:$0xf]
        %v5512 = vld [vmem:[%s5507 + $0x10] sm:$0xf]
        %v5513 = vld [vmem:[%s5507 + $0x14] sm:$0xf]
        %v5514 = vld [vmem:[%s5507 + $0x18] sm:$0xf]
        %v5515 = vld [vmem:[%s5507 + $0x1c] sm:$0xf]
        %v5516 = vld [vmem:[%s5507 + $0x20] sm:$0xf]
        %v5517 = vld [vmem:[%s5507 + $0x24] sm:$0xf]
        %v5518 = vld [vmem:[%s5507 + $0x28] sm:$0xf]
        %v5519 = vld [vmem:[%s5507 + $0x2c] sm:$0xf]
        %v5520 = vld [vmem:[%s5507 + $0x30] sm:$0xf]
        %v5521 = vld [vmem:[%s5507 + $0x34] sm:$0xf]
        %v5522 = vld [vmem:[%s5507 + $0x38] sm:$0xf]
        %v5523 = vld [vmem:[%s5507 + $0x3c] sm:$0xf]
        %v5540 = vunpack.c.l.b16 %v5508
        %v5541 = vunpack.c.l.b16 %v5509
        %v5542 = vunpack.c.l.b16 %v5510
        %v5543 = vunpack.c.l.b16 %v5511
        %v5544 = vunpack.c.l.b16 %v5512
        %v5545 = vunpack.c.l.b16 %v5513
        %v5546 = vunpack.c.l.b16 %v5514
        %v5547 = vunpack.c.l.b16 %v5515
        %v5548 = vunpack.c.l.b16 %v5516
        %v5549 = vunpack.c.l.b16 %v5517
        %v5550 = vunpack.c.l.b16 %v5518
        %v5551 = vunpack.c.l.b16 %v5519
        %v5552 = vunpack.c.l.b16 %v5520
        %v5553 = vunpack.c.l.b16 %v5521
        %v5554 = vunpack.c.l.b16 %v5522
        %v5555 = vunpack.c.l.b16 %v5523
        %v5556 = vpack.c.b16 %v5541, %v5540
        %v5557 = vpack.c.b16 %v5543, %v5542
        %v5558 = vpack.c.b16 %v5545, %v5544
        %v5559 = vpack.c.b16 %v5547, %v5546
        %v5560 = vpack.c.b16 %v5549, %v5548
        %v5561 = vpack.c.b16 %v5551, %v5550
        %v5562 = vpack.c.b16 %v5553, %v5552
        %v5563 = vpack.c.b16 %v5555, %v5554
        %5572 = vmatprep.subr.bf16.mxu0 0
        %5573 = vmatpush1.bf16.msra.mxu0 %v5556
        %5574 = vmatprep.subr.bf16.mxu0 0
        %5575 = vmatpush1.bf16.msra.mxu0 %v5557
        %5576 = vmatprep.subr.bf16.mxu0 0
        %5577 = vmatpush1.bf16.msra.mxu0 %v5558
        %5578 = vmatprep.subr.bf16.mxu0 0
        %5579 = vmatpush1.bf16.msra.mxu0 %v5559
        %5580 = vmatprep.subr.bf16.mxu0 0
        %5581 = vmatpush1.bf16.msra.mxu0 %v5560
        %5582 = vmatprep.subr.bf16.mxu0 0
        %5583 = vmatpush1.bf16.msra.mxu0 %v5561
        %5584 = vmatprep.subr.bf16.mxu0 0
        %5585 = vmatpush1.bf16.msra.mxu0 %v5562
        %5586 = vmatprep.subr.bf16.mxu0 0
        %5587 = vmatpush1.bf16.msra.mxu0 %v5563
        %5588 = vmatprep.subr.bf16.mxu0 0
        %5589 = vmatpush1.bf16.msra.mxu0 0
        %5590 = vmatprep.subr.bf16.mxu0 0
        %5591 = vmatpush1.bf16.msra.mxu0 0
        %5592 = vmatprep.subr.bf16.mxu0 0
        %5593 = vmatpush1.bf16.msra.mxu0 0
        %5594 = vmatprep.subr.bf16.mxu0 0
        %5595 = vmatpush1.bf16.msra.mxu0 0
        %5596 = vmatprep.subr.bf16.mxu0 0
        %5597 = vmatpush1.bf16.msra.mxu0 0
        %5598 = vmatprep.subr.bf16.mxu0 0
        %5599 = vmatpush1.bf16.msra.mxu0 0
        %5600 = vmatprep.subr.bf16.mxu0 0
        %5601 = vmatpush1.bf16.msra.mxu0 0
        %5602 = vmatprep.subr.bf16.mxu0 0
        %5603 = vmatpush1.bf16.msra.mxu0 0
        %5604 = vmatprep.mubr.bf16.mxu0 0
        %5605 = vmatmul.mubr.bf16.gmra.mrb[0].mxu0 %v5491
        %v5606 = vpop.f32.mrb[0].mxu0
        %v5607 = vadd.f32 0.0, %v5606
        %v5608 = vpop.f32.mrb[0].mxu0
        %v5609 = vpop.f32.mrb[0].mxu0
        %v5610 = vadd.f32 0.0, %v5609
        %v5611 = vpop.f32.mrb[0].mxu0
        %5612 = vmatprep.mubr.bf16.mxu0 0
        %5613 = vmatmul.mubr.bf16.gmra.mrb[0].mxu0 %v5492
        %v5614 = vpop.f32.mrb[0].mxu0
        %v5615 = vadd.f32 0.0, %v5614
        %v5616 = vpop.f32.mrb[0].mxu0
        %v5617 = vpop.f32.mrb[0].mxu0
        %v5618 = vadd.f32 0.0, %v5617
        %v5619 = vpop.f32.mrb[0].mxu0
        %5620 = vmatprep.mubr.bf16.mxu0 0
        %5621 = vmatmul.mubr.bf16.gmra.mrb[0].mxu0 %v5493
        %v5622 = vpop.f32.mrb[0].mxu0
        %v5623 = vadd.f32 0.0, %v5622
        %v5624 = vpop.f32.mrb[0].mxu0
        %v5625 = vpop.f32.mrb[0].mxu0
        %v5626 = vadd.f32 0.0, %v5625
        %v5627 = vpop.f32.mrb[0].mxu0
        %5628 = vmatprep.mubr.bf16.mxu0 0
        %5629 = vmatmul.mubr.bf16.gmra.mrb[0].mxu0 %v5494
        %v5630 = vpop.f32.mrb[0].mxu0
        %v5631 = vadd.f32 0.0, %v5630
        %v5632 = vpop.f32.mrb[0].mxu0
        %v5633 = vpop.f32.mrb[0].mxu0
        %v5634 = vadd.f32 0.0, %v5633
        %v5635 = vpop.f32.mrb[0].mxu0
        %5636 = vmatprep.mubr.bf16.mxu0 0
        %5637 = vmatmul.mubr.bf16.gmra.mrb[0].mxu0 %v5495
        %v5638 = vpop.f32.mrb[0].mxu0
        %v5639 = vadd.f32 0.0, %v5638
        %v5640 = vpop.f32.mrb[0].mxu0
        %v5641 = vpop.f32.mrb[0].mxu0
        %v5642 = vadd.f32 0.0, %v5641
        %v5643 = vpop.f32.mrb[0].mxu0
        %5644 = vmatprep.mubr.bf16.mxu0 0
        %5645 = vmatmul.mubr.bf16.gmra.mrb[0].mxu0 %v5496
        %v5646 = vpop.f32.mrb[0].mxu0
        %v5647 = vadd.f32 0.0, %v5646
        %v5648 = vpop.f32.mrb[0].mxu0
        %v5649 = vpop.f32.mrb[0].mxu0
        %v5650 = vadd.f32 0.0, %v5649
        %v5651 = vpop.f32.mrb[0].mxu0
        %5652 = vmatprep.mubr.bf16.mxu0 0
        %5653 = vmatmul.mubr.bf16.gmra.mrb[0].mxu0 %v5497
        %v5654 = vpop.f32.mrb[0].mxu0
        %v5655 = vadd.f32 0.0, %v5654
        %v5656 = vpop.f32.mrb[0].mxu0
        %v5657 = vpop.f32.mrb[0].mxu0
        %v5658 = vadd.f32 0.0, %v5657
        %v5659 = vpop.f32.mrb[0].mxu0
        %5660 = vmatprep.mubr.bf16.mxu0 0
        %5661 = vmatmul.mubr.bf16.gmra.mrb[0].mxu0 %v5498
        %v5662 = vpop.f32.mrb[0].mxu0
        %v5663 = vadd.f32 0.0, %v5662
        %v5664 = vpop.f32.mrb[0].mxu0
        %v5665 = vpop.f32.mrb[0].mxu0
        %v5666 = vadd.f32 0.0, %v5665
        %v5667 = vpop.f32.mrb[0].mxu0
        %5668 = vmatprep.mubr.bf16.mxu0 0
        %5669 = vmatmul.mubr.bf16.gmra.mrb[0].mxu0 %v5499
        %v5670 = vpop.f32.mrb[0].mxu0
        %v5671 = vadd.f32 0.0, %v5670
        %v5672 = vpop.f32.mrb[0].mxu0
        %v5673 = vpop.f32.mrb[0].mxu0
        %v5674 = vadd.f32 0.0, %v5673
        %v5675 = vpop.f32.mrb[0].mxu0
        %5676 = vmatprep.mubr.bf16.mxu0 0
        %5677 = vmatmul.mubr.bf16.gmra.mrb[0].mxu0 %v5500
        %v5678 = vpop.f32.mrb[0].mxu0
        %v5679 = vadd.f32 0.0, %v5678
        %v5680 = vpop.f32.mrb[0].mxu0
        %v5681 = vpop.f32.mrb[0].mxu0
        %v5682 = vadd.f32 0.0, %v5681
        %v5683 = vpop.f32.mrb[0].mxu0
        %5684 = vmatprep.mubr.bf16.mxu0 0
        %5685 = vmatmul.mubr.bf16.gmra.mrb[0].mxu0 %v5501
        %v5686 = vpop.f32.mrb[0].mxu0
        %v5687 = vadd.f32 0.0, %v5686
        %v5688 = vpop.f32.mrb[0].mxu0
        %v5689 = vpop.f32.mrb[0].mxu0
        %v5690 = vadd.f32 0.0, %v5689
        %v5691 = vpop.f32.mrb[0].mxu0
        %5692 = vmatprep.mubr.bf16.mxu0 0
        %5693 = vmatmul.mubr.bf16.gmra.mrb[0].mxu0 %v5502
        %v5694 = vpop.f32.mrb[0].mxu0
        %v5695 = vadd.f32 0.0, %v5694
        %v5696 = vpop.f32.mrb[0].mxu0
        %v5697 = vpop.f32.mrb[0].mxu0
        %v5698 = vadd.f32 0.0, %v5697
        %v5699 = vpop.f32.mrb[0].mxu0
        %5700 = vmatprep.mubr.bf16.mxu0 0
        %5701 = vmatmul.mubr.bf16.gmra.mrb[0].mxu0 %v5503
        %v5702 = vpop.f32.mrb[0].mxu0
        %v5703 = vadd.f32 0.0, %v5702
        %v5704 = vpop.f32.mrb[0].mxu0
        %v5705 = vpop.f32.mrb[0].mxu0
        %v5706 = vadd.f32 0.0, %v5705
        %v5707 = vpop.f32.mrb[0].mxu0
        %5708 = vmatprep.mubr.bf16.mxu0 0
        %5709 = vmatmul.mubr.bf16.gmra.mrb[0].mxu0 %v5504
        %v5710 = vpop.f32.mrb[0].mxu0
        %v5711 = vadd.f32 0.0, %v5710
        %v5712 = vpop.f32.mrb[0].mxu0
        %v5713 = vpop.f32.mrb[0].mxu0
        %v5714 = vadd.f32 0.0, %v5713
        %v5715 = vpop.f32.mrb[0].mxu0
        %5716 = vmatprep.mubr.bf16.mxu0 0
        %5717 = vmatmul.mubr.bf16.gmra.mrb[0].mxu0 %v5505
        %v5718 = vpop.f32.mrb[0].mxu0
        %v5719 = vadd.f32 0.0, %v5718
        %v5720 = vpop.f32.mrb[0].mxu0
        %v5721 = vpop.f32.mrb[0].mxu0
        %v5722 = vadd.f32 0.0, %v5721
        %v5723 = vpop.f32.mrb[0].mxu0
        %5724 = vmatprep.mubr.bf16.mxu0 0
        %5725 = vmatmul.mubr.bf16.gmra.mrb[0].mxu0 %v5506
        %v5726 = vpop.f32.mrb[0].mxu0
        %v5727 = vadd.f32 0.0, %v5726
        %v5728 = vpop.f32.mrb[0].mxu0
        %v5729 = vpop.f32.mrb[0].mxu0
        %v5730 = vadd.f32 0.0, %v5729
        %v5731 = vpop.f32.mrb[0].mxu0
        %5732 = vdwg.mxu0
        %v5733 = vadd.f32 %v5427, %v5607
        %v5734 = vadd.f32 %v5428, %v5610
        %v5735 = vadd.f32 %v5429, %v5615
        %v5736 = vadd.f32 %v5430, %v5618
        %v5737 = vadd.f32 %v5431, %v5623
        %v5738 = vadd.f32 %v5432, %v5626
        %v5739 = vadd.f32 %v5433, %v5631
        %v5740 = vadd.f32 %v5434, %v5634
        %v5741 = vadd.f32 %v5435, %v5639
        %v5742 = vadd.f32 %v5436, %v5642
        %v5743 = vadd.f32 %v5437, %v5647
        %v5744 = vadd.f32 %v5438, %v5650
        %v5745 = vadd.f32 %v5439, %v5655
        %v5746 = vadd.f32 %v5440, %v5658
        %v5747 = vadd.f32 %v5441, %v5663
        %v5748 = vadd.f32 %v5442, %v5666
        %v5749 = vadd.f32 %v5443, %v5671
        %v5750 = vadd.f32 %v5444, %v5674
        %v5751 = vadd.f32 %v5445, %v5679
        %v5752 = vadd.f32 %v5446, %v5682
        %v5753 = vadd.f32 %v5447, %v5687
        %v5754 = vadd.f32 %v5448, %v5690
        %v5755 = vadd.f32 %v5449, %v5695
        %v5756 = vadd.f32 %v5450, %v5698
        %v5757 = vadd.f32 %v5451, %v5703
        %v5758 = vadd.f32 %v5452, %v5706
        %v5759 = vadd.f32 %v5453, %v5711
        %v5760 = vadd.f32 %v5454, %v5714
        %v5761 = vadd.f32 %v5455, %v5719
        %v5762 = vadd.f32 %v5456, %v5722
        %v5763 = vadd.f32 %v5457, %v5727
        %v5764 = vadd.f32 %v5458, %v5730
        %v5765 = vld [vmem:[%s2327 + $0x9] sm:$0xff]
        %v5766 = vld [vmem:[%s2327 + $0x11] sm:$0xff]
        %v5767 = vld [vmem:[%s2327 + $0x29] sm:$0xff]
        %v5768 = vld [vmem:[%s2327 + $0x31] sm:$0xff]
        %v5769 = vld [vmem:[%s2327 + $0x49] sm:$0xff]
        %v5770 = vld [vmem:[%s2327 + $0x51] sm:$0xff]
        %v5771 = vld [vmem:[%s2327 + $0x69] sm:$0xff]
        %v5772 = vld [vmem:[%s2327 + $0x71] sm:$0xff]
        %v5773 = vld [vmem:[%s2327 + $0x89] sm:$0xff]
        %v5774 = vld [vmem:[%s2327 + $0x91] sm:$0xff]
        %v5775 = vld [vmem:[%s2327 + $0xa9] sm:$0xff]
        %v5776 = vld [vmem:[%s2327 + $0xb1] sm:$0xff]
        %v5777 = vld [vmem:[%s2327 + $0xc9] sm:$0xff]
        %v5778 = vld [vmem:[%s2327 + $0xd1] sm:$0xff]
        %v5779 = vld [vmem:[%s2327 + $0xe9] sm:$0xff]
        %v5780 = vld [vmem:[%s2327 + $0xf1] sm:$0xff]
        %v5781 = vld [vmem:[%s2327 + $0x109] sm:$0xff]
        %v5782 = vld [vmem:[%s2327 + $0x111] sm:$0xff]
        %v5783 = vld [vmem:[%s2327 + $0x129] sm:$0xff]
        %v5784 = vld [vmem:[%s2327 + $0x131] sm:$0xff]
        %v5785 = vld [vmem:[%s2327 + $0x149] sm:$0xff]
        %v5786 = vld [vmem:[%s2327 + $0x151] sm:$0xff]
        %v5787 = vld [vmem:[%s2327 + $0x169] sm:$0xff]
        %v5788 = vld [vmem:[%s2327 + $0x171] sm:$0xff]
        %v5789 = vld [vmem:[%s2327 + $0x189] sm:$0xff]
        %v5790 = vld [vmem:[%s2327 + $0x191] sm:$0xff]
        %v5791 = vld [vmem:[%s2327 + $0x1a9] sm:$0xff]
        %v5792 = vld [vmem:[%s2327 + $0x1b1] sm:$0xff]
        %v5793 = vld [vmem:[%s2327 + $0x1c9] sm:$0xff]
        %v5794 = vld [vmem:[%s2327 + $0x1d1] sm:$0xff]
        %v5795 = vld [vmem:[%s2327 + $0x1e9] sm:$0xff]
        %v5796 = vld [vmem:[%s2327 + $0x1f1] sm:$0xff]
        %v5797 = vpack.c.bf16 %v5766, %v5765
        %v5798 = vpack.c.bf16 %v5768, %v5767
        %v5799 = vpack.c.bf16 %v5770, %v5769
        %v5800 = vpack.c.bf16 %v5772, %v5771
        %v5801 = vpack.c.bf16 %v5774, %v5773
        %v5802 = vpack.c.bf16 %v5776, %v5775
        %v5803 = vpack.c.bf16 %v5778, %v5777
        %v5804 = vpack.c.bf16 %v5780, %v5779
        %v5805 = vpack.c.bf16 %v5782, %v5781
        %v5806 = vpack.c.bf16 %v5784, %v5783
        %v5807 = vpack.c.bf16 %v5786, %v5785
        %v5808 = vpack.c.bf16 %v5788, %v5787
        %v5809 = vpack.c.bf16 %v5790, %v5789
        %v5810 = vpack.c.bf16 %v5792, %v5791
        %v5811 = vpack.c.bf16 %v5794, %v5793
        %v5812 = vpack.c.bf16 %v5796, %v5795
        %s5813 = scalar_lea.vmem %s3, 512
        %v5814 = vld [vmem:[%s5813] sm:$0xf]
        %v5815 = vld [vmem:[%s5813 + $0x4] sm:$0xf]
        %v5816 = vld [vmem:[%s5813 + $0x8] sm:$0xf]
        %v5817 = vld [vmem:[%s5813 + $0xc] sm:$0xf]
        %v5818 = vld [vmem:[%s5813 + $0x10] sm:$0xf]
        %v5819 = vld [vmem:[%s5813 + $0x14] sm:$0xf]
        %v5820 = vld [vmem:[%s5813 + $0x18] sm:$0xf]
        %v5821 = vld [vmem:[%s5813 + $0x1c] sm:$0xf]
        %v5822 = vld [vmem:[%s5813 + $0x20] sm:$0xf]
        %v5823 = vld [vmem:[%s5813 + $0x24] sm:$0xf]
        %v5824 = vld [vmem:[%s5813 + $0x28] sm:$0xf]
        %v5825 = vld [vmem:[%s5813 + $0x2c] sm:$0xf]
        %v5826 = vld [vmem:[%s5813 + $0x30] sm:$0xf]
        %v5827 = vld [vmem:[%s5813 + $0x34] sm:$0xf]
        %v5828 = vld [vmem:[%s5813 + $0x38] sm:$0xf]
        %v5829 = vld [vmem:[%s5813 + $0x3c] sm:$0xf]
        %v5846 = vunpack.c.l.b16 %v5814
        %v5847 = vunpack.c.l.b16 %v5815
        %v5848 = vunpack.c.l.b16 %v5816
        %v5849 = vunpack.c.l.b16 %v5817
        %v5850 = vunpack.c.l.b16 %v5818
        %v5851 = vunpack.c.l.b16 %v5819
        %v5852 = vunpack.c.l.b16 %v5820
        %v5853 = vunpack.c.l.b16 %v5821
        %v5854 = vunpack.c.l.b16 %v5822
        %v5855 = vunpack.c.l.b16 %v5823
        %v5856 = vunpack.c.l.b16 %v5824
        %v5857 = vunpack.c.l.b16 %v5825
        %v5858 = vunpack.c.l.b16 %v5826
        %v5859 = vunpack.c.l.b16 %v5827
        %v5860 = vunpack.c.l.b16 %v5828
        %v5861 = vunpack.c.l.b16 %v5829
        %v5862 = vpack.c.b16 %v5847, %v5846
        %v5863 = vpack.c.b16 %v5849, %v5848
        %v5864 = vpack.c.b16 %v5851, %v5850
        %v5865 = vpack.c.b16 %v5853, %v5852
        %v5866 = vpack.c.b16 %v5855, %v5854
        %v5867 = vpack.c.b16 %v5857, %v5856
        %v5868 = vpack.c.b16 %v5859, %v5858
        %v5869 = vpack.c.b16 %v5861, %v5860
        %5878 = vmatprep.subr.bf16.mxu0 0
        %5879 = vmatpush1.bf16.msra.mxu0 %v5862
        %5880 = vmatprep.subr.bf16.mxu0 0
        %5881 = vmatpush1.bf16.msra.mxu0 %v5863
        %5882 = vmatprep.subr.bf16.mxu0 0
        %5883 = vmatpush1.bf16.msra.mxu0 %v5864
        %5884 = vmatprep.subr.bf16.mxu0 0
        %5885 = vmatpush1.bf16.msra.mxu0 %v5865
        %5886 = vmatprep.subr.bf16.mxu0 0
        %5887 = vmatpush1.bf16.msra.mxu0 %v5866
        %5888 = vmatprep.subr.bf16.mxu0 0
        %5889 = vmatpush1.bf16.msra.mxu0 %v5867
        %5890 = vmatprep.subr.bf16.mxu0 0
        %5891 = vmatpush1.bf16.msra.mxu0 %v5868
        %5892 = vmatprep.subr.bf16.mxu0 0
        %5893 = vmatpush1.bf16.msra.mxu0 %v5869
        %5894 = vmatprep.subr.bf16.mxu0 0
        %5895 = vmatpush1.bf16.msra.mxu0 0
        %5896 = vmatprep.subr.bf16.mxu0 0
        %5897 = vmatpush1.bf16.msra.mxu0 0
        %5898 = vmatprep.subr.bf16.mxu0 0
        %5899 = vmatpush1.bf16.msra.mxu0 0
        %5900 = vmatprep.subr.bf16.mxu0 0
        %5901 = vmatpush1.bf16.msra.mxu0 0
        %5902 = vmatprep.subr.bf16.mxu0 0
        %5903 = vmatpush1.bf16.msra.mxu0 0
        %5904 = vmatprep.subr.bf16.mxu0 0
        %5905 = vmatpush1.bf16.msra.mxu0 0
        %5906 = vmatprep.subr.bf16.mxu0 0
        %5907 = vmatpush1.bf16.msra.mxu0 0
        %5908 = vmatprep.subr.bf16.mxu0 0
        %5909 = vmatpush1.bf16.msra.mxu0 0
        %5910 = vmatprep.mubr.bf16.mxu0 0
        %5911 = vmatmul.mubr.bf16.gmra.mrb[0].mxu0 %v5797
        %v5912 = vpop.f32.mrb[0].mxu0
        %v5913 = vadd.f32 0.0, %v5912
        %v5914 = vpop.f32.mrb[0].mxu0
        %v5915 = vpop.f32.mrb[0].mxu0
        %v5916 = vadd.f32 0.0, %v5915
        %v5917 = vpop.f32.mrb[0].mxu0
        %5918 = vmatprep.mubr.bf16.mxu0 0
        %5919 = vmatmul.mubr.bf16.gmra.mrb[0].mxu0 %v5798
        %v5920 = vpop.f32.mrb[0].mxu0
        %v5921 = vadd.f32 0.0, %v5920
        %v5922 = vpop.f32.mrb[0].mxu0
        %v5923 = vpop.f32.mrb[0].mxu0
        %v5924 = vadd.f32 0.0, %v5923
        %v5925 = vpop.f32.mrb[0].mxu0
        %5926 = vmatprep.mubr.bf16.mxu0 0
        %5927 = vmatmul.mubr.bf16.gmra.mrb[0].mxu0 %v5799
        %v5928 = vpop.f32.mrb[0].mxu0
        %v5929 = vadd.f32 0.0, %v5928
        %v5930 = vpop.f32.mrb[0].mxu0
        %v5931 = vpop.f32.mrb[0].mxu0
        %v5932 = vadd.f32 0.0, %v5931
        %v5933 = vpop.f32.mrb[0].mxu0
        %5934 = vmatprep.mubr.bf16.mxu0 0
        %5935 = vmatmul.mubr.bf16.gmra.mrb[0].mxu0 %v5800
        %v5936 = vpop.f32.mrb[0].mxu0
        %v5937 = vadd.f32 0.0, %v5936
        %v5938 = vpop.f32.mrb[0].mxu0
        %v5939 = vpop.f32.mrb[0].mxu0
        %v5940 = vadd.f32 0.0, %v5939
        %v5941 = vpop.f32.mrb[0].mxu0
        %5942 = vmatprep.mubr.bf16.mxu0 0
        %5943 = vmatmul.mubr.bf16.gmra.mrb[0].mxu0 %v5801
        %v5944 = vpop.f32.mrb[0].mxu0
        %v5945 = vadd.f32 0.0, %v5944
        %v5946 = vpop.f32.mrb[0].mxu0
        %v5947 = vpop.f32.mrb[0].mxu0
        %v5948 = vadd.f32 0.0, %v5947
        %v5949 = vpop.f32.mrb[0].mxu0
        %5950 = vmatprep.mubr.bf16.mxu0 0
        %5951 = vmatmul.mubr.bf16.gmra.mrb[0].mxu0 %v5802
        %v5952 = vpop.f32.mrb[0].mxu0
        %v5953 = vadd.f32 0.0, %v5952
        %v5954 = vpop.f32.mrb[0].mxu0
        %v5955 = vpop.f32.mrb[0].mxu0
        %v5956 = vadd.f32 0.0, %v5955
        %v5957 = vpop.f32.mrb[0].mxu0
        %5958 = vmatprep.mubr.bf16.mxu0 0
        %5959 = vmatmul.mubr.bf16.gmra.mrb[0].mxu0 %v5803
        %v5960 = vpop.f32.mrb[0].mxu0
        %v5961 = vadd.f32 0.0, %v5960
        %v5962 = vpop.f32.mrb[0].mxu0
        %v5963 = vpop.f32.mrb[0].mxu0
        %v5964 = vadd.f32 0.0, %v5963
        %v5965 = vpop.f32.mrb[0].mxu0
        %5966 = vmatprep.mubr.bf16.mxu0 0
        %5967 = vmatmul.mubr.bf16.gmra.mrb[0].mxu0 %v5804
        %v5968 = vpop.f32.mrb[0].mxu0
        %v5969 = vadd.f32 0.0, %v5968
        %v5970 = vpop.f32.mrb[0].mxu0
        %v5971 = vpop.f32.mrb[0].mxu0
        %v5972 = vadd.f32 0.0, %v5971
        %v5973 = vpop.f32.mrb[0].mxu0
        %5974 = vmatprep.mubr.bf16.mxu0 0
        %5975 = vmatmul.mubr.bf16.gmra.mrb[0].mxu0 %v5805
        %v5976 = vpop.f32.mrb[0].mxu0
        %v5977 = vadd.f32 0.0, %v5976
        %v5978 = vpop.f32.mrb[0].mxu0
        %v5979 = vpop.f32.mrb[0].mxu0
        %v5980 = vadd.f32 0.0, %v5979
        %v5981 = vpop.f32.mrb[0].mxu0
        %5982 = vmatprep.mubr.bf16.mxu0 0
        %5983 = vmatmul.mubr.bf16.gmra.mrb[0].mxu0 %v5806
        %v5984 = vpop.f32.mrb[0].mxu0
        %v5985 = vadd.f32 0.0, %v5984
        %v5986 = vpop.f32.mrb[0].mxu0
        %v5987 = vpop.f32.mrb[0].mxu0
        %v5988 = vadd.f32 0.0, %v5987
        %v5989 = vpop.f32.mrb[0].mxu0
        %5990 = vmatprep.mubr.bf16.mxu0 0
        %5991 = vmatmul.mubr.bf16.gmra.mrb[0].mxu0 %v5807
        %v5992 = vpop.f32.mrb[0].mxu0
        %v5993 = vadd.f32 0.0, %v5992
        %v5994 = vpop.f32.mrb[0].mxu0
        %v5995 = vpop.f32.mrb[0].mxu0
        %v5996 = vadd.f32 0.0, %v5995
        %v5997 = vpop.f32.mrb[0].mxu0
        %5998 = vmatprep.mubr.bf16.mxu0 0
        %5999 = vmatmul.mubr.bf16.gmra.mrb[0].mxu0 %v5808
        %v6000 = vpop.f32.mrb[0].mxu0
        %v6001 = vadd.f32 0.0, %v6000
        %v6002 = vpop.f32.mrb[0].mxu0
        %v6003 = vpop.f32.mrb[0].mxu0
        %v6004 = vadd.f32 0.0, %v6003
        %v6005 = vpop.f32.mrb[0].mxu0
        %6006 = vmatprep.mubr.bf16.mxu0 0
        %6007 = vmatmul.mubr.bf16.gmra.mrb[0].mxu0 %v5809
        %v6008 = vpop.f32.mrb[0].mxu0
        %v6009 = vadd.f32 0.0, %v6008
        %v6010 = vpop.f32.mrb[0].mxu0
        %v6011 = vpop.f32.mrb[0].mxu0
        %v6012 = vadd.f32 0.0, %v6011
        %v6013 = vpop.f32.mrb[0].mxu0
        %6014 = vmatprep.mubr.bf16.mxu0 0
        %6015 = vmatmul.mubr.bf16.gmra.mrb[0].mxu0 %v5810
        %v6016 = vpop.f32.mrb[0].mxu0
        %v6017 = vadd.f32 0.0, %v6016
        %v6018 = vpop.f32.mrb[0].mxu0
        %v6019 = vpop.f32.mrb[0].mxu0
        %v6020 = vadd.f32 0.0, %v6019
        %v6021 = vpop.f32.mrb[0].mxu0
        %6022 = vmatprep.mubr.bf16.mxu0 0
        %6023 = vmatmul.mubr.bf16.gmra.mrb[0].mxu0 %v5811
        %v6024 = vpop.f32.mrb[0].mxu0
        %v6025 = vadd.f32 0.0, %v6024
        %v6026 = vpop.f32.mrb[0].mxu0
        %v6027 = vpop.f32.mrb[0].mxu0
        %v6028 = vadd.f32 0.0, %v6027
        %v6029 = vpop.f32.mrb[0].mxu0
        %6030 = vmatprep.mubr.bf16.mxu0 0
        %6031 = vmatmul.mubr.bf16.gmra.mrb[0].mxu0 %v5812
        %v6032 = vpop.f32.mrb[0].mxu0
        %v6033 = vadd.f32 0.0, %v6032
        %v6034 = vpop.f32.mrb[0].mxu0
        %v6035 = vpop.f32.mrb[0].mxu0
        %v6036 = vadd.f32 0.0, %v6035
        %v6037 = vpop.f32.mrb[0].mxu0
        %6038 = vdwg.mxu0
        %v6039 = vadd.f32 %v5733, %v5913
        %v6040 = vadd.f32 %v5734, %v5916
        %v6041 = vadd.f32 %v5735, %v5921
        %v6042 = vadd.f32 %v5736, %v5924
        %v6043 = vadd.f32 %v5737, %v5929
        %v6044 = vadd.f32 %v5738, %v5932
        %v6045 = vadd.f32 %v5739, %v5937
        %v6046 = vadd.f32 %v5740, %v5940
        %v6047 = vadd.f32 %v5741, %v5945
        %v6048 = vadd.f32 %v5742, %v5948
        %v6049 = vadd.f32 %v5743, %v5953
        %v6050 = vadd.f32 %v5744, %v5956
        %v6051 = vadd.f32 %v5745, %v5961
        %v6052 = vadd.f32 %v5746, %v5964
        %v6053 = vadd.f32 %v5747, %v5969
        %v6054 = vadd.f32 %v5748, %v5972
        %v6055 = vadd.f32 %v5749, %v5977
        %v6056 = vadd.f32 %v5750, %v5980
        %v6057 = vadd.f32 %v5751, %v5985
        %v6058 = vadd.f32 %v5752, %v5988
        %v6059 = vadd.f32 %v5753, %v5993
        %v6060 = vadd.f32 %v5754, %v5996
        %v6061 = vadd.f32 %v5755, %v6001
        %v6062 = vadd.f32 %v5756, %v6004
        %v6063 = vadd.f32 %v5757, %v6009
        %v6064 = vadd.f32 %v5758, %v6012
        %v6065 = vadd.f32 %v5759, %v6017
        %v6066 = vadd.f32 %v5760, %v6020
        %v6067 = vadd.f32 %v5761, %v6025
        %v6068 = vadd.f32 %v5762, %v6028
        %v6069 = vadd.f32 %v5763, %v6033
        %v6070 = vadd.f32 %v5764, %v6036
        %v6071 = vmax.f32 %v6039, 0.0
        %v6072 = vmax.f32 %v6040, 0.0
        %v6073 = vmax.f32 %v6041, 0.0
        %v6074 = vmax.f32 %v6042, 0.0
        %v6075 = vmax.f32 %v6043, 0.0
        %v6076 = vmax.f32 %v6044, 0.0
        %v6077 = vmax.f32 %v6045, 0.0
        %v6078 = vmax.f32 %v6046, 0.0
        %v6079 = vmax.f32 %v6047, 0.0
        %v6080 = vmax.f32 %v6048, 0.0
        %v6081 = vmax.f32 %v6049, 0.0
        %v6082 = vmax.f32 %v6050, 0.0
        %v6083 = vmax.f32 %v6051, 0.0
        %v6084 = vmax.f32 %v6052, 0.0
        %v6085 = vmax.f32 %v6053, 0.0
        %v6086 = vmax.f32 %v6054, 0.0
        %v6087 = vmax.f32 %v6055, 0.0
        %v6088 = vmax.f32 %v6056, 0.0
        %v6089 = vmax.f32 %v6057, 0.0
        %v6090 = vmax.f32 %v6058, 0.0
        %v6091 = vmax.f32 %v6059, 0.0
        %v6092 = vmax.f32 %v6060, 0.0
        %v6093 = vmax.f32 %v6061, 0.0
        %v6094 = vmax.f32 %v6062, 0.0
        %v6095 = vmax.f32 %v6063, 0.0
        %v6096 = vmax.f32 %v6064, 0.0
        %v6097 = vmax.f32 %v6065, 0.0
        %v6098 = vmax.f32 %v6066, 0.0
        %v6099 = vmax.f32 %v6067, 0.0
        %v6100 = vmax.f32 %v6068, 0.0
        %v6101 = vmax.f32 %v6069, 0.0
        %v6102 = vmax.f32 %v6070, 0.0
        %6103 = vst [vmem:[%s451 + $0x8] sm:$0xff] %v6071
        %6104 = vst [vmem:[%s451 + $0x10] sm:$0xff] %v6072
        %6105 = vst [vmem:[%s451 + $0x28] sm:$0xff] %v6073
        %6106 = vst [vmem:[%s451 + $0x30] sm:$0xff] %v6074
        %6107 = vst [vmem:[%s451 + $0x48] sm:$0xff] %v6075
        %6108 = vst [vmem:[%s451 + $0x50] sm:$0xff] %v6076
        %6109 = vst [vmem:[%s451 + $0x68] sm:$0xff] %v6077
        %6110 = vst [vmem:[%s451 + $0x70] sm:$0xff] %v6078
        %6111 = vst [vmem:[%s451 + $0x88] sm:$0xff] %v6079
        %6112 = vst [vmem:[%s451 + $0x90] sm:$0xff] %v6080
        %6113 = vst [vmem:[%s451 + $0xa8] sm:$0xff] %v6081
        %6114 = vst [vmem:[%s451 + $0xb0] sm:$0xff] %v6082
        %6115 = vst [vmem:[%s451 + $0xc8] sm:$0xff] %v6083
        %6116 = vst [vmem:[%s451 + $0xd0] sm:$0xff] %v6084
        %6117 = vst [vmem:[%s451 + $0xe8] sm:$0xff] %v6085
        %6118 = vst [vmem:[%s451 + $0xf0] sm:$0xff] %v6086
        %6119 = vst [vmem:[%s451 + $0x108] sm:$0xff] %v6087
        %6120 = vst [vmem:[%s451 + $0x110] sm:$0xff] %v6088
        %6121 = vst [vmem:[%s451 + $0x128] sm:$0xff] %v6089
        %6122 = vst [vmem:[%s451 + $0x130] sm:$0xff] %v6090
        %6123 = vst [vmem:[%s451 + $0x148] sm:$0xff] %v6091
        %6124 = vst [vmem:[%s451 + $0x150] sm:$0xff] %v6092
        %6125 = vst [vmem:[%s451 + $0x168] sm:$0xff] %v6093
        %6126 = vst [vmem:[%s451 + $0x170] sm:$0xff] %v6094
        %6127 = vst [vmem:[%s451 + $0x188] sm:$0xff] %v6095
        %6128 = vst [vmem:[%s451 + $0x190] sm:$0xff] %v6096
        %6129 = vst [vmem:[%s451 + $0x1a8] sm:$0xff] %v6097
        %6130 = vst [vmem:[%s451 + $0x1b0] sm:$0xff] %v6098
        %6131 = vst [vmem:[%s451 + $0x1c8] sm:$0xff] %v6099
        %6132 = vst [vmem:[%s451 + $0x1d0] sm:$0xff] %v6100
        %6133 = vst [vmem:[%s451 + $0x1e8] sm:$0xff] %v6101
        %6134 = vst [vmem:[%s451 + $0x1f0] sm:$0xff] %v6102
        %v6135 = vld [vmem:[%s6] sm:$0x1]
        %v6137 = vlaneseq
        %v6138 = vshrl.u32 %v6137, 7
        %v6139 = vsub.s32 0, %v6138
        %v6140 = vrot.slane %v6135, %v6139
        %v6142 = vadd.f32 %v6140, 0.0
        %v6143 = vld [vmem:[#allocation2 + $0x7] sm:$0xff]
        %v6144 = vld [vmem:[#allocation2 + $0xf] sm:$0xff]
        %v6145 = vld [vmem:[#allocation2 + $0x27] sm:$0xff]
        %v6146 = vld [vmem:[#allocation2 + $0x2f] sm:$0xff]
        %v6147 = vld [vmem:[#allocation2 + $0x47] sm:$0xff]
        %v6148 = vld [vmem:[#allocation2 + $0x4f] sm:$0xff]
        %v6149 = vld [vmem:[#allocation2 + $0x67] sm:$0xff]
        %v6150 = vld [vmem:[#allocation2 + $0x6f] sm:$0xff]
        %v6151 = vld [vmem:[#allocation2 + $0x87] sm:$0xff]
        %v6152 = vld [vmem:[#allocation2 + $0x8f] sm:$0xff]
        %v6153 = vld [vmem:[#allocation2 + $0xa7] sm:$0xff]
        %v6154 = vld [vmem:[#allocation2 + $0xaf] sm:$0xff]
        %v6155 = vld [vmem:[#allocation2 + $0xc7] sm:$0xff]
        %v6156 = vld [vmem:[#allocation2 + $0xcf] sm:$0xff]
        %v6157 = vld [vmem:[#allocation2 + $0xe7] sm:$0xff]
        %v6158 = vld [vmem:[#allocation2 + $0xef] sm:$0xff]
        %v6159 = vld [vmem:[#allocation2 + $0x107] sm:$0xff]
        %v6160 = vld [vmem:[#allocation2 + $0x10f] sm:$0xff]
        %v6161 = vld [vmem:[#allocation2 + $0x127] sm:$0xff]
        %v6162 = vld [vmem:[#allocation2 + $0x12f] sm:$0xff]
        %v6163 = vld [vmem:[#allocation2 + $0x147] sm:$0xff]
        %v6164 = vld [vmem:[#allocation2 + $0x14f] sm:$0xff]
        %v6165 = vld [vmem:[#allocation2 + $0x167] sm:$0xff]
        %v6166 = vld [vmem:[#allocation2 + $0x16f] sm:$0xff]
        %v6167 = vld [vmem:[#allocation2 + $0x187] sm:$0xff]
        %v6168 = vld [vmem:[#allocation2 + $0x18f] sm:$0xff]
        %v6169 = vld [vmem:[#allocation2 + $0x1a7] sm:$0xff]
        %v6170 = vld [vmem:[#allocation2 + $0x1af] sm:$0xff]
        %v6171 = vld [vmem:[#allocation2 + $0x1c7] sm:$0xff]
        %v6172 = vld [vmem:[#allocation2 + $0x1cf] sm:$0xff]
        %v6173 = vld [vmem:[#allocation2 + $0x1e7] sm:$0xff]
        %v6174 = vld [vmem:[#allocation2 + $0x1ef] sm:$0xff]
        %v6175 = vpack.c.bf16 %v6144, %v6143
        %v6176 = vpack.c.bf16 %v6146, %v6145
        %v6177 = vpack.c.bf16 %v6148, %v6147
        %v6178 = vpack.c.bf16 %v6150, %v6149
        %v6179 = vpack.c.bf16 %v6152, %v6151
        %v6180 = vpack.c.bf16 %v6154, %v6153
        %v6181 = vpack.c.bf16 %v6156, %v6155
        %v6182 = vpack.c.bf16 %v6158, %v6157
        %v6183 = vpack.c.bf16 %v6160, %v6159
        %v6184 = vpack.c.bf16 %v6162, %v6161
        %v6185 = vpack.c.bf16 %v6164, %v6163
        %v6186 = vpack.c.bf16 %v6166, %v6165
        %v6187 = vpack.c.bf16 %v6168, %v6167
        %v6188 = vpack.c.bf16 %v6170, %v6169
        %v6189 = vpack.c.bf16 %v6172, %v6171
        %v6190 = vpack.c.bf16 %v6174, %v6173
        %v6191 = vld [vmem:[#allocation3] sm:$0xf]
        %v6192 = vld [vmem:[#allocation3 + $0x4] sm:$0xf]
        %v6193 = vld [vmem:[#allocation3 + $0x8] sm:$0xf]
        %v6194 = vld [vmem:[#allocation3 + $0xc] sm:$0xf]
        %v6195 = vld [vmem:[#allocation3 + $0x10] sm:$0xf]
        %v6196 = vld [vmem:[#allocation3 + $0x14] sm:$0xf]
        %v6197 = vld [vmem:[#allocation3 + $0x18] sm:$0xf]
        %v6198 = vld [vmem:[#allocation3 + $0x1c] sm:$0xf]
        %v6199 = vld [vmem:[#allocation3 + $0x20] sm:$0xf]
        %v6200 = vld [vmem:[#allocation3 + $0x24] sm:$0xf]
        %v6201 = vld [vmem:[#allocation3 + $0x28] sm:$0xf]
        %v6202 = vld [vmem:[#allocation3 + $0x2c] sm:$0xf]
        %v6203 = vld [vmem:[#allocation3 + $0x30] sm:$0xf]
        %v6204 = vld [vmem:[#allocation3 + $0x34] sm:$0xf]
        %v6205 = vld [vmem:[#allocation3 + $0x38] sm:$0xf]
        %v6206 = vld [vmem:[#allocation3 + $0x3c] sm:$0xf]
        %v6223 = vunpack.c.l.b16 %v6191
        %v6224 = vunpack.c.l.b16 %v6192
        %v6225 = vunpack.c.l.b16 %v6193
        %v6226 = vunpack.c.l.b16 %v6194
        %v6227 = vunpack.c.l.b16 %v6195
        %v6228 = vunpack.c.l.b16 %v6196
        %v6229 = vunpack.c.l.b16 %v6197
        %v6230 = vunpack.c.l.b16 %v6198
        %v6231 = vunpack.c.l.b16 %v6199
        %v6232 = vunpack.c.l.b16 %v6200
        %v6233 = vunpack.c.l.b16 %v6201
        %v6234 = vunpack.c.l.b16 %v6202
        %v6235 = vunpack.c.l.b16 %v6203
        %v6236 = vunpack.c.l.b16 %v6204
        %v6237 = vunpack.c.l.b16 %v6205
        %v6238 = vunpack.c.l.b16 %v6206
        %v6239 = vpack.c.b16 %v6224, %v6223
        %v6240 = vpack.c.b16 %v6226, %v6225
        %v6241 = vpack.c.b16 %v6228, %v6227
        %v6242 = vpack.c.b16 %v6230, %v6229
        %v6243 = vpack.c.b16 %v6232, %v6231
        %v6244 = vpack.c.b16 %v6234, %v6233
        %v6245 = vpack.c.b16 %v6236, %v6235
        %v6246 = vpack.c.b16 %v6238, %v6237
        %6255 = vmatprep.subr.bf16.mxu0 0
        %6256 = vmatpush1.bf16.msra.mxu0 %v6239
        %6257 = vmatprep.subr.bf16.mxu0 0
        %6258 = vmatpush1.bf16.msra.mxu0 %v6240
        %6259 = vmatprep.subr.bf16.mxu0 0
        %6260 = vmatpush1.bf16.msra.mxu0 %v6241
        %6261 = vmatprep.subr.bf16.mxu0 0
        %6262 = vmatpush1.bf16.msra.mxu0 %v6242
        %6263 = vmatprep.subr.bf16.mxu0 0
        %6264 = vmatpush1.bf16.msra.mxu0 %v6243
        %6265 = vmatprep.subr.bf16.mxu0 0
        %6266 = vmatpush1.bf16.msra.mxu0 %v6244
        %6267 = vmatprep.subr.bf16.mxu0 0
        %6268 = vmatpush1.bf16.msra.mxu0 %v6245
        %6269 = vmatprep.subr.bf16.mxu0 0
        %6270 = vmatpush1.bf16.msra.mxu0 %v6246
        %6271 = vmatprep.subr.bf16.mxu0 0
        %6272 = vmatpush1.bf16.msra.mxu0 0
        %6273 = vmatprep.subr.bf16.mxu0 0
        %6274 = vmatpush1.bf16.msra.mxu0 0
        %6275 = vmatprep.subr.bf16.mxu0 0
        %6276 = vmatpush1.bf16.msra.mxu0 0
        %6277 = vmatprep.subr.bf16.mxu0 0
        %6278 = vmatpush1.bf16.msra.mxu0 0
        %6279 = vmatprep.subr.bf16.mxu0 0
        %6280 = vmatpush1.bf16.msra.mxu0 0
        %6281 = vmatprep.subr.bf16.mxu0 0
        %6282 = vmatpush1.bf16.msra.mxu0 0
        %6283 = vmatprep.subr.bf16.mxu0 0
        %6284 = vmatpush1.bf16.msra.mxu0 0
        %6285 = vmatprep.subr.bf16.mxu0 0
        %6286 = vmatpush1.bf16.msra.mxu0 0
        %6287 = vmatprep.mubr.bf16.mxu0 0
        %6288 = vmatmul.mubr.bf16.gmra.mrb[0].mxu0 %v6175
        %v6289 = vpop.f32.mrb[0].mxu0
        %v6290 = vadd.f32 0.0, %v6289
        %v6291 = vpop.f32.mrb[0].mxu0
        %v6292 = vpop.f32.mrb[0].mxu0
        %v6293 = vadd.f32 0.0, %v6292
        %v6294 = vpop.f32.mrb[0].mxu0
        %6295 = vmatprep.mubr.bf16.mxu0 0
        %6296 = vmatmul.mubr.bf16.gmra.mrb[0].mxu0 %v6176
        %v6297 = vpop.f32.mrb[0].mxu0
        %v6298 = vadd.f32 0.0, %v6297
        %v6299 = vpop.f32.mrb[0].mxu0
        %v6300 = vpop.f32.mrb[0].mxu0
        %v6301 = vadd.f32 0.0, %v6300
        %v6302 = vpop.f32.mrb[0].mxu0
        %6303 = vmatprep.mubr.bf16.mxu0 0
        %6304 = vmatmul.mubr.bf16.gmra.mrb[0].mxu0 %v6177
        %v6305 = vpop.f32.mrb[0].mxu0
        %v6306 = vadd.f32 0.0, %v6305
        %v6307 = vpop.f32.mrb[0].mxu0
        %v6308 = vpop.f32.mrb[0].mxu0
        %v6309 = vadd.f32 0.0, %v6308
        %v6310 = vpop.f32.mrb[0].mxu0
        %6311 = vmatprep.mubr.bf16.mxu0 0
        %6312 = vmatmul.mubr.bf16.gmra.mrb[0].mxu0 %v6178
        %v6313 = vpop.f32.mrb[0].mxu0
        %v6314 = vadd.f32 0.0, %v6313
        %v6315 = vpop.f32.mrb[0].mxu0
        %v6316 = vpop.f32.mrb[0].mxu0
        %v6317 = vadd.f32 0.0, %v6316
        %v6318 = vpop.f32.mrb[0].mxu0
        %6319 = vmatprep.mubr.bf16.mxu0 0
        %6320 = vmatmul.mubr.bf16.gmra.mrb[0].mxu0 %v6179
        %v6321 = vpop.f32.mrb[0].mxu0
        %v6322 = vadd.f32 0.0, %v6321
        %v6323 = vpop.f32.mrb[0].mxu0
        %v6324 = vpop.f32.mrb[0].mxu0
        %v6325 = vadd.f32 0.0, %v6324
        %v6326 = vpop.f32.mrb[0].mxu0
        %6327 = vmatprep.mubr.bf16.mxu0 0
        %6328 = vmatmul.mubr.bf16.gmra.mrb[0].mxu0 %v6180
        %v6329 = vpop.f32.mrb[0].mxu0
        %v6330 = vadd.f32 0.0, %v6329
        %v6331 = vpop.f32.mrb[0].mxu0
        %v6332 = vpop.f32.mrb[0].mxu0
        %v6333 = vadd.f32 0.0, %v6332
        %v6334 = vpop.f32.mrb[0].mxu0
        %6335 = vmatprep.mubr.bf16.mxu0 0
        %6336 = vmatmul.mubr.bf16.gmra.mrb[0].mxu0 %v6181
        %v6337 = vpop.f32.mrb[0].mxu0
        %v6338 = vadd.f32 0.0, %v6337
        %v6339 = vpop.f32.mrb[0].mxu0
        %v6340 = vpop.f32.mrb[0].mxu0
        %v6341 = vadd.f32 0.0, %v6340
        %v6342 = vpop.f32.mrb[0].mxu0
        %6343 = vmatprep.mubr.bf16.mxu0 0
        %6344 = vmatmul.mubr.bf16.gmra.mrb[0].mxu0 %v6182
        %v6345 = vpop.f32.mrb[0].mxu0
        %v6346 = vadd.f32 0.0, %v6345
        %v6347 = vpop.f32.mrb[0].mxu0
        %v6348 = vpop.f32.mrb[0].mxu0
        %v6349 = vadd.f32 0.0, %v6348
        %v6350 = vpop.f32.mrb[0].mxu0
        %6351 = vmatprep.mubr.bf16.mxu0 0
        %6352 = vmatmul.mubr.bf16.gmra.mrb[0].mxu0 %v6183
        %v6353 = vpop.f32.mrb[0].mxu0
        %v6354 = vadd.f32 0.0, %v6353
        %v6355 = vpop.f32.mrb[0].mxu0
        %v6356 = vpop.f32.mrb[0].mxu0
        %v6357 = vadd.f32 0.0, %v6356
        %v6358 = vpop.f32.mrb[0].mxu0
        %6359 = vmatprep.mubr.bf16.mxu0 0
        %6360 = vmatmul.mubr.bf16.gmra.mrb[0].mxu0 %v6184
        %v6361 = vpop.f32.mrb[0].mxu0
        %v6362 = vadd.f32 0.0, %v6361
        %v6363 = vpop.f32.mrb[0].mxu0
        %v6364 = vpop.f32.mrb[0].mxu0
        %v6365 = vadd.f32 0.0, %v6364
        %v6366 = vpop.f32.mrb[0].mxu0
        %6367 = vmatprep.mubr.bf16.mxu0 0
        %6368 = vmatmul.mubr.bf16.gmra.mrb[0].mxu0 %v6185
        %v6369 = vpop.f32.mrb[0].mxu0
        %v6370 = vadd.f32 0.0, %v6369
        %v6371 = vpop.f32.mrb[0].mxu0
        %v6372 = vpop.f32.mrb[0].mxu0
        %v6373 = vadd.f32 0.0, %v6372
        %v6374 = vpop.f32.mrb[0].mxu0
        %6375 = vmatprep.mubr.bf16.mxu0 0
        %6376 = vmatmul.mubr.bf16.gmra.mrb[0].mxu0 %v6186
        %v6377 = vpop.f32.mrb[0].mxu0
        %v6378 = vadd.f32 0.0, %v6377
        %v6379 = vpop.f32.mrb[0].mxu0
        %v6380 = vpop.f32.mrb[0].mxu0
        %v6381 = vadd.f32 0.0, %v6380
        %v6382 = vpop.f32.mrb[0].mxu0
        %6383 = vmatprep.mubr.bf16.mxu0 0
        %6384 = vmatmul.mubr.bf16.gmra.mrb[0].mxu0 %v6187
        %v6385 = vpop.f32.mrb[0].mxu0
        %v6386 = vadd.f32 0.0, %v6385
        %v6387 = vpop.f32.mrb[0].mxu0
        %v6388 = vpop.f32.mrb[0].mxu0
        %v6389 = vadd.f32 0.0, %v6388
        %v6390 = vpop.f32.mrb[0].mxu0
        %6391 = vmatprep.mubr.bf16.mxu0 0
        %6392 = vmatmul.mubr.bf16.gmra.mrb[0].mxu0 %v6188
        %v6393 = vpop.f32.mrb[0].mxu0
        %v6394 = vadd.f32 0.0, %v6393
        %v6395 = vpop.f32.mrb[0].mxu0
        %v6396 = vpop.f32.mrb[0].mxu0
        %v6397 = vadd.f32 0.0, %v6396
        %v6398 = vpop.f32.mrb[0].mxu0
        %6399 = vmatprep.mubr.bf16.mxu0 0
        %6400 = vmatmul.mubr.bf16.gmra.mrb[0].mxu0 %v6189
        %v6401 = vpop.f32.mrb[0].mxu0
        %v6402 = vadd.f32 0.0, %v6401
        %v6403 = vpop.f32.mrb[0].mxu0
        %v6404 = vpop.f32.mrb[0].mxu0
        %v6405 = vadd.f32 0.0, %v6404
        %v6406 = vpop.f32.mrb[0].mxu0
        %6407 = vmatprep.mubr.bf16.mxu0 0
        %6408 = vmatmul.mubr.bf16.gmra.mrb[0].mxu0 %v6190
        %v6409 = vpop.f32.mrb[0].mxu0
        %v6410 = vadd.f32 0.0, %v6409
        %v6411 = vpop.f32.mrb[0].mxu0
        %v6412 = vpop.f32.mrb[0].mxu0
        %v6413 = vadd.f32 0.0, %v6412
        %v6414 = vpop.f32.mrb[0].mxu0
        %6415 = vdwg.mxu0
        %v6416 = vadd.f32 %v6142, %v6290
        %v6417 = vadd.f32 %v6142, %v6293
        %v6418 = vadd.f32 %v6142, %v6298
        %v6419 = vadd.f32 %v6142, %v6301
        %v6420 = vadd.f32 %v6142, %v6306
        %v6421 = vadd.f32 %v6142, %v6309
        %v6422 = vadd.f32 %v6142, %v6314
        %v6423 = vadd.f32 %v6142, %v6317
        %v6424 = vadd.f32 %v6142, %v6322
        %v6425 = vadd.f32 %v6142, %v6325
        %v6426 = vadd.f32 %v6142, %v6330
        %v6427 = vadd.f32 %v6142, %v6333
        %v6428 = vadd.f32 %v6142, %v6338
        %v6429 = vadd.f32 %v6142, %v6341
        %v6430 = vadd.f32 %v6142, %v6346
        %v6431 = vadd.f32 %v6142, %v6349
        %v6432 = vadd.f32 %v6142, %v6354
        %v6433 = vadd.f32 %v6142, %v6357
        %v6434 = vadd.f32 %v6142, %v6362
        %v6435 = vadd.f32 %v6142, %v6365
        %v6436 = vadd.f32 %v6142, %v6370
        %v6437 = vadd.f32 %v6142, %v6373
        %v6438 = vadd.f32 %v6142, %v6378
        %v6439 = vadd.f32 %v6142, %v6381
        %v6440 = vadd.f32 %v6142, %v6386
        %v6441 = vadd.f32 %v6142, %v6389
        %v6442 = vadd.f32 %v6142, %v6394
        %v6443 = vadd.f32 %v6142, %v6397
        %v6444 = vadd.f32 %v6142, %v6402
        %v6445 = vadd.f32 %v6142, %v6405
        %v6446 = vadd.f32 %v6142, %v6410
        %v6447 = vadd.f32 %v6142, %v6413
        %v6448 = vld [vmem:[#allocation2 + $0x8] sm:$0xff]
        %v6449 = vld [vmem:[#allocation2 + $0x10] sm:$0xff]
        %v6450 = vld [vmem:[#allocation2 + $0x28] sm:$0xff]
        %v6451 = vld [vmem:[#allocation2 + $0x30] sm:$0xff]
        %v6452 = vld [vmem:[#allocation2 + $0x48] sm:$0xff]
        %v6453 = vld [vmem:[#allocation2 + $0x50] sm:$0xff]
        %v6454 = vld [vmem:[#allocation2 + $0x68] sm:$0xff]
        %v6455 = vld [vmem:[#allocation2 + $0x70] sm:$0xff]
        %v6456 = vld [vmem:[#allocation2 + $0x88] sm:$0xff]
        %v6457 = vld [vmem:[#allocation2 + $0x90] sm:$0xff]
        %v6458 = vld [vmem:[#allocation2 + $0xa8] sm:$0xff]
        %v6459 = vld [vmem:[#allocation2 + $0xb0] sm:$0xff]
        %v6460 = vld [vmem:[#allocation2 + $0xc8] sm:$0xff]
        %v6461 = vld [vmem:[#allocation2 + $0xd0] sm:$0xff]
        %v6462 = vld [vmem:[#allocation2 + $0xe8] sm:$0xff]
        %v6463 = vld [vmem:[#allocation2 + $0xf0] sm:$0xff]
        %v6464 = vld [vmem:[#allocation2 + $0x108] sm:$0xff]
        %v6465 = vld [vmem:[#allocation2 + $0x110] sm:$0xff]
        %v6466 = vld [vmem:[#allocation2 + $0x128] sm:$0xff]
        %v6467 = vld [vmem:[#allocation2 + $0x130] sm:$0xff]
        %v6468 = vld [vmem:[#allocation2 + $0x148] sm:$0xff]
        %v6469 = vld [vmem:[#allocation2 + $0x150] sm:$0xff]
        %v6470 = vld [vmem:[#allocation2 + $0x168] sm:$0xff]
        %v6471 = vld [vmem:[#allocation2 + $0x170] sm:$0xff]
        %v6472 = vld [vmem:[#allocation2 + $0x188] sm:$0xff]
        %v6473 = vld [vmem:[#allocation2 + $0x190] sm:$0xff]
        %v6474 = vld [vmem:[#allocation2 + $0x1a8] sm:$0xff]
        %v6475 = vld [vmem:[#allocation2 + $0x1b0] sm:$0xff]
        %v6476 = vld [vmem:[#allocation2 + $0x1c8] sm:$0xff]
        %v6477 = vld [vmem:[#allocation2 + $0x1d0] sm:$0xff]
        %v6478 = vld [vmem:[#allocation2 + $0x1e8] sm:$0xff]
        %v6479 = vld [vmem:[#allocation2 + $0x1f0] sm:$0xff]
        %v6480 = vpack.c.bf16 %v6449, %v6448
        %v6481 = vpack.c.bf16 %v6451, %v6450
        %v6482 = vpack.c.bf16 %v6453, %v6452
        %v6483 = vpack.c.bf16 %v6455, %v6454
        %v6484 = vpack.c.bf16 %v6457, %v6456
        %v6485 = vpack.c.bf16 %v6459, %v6458
        %v6486 = vpack.c.bf16 %v6461, %v6460
        %v6487 = vpack.c.bf16 %v6463, %v6462
        %v6488 = vpack.c.bf16 %v6465, %v6464
        %v6489 = vpack.c.bf16 %v6467, %v6466
        %v6490 = vpack.c.bf16 %v6469, %v6468
        %v6491 = vpack.c.bf16 %v6471, %v6470
        %v6492 = vpack.c.bf16 %v6473, %v6472
        %v6493 = vpack.c.bf16 %v6475, %v6474
        %v6494 = vpack.c.bf16 %v6477, %v6476
        %v6495 = vpack.c.bf16 %v6479, %v6478
        %s6496 = scalar_lea.vmem [#allocation3], 64
        %v6497 = vld [vmem:[%s6496] sm:$0xf]
        %v6498 = vld [vmem:[%s6496 + $0x4] sm:$0xf]
        %v6499 = vld [vmem:[%s6496 + $0x8] sm:$0xf]
        %v6500 = vld [vmem:[%s6496 + $0xc] sm:$0xf]
        %v6501 = vld [vmem:[%s6496 + $0x10] sm:$0xf]
        %v6502 = vld [vmem:[%s6496 + $0x14] sm:$0xf]
        %v6503 = vld [vmem:[%s6496 + $0x18] sm:$0xf]
        %v6504 = vld [vmem:[%s6496 + $0x1c] sm:$0xf]
        %v6505 = vld [vmem:[%s6496 + $0x20] sm:$0xf]
        %v6506 = vld [vmem:[%s6496 + $0x24] sm:$0xf]
        %v6507 = vld [vmem:[%s6496 + $0x28] sm:$0xf]
        %v6508 = vld [vmem:[%s6496 + $0x2c] sm:$0xf]
        %v6509 = vld [vmem:[%s6496 + $0x30] sm:$0xf]
        %v6510 = vld [vmem:[%s6496 + $0x34] sm:$0xf]
        %v6511 = vld [vmem:[%s6496 + $0x38] sm:$0xf]
        %v6512 = vld [vmem:[%s6496 + $0x3c] sm:$0xf]
        %v6529 = vunpack.c.l.b16 %v6497
        %v6530 = vunpack.c.l.b16 %v6498
        %v6531 = vunpack.c.l.b16 %v6499
        %v6532 = vunpack.c.l.b16 %v6500
        %v6533 = vunpack.c.l.b16 %v6501
        %v6534 = vunpack.c.l.b16 %v6502
        %v6535 = vunpack.c.l.b16 %v6503
        %v6536 = vunpack.c.l.b16 %v6504
        %v6537 = vunpack.c.l.b16 %v6505
        %v6538 = vunpack.c.l.b16 %v6506
        %v6539 = vunpack.c.l.b16 %v6507
        %v6540 = vunpack.c.l.b16 %v6508
        %v6541 = vunpack.c.l.b16 %v6509
        %v6542 = vunpack.c.l.b16 %v6510
        %v6543 = vunpack.c.l.b16 %v6511
        %v6544 = vunpack.c.l.b16 %v6512
        %v6545 = vpack.c.b16 %v6530, %v6529
        %v6546 = vpack.c.b16 %v6532, %v6531
        %v6547 = vpack.c.b16 %v6534, %v6533
        %v6548 = vpack.c.b16 %v6536, %v6535
        %v6549 = vpack.c.b16 %v6538, %v6537
        %v6550 = vpack.c.b16 %v6540, %v6539
        %v6551 = vpack.c.b16 %v6542, %v6541
        %v6552 = vpack.c.b16 %v6544, %v6543
        %6561 = vmatprep.subr.bf16.mxu0 0
        %6562 = vmatpush1.bf16.msra.mxu0 %v6545
        %6563 = vmatprep.subr.bf16.mxu0 0
        %6564 = vmatpush1.bf16.msra.mxu0 %v6546
        %6565 = vmatprep.subr.bf16.mxu0 0
        %6566 = vmatpush1.bf16.msra.mxu0 %v6547
        %6567 = vmatprep.subr.bf16.mxu0 0
        %6568 = vmatpush1.bf16.msra.mxu0 %v6548
        %6569 = vmatprep.subr.bf16.mxu0 0
        %6570 = vmatpush1.bf16.msra.mxu0 %v6549
        %6571 = vmatprep.subr.bf16.mxu0 0
        %6572 = vmatpush1.bf16.msra.mxu0 %v6550
        %6573 = vmatprep.subr.bf16.mxu0 0
        %6574 = vmatpush1.bf16.msra.mxu0 %v6551
        %6575 = vmatprep.subr.bf16.mxu0 0
        %6576 = vmatpush1.bf16.msra.mxu0 %v6552
        %6577 = vmatprep.subr.bf16.mxu0 0
        %6578 = vmatpush1.bf16.msra.mxu0 0
        %6579 = vmatprep.subr.bf16.mxu0 0
        %6580 = vmatpush1.bf16.msra.mxu0 0
        %6581 = vmatprep.subr.bf16.mxu0 0
        %6582 = vmatpush1.bf16.msra.mxu0 0
        %6583 = vmatprep.subr.bf16.mxu0 0
        %6584 = vmatpush1.bf16.msra.mxu0 0
        %6585 = vmatprep.subr.bf16.mxu0 0
        %6586 = vmatpush1.bf16.msra.mxu0 0
        %6587 = vmatprep.subr.bf16.mxu0 0
        %6588 = vmatpush1.bf16.msra.mxu0 0
        %6589 = vmatprep.subr.bf16.mxu0 0
        %6590 = vmatpush1.bf16.msra.mxu0 0
        %6591 = vmatprep.subr.bf16.mxu0 0
        %6592 = vmatpush1.bf16.msra.mxu0 0
        %6593 = vmatprep.mubr.bf16.mxu0 0
        %6594 = vmatmul.mubr.bf16.gmra.mrb[0].mxu0 %v6480
        %v6595 = vpop.f32.mrb[0].mxu0
        %v6596 = vadd.f32 0.0, %v6595
        %v6597 = vpop.f32.mrb[0].mxu0
        %v6598 = vpop.f32.mrb[0].mxu0
        %v6599 = vadd.f32 0.0, %v6598
        %v6600 = vpop.f32.mrb[0].mxu0
        %6601 = vmatprep.mubr.bf16.mxu0 0
        %6602 = vmatmul.mubr.bf16.gmra.mrb[0].mxu0 %v6481
        %v6603 = vpop.f32.mrb[0].mxu0
        %v6604 = vadd.f32 0.0, %v6603
        %v6605 = vpop.f32.mrb[0].mxu0
        %v6606 = vpop.f32.mrb[0].mxu0
        %v6607 = vadd.f32 0.0, %v6606
        %v6608 = vpop.f32.mrb[0].mxu0
        %6609 = vmatprep.mubr.bf16.mxu0 0
        %6610 = vmatmul.mubr.bf16.gmra.mrb[0].mxu0 %v6482
        %v6611 = vpop.f32.mrb[0].mxu0
        %v6612 = vadd.f32 0.0, %v6611
        %v6613 = vpop.f32.mrb[0].mxu0
        %v6614 = vpop.f32.mrb[0].mxu0
        %v6615 = vadd.f32 0.0, %v6614
        %v6616 = vpop.f32.mrb[0].mxu0
        %6617 = vmatprep.mubr.bf16.mxu0 0
        %6618 = vmatmul.mubr.bf16.gmra.mrb[0].mxu0 %v6483
        %v6619 = vpop.f32.mrb[0].mxu0
        %v6620 = vadd.f32 0.0, %v6619
        %v6621 = vpop.f32.mrb[0].mxu0
        %v6622 = vpop.f32.mrb[0].mxu0
        %v6623 = vadd.f32 0.0, %v6622
        %v6624 = vpop.f32.mrb[0].mxu0
        %6625 = vmatprep.mubr.bf16.mxu0 0
        %6626 = vmatmul.mubr.bf16.gmra.mrb[0].mxu0 %v6484
        %v6627 = vpop.f32.mrb[0].mxu0
        %v6628 = vadd.f32 0.0, %v6627
        %v6629 = vpop.f32.mrb[0].mxu0
        %v6630 = vpop.f32.mrb[0].mxu0
        %v6631 = vadd.f32 0.0, %v6630
        %v6632 = vpop.f32.mrb[0].mxu0
        %6633 = vmatprep.mubr.bf16.mxu0 0
        %6634 = vmatmul.mubr.bf16.gmra.mrb[0].mxu0 %v6485
        %v6635 = vpop.f32.mrb[0].mxu0
        %v6636 = vadd.f32 0.0, %v6635
        %v6637 = vpop.f32.mrb[0].mxu0
        %v6638 = vpop.f32.mrb[0].mxu0
        %v6639 = vadd.f32 0.0, %v6638
        %v6640 = vpop.f32.mrb[0].mxu0
        %6641 = vmatprep.mubr.bf16.mxu0 0
        %6642 = vmatmul.mubr.bf16.gmra.mrb[0].mxu0 %v6486
        %v6643 = vpop.f32.mrb[0].mxu0
        %v6644 = vadd.f32 0.0, %v6643
        %v6645 = vpop.f32.mrb[0].mxu0
        %v6646 = vpop.f32.mrb[0].mxu0
        %v6647 = vadd.f32 0.0, %v6646
        %v6648 = vpop.f32.mrb[0].mxu0
        %6649 = vmatprep.mubr.bf16.mxu0 0
        %6650 = vmatmul.mubr.bf16.gmra.mrb[0].mxu0 %v6487
        %v6651 = vpop.f32.mrb[0].mxu0
        %v6652 = vadd.f32 0.0, %v6651
        %v6653 = vpop.f32.mrb[0].mxu0
        %v6654 = vpop.f32.mrb[0].mxu0
        %v6655 = vadd.f32 0.0, %v6654
        %v6656 = vpop.f32.mrb[0].mxu0
        %6657 = vmatprep.mubr.bf16.mxu0 0
        %6658 = vmatmul.mubr.bf16.gmra.mrb[0].mxu0 %v6488
        %v6659 = vpop.f32.mrb[0].mxu0
        %v6660 = vadd.f32 0.0, %v6659
        %v6661 = vpop.f32.mrb[0].mxu0
        %v6662 = vpop.f32.mrb[0].mxu0
        %v6663 = vadd.f32 0.0, %v6662
        %v6664 = vpop.f32.mrb[0].mxu0
        %6665 = vmatprep.mubr.bf16.mxu0 0
        %6666 = vmatmul.mubr.bf16.gmra.mrb[0].mxu0 %v6489
        %v6667 = vpop.f32.mrb[0].mxu0
        %v6668 = vadd.f32 0.0, %v6667
        %v6669 = vpop.f32.mrb[0].mxu0
        %v6670 = vpop.f32.mrb[0].mxu0
        %v6671 = vadd.f32 0.0, %v6670
        %v6672 = vpop.f32.mrb[0].mxu0
        %6673 = vmatprep.mubr.bf16.mxu0 0
        %6674 = vmatmul.mubr.bf16.gmra.mrb[0].mxu0 %v6490
        %v6675 = vpop.f32.mrb[0].mxu0
        %v6676 = vadd.f32 0.0, %v6675
        %v6677 = vpop.f32.mrb[0].mxu0
        %v6678 = vpop.f32.mrb[0].mxu0
        %v6679 = vadd.f32 0.0, %v6678
        %v6680 = vpop.f32.mrb[0].mxu0
        %6681 = vmatprep.mubr.bf16.mxu0 0
        %6682 = vmatmul.mubr.bf16.gmra.mrb[0].mxu0 %v6491
        %v6683 = vpop.f32.mrb[0].mxu0
        %v6684 = vadd.f32 0.0, %v6683
        %v6685 = vpop.f32.mrb[0].mxu0
        %v6686 = vpop.f32.mrb[0].mxu0
        %v6687 = vadd.f32 0.0, %v6686
        %v6688 = vpop.f32.mrb[0].mxu0
        %6689 = vmatprep.mubr.bf16.mxu0 0
        %6690 = vmatmul.mubr.bf16.gmra.mrb[0].mxu0 %v6492
        %v6691 = vpop.f32.mrb[0].mxu0
        %v6692 = vadd.f32 0.0, %v6691
        %v6693 = vpop.f32.mrb[0].mxu0
        %v6694 = vpop.f32.mrb[0].mxu0
        %v6695 = vadd.f32 0.0, %v6694
        %v6696 = vpop.f32.mrb[0].mxu0
        %6697 = vmatprep.mubr.bf16.mxu0 0
        %6698 = vmatmul.mubr.bf16.gmra.mrb[0].mxu0 %v6493
        %v6699 = vpop.f32.mrb[0].mxu0
        %v6700 = vadd.f32 0.0, %v6699
        %v6701 = vpop.f32.mrb[0].mxu0
        %v6702 = vpop.f32.mrb[0].mxu0
        %v6703 = vadd.f32 0.0, %v6702
        %v6704 = vpop.f32.mrb[0].mxu0
        %6705 = vmatprep.mubr.bf16.mxu0 0
        %6706 = vmatmul.mubr.bf16.gmra.mrb[0].mxu0 %v6494
        %v6707 = vpop.f32.mrb[0].mxu0
        %v6708 = vadd.f32 0.0, %v6707
        %v6709 = vpop.f32.mrb[0].mxu0
        %v6710 = vpop.f32.mrb[0].mxu0
        %v6711 = vadd.f32 0.0, %v6710
        %v6712 = vpop.f32.mrb[0].mxu0
        %6713 = vmatprep.mubr.bf16.mxu0 0
        %6714 = vmatmul.mubr.bf16.gmra.mrb[0].mxu0 %v6495
        %v6715 = vpop.f32.mrb[0].mxu0
        %v6716 = vadd.f32 0.0, %v6715
        %v6717 = vpop.f32.mrb[0].mxu0
        %v6718 = vpop.f32.mrb[0].mxu0
        %v6719 = vadd.f32 0.0, %v6718
        %v6720 = vpop.f32.mrb[0].mxu0
        %6721 = vdwg.mxu0
        %v6722 = vadd.f32 %v6416, %v6596
        %v6723 = vadd.f32 %v6417, %v6599
        %v6724 = vadd.f32 %v6418, %v6604
        %v6725 = vadd.f32 %v6419, %v6607
        %v6726 = vadd.f32 %v6420, %v6612
        %v6727 = vadd.f32 %v6421, %v6615
        %v6728 = vadd.f32 %v6422, %v6620
        %v6729 = vadd.f32 %v6423, %v6623
        %v6730 = vadd.f32 %v6424, %v6628
        %v6731 = vadd.f32 %v6425, %v6631
        %v6732 = vadd.f32 %v6426, %v6636
        %v6733 = vadd.f32 %v6427, %v6639
        %v6734 = vadd.f32 %v6428, %v6644
        %v6735 = vadd.f32 %v6429, %v6647
        %v6736 = vadd.f32 %v6430, %v6652
        %v6737 = vadd.f32 %v6431, %v6655
        %v6738 = vadd.f32 %v6432, %v6660
        %v6739 = vadd.f32 %v6433, %v6663
        %v6740 = vadd.f32 %v6434, %v6668
        %v6741 = vadd.f32 %v6435, %v6671
        %v6742 = vadd.f32 %v6436, %v6676
        %v6743 = vadd.f32 %v6437, %v6679
        %v6744 = vadd.f32 %v6438, %v6684
        %v6745 = vadd.f32 %v6439, %v6687
        %v6746 = vadd.f32 %v6440, %v6692
        %v6747 = vadd.f32 %v6441, %v6695
        %v6748 = vadd.f32 %v6442, %v6700
        %v6749 = vadd.f32 %v6443, %v6703
        %v6750 = vadd.f32 %v6444, %v6708
        %v6751 = vadd.f32 %v6445, %v6711
        %v6752 = vadd.f32 %v6446, %v6716
        %v6753 = vadd.f32 %v6447, %v6719
        %v6754 = vld [vmem:[#allocation2 + $0x9] sm:$0xff]
        %v6755 = vld [vmem:[#allocation2 + $0x11] sm:$0xff]
        %v6756 = vld [vmem:[#allocation2 + $0x29] sm:$0xff]
        %v6757 = vld [vmem:[#allocation2 + $0x31] sm:$0xff]
        %v6758 = vld [vmem:[#allocation2 + $0x49] sm:$0xff]
        %v6759 = vld [vmem:[#allocation2 + $0x51] sm:$0xff]
        %v6760 = vld [vmem:[#allocation2 + $0x69] sm:$0xff]
        %v6761 = vld [vmem:[#allocation2 + $0x71] sm:$0xff]
        %v6762 = vld [vmem:[#allocation2 + $0x89] sm:$0xff]
        %v6763 = vld [vmem:[#allocation2 + $0x91] sm:$0xff]
        %v6764 = vld [vmem:[#allocation2 + $0xa9] sm:$0xff]
        %v6765 = vld [vmem:[#allocation2 + $0xb1] sm:$0xff]
        %v6766 = vld [vmem:[#allocation2 + $0xc9] sm:$0xff]
        %v6767 = vld [vmem:[#allocation2 + $0xd1] sm:$0xff]
        %v6768 = vld [vmem:[#allocation2 + $0xe9] sm:$0xff]
        %v6769 = vld [vmem:[#allocation2 + $0xf1] sm:$0xff]
        %v6770 = vld [vmem:[#allocation2 + $0x109] sm:$0xff]
        %v6771 = vld [vmem:[#allocation2 + $0x111] sm:$0xff]
        %v6772 = vld [vmem:[#allocation2 + $0x129] sm:$0xff]
        %v6773 = vld [vmem:[#allocation2 + $0x131] sm:$0xff]
        %v6774 = vld [vmem:[#allocation2 + $0x149] sm:$0xff]
        %v6775 = vld [vmem:[#allocation2 + $0x151] sm:$0xff]
        %v6776 = vld [vmem:[#allocation2 + $0x169] sm:$0xff]
        %v6777 = vld [vmem:[#allocation2 + $0x171] sm:$0xff]
        %v6778 = vld [vmem:[#allocation2 + $0x189] sm:$0xff]
        %v6779 = vld [vmem:[#allocation2 + $0x191] sm:$0xff]
        %v6780 = vld [vmem:[#allocation2 + $0x1a9] sm:$0xff]
        %v6781 = vld [vmem:[#allocation2 + $0x1b1] sm:$0xff]
        %v6782 = vld [vmem:[#allocation2 + $0x1c9] sm:$0xff]
        %v6783 = vld [vmem:[#allocation2 + $0x1d1] sm:$0xff]
        %v6784 = vld [vmem:[#allocation2 + $0x1e9] sm:$0xff]
        %v6785 = vld [vmem:[#allocation2 + $0x1f1] sm:$0xff]
        %v6786 = vpack.c.bf16 %v6755, %v6754
        %v6787 = vpack.c.bf16 %v6757, %v6756
        %v6788 = vpack.c.bf16 %v6759, %v6758
        %v6789 = vpack.c.bf16 %v6761, %v6760
        %v6790 = vpack.c.bf16 %v6763, %v6762
        %v6791 = vpack.c.bf16 %v6765, %v6764
        %v6792 = vpack.c.bf16 %v6767, %v6766
        %v6793 = vpack.c.bf16 %v6769, %v6768
        %v6794 = vpack.c.bf16 %v6771, %v6770
        %v6795 = vpack.c.bf16 %v6773, %v6772
        %v6796 = vpack.c.bf16 %v6775, %v6774
        %v6797 = vpack.c.bf16 %v6777, %v6776
        %v6798 = vpack.c.bf16 %v6779, %v6778
        %v6799 = vpack.c.bf16 %v6781, %v6780
        %v6800 = vpack.c.bf16 %v6783, %v6782
        %v6801 = vpack.c.bf16 %v6785, %v6784
        %s6802 = scalar_lea.vmem [#allocation3], 128
        %v6803 = vld [vmem:[%s6802] sm:$0xf]
        %v6804 = vld [vmem:[%s6802 + $0x4] sm:$0xf]
        %v6805 = vld [vmem:[%s6802 + $0x8] sm:$0xf]
        %v6806 = vld [vmem:[%s6802 + $0xc] sm:$0xf]
        %v6807 = vld [vmem:[%s6802 + $0x10] sm:$0xf]
        %v6808 = vld [vmem:[%s6802 + $0x14] sm:$0xf]
        %v6809 = vld [vmem:[%s6802 + $0x18] sm:$0xf]
        %v6810 = vld [vmem:[%s6802 + $0x1c] sm:$0xf]
        %v6811 = vld [vmem:[%s6802 + $0x20] sm:$0xf]
        %v6812 = vld [vmem:[%s6802 + $0x24] sm:$0xf]
        %v6813 = vld [vmem:[%s6802 + $0x28] sm:$0xf]
        %v6814 = vld [vmem:[%s6802 + $0x2c] sm:$0xf]
        %v6815 = vld [vmem:[%s6802 + $0x30] sm:$0xf]
        %v6816 = vld [vmem:[%s6802 + $0x34] sm:$0xf]
        %v6817 = vld [vmem:[%s6802 + $0x38] sm:$0xf]
        %v6818 = vld [vmem:[%s6802 + $0x3c] sm:$0xf]
        %v6835 = vunpack.c.l.b16 %v6803
        %v6836 = vunpack.c.l.b16 %v6804
        %v6837 = vunpack.c.l.b16 %v6805
        %v6838 = vunpack.c.l.b16 %v6806
        %v6839 = vunpack.c.l.b16 %v6807
        %v6840 = vunpack.c.l.b16 %v6808
        %v6841 = vunpack.c.l.b16 %v6809
        %v6842 = vunpack.c.l.b16 %v6810
        %v6843 = vunpack.c.l.b16 %v6811
        %v6844 = vunpack.c.l.b16 %v6812
        %v6845 = vunpack.c.l.b16 %v6813
        %v6846 = vunpack.c.l.b16 %v6814
        %v6847 = vunpack.c.l.b16 %v6815
        %v6848 = vunpack.c.l.b16 %v6816
        %v6849 = vunpack.c.l.b16 %v6817
        %v6850 = vunpack.c.l.b16 %v6818
        %v6851 = vpack.c.b16 %v6836, %v6835
        %v6852 = vpack.c.b16 %v6838, %v6837
        %v6853 = vpack.c.b16 %v6840, %v6839
        %v6854 = vpack.c.b16 %v6842, %v6841
        %v6855 = vpack.c.b16 %v6844, %v6843
        %v6856 = vpack.c.b16 %v6846, %v6845
        %v6857 = vpack.c.b16 %v6848, %v6847
        %v6858 = vpack.c.b16 %v6850, %v6849
        %6867 = vmatprep.subr.bf16.mxu0 0
        %6868 = vmatpush1.bf16.msra.mxu0 %v6851
        %6869 = vmatprep.subr.bf16.mxu0 0
        %6870 = vmatpush1.bf16.msra.mxu0 %v6852
        %6871 = vmatprep.subr.bf16.mxu0 0
        %6872 = vmatpush1.bf16.msra.mxu0 %v6853
        %6873 = vmatprep.subr.bf16.mxu0 0
        %6874 = vmatpush1.bf16.msra.mxu0 %v6854
        %6875 = vmatprep.subr.bf16.mxu0 0
        %6876 = vmatpush1.bf16.msra.mxu0 %v6855
        %6877 = vmatprep.subr.bf16.mxu0 0
        %6878 = vmatpush1.bf16.msra.mxu0 %v6856
        %6879 = vmatprep.subr.bf16.mxu0 0
        %6880 = vmatpush1.bf16.msra.mxu0 %v6857
        %6881 = vmatprep.subr.bf16.mxu0 0
        %6882 = vmatpush1.bf16.msra.mxu0 %v6858
        %6883 = vmatprep.subr.bf16.mxu0 0
        %6884 = vmatpush1.bf16.msra.mxu0 0
        %6885 = vmatprep.subr.bf16.mxu0 0
        %6886 = vmatpush1.bf16.msra.mxu0 0
        %6887 = vmatprep.subr.bf16.mxu0 0
        %6888 = vmatpush1.bf16.msra.mxu0 0
        %6889 = vmatprep.subr.bf16.mxu0 0
        %6890 = vmatpush1.bf16.msra.mxu0 0
        %6891 = vmatprep.subr.bf16.mxu0 0
        %6892 = vmatpush1.bf16.msra.mxu0 0
        %6893 = vmatprep.subr.bf16.mxu0 0
        %6894 = vmatpush1.bf16.msra.mxu0 0
        %6895 = vmatprep.subr.bf16.mxu0 0
        %6896 = vmatpush1.bf16.msra.mxu0 0
        %6897 = vmatprep.subr.bf16.mxu0 0
        %6898 = vmatpush1.bf16.msra.mxu0 0
        %6899 = vmatprep.mubr.bf16.mxu0 0
        %6900 = vmatmul.mubr.bf16.gmra.mrb[0].mxu0 %v6786
        %v6901 = vpop.f32.mrb[0].mxu0
        %v6902 = vadd.f32 0.0, %v6901
        %v6903 = vpop.f32.mrb[0].mxu0
        %v6904 = vpop.f32.mrb[0].mxu0
        %v6905 = vadd.f32 0.0, %v6904
        %v6906 = vpop.f32.mrb[0].mxu0
        %6907 = vmatprep.mubr.bf16.mxu0 0
        %6908 = vmatmul.mubr.bf16.gmra.mrb[0].mxu0 %v6787
        %v6909 = vpop.f32.mrb[0].mxu0
        %v6910 = vadd.f32 0.0, %v6909
        %v6911 = vpop.f32.mrb[0].mxu0
        %v6912 = vpop.f32.mrb[0].mxu0
        %v6913 = vadd.f32 0.0, %v6912
        %v6914 = vpop.f32.mrb[0].mxu0
        %6915 = vmatprep.mubr.bf16.mxu0 0
        %6916 = vmatmul.mubr.bf16.gmra.mrb[0].mxu0 %v6788
        %v6917 = vpop.f32.mrb[0].mxu0
        %v6918 = vadd.f32 0.0, %v6917
        %v6919 = vpop.f32.mrb[0].mxu0
        %v6920 = vpop.f32.mrb[0].mxu0
        %v6921 = vadd.f32 0.0, %v6920
        %v6922 = vpop.f32.mrb[0].mxu0
        %6923 = vmatprep.mubr.bf16.mxu0 0
        %6924 = vmatmul.mubr.bf16.gmra.mrb[0].mxu0 %v6789
        %v6925 = vpop.f32.mrb[0].mxu0
        %v6926 = vadd.f32 0.0, %v6925
        %v6927 = vpop.f32.mrb[0].mxu0
        %v6928 = vpop.f32.mrb[0].mxu0
        %v6929 = vadd.f32 0.0, %v6928
        %v6930 = vpop.f32.mrb[0].mxu0
        %6931 = vmatprep.mubr.bf16.mxu0 0
        %6932 = vmatmul.mubr.bf16.gmra.mrb[0].mxu0 %v6790
        %v6933 = vpop.f32.mrb[0].mxu0
        %v6934 = vadd.f32 0.0, %v6933
        %v6935 = vpop.f32.mrb[0].mxu0
        %v6936 = vpop.f32.mrb[0].mxu0
        %v6937 = vadd.f32 0.0, %v6936
        %v6938 = vpop.f32.mrb[0].mxu0
        %6939 = vmatprep.mubr.bf16.mxu0 0
        %6940 = vmatmul.mubr.bf16.gmra.mrb[0].mxu0 %v6791
        %v6941 = vpop.f32.mrb[0].mxu0
        %v6942 = vadd.f32 0.0, %v6941
        %v6943 = vpop.f32.mrb[0].mxu0
        %v6944 = vpop.f32.mrb[0].mxu0
        %v6945 = vadd.f32 0.0, %v6944
        %v6946 = vpop.f32.mrb[0].mxu0
        %6947 = vmatprep.mubr.bf16.mxu0 0
        %6948 = vmatmul.mubr.bf16.gmra.mrb[0].mxu0 %v6792
        %v6949 = vpop.f32.mrb[0].mxu0
        %v6950 = vadd.f32 0.0, %v6949
        %v6951 = vpop.f32.mrb[0].mxu0
        %v6952 = vpop.f32.mrb[0].mxu0
        %v6953 = vadd.f32 0.0, %v6952
        %v6954 = vpop.f32.mrb[0].mxu0
        %6955 = vmatprep.mubr.bf16.mxu0 0
        %6956 = vmatmul.mubr.bf16.gmra.mrb[0].mxu0 %v6793
        %v6957 = vpop.f32.mrb[0].mxu0
        %v6958 = vadd.f32 0.0, %v6957
        %v6959 = vpop.f32.mrb[0].mxu0
        %v6960 = vpop.f32.mrb[0].mxu0
        %v6961 = vadd.f32 0.0, %v6960
        %v6962 = vpop.f32.mrb[0].mxu0
        %6963 = vmatprep.mubr.bf16.mxu0 0
        %6964 = vmatmul.mubr.bf16.gmra.mrb[0].mxu0 %v6794
        %v6965 = vpop.f32.mrb[0].mxu0
        %v6966 = vadd.f32 0.0, %v6965
        %v6967 = vpop.f32.mrb[0].mxu0
        %v6968 = vpop.f32.mrb[0].mxu0
        %v6969 = vadd.f32 0.0, %v6968
        %v6970 = vpop.f32.mrb[0].mxu0
        %6971 = vmatprep.mubr.bf16.mxu0 0
        %6972 = vmatmul.mubr.bf16.gmra.mrb[0].mxu0 %v6795
        %v6973 = vpop.f32.mrb[0].mxu0
        %v6974 = vadd.f32 0.0, %v6973
        %v6975 = vpop.f32.mrb[0].mxu0
        %v6976 = vpop.f32.mrb[0].mxu0
        %v6977 = vadd.f32 0.0, %v6976
        %v6978 = vpop.f32.mrb[0].mxu0
        %6979 = vmatprep.mubr.bf16.mxu0 0
        %6980 = vmatmul.mubr.bf16.gmra.mrb[0].mxu0 %v6796
        %v6981 = vpop.f32.mrb[0].mxu0
        %v6982 = vadd.f32 0.0, %v6981
        %v6983 = vpop.f32.mrb[0].mxu0
        %v6984 = vpop.f32.mrb[0].mxu0
        %v6985 = vadd.f32 0.0, %v6984
        %v6986 = vpop.f32.mrb[0].mxu0
        %6987 = vmatprep.mubr.bf16.mxu0 0
        %6988 = vmatmul.mubr.bf16.gmra.mrb[0].mxu0 %v6797
        %v6989 = vpop.f32.mrb[0].mxu0
        %v6990 = vadd.f32 0.0, %v6989
        %v6991 = vpop.f32.mrb[0].mxu0
        %v6992 = vpop.f32.mrb[0].mxu0
        %v6993 = vadd.f32 0.0, %v6992
        %v6994 = vpop.f32.mrb[0].mxu0
        %6995 = vmatprep.mubr.bf16.mxu0 0
        %6996 = vmatmul.mubr.bf16.gmra.mrb[0].mxu0 %v6798
        %v6997 = vpop.f32.mrb[0].mxu0
        %v6998 = vadd.f32 0.0, %v6997
        %v6999 = vpop.f32.mrb[0].mxu0
        %v7000 = vpop.f32.mrb[0].mxu0
        %v7001 = vadd.f32 0.0, %v7000
        %v7002 = vpop.f32.mrb[0].mxu0
        %7003 = vmatprep.mubr.bf16.mxu0 0
        %7004 = vmatmul.mubr.bf16.gmra.mrb[0].mxu0 %v6799
        %v7005 = vpop.f32.mrb[0].mxu0
        %v7006 = vadd.f32 0.0, %v7005
        %v7007 = vpop.f32.mrb[0].mxu0
        %v7008 = vpop.f32.mrb[0].mxu0
        %v7009 = vadd.f32 0.0, %v7008
        %v7010 = vpop.f32.mrb[0].mxu0
        %7011 = vmatprep.mubr.bf16.mxu0 0
        %7012 = vmatmul.mubr.bf16.gmra.mrb[0].mxu0 %v6800
        %v7013 = vpop.f32.mrb[0].mxu0
        %v7014 = vadd.f32 0.0, %v7013
        %v7015 = vpop.f32.mrb[0].mxu0
        %v7016 = vpop.f32.mrb[0].mxu0
        %v7017 = vadd.f32 0.0, %v7016
        %v7018 = vpop.f32.mrb[0].mxu0
        %7019 = vmatprep.mubr.bf16.mxu0 0
        %7020 = vmatmul.mubr.bf16.gmra.mrb[0].mxu0 %v6801
        %v7021 = vpop.f32.mrb[0].mxu0
        %v7022 = vadd.f32 0.0, %v7021
        %v7023 = vpop.f32.mrb[0].mxu0
        %v7024 = vpop.f32.mrb[0].mxu0
        %v7025 = vadd.f32 0.0, %v7024
        %v7026 = vpop.f32.mrb[0].mxu0
        %7027 = vdwg.mxu0
        %v7028 = vadd.f32 %v6722, %v6902
        %v7029 = vadd.f32 %v6723, %v6905
        %v7030 = vadd.f32 %v6724, %v6910
        %v7031 = vadd.f32 %v6725, %v6913
        %v7032 = vadd.f32 %v6726, %v6918
        %v7033 = vadd.f32 %v6727, %v6921
        %v7034 = vadd.f32 %v6728, %v6926
        %v7035 = vadd.f32 %v6729, %v6929
        %v7036 = vadd.f32 %v6730, %v6934
        %v7037 = vadd.f32 %v6731, %v6937
        %v7038 = vadd.f32 %v6732, %v6942
        %v7039 = vadd.f32 %v6733, %v6945
        %v7040 = vadd.f32 %v6734, %v6950
        %v7041 = vadd.f32 %v6735, %v6953
        %v7042 = vadd.f32 %v6736, %v6958
        %v7043 = vadd.f32 %v6737, %v6961
        %v7044 = vadd.f32 %v6738, %v6966
        %v7045 = vadd.f32 %v6739, %v6969
        %v7046 = vadd.f32 %v6740, %v6974
        %v7047 = vadd.f32 %v6741, %v6977
        %v7048 = vadd.f32 %v6742, %v6982
        %v7049 = vadd.f32 %v6743, %v6985
        %v7050 = vadd.f32 %v6744, %v6990
        %v7051 = vadd.f32 %v6745, %v6993
        %v7052 = vadd.f32 %v6746, %v6998
        %v7053 = vadd.f32 %v6747, %v7001
        %v7054 = vadd.f32 %v6748, %v7006
        %v7055 = vadd.f32 %v6749, %v7009
        %v7056 = vadd.f32 %v6750, %v7014
        %v7057 = vadd.f32 %v6751, %v7017
        %v7058 = vadd.f32 %v6752, %v7022
        %v7059 = vadd.f32 %v6753, %v7025
        %v7060 = vld [vmem:[%s451 + $0x7] sm:$0xff]
        %v7061 = vld [vmem:[%s451 + $0xf] sm:$0xff]
        %v7062 = vld [vmem:[%s451 + $0x27] sm:$0xff]
        %v7063 = vld [vmem:[%s451 + $0x2f] sm:$0xff]
        %v7064 = vld [vmem:[%s451 + $0x47] sm:$0xff]
        %v7065 = vld [vmem:[%s451 + $0x4f] sm:$0xff]
        %v7066 = vld [vmem:[%s451 + $0x67] sm:$0xff]
        %v7067 = vld [vmem:[%s451 + $0x6f] sm:$0xff]
        %v7068 = vld [vmem:[%s451 + $0x87] sm:$0xff]
        %v7069 = vld [vmem:[%s451 + $0x8f] sm:$0xff]
        %v7070 = vld [vmem:[%s451 + $0xa7] sm:$0xff]
        %v7071 = vld [vmem:[%s451 + $0xaf] sm:$0xff]
        %v7072 = vld [vmem:[%s451 + $0xc7] sm:$0xff]
        %v7073 = vld [vmem:[%s451 + $0xcf] sm:$0xff]
        %v7074 = vld [vmem:[%s451 + $0xe7] sm:$0xff]
        %v7075 = vld [vmem:[%s451 + $0xef] sm:$0xff]
        %v7076 = vld [vmem:[%s451 + $0x107] sm:$0xff]
        %v7077 = vld [vmem:[%s451 + $0x10f] sm:$0xff]
        %v7078 = vld [vmem:[%s451 + $0x127] sm:$0xff]
        %v7079 = vld [vmem:[%s451 + $0x12f] sm:$0xff]
        %v7080 = vld [vmem:[%s451 + $0x147] sm:$0xff]
        %v7081 = vld [vmem:[%s451 + $0x14f] sm:$0xff]
        %v7082 = vld [vmem:[%s451 + $0x167] sm:$0xff]
        %v7083 = vld [vmem:[%s451 + $0x16f] sm:$0xff]
        %v7084 = vld [vmem:[%s451 + $0x187] sm:$0xff]
        %v7085 = vld [vmem:[%s451 + $0x18f] sm:$0xff]
        %v7086 = vld [vmem:[%s451 + $0x1a7] sm:$0xff]
        %v7087 = vld [vmem:[%s451 + $0x1af] sm:$0xff]
        %v7088 = vld [vmem:[%s451 + $0x1c7] sm:$0xff]
        %v7089 = vld [vmem:[%s451 + $0x1cf] sm:$0xff]
        %v7090 = vld [vmem:[%s451 + $0x1e7] sm:$0xff]
        %v7091 = vld [vmem:[%s451 + $0x1ef] sm:$0xff]
        %v7092 = vpack.c.bf16 %v7061, %v7060
        %v7093 = vpack.c.bf16 %v7063, %v7062
        %v7094 = vpack.c.bf16 %v7065, %v7064
        %v7095 = vpack.c.bf16 %v7067, %v7066
        %v7096 = vpack.c.bf16 %v7069, %v7068
        %v7097 = vpack.c.bf16 %v7071, %v7070
        %v7098 = vpack.c.bf16 %v7073, %v7072
        %v7099 = vpack.c.bf16 %v7075, %v7074
        %v7100 = vpack.c.bf16 %v7077, %v7076
        %v7101 = vpack.c.bf16 %v7079, %v7078
        %v7102 = vpack.c.bf16 %v7081, %v7080
        %v7103 = vpack.c.bf16 %v7083, %v7082
        %v7104 = vpack.c.bf16 %v7085, %v7084
        %v7105 = vpack.c.bf16 %v7087, %v7086
        %v7106 = vpack.c.bf16 %v7089, %v7088
        %v7107 = vpack.c.bf16 %v7091, %v7090
        %s7108 = scalar_lea.vmem [#allocation3], 192
        %v7109 = vld [vmem:[%s7108] sm:$0xf]
        %v7110 = vld [vmem:[%s7108 + $0x4] sm:$0xf]
        %v7111 = vld [vmem:[%s7108 + $0x8] sm:$0xf]
        %v7112 = vld [vmem:[%s7108 + $0xc] sm:$0xf]
        %v7113 = vld [vmem:[%s7108 + $0x10] sm:$0xf]
        %v7114 = vld [vmem:[%s7108 + $0x14] sm:$0xf]
        %v7115 = vld [vmem:[%s7108 + $0x18] sm:$0xf]
        %v7116 = vld [vmem:[%s7108 + $0x1c] sm:$0xf]
        %v7117 = vld [vmem:[%s7108 + $0x20] sm:$0xf]
        %v7118 = vld [vmem:[%s7108 + $0x24] sm:$0xf]
        %v7119 = vld [vmem:[%s7108 + $0x28] sm:$0xf]
        %v7120 = vld [vmem:[%s7108 + $0x2c] sm:$0xf]
        %v7121 = vld [vmem:[%s7108 + $0x30] sm:$0xf]
        %v7122 = vld [vmem:[%s7108 + $0x34] sm:$0xf]
        %v7123 = vld [vmem:[%s7108 + $0x38] sm:$0xf]
        %v7124 = vld [vmem:[%s7108 + $0x3c] sm:$0xf]
        %v7141 = vunpack.c.l.b16 %v7109
        %v7142 = vunpack.c.l.b16 %v7110
        %v7143 = vunpack.c.l.b16 %v7111
        %v7144 = vunpack.c.l.b16 %v7112
        %v7145 = vunpack.c.l.b16 %v7113
        %v7146 = vunpack.c.l.b16 %v7114
        %v7147 = vunpack.c.l.b16 %v7115
        %v7148 = vunpack.c.l.b16 %v7116
        %v7149 = vunpack.c.l.b16 %v7117
        %v7150 = vunpack.c.l.b16 %v7118
        %v7151 = vunpack.c.l.b16 %v7119
        %v7152 = vunpack.c.l.b16 %v7120
        %v7153 = vunpack.c.l.b16 %v7121
        %v7154 = vunpack.c.l.b16 %v7122
        %v7155 = vunpack.c.l.b16 %v7123
        %v7156 = vunpack.c.l.b16 %v7124
        %v7157 = vpack.c.b16 %v7142, %v7141
        %v7158 = vpack.c.b16 %v7144, %v7143
        %v7159 = vpack.c.b16 %v7146, %v7145
        %v7160 = vpack.c.b16 %v7148, %v7147
        %v7161 = vpack.c.b16 %v7150, %v7149
        %v7162 = vpack.c.b16 %v7152, %v7151
        %v7163 = vpack.c.b16 %v7154, %v7153
        %v7164 = vpack.c.b16 %v7156, %v7155
        %7173 = vmatprep.subr.bf16.mxu0 0
        %7174 = vmatpush1.bf16.msra.mxu0 %v7157
        %7175 = vmatprep.subr.bf16.mxu0 0
        %7176 = vmatpush1.bf16.msra.mxu0 %v7158
        %7177 = vmatprep.subr.bf16.mxu0 0
        %7178 = vmatpush1.bf16.msra.mxu0 %v7159
        %7179 = vmatprep.subr.bf16.mxu0 0
        %7180 = vmatpush1.bf16.msra.mxu0 %v7160
        %7181 = vmatprep.subr.bf16.mxu0 0
        %7182 = vmatpush1.bf16.msra.mxu0 %v7161
        %7183 = vmatprep.subr.bf16.mxu0 0
        %7184 = vmatpush1.bf16.msra.mxu0 %v7162
        %7185 = vmatprep.subr.bf16.mxu0 0
        %7186 = vmatpush1.bf16.msra.mxu0 %v7163
        %7187 = vmatprep.subr.bf16.mxu0 0
        %7188 = vmatpush1.bf16.msra.mxu0 %v7164
        %7189 = vmatprep.subr.bf16.mxu0 0
        %7190 = vmatpush1.bf16.msra.mxu0 0
        %7191 = vmatprep.subr.bf16.mxu0 0
        %7192 = vmatpush1.bf16.msra.mxu0 0
        %7193 = vmatprep.subr.bf16.mxu0 0
        %7194 = vmatpush1.bf16.msra.mxu0 0
        %7195 = vmatprep.subr.bf16.mxu0 0
        %7196 = vmatpush1.bf16.msra.mxu0 0
        %7197 = vmatprep.subr.bf16.mxu0 0
        %7198 = vmatpush1.bf16.msra.mxu0 0
        %7199 = vmatprep.subr.bf16.mxu0 0
        %7200 = vmatpush1.bf16.msra.mxu0 0
        %7201 = vmatprep.subr.bf16.mxu0 0
        %7202 = vmatpush1.bf16.msra.mxu0 0
        %7203 = vmatprep.subr.bf16.mxu0 0
        %7204 = vmatpush1.bf16.msra.mxu0 0
        %7205 = vmatprep.mubr.bf16.mxu0 0
        %7206 = vmatmul.mubr.bf16.gmra.mrb[0].mxu0 %v7092
        %v7207 = vpop.f32.mrb[0].mxu0
        %v7208 = vadd.f32 0.0, %v7207
        %v7209 = vpop.f32.mrb[0].mxu0
        %v7210 = vpop.f32.mrb[0].mxu0
        %v7211 = vadd.f32 0.0, %v7210
        %v7212 = vpop.f32.mrb[0].mxu0
        %7213 = vmatprep.mubr.bf16.mxu0 0
        %7214 = vmatmul.mubr.bf16.gmra.mrb[0].mxu0 %v7093
        %v7215 = vpop.f32.mrb[0].mxu0
        %v7216 = vadd.f32 0.0, %v7215
        %v7217 = vpop.f32.mrb[0].mxu0
        %v7218 = vpop.f32.mrb[0].mxu0
        %v7219 = vadd.f32 0.0, %v7218
        %v7220 = vpop.f32.mrb[0].mxu0
        %7221 = vmatprep.mubr.bf16.mxu0 0
        %7222 = vmatmul.mubr.bf16.gmra.mrb[0].mxu0 %v7094
        %v7223 = vpop.f32.mrb[0].mxu0
        %v7224 = vadd.f32 0.0, %v7223
        %v7225 = vpop.f32.mrb[0].mxu0
        %v7226 = vpop.f32.mrb[0].mxu0
        %v7227 = vadd.f32 0.0, %v7226
        %v7228 = vpop.f32.mrb[0].mxu0
        %7229 = vmatprep.mubr.bf16.mxu0 0
        %7230 = vmatmul.mubr.bf16.gmra.mrb[0].mxu0 %v7095
        %v7231 = vpop.f32.mrb[0].mxu0
        %v7232 = vadd.f32 0.0, %v7231
        %v7233 = vpop.f32.mrb[0].mxu0
        %v7234 = vpop.f32.mrb[0].mxu0
        %v7235 = vadd.f32 0.0, %v7234
        %v7236 = vpop.f32.mrb[0].mxu0
        %7237 = vmatprep.mubr.bf16.mxu0 0
        %7238 = vmatmul.mubr.bf16.gmra.mrb[0].mxu0 %v7096
        %v7239 = vpop.f32.mrb[0].mxu0
        %v7240 = vadd.f32 0.0, %v7239
        %v7241 = vpop.f32.mrb[0].mxu0
        %v7242 = vpop.f32.mrb[0].mxu0
        %v7243 = vadd.f32 0.0, %v7242
        %v7244 = vpop.f32.mrb[0].mxu0
        %7245 = vmatprep.mubr.bf16.mxu0 0
        %7246 = vmatmul.mubr.bf16.gmra.mrb[0].mxu0 %v7097
        %v7247 = vpop.f32.mrb[0].mxu0
        %v7248 = vadd.f32 0.0, %v7247
        %v7249 = vpop.f32.mrb[0].mxu0
        %v7250 = vpop.f32.mrb[0].mxu0
        %v7251 = vadd.f32 0.0, %v7250
        %v7252 = vpop.f32.mrb[0].mxu0
        %7253 = vmatprep.mubr.bf16.mxu0 0
        %7254 = vmatmul.mubr.bf16.gmra.mrb[0].mxu0 %v7098
        %v7255 = vpop.f32.mrb[0].mxu0
        %v7256 = vadd.f32 0.0, %v7255
        %v7257 = vpop.f32.mrb[0].mxu0
        %v7258 = vpop.f32.mrb[0].mxu0
        %v7259 = vadd.f32 0.0, %v7258
        %v7260 = vpop.f32.mrb[0].mxu0
        %7261 = vmatprep.mubr.bf16.mxu0 0
        %7262 = vmatmul.mubr.bf16.gmra.mrb[0].mxu0 %v7099
        %v7263 = vpop.f32.mrb[0].mxu0
        %v7264 = vadd.f32 0.0, %v7263
        %v7265 = vpop.f32.mrb[0].mxu0
        %v7266 = vpop.f32.mrb[0].mxu0
        %v7267 = vadd.f32 0.0, %v7266
        %v7268 = vpop.f32.mrb[0].mxu0
        %7269 = vmatprep.mubr.bf16.mxu0 0
        %7270 = vmatmul.mubr.bf16.gmra.mrb[0].mxu0 %v7100
        %v7271 = vpop.f32.mrb[0].mxu0
        %v7272 = vadd.f32 0.0, %v7271
        %v7273 = vpop.f32.mrb[0].mxu0
        %v7274 = vpop.f32.mrb[0].mxu0
        %v7275 = vadd.f32 0.0, %v7274
        %v7276 = vpop.f32.mrb[0].mxu0
        %7277 = vmatprep.mubr.bf16.mxu0 0
        %7278 = vmatmul.mubr.bf16.gmra.mrb[0].mxu0 %v7101
        %v7279 = vpop.f32.mrb[0].mxu0
        %v7280 = vadd.f32 0.0, %v7279
        %v7281 = vpop.f32.mrb[0].mxu0
        %v7282 = vpop.f32.mrb[0].mxu0
        %v7283 = vadd.f32 0.0, %v7282
        %v7284 = vpop.f32.mrb[0].mxu0
        %7285 = vmatprep.mubr.bf16.mxu0 0
        %7286 = vmatmul.mubr.bf16.gmra.mrb[0].mxu0 %v7102
        %v7287 = vpop.f32.mrb[0].mxu0
        %v7288 = vadd.f32 0.0, %v7287
        %v7289 = vpop.f32.mrb[0].mxu0
        %v7290 = vpop.f32.mrb[0].mxu0
        %v7291 = vadd.f32 0.0, %v7290
        %v7292 = vpop.f32.mrb[0].mxu0
        %7293 = vmatprep.mubr.bf16.mxu0 0
        %7294 = vmatmul.mubr.bf16.gmra.mrb[0].mxu0 %v7103
        %v7295 = vpop.f32.mrb[0].mxu0
        %v7296 = vadd.f32 0.0, %v7295
        %v7297 = vpop.f32.mrb[0].mxu0
        %v7298 = vpop.f32.mrb[0].mxu0
        %v7299 = vadd.f32 0.0, %v7298
        %v7300 = vpop.f32.mrb[0].mxu0
        %7301 = vmatprep.mubr.bf16.mxu0 0
        %7302 = vmatmul.mubr.bf16.gmra.mrb[0].mxu0 %v7104
        %v7303 = vpop.f32.mrb[0].mxu0
        %v7304 = vadd.f32 0.0, %v7303
        %v7305 = vpop.f32.mrb[0].mxu0
        %v7306 = vpop.f32.mrb[0].mxu0
        %v7307 = vadd.f32 0.0, %v7306
        %v7308 = vpop.f32.mrb[0].mxu0
        %7309 = vmatprep.mubr.bf16.mxu0 0
        %7310 = vmatmul.mubr.bf16.gmra.mrb[0].mxu0 %v7105
        %v7311 = vpop.f32.mrb[0].mxu0
        %v7312 = vadd.f32 0.0, %v7311
        %v7313 = vpop.f32.mrb[0].mxu0
        %v7314 = vpop.f32.mrb[0].mxu0
        %v7315 = vadd.f32 0.0, %v7314
        %v7316 = vpop.f32.mrb[0].mxu0
        %7317 = vmatprep.mubr.bf16.mxu0 0
        %7318 = vmatmul.mubr.bf16.gmra.mrb[0].mxu0 %v7106
        %v7319 = vpop.f32.mrb[0].mxu0
        %v7320 = vadd.f32 0.0, %v7319
        %v7321 = vpop.f32.mrb[0].mxu0
        %v7322 = vpop.f32.mrb[0].mxu0
        %v7323 = vadd.f32 0.0, %v7322
        %v7324 = vpop.f32.mrb[0].mxu0
        %7325 = vmatprep.mubr.bf16.mxu0 0
        %7326 = vmatmul.mubr.bf16.gmra.mrb[0].mxu0 %v7107
        %v7327 = vpop.f32.mrb[0].mxu0
        %v7328 = vadd.f32 0.0, %v7327
        %v7329 = vpop.f32.mrb[0].mxu0
        %v7330 = vpop.f32.mrb[0].mxu0
        %v7331 = vadd.f32 0.0, %v7330
        %v7332 = vpop.f32.mrb[0].mxu0
        %7333 = vdwg.mxu0
        %v7334 = vadd.f32 %v7028, %v7208
        %v7335 = vadd.f32 %v7029, %v7211
        %v7336 = vadd.f32 %v7030, %v7216
        %v7337 = vadd.f32 %v7031, %v7219
        %v7338 = vadd.f32 %v7032, %v7224
        %v7339 = vadd.f32 %v7033, %v7227
        %v7340 = vadd.f32 %v7034, %v7232
        %v7341 = vadd.f32 %v7035, %v7235
        %v7342 = vadd.f32 %v7036, %v7240
        %v7343 = vadd.f32 %v7037, %v7243
        %v7344 = vadd.f32 %v7038, %v7248
        %v7345 = vadd.f32 %v7039, %v7251
        %v7346 = vadd.f32 %v7040, %v7256
        %v7347 = vadd.f32 %v7041, %v7259
        %v7348 = vadd.f32 %v7042, %v7264
        %v7349 = vadd.f32 %v7043, %v7267
        %v7350 = vadd.f32 %v7044, %v7272
        %v7351 = vadd.f32 %v7045, %v7275
        %v7352 = vadd.f32 %v7046, %v7280
        %v7353 = vadd.f32 %v7047, %v7283
        %v7354 = vadd.f32 %v7048, %v7288
        %v7355 = vadd.f32 %v7049, %v7291
        %v7356 = vadd.f32 %v7050, %v7296
        %v7357 = vadd.f32 %v7051, %v7299
        %v7358 = vadd.f32 %v7052, %v7304
        %v7359 = vadd.f32 %v7053, %v7307
        %v7360 = vadd.f32 %v7054, %v7312
        %v7361 = vadd.f32 %v7055, %v7315
        %v7362 = vadd.f32 %v7056, %v7320
        %v7363 = vadd.f32 %v7057, %v7323
        %v7364 = vadd.f32 %v7058, %v7328
        %v7365 = vadd.f32 %v7059, %v7331
        %v7366 = vld [vmem:[%s451 + $0x8] sm:$0xff]
        %v7367 = vld [vmem:[%s451 + $0x10] sm:$0xff]
        %v7368 = vld [vmem:[%s451 + $0x28] sm:$0xff]
        %v7369 = vld [vmem:[%s451 + $0x30] sm:$0xff]
        %v7370 = vld [vmem:[%s451 + $0x48] sm:$0xff]
        %v7371 = vld [vmem:[%s451 + $0x50] sm:$0xff]
        %v7372 = vld [vmem:[%s451 + $0x68] sm:$0xff]
        %v7373 = vld [vmem:[%s451 + $0x70] sm:$0xff]
        %v7374 = vld [vmem:[%s451 + $0x88] sm:$0xff]
        %v7375 = vld [vmem:[%s451 + $0x90] sm:$0xff]
        %v7376 = vld [vmem:[%s451 + $0xa8] sm:$0xff]
        %v7377 = vld [vmem:[%s451 + $0xb0] sm:$0xff]
        %v7378 = vld [vmem:[%s451 + $0xc8] sm:$0xff]
        %v7379 = vld [vmem:[%s451 + $0xd0] sm:$0xff]
        %v7380 = vld [vmem:[%s451 + $0xe8] sm:$0xff]
        %v7381 = vld [vmem:[%s451 + $0xf0] sm:$0xff]
        %v7382 = vld [vmem:[%s451 + $0x108] sm:$0xff]
        %v7383 = vld [vmem:[%s451 + $0x110] sm:$0xff]
        %v7384 = vld [vmem:[%s451 + $0x128] sm:$0xff]
        %v7385 = vld [vmem:[%s451 + $0x130] sm:$0xff]
        %v7386 = vld [vmem:[%s451 + $0x148] sm:$0xff]
        %v7387 = vld [vmem:[%s451 + $0x150] sm:$0xff]
        %v7388 = vld [vmem:[%s451 + $0x168] sm:$0xff]
        %v7389 = vld [vmem:[%s451 + $0x170] sm:$0xff]
        %v7390 = vld [vmem:[%s451 + $0x188] sm:$0xff]
        %v7391 = vld [vmem:[%s451 + $0x190] sm:$0xff]
        %v7392 = vld [vmem:[%s451 + $0x1a8] sm:$0xff]
        %v7393 = vld [vmem:[%s451 + $0x1b0] sm:$0xff]
        %v7394 = vld [vmem:[%s451 + $0x1c8] sm:$0xff]
        %v7395 = vld [vmem:[%s451 + $0x1d0] sm:$0xff]
        %v7396 = vld [vmem:[%s451 + $0x1e8] sm:$0xff]
        %v7397 = vld [vmem:[%s451 + $0x1f0] sm:$0xff]
        %v7398 = vpack.c.bf16 %v7367, %v7366
        %v7399 = vpack.c.bf16 %v7369, %v7368
        %v7400 = vpack.c.bf16 %v7371, %v7370
        %v7401 = vpack.c.bf16 %v7373, %v7372
        %v7402 = vpack.c.bf16 %v7375, %v7374
        %v7403 = vpack.c.bf16 %v7377, %v7376
        %v7404 = vpack.c.bf16 %v7379, %v7378
        %v7405 = vpack.c.bf16 %v7381, %v7380
        %v7406 = vpack.c.bf16 %v7383, %v7382
        %v7407 = vpack.c.bf16 %v7385, %v7384
        %v7408 = vpack.c.bf16 %v7387, %v7386
        %v7409 = vpack.c.bf16 %v7389, %v7388
        %v7410 = vpack.c.bf16 %v7391, %v7390
        %v7411 = vpack.c.bf16 %v7393, %v7392
        %v7412 = vpack.c.bf16 %v7395, %v7394
        %v7413 = vpack.c.bf16 %v7397, %v7396
        %s7414 = scalar_lea.vmem [#allocation3], 256
        %v7415 = vld [vmem:[%s7414] sm:$0xf]
        %v7416 = vld [vmem:[%s7414 + $0x4] sm:$0xf]
        %v7417 = vld [vmem:[%s7414 + $0x8] sm:$0xf]
        %v7418 = vld [vmem:[%s7414 + $0xc] sm:$0xf]
        %v7419 = vld [vmem:[%s7414 + $0x10] sm:$0xf]
        %v7420 = vld [vmem:[%s7414 + $0x14] sm:$0xf]
        %v7421 = vld [vmem:[%s7414 + $0x18] sm:$0xf]
        %v7422 = vld [vmem:[%s7414 + $0x1c] sm:$0xf]
        %v7423 = vld [vmem:[%s7414 + $0x20] sm:$0xf]
        %v7424 = vld [vmem:[%s7414 + $0x24] sm:$0xf]
        %v7425 = vld [vmem:[%s7414 + $0x28] sm:$0xf]
        %v7426 = vld [vmem:[%s7414 + $0x2c] sm:$0xf]
        %v7427 = vld [vmem:[%s7414 + $0x30] sm:$0xf]
        %v7428 = vld [vmem:[%s7414 + $0x34] sm:$0xf]
        %v7429 = vld [vmem:[%s7414 + $0x38] sm:$0xf]
        %v7430 = vld [vmem:[%s7414 + $0x3c] sm:$0xf]
        %v7447 = vunpack.c.l.b16 %v7415
        %v7448 = vunpack.c.l.b16 %v7416
        %v7449 = vunpack.c.l.b16 %v7417
        %v7450 = vunpack.c.l.b16 %v7418
        %v7451 = vunpack.c.l.b16 %v7419
        %v7452 = vunpack.c.l.b16 %v7420
        %v7453 = vunpack.c.l.b16 %v7421
        %v7454 = vunpack.c.l.b16 %v7422
        %v7455 = vunpack.c.l.b16 %v7423
        %v7456 = vunpack.c.l.b16 %v7424
        %v7457 = vunpack.c.l.b16 %v7425
        %v7458 = vunpack.c.l.b16 %v7426
        %v7459 = vunpack.c.l.b16 %v7427
        %v7460 = vunpack.c.l.b16 %v7428
        %v7461 = vunpack.c.l.b16 %v7429
        %v7462 = vunpack.c.l.b16 %v7430
        %v7463 = vpack.c.b16 %v7448, %v7447
        %v7464 = vpack.c.b16 %v7450, %v7449
        %v7465 = vpack.c.b16 %v7452, %v7451
        %v7466 = vpack.c.b16 %v7454, %v7453
        %v7467 = vpack.c.b16 %v7456, %v7455
        %v7468 = vpack.c.b16 %v7458, %v7457
        %v7469 = vpack.c.b16 %v7460, %v7459
        %v7470 = vpack.c.b16 %v7462, %v7461
        %7479 = vmatprep.subr.bf16.mxu0 0
        %7480 = vmatpush1.bf16.msra.mxu0 %v7463
        %7481 = vmatprep.subr.bf16.mxu0 0
        %7482 = vmatpush1.bf16.msra.mxu0 %v7464
        %7483 = vmatprep.subr.bf16.mxu0 0
        %7484 = vmatpush1.bf16.msra.mxu0 %v7465
        %7485 = vmatprep.subr.bf16.mxu0 0
        %7486 = vmatpush1.bf16.msra.mxu0 %v7466
        %7487 = vmatprep.subr.bf16.mxu0 0
        %7488 = vmatpush1.bf16.msra.mxu0 %v7467
        %7489 = vmatprep.subr.bf16.mxu0 0
        %7490 = vmatpush1.bf16.msra.mxu0 %v7468
        %7491 = vmatprep.subr.bf16.mxu0 0
        %7492 = vmatpush1.bf16.msra.mxu0 %v7469
        %7493 = vmatprep.subr.bf16.mxu0 0
        %7494 = vmatpush1.bf16.msra.mxu0 %v7470
        %7495 = vmatprep.subr.bf16.mxu0 0
        %7496 = vmatpush1.bf16.msra.mxu0 0
        %7497 = vmatprep.subr.bf16.mxu0 0
        %7498 = vmatpush1.bf16.msra.mxu0 0
        %7499 = vmatprep.subr.bf16.mxu0 0
        %7500 = vmatpush1.bf16.msra.mxu0 0
        %7501 = vmatprep.subr.bf16.mxu0 0
        %7502 = vmatpush1.bf16.msra.mxu0 0
        %7503 = vmatprep.subr.bf16.mxu0 0
        %7504 = vmatpush1.bf16.msra.mxu0 0
        %7505 = vmatprep.subr.bf16.mxu0 0
        %7506 = vmatpush1.bf16.msra.mxu0 0
        %7507 = vmatprep.subr.bf16.mxu0 0
        %7508 = vmatpush1.bf16.msra.mxu0 0
        %7509 = vmatprep.subr.bf16.mxu0 0
        %7510 = vmatpush1.bf16.msra.mxu0 0
        %7511 = vmatprep.mubr.bf16.mxu0 0
        %7512 = vmatmul.mubr.bf16.gmra.mrb[0].mxu0 %v7398
        %v7513 = vpop.f32.mrb[0].mxu0
        %v7514 = vadd.f32 0.0, %v7513
        %v7515 = vpop.f32.mrb[0].mxu0
        %v7516 = vpop.f32.mrb[0].mxu0
        %v7517 = vadd.f32 0.0, %v7516
        %v7518 = vpop.f32.mrb[0].mxu0
        %7519 = vmatprep.mubr.bf16.mxu0 0
        %7520 = vmatmul.mubr.bf16.gmra.mrb[0].mxu0 %v7399
        %v7521 = vpop.f32.mrb[0].mxu0
        %v7522 = vadd.f32 0.0, %v7521
        %v7523 = vpop.f32.mrb[0].mxu0
        %v7524 = vpop.f32.mrb[0].mxu0
        %v7525 = vadd.f32 0.0, %v7524
        %v7526 = vpop.f32.mrb[0].mxu0
        %7527 = vmatprep.mubr.bf16.mxu0 0
        %7528 = vmatmul.mubr.bf16.gmra.mrb[0].mxu0 %v7400
        %v7529 = vpop.f32.mrb[0].mxu0
        %v7530 = vadd.f32 0.0, %v7529
        %v7531 = vpop.f32.mrb[0].mxu0
        %v7532 = vpop.f32.mrb[0].mxu0
        %v7533 = vadd.f32 0.0, %v7532
        %v7534 = vpop.f32.mrb[0].mxu0
        %7535 = vmatprep.mubr.bf16.mxu0 0
        %7536 = vmatmul.mubr.bf16.gmra.mrb[0].mxu0 %v7401
        %v7537 = vpop.f32.mrb[0].mxu0
        %v7538 = vadd.f32 0.0, %v7537
        %v7539 = vpop.f32.mrb[0].mxu0
        %v7540 = vpop.f32.mrb[0].mxu0
        %v7541 = vadd.f32 0.0, %v7540
        %v7542 = vpop.f32.mrb[0].mxu0
        %7543 = vmatprep.mubr.bf16.mxu0 0
        %7544 = vmatmul.mubr.bf16.gmra.mrb[0].mxu0 %v7402
        %v7545 = vpop.f32.mrb[0].mxu0
        %v7546 = vadd.f32 0.0, %v7545
        %v7547 = vpop.f32.mrb[0].mxu0
        %v7548 = vpop.f32.mrb[0].mxu0
        %v7549 = vadd.f32 0.0, %v7548
        %v7550 = vpop.f32.mrb[0].mxu0
        %7551 = vmatprep.mubr.bf16.mxu0 0
        %7552 = vmatmul.mubr.bf16.gmra.mrb[0].mxu0 %v7403
        %v7553 = vpop.f32.mrb[0].mxu0
        %v7554 = vadd.f32 0.0, %v7553
        %v7555 = vpop.f32.mrb[0].mxu0
        %v7556 = vpop.f32.mrb[0].mxu0
        %v7557 = vadd.f32 0.0, %v7556
        %v7558 = vpop.f32.mrb[0].mxu0
        %7559 = vmatprep.mubr.bf16.mxu0 0
        %7560 = vmatmul.mubr.bf16.gmra.mrb[0].mxu0 %v7404
        %v7561 = vpop.f32.mrb[0].mxu0
        %v7562 = vadd.f32 0.0, %v7561
        %v7563 = vpop.f32.mrb[0].mxu0
        %v7564 = vpop.f32.mrb[0].mxu0
        %v7565 = vadd.f32 0.0, %v7564
        %v7566 = vpop.f32.mrb[0].mxu0
        %7567 = vmatprep.mubr.bf16.mxu0 0
        %7568 = vmatmul.mubr.bf16.gmra.mrb[0].mxu0 %v7405
        %v7569 = vpop.f32.mrb[0].mxu0
        %v7570 = vadd.f32 0.0, %v7569
        %v7571 = vpop.f32.mrb[0].mxu0
        %v7572 = vpop.f32.mrb[0].mxu0
        %v7573 = vadd.f32 0.0, %v7572
        %v7574 = vpop.f32.mrb[0].mxu0
        %7575 = vmatprep.mubr.bf16.mxu0 0
        %7576 = vmatmul.mubr.bf16.gmra.mrb[0].mxu0 %v7406
        %v7577 = vpop.f32.mrb[0].mxu0
        %v7578 = vadd.f32 0.0, %v7577
        %v7579 = vpop.f32.mrb[0].mxu0
        %v7580 = vpop.f32.mrb[0].mxu0
        %v7581 = vadd.f32 0.0, %v7580
        %v7582 = vpop.f32.mrb[0].mxu0
        %7583 = vmatprep.mubr.bf16.mxu0 0
        %7584 = vmatmul.mubr.bf16.gmra.mrb[0].mxu0 %v7407
        %v7585 = vpop.f32.mrb[0].mxu0
        %v7586 = vadd.f32 0.0, %v7585
        %v7587 = vpop.f32.mrb[0].mxu0
        %v7588 = vpop.f32.mrb[0].mxu0
        %v7589 = vadd.f32 0.0, %v7588
        %v7590 = vpop.f32.mrb[0].mxu0
        %7591 = vmatprep.mubr.bf16.mxu0 0
        %7592 = vmatmul.mubr.bf16.gmra.mrb[0].mxu0 %v7408
        %v7593 = vpop.f32.mrb[0].mxu0
        %v7594 = vadd.f32 0.0, %v7593
        %v7595 = vpop.f32.mrb[0].mxu0
        %v7596 = vpop.f32.mrb[0].mxu0
        %v7597 = vadd.f32 0.0, %v7596
        %v7598 = vpop.f32.mrb[0].mxu0
        %7599 = vmatprep.mubr.bf16.mxu0 0
        %7600 = vmatmul.mubr.bf16.gmra.mrb[0].mxu0 %v7409
        %v7601 = vpop.f32.mrb[0].mxu0
        %v7602 = vadd.f32 0.0, %v7601
        %v7603 = vpop.f32.mrb[0].mxu0
        %v7604 = vpop.f32.mrb[0].mxu0
        %v7605 = vadd.f32 0.0, %v7604
        %v7606 = vpop.f32.mrb[0].mxu0
        %7607 = vmatprep.mubr.bf16.mxu0 0
        %7608 = vmatmul.mubr.bf16.gmra.mrb[0].mxu0 %v7410
        %v7609 = vpop.f32.mrb[0].mxu0
        %v7610 = vadd.f32 0.0, %v7609
        %v7611 = vpop.f32.mrb[0].mxu0
        %v7612 = vpop.f32.mrb[0].mxu0
        %v7613 = vadd.f32 0.0, %v7612
        %v7614 = vpop.f32.mrb[0].mxu0
        %7615 = vmatprep.mubr.bf16.mxu0 0
        %7616 = vmatmul.mubr.bf16.gmra.mrb[0].mxu0 %v7411
        %v7617 = vpop.f32.mrb[0].mxu0
        %v7618 = vadd.f32 0.0, %v7617
        %v7619 = vpop.f32.mrb[0].mxu0
        %v7620 = vpop.f32.mrb[0].mxu0
        %v7621 = vadd.f32 0.0, %v7620
        %v7622 = vpop.f32.mrb[0].mxu0
        %7623 = vmatprep.mubr.bf16.mxu0 0
        %7624 = vmatmul.mubr.bf16.gmra.mrb[0].mxu0 %v7412
        %v7625 = vpop.f32.mrb[0].mxu0
        %v7626 = vadd.f32 0.0, %v7625
        %v7627 = vpop.f32.mrb[0].mxu0
        %v7628 = vpop.f32.mrb[0].mxu0
        %v7629 = vadd.f32 0.0, %v7628
        %v7630 = vpop.f32.mrb[0].mxu0
        %7631 = vmatprep.mubr.bf16.mxu0 0
        %7632 = vmatmul.mubr.bf16.gmra.mrb[0].mxu0 %v7413
        %v7633 = vpop.f32.mrb[0].mxu0
        %v7634 = vadd.f32 0.0, %v7633
        %v7635 = vpop.f32.mrb[0].mxu0
        %v7636 = vpop.f32.mrb[0].mxu0
        %v7637 = vadd.f32 0.0, %v7636
        %v7638 = vpop.f32.mrb[0].mxu0
        %7639 = vdwg.mxu0
        %v7640 = vadd.f32 %v7334, %v7514
        %v7641 = vadd.f32 %v7335, %v7517
        %v7642 = vadd.f32 %v7336, %v7522
        %v7643 = vadd.f32 %v7337, %v7525
        %v7644 = vadd.f32 %v7338, %v7530
        %v7645 = vadd.f32 %v7339, %v7533
        %v7646 = vadd.f32 %v7340, %v7538
        %v7647 = vadd.f32 %v7341, %v7541
        %v7648 = vadd.f32 %v7342, %v7546
        %v7649 = vadd.f32 %v7343, %v7549
        %v7650 = vadd.f32 %v7344, %v7554
        %v7651 = vadd.f32 %v7345, %v7557
        %v7652 = vadd.f32 %v7346, %v7562
        %v7653 = vadd.f32 %v7347, %v7565
        %v7654 = vadd.f32 %v7348, %v7570
        %v7655 = vadd.f32 %v7349, %v7573
        %v7656 = vadd.f32 %v7350, %v7578
        %v7657 = vadd.f32 %v7351, %v7581
        %v7658 = vadd.f32 %v7352, %v7586
        %v7659 = vadd.f32 %v7353, %v7589
        %v7660 = vadd.f32 %v7354, %v7594
        %v7661 = vadd.f32 %v7355, %v7597
        %v7662 = vadd.f32 %v7356, %v7602
        %v7663 = vadd.f32 %v7357, %v7605
        %v7664 = vadd.f32 %v7358, %v7610
        %v7665 = vadd.f32 %v7359, %v7613
        %v7666 = vadd.f32 %v7360, %v7618
        %v7667 = vadd.f32 %v7361, %v7621
        %v7668 = vadd.f32 %v7362, %v7626
        %v7669 = vadd.f32 %v7363, %v7629
        %v7670 = vadd.f32 %v7364, %v7634
        %v7671 = vadd.f32 %v7365, %v7637
        %v7672 = vld [vmem:[%s451 + $0x9] sm:$0xff]
        %v7673 = vld [vmem:[%s451 + $0x11] sm:$0xff]
        %v7674 = vld [vmem:[%s451 + $0x29] sm:$0xff]
        %v7675 = vld [vmem:[%s451 + $0x31] sm:$0xff]
        %v7676 = vld [vmem:[%s451 + $0x49] sm:$0xff]
        %v7677 = vld [vmem:[%s451 + $0x51] sm:$0xff]
        %v7678 = vld [vmem:[%s451 + $0x69] sm:$0xff]
        %v7679 = vld [vmem:[%s451 + $0x71] sm:$0xff]
        %v7680 = vld [vmem:[%s451 + $0x89] sm:$0xff]
        %v7681 = vld [vmem:[%s451 + $0x91] sm:$0xff]
        %v7682 = vld [vmem:[%s451 + $0xa9] sm:$0xff]
        %v7683 = vld [vmem:[%s451 + $0xb1] sm:$0xff]
        %v7684 = vld [vmem:[%s451 + $0xc9] sm:$0xff]
        %v7685 = vld [vmem:[%s451 + $0xd1] sm:$0xff]
        %v7686 = vld [vmem:[%s451 + $0xe9] sm:$0xff]
        %v7687 = vld [vmem:[%s451 + $0xf1] sm:$0xff]
        %v7688 = vld [vmem:[%s451 + $0x109] sm:$0xff]
        %v7689 = vld [vmem:[%s451 + $0x111] sm:$0xff]
        %v7690 = vld [vmem:[%s451 + $0x129] sm:$0xff]
        %v7691 = vld [vmem:[%s451 + $0x131] sm:$0xff]
        %v7692 = vld [vmem:[%s451 + $0x149] sm:$0xff]
        %v7693 = vld [vmem:[%s451 + $0x151] sm:$0xff]
        %v7694 = vld [vmem:[%s451 + $0x169] sm:$0xff]
        %v7695 = vld [vmem:[%s451 + $0x171] sm:$0xff]
        %v7696 = vld [vmem:[%s451 + $0x189] sm:$0xff]
        %v7697 = vld [vmem:[%s451 + $0x191] sm:$0xff]
        %v7698 = vld [vmem:[%s451 + $0x1a9] sm:$0xff]
        %v7699 = vld [vmem:[%s451 + $0x1b1] sm:$0xff]
        %v7700 = vld [vmem:[%s451 + $0x1c9] sm:$0xff]
        %v7701 = vld [vmem:[%s451 + $0x1d1] sm:$0xff]
        %v7702 = vld [vmem:[%s451 + $0x1e9] sm:$0xff]
        %v7703 = vld [vmem:[%s451 + $0x1f1] sm:$0xff]
        %v7704 = vpack.c.bf16 %v7673, %v7672
        %v7705 = vpack.c.bf16 %v7675, %v7674
        %v7706 = vpack.c.bf16 %v7677, %v7676
        %v7707 = vpack.c.bf16 %v7679, %v7678
        %v7708 = vpack.c.bf16 %v7681, %v7680
        %v7709 = vpack.c.bf16 %v7683, %v7682
        %v7710 = vpack.c.bf16 %v7685, %v7684
        %v7711 = vpack.c.bf16 %v7687, %v7686
        %v7712 = vpack.c.bf16 %v7689, %v7688
        %v7713 = vpack.c.bf16 %v7691, %v7690
        %v7714 = vpack.c.bf16 %v7693, %v7692
        %v7715 = vpack.c.bf16 %v7695, %v7694
        %v7716 = vpack.c.bf16 %v7697, %v7696
        %v7717 = vpack.c.bf16 %v7699, %v7698
        %v7718 = vpack.c.bf16 %v7701, %v7700
        %v7719 = vpack.c.bf16 %v7703, %v7702
        %s7720 = scalar_lea.vmem [#allocation3], 320
        %v7721 = vld [vmem:[%s7720] sm:$0xf]
        %v7722 = vld [vmem:[%s7720 + $0x4] sm:$0xf]
        %v7723 = vld [vmem:[%s7720 + $0x8] sm:$0xf]
        %v7724 = vld [vmem:[%s7720 + $0xc] sm:$0xf]
        %v7725 = vld [vmem:[%s7720 + $0x10] sm:$0xf]
        %v7726 = vld [vmem:[%s7720 + $0x14] sm:$0xf]
        %v7727 = vld [vmem:[%s7720 + $0x18] sm:$0xf]
        %v7728 = vld [vmem:[%s7720 + $0x1c] sm:$0xf]
        %v7729 = vld [vmem:[%s7720 + $0x20] sm:$0xf]
        %v7730 = vld [vmem:[%s7720 + $0x24] sm:$0xf]
        %v7731 = vld [vmem:[%s7720 + $0x28] sm:$0xf]
        %v7732 = vld [vmem:[%s7720 + $0x2c] sm:$0xf]
        %v7733 = vld [vmem:[%s7720 + $0x30] sm:$0xf]
        %v7734 = vld [vmem:[%s7720 + $0x34] sm:$0xf]
        %v7735 = vld [vmem:[%s7720 + $0x38] sm:$0xf]
        %v7736 = vld [vmem:[%s7720 + $0x3c] sm:$0xf]
        %v7753 = vunpack.c.l.b16 %v7721
        %v7754 = vunpack.c.l.b16 %v7722
        %v7755 = vunpack.c.l.b16 %v7723
        %v7756 = vunpack.c.l.b16 %v7724
        %v7757 = vunpack.c.l.b16 %v7725
        %v7758 = vunpack.c.l.b16 %v7726
        %v7759 = vunpack.c.l.b16 %v7727
        %v7760 = vunpack.c.l.b16 %v7728
        %v7761 = vunpack.c.l.b16 %v7729
        %v7762 = vunpack.c.l.b16 %v7730
        %v7763 = vunpack.c.l.b16 %v7731
        %v7764 = vunpack.c.l.b16 %v7732
        %v7765 = vunpack.c.l.b16 %v7733
        %v7766 = vunpack.c.l.b16 %v7734
        %v7767 = vunpack.c.l.b16 %v7735
        %v7768 = vunpack.c.l.b16 %v7736
        %v7769 = vpack.c.b16 %v7754, %v7753
        %v7770 = vpack.c.b16 %v7756, %v7755
        %v7771 = vpack.c.b16 %v7758, %v7757
        %v7772 = vpack.c.b16 %v7760, %v7759
        %v7773 = vpack.c.b16 %v7762, %v7761
        %v7774 = vpack.c.b16 %v7764, %v7763
        %v7775 = vpack.c.b16 %v7766, %v7765
        %v7776 = vpack.c.b16 %v7768, %v7767
        %7785 = vmatprep.subr.bf16.mxu0 0
        %7786 = vmatpush1.bf16.msra.mxu0 %v7769
        %7787 = vmatprep.subr.bf16.mxu0 0
        %7788 = vmatpush1.bf16.msra.mxu0 %v7770
        %7789 = vmatprep.subr.bf16.mxu0 0
        %7790 = vmatpush1.bf16.msra.mxu0 %v7771
        %7791 = vmatprep.subr.bf16.mxu0 0
        %7792 = vmatpush1.bf16.msra.mxu0 %v7772
        %7793 = vmatprep.subr.bf16.mxu0 0
        %7794 = vmatpush1.bf16.msra.mxu0 %v7773
        %7795 = vmatprep.subr.bf16.mxu0 0
        %7796 = vmatpush1.bf16.msra.mxu0 %v7774
        %7797 = vmatprep.subr.bf16.mxu0 0
        %7798 = vmatpush1.bf16.msra.mxu0 %v7775
        %7799 = vmatprep.subr.bf16.mxu0 0
        %7800 = vmatpush1.bf16.msra.mxu0 %v7776
        %7801 = vmatprep.subr.bf16.mxu0 0
        %7802 = vmatpush1.bf16.msra.mxu0 0
        %7803 = vmatprep.subr.bf16.mxu0 0
        %7804 = vmatpush1.bf16.msra.mxu0 0
        %7805 = vmatprep.subr.bf16.mxu0 0
        %7806 = vmatpush1.bf16.msra.mxu0 0
        %7807 = vmatprep.subr.bf16.mxu0 0
        %7808 = vmatpush1.bf16.msra.mxu0 0
        %7809 = vmatprep.subr.bf16.mxu0 0
        %7810 = vmatpush1.bf16.msra.mxu0 0
        %7811 = vmatprep.subr.bf16.mxu0 0
        %7812 = vmatpush1.bf16.msra.mxu0 0
        %7813 = vmatprep.subr.bf16.mxu0 0
        %7814 = vmatpush1.bf16.msra.mxu0 0
        %7815 = vmatprep.subr.bf16.mxu0 0
        %7816 = vmatpush1.bf16.msra.mxu0 0
        %7817 = vmatprep.mubr.bf16.mxu0 0
        %7818 = vmatmul.mubr.bf16.gmra.mrb[0].mxu0 %v7704
        %v7819 = vpop.f32.mrb[0].mxu0
        %v7820 = vadd.f32 0.0, %v7819
        %v7821 = vpop.f32.mrb[0].mxu0
        %v7822 = vpop.f32.mrb[0].mxu0
        %v7823 = vadd.f32 0.0, %v7822
        %v7824 = vpop.f32.mrb[0].mxu0
        %7825 = vmatprep.mubr.bf16.mxu0 0
        %7826 = vmatmul.mubr.bf16.gmra.mrb[0].mxu0 %v7705
        %v7827 = vpop.f32.mrb[0].mxu0
        %v7828 = vadd.f32 0.0, %v7827
        %v7829 = vpop.f32.mrb[0].mxu0
        %v7830 = vpop.f32.mrb[0].mxu0
        %v7831 = vadd.f32 0.0, %v7830
        %v7832 = vpop.f32.mrb[0].mxu0
        %7833 = vmatprep.mubr.bf16.mxu0 0
        %7834 = vmatmul.mubr.bf16.gmra.mrb[0].mxu0 %v7706
        %v7835 = vpop.f32.mrb[0].mxu0
        %v7836 = vadd.f32 0.0, %v7835
        %v7837 = vpop.f32.mrb[0].mxu0
        %v7838 = vpop.f32.mrb[0].mxu0
        %v7839 = vadd.f32 0.0, %v7838
        %v7840 = vpop.f32.mrb[0].mxu0
        %7841 = vmatprep.mubr.bf16.mxu0 0
        %7842 = vmatmul.mubr.bf16.gmra.mrb[0].mxu0 %v7707
        %v7843 = vpop.f32.mrb[0].mxu0
        %v7844 = vadd.f32 0.0, %v7843
        %v7845 = vpop.f32.mrb[0].mxu0
        %v7846 = vpop.f32.mrb[0].mxu0
        %v7847 = vadd.f32 0.0, %v7846
        %v7848 = vpop.f32.mrb[0].mxu0
        %7849 = vmatprep.mubr.bf16.mxu0 0
        %7850 = vmatmul.mubr.bf16.gmra.mrb[0].mxu0 %v7708
        %v7851 = vpop.f32.mrb[0].mxu0
        %v7852 = vadd.f32 0.0, %v7851
        %v7853 = vpop.f32.mrb[0].mxu0
        %v7854 = vpop.f32.mrb[0].mxu0
        %v7855 = vadd.f32 0.0, %v7854
        %v7856 = vpop.f32.mrb[0].mxu0
        %7857 = vmatprep.mubr.bf16.mxu0 0
        %7858 = vmatmul.mubr.bf16.gmra.mrb[0].mxu0 %v7709
        %v7859 = vpop.f32.mrb[0].mxu0
        %v7860 = vadd.f32 0.0, %v7859
        %v7861 = vpop.f32.mrb[0].mxu0
        %v7862 = vpop.f32.mrb[0].mxu0
        %v7863 = vadd.f32 0.0, %v7862
        %v7864 = vpop.f32.mrb[0].mxu0
        %7865 = vmatprep.mubr.bf16.mxu0 0
        %7866 = vmatmul.mubr.bf16.gmra.mrb[0].mxu0 %v7710
        %v7867 = vpop.f32.mrb[0].mxu0
        %v7868 = vadd.f32 0.0, %v7867
        %v7869 = vpop.f32.mrb[0].mxu0
        %v7870 = vpop.f32.mrb[0].mxu0
        %v7871 = vadd.f32 0.0, %v7870
        %v7872 = vpop.f32.mrb[0].mxu0
        %7873 = vmatprep.mubr.bf16.mxu0 0
        %7874 = vmatmul.mubr.bf16.gmra.mrb[0].mxu0 %v7711
        %v7875 = vpop.f32.mrb[0].mxu0
        %v7876 = vadd.f32 0.0, %v7875
        %v7877 = vpop.f32.mrb[0].mxu0
        %v7878 = vpop.f32.mrb[0].mxu0
        %v7879 = vadd.f32 0.0, %v7878
        %v7880 = vpop.f32.mrb[0].mxu0
        %7881 = vmatprep.mubr.bf16.mxu0 0
        %7882 = vmatmul.mubr.bf16.gmra.mrb[0].mxu0 %v7712
        %v7883 = vpop.f32.mrb[0].mxu0
        %v7884 = vadd.f32 0.0, %v7883
        %v7885 = vpop.f32.mrb[0].mxu0
        %v7886 = vpop.f32.mrb[0].mxu0
        %v7887 = vadd.f32 0.0, %v7886
        %v7888 = vpop.f32.mrb[0].mxu0
        %7889 = vmatprep.mubr.bf16.mxu0 0
        %7890 = vmatmul.mubr.bf16.gmra.mrb[0].mxu0 %v7713
        %v7891 = vpop.f32.mrb[0].mxu0
        %v7892 = vadd.f32 0.0, %v7891
        %v7893 = vpop.f32.mrb[0].mxu0
        %v7894 = vpop.f32.mrb[0].mxu0
        %v7895 = vadd.f32 0.0, %v7894
        %v7896 = vpop.f32.mrb[0].mxu0
        %7897 = vmatprep.mubr.bf16.mxu0 0
        %7898 = vmatmul.mubr.bf16.gmra.mrb[0].mxu0 %v7714
        %v7899 = vpop.f32.mrb[0].mxu0
        %v7900 = vadd.f32 0.0, %v7899
        %v7901 = vpop.f32.mrb[0].mxu0
        %v7902 = vpop.f32.mrb[0].mxu0
        %v7903 = vadd.f32 0.0, %v7902
        %v7904 = vpop.f32.mrb[0].mxu0
        %7905 = vmatprep.mubr.bf16.mxu0 0
        %7906 = vmatmul.mubr.bf16.gmra.mrb[0].mxu0 %v7715
        %v7907 = vpop.f32.mrb[0].mxu0
        %v7908 = vadd.f32 0.0, %v7907
        %v7909 = vpop.f32.mrb[0].mxu0
        %v7910 = vpop.f32.mrb[0].mxu0
        %v7911 = vadd.f32 0.0, %v7910
        %v7912 = vpop.f32.mrb[0].mxu0
        %7913 = vmatprep.mubr.bf16.mxu0 0
        %7914 = vmatmul.mubr.bf16.gmra.mrb[0].mxu0 %v7716
        %v7915 = vpop.f32.mrb[0].mxu0
        %v7916 = vadd.f32 0.0, %v7915
        %v7917 = vpop.f32.mrb[0].mxu0
        %v7918 = vpop.f32.mrb[0].mxu0
        %v7919 = vadd.f32 0.0, %v7918
        %v7920 = vpop.f32.mrb[0].mxu0
        %7921 = vmatprep.mubr.bf16.mxu0 0
        %7922 = vmatmul.mubr.bf16.gmra.mrb[0].mxu0 %v7717
        %v7923 = vpop.f32.mrb[0].mxu0
        %v7924 = vadd.f32 0.0, %v7923
        %v7925 = vpop.f32.mrb[0].mxu0
        %v7926 = vpop.f32.mrb[0].mxu0
        %v7927 = vadd.f32 0.0, %v7926
        %v7928 = vpop.f32.mrb[0].mxu0
        %7929 = vmatprep.mubr.bf16.mxu0 0
        %7930 = vmatmul.mubr.bf16.gmra.mrb[0].mxu0 %v7718
        %v7931 = vpop.f32.mrb[0].mxu0
        %v7932 = vadd.f32 0.0, %v7931
        %v7933 = vpop.f32.mrb[0].mxu0
        %v7934 = vpop.f32.mrb[0].mxu0
        %v7935 = vadd.f32 0.0, %v7934
        %v7936 = vpop.f32.mrb[0].mxu0
        %7937 = vmatprep.mubr.bf16.mxu0 0
        %7938 = vmatmul.mubr.bf16.gmra.mrb[0].mxu0 %v7719
        %v7939 = vpop.f32.mrb[0].mxu0
        %v7940 = vadd.f32 0.0, %v7939
        %v7941 = vpop.f32.mrb[0].mxu0
        %v7942 = vpop.f32.mrb[0].mxu0
        %v7943 = vadd.f32 0.0, %v7942
        %v7944 = vpop.f32.mrb[0].mxu0
        %7945 = vdwg.mxu0
        %v7946 = vadd.f32 %v7640, %v7820
        %v7947 = vadd.f32 %v7641, %v7823
        %v7948 = vadd.f32 %v7642, %v7828
        %v7949 = vadd.f32 %v7643, %v7831
        %v7950 = vadd.f32 %v7644, %v7836
        %v7951 = vadd.f32 %v7645, %v7839
        %v7952 = vadd.f32 %v7646, %v7844
        %v7953 = vadd.f32 %v7647, %v7847
        %v7954 = vadd.f32 %v7648, %v7852
        %v7955 = vadd.f32 %v7649, %v7855
        %v7956 = vadd.f32 %v7650, %v7860
        %v7957 = vadd.f32 %v7651, %v7863
        %v7958 = vadd.f32 %v7652, %v7868
        %v7959 = vadd.f32 %v7653, %v7871
        %v7960 = vadd.f32 %v7654, %v7876
        %v7961 = vadd.f32 %v7655, %v7879
        %v7962 = vadd.f32 %v7656, %v7884
        %v7963 = vadd.f32 %v7657, %v7887
        %v7964 = vadd.f32 %v7658, %v7892
        %v7965 = vadd.f32 %v7659, %v7895
        %v7966 = vadd.f32 %v7660, %v7900
        %v7967 = vadd.f32 %v7661, %v7903
        %v7968 = vadd.f32 %v7662, %v7908
        %v7969 = vadd.f32 %v7663, %v7911
        %v7970 = vadd.f32 %v7664, %v7916
        %v7971 = vadd.f32 %v7665, %v7919
        %v7972 = vadd.f32 %v7666, %v7924
        %v7973 = vadd.f32 %v7667, %v7927
        %v7974 = vadd.f32 %v7668, %v7932
        %v7975 = vadd.f32 %v7669, %v7935
        %v7976 = vadd.f32 %v7670, %v7940
        %v7977 = vadd.f32 %v7671, %v7943
        %v7978 = vld [vmem:[%s2327 + $0x7] sm:$0xff]
        %v7979 = vld [vmem:[%s2327 + $0xf] sm:$0xff]
        %v7980 = vld [vmem:[%s2327 + $0x27] sm:$0xff]
        %v7981 = vld [vmem:[%s2327 + $0x2f] sm:$0xff]
        %v7982 = vld [vmem:[%s2327 + $0x47] sm:$0xff]
        %v7983 = vld [vmem:[%s2327 + $0x4f] sm:$0xff]
        %v7984 = vld [vmem:[%s2327 + $0x67] sm:$0xff]
        %v7985 = vld [vmem:[%s2327 + $0x6f] sm:$0xff]
        %v7986 = vld [vmem:[%s2327 + $0x87] sm:$0xff]
        %v7987 = vld [vmem:[%s2327 + $0x8f] sm:$0xff]
        %v7988 = vld [vmem:[%s2327 + $0xa7] sm:$0xff]
        %v7989 = vld [vmem:[%s2327 + $0xaf] sm:$0xff]
        %v7990 = vld [vmem:[%s2327 + $0xc7] sm:$0xff]
        %v7991 = vld [vmem:[%s2327 + $0xcf] sm:$0xff]
        %v7992 = vld [vmem:[%s2327 + $0xe7] sm:$0xff]
        %v7993 = vld [vmem:[%s2327 + $0xef] sm:$0xff]
        %v7994 = vld [vmem:[%s2327 + $0x107] sm:$0xff]
        %v7995 = vld [vmem:[%s2327 + $0x10f] sm:$0xff]
        %v7996 = vld [vmem:[%s2327 + $0x127] sm:$0xff]
        %v7997 = vld [vmem:[%s2327 + $0x12f] sm:$0xff]
        %v7998 = vld [vmem:[%s2327 + $0x147] sm:$0xff]
        %v7999 = vld [vmem:[%s2327 + $0x14f] sm:$0xff]
        %v8000 = vld [vmem:[%s2327 + $0x167] sm:$0xff]
        %v8001 = vld [vmem:[%s2327 + $0x16f] sm:$0xff]
        %v8002 = vld [vmem:[%s2327 + $0x187] sm:$0xff]
        %v8003 = vld [vmem:[%s2327 + $0x18f] sm:$0xff]
        %v8004 = vld [vmem:[%s2327 + $0x1a7] sm:$0xff]
        %v8005 = vld [vmem:[%s2327 + $0x1af] sm:$0xff]
        %v8006 = vld [vmem:[%s2327 + $0x1c7] sm:$0xff]
        %v8007 = vld [vmem:[%s2327 + $0x1cf] sm:$0xff]
        %v8008 = vld [vmem:[%s2327 + $0x1e7] sm:$0xff]
        %v8009 = vld [vmem:[%s2327 + $0x1ef] sm:$0xff]
        %v8010 = vpack.c.bf16 %v7979, %v7978
        %v8011 = vpack.c.bf16 %v7981, %v7980
        %v8012 = vpack.c.bf16 %v7983, %v7982
        %v8013 = vpack.c.bf16 %v7985, %v7984
        %v8014 = vpack.c.bf16 %v7987, %v7986
        %v8015 = vpack.c.bf16 %v7989, %v7988
        %v8016 = vpack.c.bf16 %v7991, %v7990
        %v8017 = vpack.c.bf16 %v7993, %v7992
        %v8018 = vpack.c.bf16 %v7995, %v7994
        %v8019 = vpack.c.bf16 %v7997, %v7996
        %v8020 = vpack.c.bf16 %v7999, %v7998
        %v8021 = vpack.c.bf16 %v8001, %v8000
        %v8022 = vpack.c.bf16 %v8003, %v8002
        %v8023 = vpack.c.bf16 %v8005, %v8004
        %v8024 = vpack.c.bf16 %v8007, %v8006
        %v8025 = vpack.c.bf16 %v8009, %v8008
        %s8026 = scalar_lea.vmem [#allocation3], 384
        %v8027 = vld [vmem:[%s8026] sm:$0xf]
        %v8028 = vld [vmem:[%s8026 + $0x4] sm:$0xf]
        %v8029 = vld [vmem:[%s8026 + $0x8] sm:$0xf]
        %v8030 = vld [vmem:[%s8026 + $0xc] sm:$0xf]
        %v8031 = vld [vmem:[%s8026 + $0x10] sm:$0xf]
        %v8032 = vld [vmem:[%s8026 + $0x14] sm:$0xf]
        %v8033 = vld [vmem:[%s8026 + $0x18] sm:$0xf]
        %v8034 = vld [vmem:[%s8026 + $0x1c] sm:$0xf]
        %v8035 = vld [vmem:[%s8026 + $0x20] sm:$0xf]
        %v8036 = vld [vmem:[%s8026 + $0x24] sm:$0xf]
        %v8037 = vld [vmem:[%s8026 + $0x28] sm:$0xf]
        %v8038 = vld [vmem:[%s8026 + $0x2c] sm:$0xf]
        %v8039 = vld [vmem:[%s8026 + $0x30] sm:$0xf]
        %v8040 = vld [vmem:[%s8026 + $0x34] sm:$0xf]
        %v8041 = vld [vmem:[%s8026 + $0x38] sm:$0xf]
        %v8042 = vld [vmem:[%s8026 + $0x3c] sm:$0xf]
        %v8059 = vunpack.c.l.b16 %v8027
        %v8060 = vunpack.c.l.b16 %v8028
        %v8061 = vunpack.c.l.b16 %v8029
        %v8062 = vunpack.c.l.b16 %v8030
        %v8063 = vunpack.c.l.b16 %v8031
        %v8064 = vunpack.c.l.b16 %v8032
        %v8065 = vunpack.c.l.b16 %v8033
        %v8066 = vunpack.c.l.b16 %v8034
        %v8067 = vunpack.c.l.b16 %v8035
        %v8068 = vunpack.c.l.b16 %v8036
        %v8069 = vunpack.c.l.b16 %v8037
        %v8070 = vunpack.c.l.b16 %v8038
        %v8071 = vunpack.c.l.b16 %v8039
        %v8072 = vunpack.c.l.b16 %v8040
        %v8073 = vunpack.c.l.b16 %v8041
        %v8074 = vunpack.c.l.b16 %v8042
        %v8075 = vpack.c.b16 %v8060, %v8059
        %v8076 = vpack.c.b16 %v8062, %v8061
        %v8077 = vpack.c.b16 %v8064, %v8063
        %v8078 = vpack.c.b16 %v8066, %v8065
        %v8079 = vpack.c.b16 %v8068, %v8067
        %v8080 = vpack.c.b16 %v8070, %v8069
        %v8081 = vpack.c.b16 %v8072, %v8071
        %v8082 = vpack.c.b16 %v8074, %v8073
        %8091 = vmatprep.subr.bf16.mxu0 0
        %8092 = vmatpush1.bf16.msra.mxu0 %v8075
        %8093 = vmatprep.subr.bf16.mxu0 0
        %8094 = vmatpush1.bf16.msra.mxu0 %v8076
        %8095 = vmatprep.subr.bf16.mxu0 0
        %8096 = vmatpush1.bf16.msra.mxu0 %v8077
        %8097 = vmatprep.subr.bf16.mxu0 0
        %8098 = vmatpush1.bf16.msra.mxu0 %v8078
        %8099 = vmatprep.subr.bf16.mxu0 0
        %8100 = vmatpush1.bf16.msra.mxu0 %v8079
        %8101 = vmatprep.subr.bf16.mxu0 0
        %8102 = vmatpush1.bf16.msra.mxu0 %v8080
        %8103 = vmatprep.subr.bf16.mxu0 0
        %8104 = vmatpush1.bf16.msra.mxu0 %v8081
        %8105 = vmatprep.subr.bf16.mxu0 0
        %8106 = vmatpush1.bf16.msra.mxu0 %v8082
        %8107 = vmatprep.subr.bf16.mxu0 0
        %8108 = vmatpush1.bf16.msra.mxu0 0
        %8109 = vmatprep.subr.bf16.mxu0 0
        %8110 = vmatpush1.bf16.msra.mxu0 0
        %8111 = vmatprep.subr.bf16.mxu0 0
        %8112 = vmatpush1.bf16.msra.mxu0 0
        %8113 = vmatprep.subr.bf16.mxu0 0
        %8114 = vmatpush1.bf16.msra.mxu0 0
        %8115 = vmatprep.subr.bf16.mxu0 0
        %8116 = vmatpush1.bf16.msra.mxu0 0
        %8117 = vmatprep.subr.bf16.mxu0 0
        %8118 = vmatpush1.bf16.msra.mxu0 0
        %8119 = vmatprep.subr.bf16.mxu0 0
        %8120 = vmatpush1.bf16.msra.mxu0 0
        %8121 = vmatprep.subr.bf16.mxu0 0
        %8122 = vmatpush1.bf16.msra.mxu0 0
        %8123 = vmatprep.mubr.bf16.mxu0 0
        %8124 = vmatmul.mubr.bf16.gmra.mrb[0].mxu0 %v8010
        %v8125 = vpop.f32.mrb[0].mxu0
        %v8126 = vadd.f32 0.0, %v8125
        %v8127 = vpop.f32.mrb[0].mxu0
        %v8128 = vpop.f32.mrb[0].mxu0
        %v8129 = vadd.f32 0.0, %v8128
        %v8130 = vpop.f32.mrb[0].mxu0
        %8131 = vmatprep.mubr.bf16.mxu0 0
        %8132 = vmatmul.mubr.bf16.gmra.mrb[0].mxu0 %v8011
        %v8133 = vpop.f32.mrb[0].mxu0
        %v8134 = vadd.f32 0.0, %v8133
        %v8135 = vpop.f32.mrb[0].mxu0
        %v8136 = vpop.f32.mrb[0].mxu0
        %v8137 = vadd.f32 0.0, %v8136
        %v8138 = vpop.f32.mrb[0].mxu0
        %8139 = vmatprep.mubr.bf16.mxu0 0
        %8140 = vmatmul.mubr.bf16.gmra.mrb[0].mxu0 %v8012
        %v8141 = vpop.f32.mrb[0].mxu0
        %v8142 = vadd.f32 0.0, %v8141
        %v8143 = vpop.f32.mrb[0].mxu0
        %v8144 = vpop.f32.mrb[0].mxu0
        %v8145 = vadd.f32 0.0, %v8144
        %v8146 = vpop.f32.mrb[0].mxu0
        %8147 = vmatprep.mubr.bf16.mxu0 0
        %8148 = vmatmul.mubr.bf16.gmra.mrb[0].mxu0 %v8013
        %v8149 = vpop.f32.mrb[0].mxu0
        %v8150 = vadd.f32 0.0, %v8149
        %v8151 = vpop.f32.mrb[0].mxu0
        %v8152 = vpop.f32.mrb[0].mxu0
        %v8153 = vadd.f32 0.0, %v8152
        %v8154 = vpop.f32.mrb[0].mxu0
        %8155 = vmatprep.mubr.bf16.mxu0 0
        %8156 = vmatmul.mubr.bf16.gmra.mrb[0].mxu0 %v8014
        %v8157 = vpop.f32.mrb[0].mxu0
        %v8158 = vadd.f32 0.0, %v8157
        %v8159 = vpop.f32.mrb[0].mxu0
        %v8160 = vpop.f32.mrb[0].mxu0
        %v8161 = vadd.f32 0.0, %v8160
        %v8162 = vpop.f32.mrb[0].mxu0
        %8163 = vmatprep.mubr.bf16.mxu0 0
        %8164 = vmatmul.mubr.bf16.gmra.mrb[0].mxu0 %v8015
        %v8165 = vpop.f32.mrb[0].mxu0
        %v8166 = vadd.f32 0.0, %v8165
        %v8167 = vpop.f32.mrb[0].mxu0
        %v8168 = vpop.f32.mrb[0].mxu0
        %v8169 = vadd.f32 0.0, %v8168
        %v8170 = vpop.f32.mrb[0].mxu0
        %8171 = vmatprep.mubr.bf16.mxu0 0
        %8172 = vmatmul.mubr.bf16.gmra.mrb[0].mxu0 %v8016
        %v8173 = vpop.f32.mrb[0].mxu0
        %v8174 = vadd.f32 0.0, %v8173
        %v8175 = vpop.f32.mrb[0].mxu0
        %v8176 = vpop.f32.mrb[0].mxu0
        %v8177 = vadd.f32 0.0, %v8176
        %v8178 = vpop.f32.mrb[0].mxu0
        %8179 = vmatprep.mubr.bf16.mxu0 0
        %8180 = vmatmul.mubr.bf16.gmra.mrb[0].mxu0 %v8017
        %v8181 = vpop.f32.mrb[0].mxu0
        %v8182 = vadd.f32 0.0, %v8181
        %v8183 = vpop.f32.mrb[0].mxu0
        %v8184 = vpop.f32.mrb[0].mxu0
        %v8185 = vadd.f32 0.0, %v8184
        %v8186 = vpop.f32.mrb[0].mxu0
        %8187 = vmatprep.mubr.bf16.mxu0 0
        %8188 = vmatmul.mubr.bf16.gmra.mrb[0].mxu0 %v8018
        %v8189 = vpop.f32.mrb[0].mxu0
        %v8190 = vadd.f32 0.0, %v8189
        %v8191 = vpop.f32.mrb[0].mxu0
        %v8192 = vpop.f32.mrb[0].mxu0
        %v8193 = vadd.f32 0.0, %v8192
        %v8194 = vpop.f32.mrb[0].mxu0
        %8195 = vmatprep.mubr.bf16.mxu0 0
        %8196 = vmatmul.mubr.bf16.gmra.mrb[0].mxu0 %v8019
        %v8197 = vpop.f32.mrb[0].mxu0
        %v8198 = vadd.f32 0.0, %v8197
        %v8199 = vpop.f32.mrb[0].mxu0
        %v8200 = vpop.f32.mrb[0].mxu0
        %v8201 = vadd.f32 0.0, %v8200
        %v8202 = vpop.f32.mrb[0].mxu0
        %8203 = vmatprep.mubr.bf16.mxu0 0
        %8204 = vmatmul.mubr.bf16.gmra.mrb[0].mxu0 %v8020
        %v8205 = vpop.f32.mrb[0].mxu0
        %v8206 = vadd.f32 0.0, %v8205
        %v8207 = vpop.f32.mrb[0].mxu0
        %v8208 = vpop.f32.mrb[0].mxu0
        %v8209 = vadd.f32 0.0, %v8208
        %v8210 = vpop.f32.mrb[0].mxu0
        %8211 = vmatprep.mubr.bf16.mxu0 0
        %8212 = vmatmul.mubr.bf16.gmra.mrb[0].mxu0 %v8021
        %v8213 = vpop.f32.mrb[0].mxu0
        %v8214 = vadd.f32 0.0, %v8213
        %v8215 = vpop.f32.mrb[0].mxu0
        %v8216 = vpop.f32.mrb[0].mxu0
        %v8217 = vadd.f32 0.0, %v8216
        %v8218 = vpop.f32.mrb[0].mxu0
        %8219 = vmatprep.mubr.bf16.mxu0 0
        %8220 = vmatmul.mubr.bf16.gmra.mrb[0].mxu0 %v8022
        %v8221 = vpop.f32.mrb[0].mxu0
        %v8222 = vadd.f32 0.0, %v8221
        %v8223 = vpop.f32.mrb[0].mxu0
        %v8224 = vpop.f32.mrb[0].mxu0
        %v8225 = vadd.f32 0.0, %v8224
        %v8226 = vpop.f32.mrb[0].mxu0
        %8227 = vmatprep.mubr.bf16.mxu0 0
        %8228 = vmatmul.mubr.bf16.gmra.mrb[0].mxu0 %v8023
        %v8229 = vpop.f32.mrb[0].mxu0
        %v8230 = vadd.f32 0.0, %v8229
        %v8231 = vpop.f32.mrb[0].mxu0
        %v8232 = vpop.f32.mrb[0].mxu0
        %v8233 = vadd.f32 0.0, %v8232
        %v8234 = vpop.f32.mrb[0].mxu0
        %8235 = vmatprep.mubr.bf16.mxu0 0
        %8236 = vmatmul.mubr.bf16.gmra.mrb[0].mxu0 %v8024
        %v8237 = vpop.f32.mrb[0].mxu0
        %v8238 = vadd.f32 0.0, %v8237
        %v8239 = vpop.f32.mrb[0].mxu0
        %v8240 = vpop.f32.mrb[0].mxu0
        %v8241 = vadd.f32 0.0, %v8240
        %v8242 = vpop.f32.mrb[0].mxu0
        %8243 = vmatprep.mubr.bf16.mxu0 0
        %8244 = vmatmul.mubr.bf16.gmra.mrb[0].mxu0 %v8025
        %v8245 = vpop.f32.mrb[0].mxu0
        %v8246 = vadd.f32 0.0, %v8245
        %v8247 = vpop.f32.mrb[0].mxu0
        %v8248 = vpop.f32.mrb[0].mxu0
        %v8249 = vadd.f32 0.0, %v8248
        %v8250 = vpop.f32.mrb[0].mxu0
        %8251 = vdwg.mxu0
        %v8252 = vadd.f32 %v7946, %v8126
        %v8253 = vadd.f32 %v7947, %v8129
        %v8254 = vadd.f32 %v7948, %v8134
        %v8255 = vadd.f32 %v7949, %v8137
        %v8256 = vadd.f32 %v7950, %v8142
        %v8257 = vadd.f32 %v7951, %v8145
        %v8258 = vadd.f32 %v7952, %v8150
        %v8259 = vadd.f32 %v7953, %v8153
        %v8260 = vadd.f32 %v7954, %v8158
        %v8261 = vadd.f32 %v7955, %v8161
        %v8262 = vadd.f32 %v7956, %v8166
        %v8263 = vadd.f32 %v7957, %v8169
        %v8264 = vadd.f32 %v7958, %v8174
        %v8265 = vadd.f32 %v7959, %v8177
        %v8266 = vadd.f32 %v7960, %v8182
        %v8267 = vadd.f32 %v7961, %v8185
        %v8268 = vadd.f32 %v7962, %v8190
        %v8269 = vadd.f32 %v7963, %v8193
        %v8270 = vadd.f32 %v7964, %v8198
        %v8271 = vadd.f32 %v7965, %v8201
        %v8272 = vadd.f32 %v7966, %v8206
        %v8273 = vadd.f32 %v7967, %v8209
        %v8274 = vadd.f32 %v7968, %v8214
        %v8275 = vadd.f32 %v7969, %v8217
        %v8276 = vadd.f32 %v7970, %v8222
        %v8277 = vadd.f32 %v7971, %v8225
        %v8278 = vadd.f32 %v7972, %v8230
        %v8279 = vadd.f32 %v7973, %v8233
        %v8280 = vadd.f32 %v7974, %v8238
        %v8281 = vadd.f32 %v7975, %v8241
        %v8282 = vadd.f32 %v7976, %v8246
        %v8283 = vadd.f32 %v7977, %v8249
        %v8284 = vld [vmem:[%s2327 + $0x8] sm:$0xff]
        %v8285 = vld [vmem:[%s2327 + $0x10] sm:$0xff]
        %v8286 = vld [vmem:[%s2327 + $0x28] sm:$0xff]
        %v8287 = vld [vmem:[%s2327 + $0x30] sm:$0xff]
        %v8288 = vld [vmem:[%s2327 + $0x48] sm:$0xff]
        %v8289 = vld [vmem:[%s2327 + $0x50] sm:$0xff]
        %v8290 = vld [vmem:[%s2327 + $0x68] sm:$0xff]
        %v8291 = vld [vmem:[%s2327 + $0x70] sm:$0xff]
        %v8292 = vld [vmem:[%s2327 + $0x88] sm:$0xff]
        %v8293 = vld [vmem:[%s2327 + $0x90] sm:$0xff]
        %v8294 = vld [vmem:[%s2327 + $0xa8] sm:$0xff]
        %v8295 = vld [vmem:[%s2327 + $0xb0] sm:$0xff]
        %v8296 = vld [vmem:[%s2327 + $0xc8] sm:$0xff]
        %v8297 = vld [vmem:[%s2327 + $0xd0] sm:$0xff]
        %v8298 = vld [vmem:[%s2327 + $0xe8] sm:$0xff]
        %v8299 = vld [vmem:[%s2327 + $0xf0] sm:$0xff]
        %v8300 = vld [vmem:[%s2327 + $0x108] sm:$0xff]
        %v8301 = vld [vmem:[%s2327 + $0x110] sm:$0xff]
        %v8302 = vld [vmem:[%s2327 + $0x128] sm:$0xff]
        %v8303 = vld [vmem:[%s2327 + $0x130] sm:$0xff]
        %v8304 = vld [vmem:[%s2327 + $0x148] sm:$0xff]
        %v8305 = vld [vmem:[%s2327 + $0x150] sm:$0xff]
        %v8306 = vld [vmem:[%s2327 + $0x168] sm:$0xff]
        %v8307 = vld [vmem:[%s2327 + $0x170] sm:$0xff]
        %v8308 = vld [vmem:[%s2327 + $0x188] sm:$0xff]
        %v8309 = vld [vmem:[%s2327 + $0x190] sm:$0xff]
        %v8310 = vld [vmem:[%s2327 + $0x1a8] sm:$0xff]
        %v8311 = vld [vmem:[%s2327 + $0x1b0] sm:$0xff]
        %v8312 = vld [vmem:[%s2327 + $0x1c8] sm:$0xff]
        %v8313 = vld [vmem:[%s2327 + $0x1d0] sm:$0xff]
        %v8314 = vld [vmem:[%s2327 + $0x1e8] sm:$0xff]
        %v8315 = vld [vmem:[%s2327 + $0x1f0] sm:$0xff]
        %v8316 = vpack.c.bf16 %v8285, %v8284
        %v8317 = vpack.c.bf16 %v8287, %v8286
        %v8318 = vpack.c.bf16 %v8289, %v8288
        %v8319 = vpack.c.bf16 %v8291, %v8290
        %v8320 = vpack.c.bf16 %v8293, %v8292
        %v8321 = vpack.c.bf16 %v8295, %v8294
        %v8322 = vpack.c.bf16 %v8297, %v8296
        %v8323 = vpack.c.bf16 %v8299, %v8298
        %v8324 = vpack.c.bf16 %v8301, %v8300
        %v8325 = vpack.c.bf16 %v8303, %v8302
        %v8326 = vpack.c.bf16 %v8305, %v8304
        %v8327 = vpack.c.bf16 %v8307, %v8306
        %v8328 = vpack.c.bf16 %v8309, %v8308
        %v8329 = vpack.c.bf16 %v8311, %v8310
        %v8330 = vpack.c.bf16 %v8313, %v8312
        %v8331 = vpack.c.bf16 %v8315, %v8314
        %s8332 = scalar_lea.vmem [#allocation3], 448
        %v8333 = vld [vmem:[%s8332] sm:$0xf]
        %v8334 = vld [vmem:[%s8332 + $0x4] sm:$0xf]
        %v8335 = vld [vmem:[%s8332 + $0x8] sm:$0xf]
        %v8336 = vld [vmem:[%s8332 + $0xc] sm:$0xf]
        %v8337 = vld [vmem:[%s8332 + $0x10] sm:$0xf]
        %v8338 = vld [vmem:[%s8332 + $0x14] sm:$0xf]
        %v8339 = vld [vmem:[%s8332 + $0x18] sm:$0xf]
        %v8340 = vld [vmem:[%s8332 + $0x1c] sm:$0xf]
        %v8341 = vld [vmem:[%s8332 + $0x20] sm:$0xf]
        %v8342 = vld [vmem:[%s8332 + $0x24] sm:$0xf]
        %v8343 = vld [vmem:[%s8332 + $0x28] sm:$0xf]
        %v8344 = vld [vmem:[%s8332 + $0x2c] sm:$0xf]
        %v8345 = vld [vmem:[%s8332 + $0x30] sm:$0xf]
        %v8346 = vld [vmem:[%s8332 + $0x34] sm:$0xf]
        %v8347 = vld [vmem:[%s8332 + $0x38] sm:$0xf]
        %v8348 = vld [vmem:[%s8332 + $0x3c] sm:$0xf]
        %v8365 = vunpack.c.l.b16 %v8333
        %v8366 = vunpack.c.l.b16 %v8334
        %v8367 = vunpack.c.l.b16 %v8335
        %v8368 = vunpack.c.l.b16 %v8336
        %v8369 = vunpack.c.l.b16 %v8337
        %v8370 = vunpack.c.l.b16 %v8338
        %v8371 = vunpack.c.l.b16 %v8339
        %v8372 = vunpack.c.l.b16 %v8340
        %v8373 = vunpack.c.l.b16 %v8341
        %v8374 = vunpack.c.l.b16 %v8342
        %v8375 = vunpack.c.l.b16 %v8343
        %v8376 = vunpack.c.l.b16 %v8344
        %v8377 = vunpack.c.l.b16 %v8345
        %v8378 = vunpack.c.l.b16 %v8346
        %v8379 = vunpack.c.l.b16 %v8347
        %v8380 = vunpack.c.l.b16 %v8348
        %v8381 = vpack.c.b16 %v8366, %v8365
        %v8382 = vpack.c.b16 %v8368, %v8367
        %v8383 = vpack.c.b16 %v8370, %v8369
        %v8384 = vpack.c.b16 %v8372, %v8371
        %v8385 = vpack.c.b16 %v8374, %v8373
        %v8386 = vpack.c.b16 %v8376, %v8375
        %v8387 = vpack.c.b16 %v8378, %v8377
        %v8388 = vpack.c.b16 %v8380, %v8379
        %8397 = vmatprep.subr.bf16.mxu0 0
        %8398 = vmatpush1.bf16.msra.mxu0 %v8381
        %8399 = vmatprep.subr.bf16.mxu0 0
        %8400 = vmatpush1.bf16.msra.mxu0 %v8382
        %8401 = vmatprep.subr.bf16.mxu0 0
        %8402 = vmatpush1.bf16.msra.mxu0 %v8383
        %8403 = vmatprep.subr.bf16.mxu0 0
        %8404 = vmatpush1.bf16.msra.mxu0 %v8384
        %8405 = vmatprep.subr.bf16.mxu0 0
        %8406 = vmatpush1.bf16.msra.mxu0 %v8385
        %8407 = vmatprep.subr.bf16.mxu0 0
        %8408 = vmatpush1.bf16.msra.mxu0 %v8386
        %8409 = vmatprep.subr.bf16.mxu0 0
        %8410 = vmatpush1.bf16.msra.mxu0 %v8387
        %8411 = vmatprep.subr.bf16.mxu0 0
        %8412 = vmatpush1.bf16.msra.mxu0 %v8388
        %8413 = vmatprep.subr.bf16.mxu0 0
        %8414 = vmatpush1.bf16.msra.mxu0 0
        %8415 = vmatprep.subr.bf16.mxu0 0
        %8416 = vmatpush1.bf16.msra.mxu0 0
        %8417 = vmatprep.subr.bf16.mxu0 0
        %8418 = vmatpush1.bf16.msra.mxu0 0
        %8419 = vmatprep.subr.bf16.mxu0 0
        %8420 = vmatpush1.bf16.msra.mxu0 0
        %8421 = vmatprep.subr.bf16.mxu0 0
        %8422 = vmatpush1.bf16.msra.mxu0 0
        %8423 = vmatprep.subr.bf16.mxu0 0
        %8424 = vmatpush1.bf16.msra.mxu0 0
        %8425 = vmatprep.subr.bf16.mxu0 0
        %8426 = vmatpush1.bf16.msra.mxu0 0
        %8427 = vmatprep.subr.bf16.mxu0 0
        %8428 = vmatpush1.bf16.msra.mxu0 0
        %8429 = vmatprep.mubr.bf16.mxu0 0
        %8430 = vmatmul.mubr.bf16.gmra.mrb[0].mxu0 %v8316
        %v8431 = vpop.f32.mrb[0].mxu0
        %v8432 = vadd.f32 0.0, %v8431
        %v8433 = vpop.f32.mrb[0].mxu0
        %v8434 = vpop.f32.mrb[0].mxu0
        %v8435 = vadd.f32 0.0, %v8434
        %v8436 = vpop.f32.mrb[0].mxu0
        %8437 = vmatprep.mubr.bf16.mxu0 0
        %8438 = vmatmul.mubr.bf16.gmra.mrb[0].mxu0 %v8317
        %v8439 = vpop.f32.mrb[0].mxu0
        %v8440 = vadd.f32 0.0, %v8439
        %v8441 = vpop.f32.mrb[0].mxu0
        %v8442 = vpop.f32.mrb[0].mxu0
        %v8443 = vadd.f32 0.0, %v8442
        %v8444 = vpop.f32.mrb[0].mxu0
        %8445 = vmatprep.mubr.bf16.mxu0 0
        %8446 = vmatmul.mubr.bf16.gmra.mrb[0].mxu0 %v8318
        %v8447 = vpop.f32.mrb[0].mxu0
        %v8448 = vadd.f32 0.0, %v8447
        %v8449 = vpop.f32.mrb[0].mxu0
        %v8450 = vpop.f32.mrb[0].mxu0
        %v8451 = vadd.f32 0.0, %v8450
        %v8452 = vpop.f32.mrb[0].mxu0
        %8453 = vmatprep.mubr.bf16.mxu0 0
        %8454 = vmatmul.mubr.bf16.gmra.mrb[0].mxu0 %v8319
        %v8455 = vpop.f32.mrb[0].mxu0
        %v8456 = vadd.f32 0.0, %v8455
        %v8457 = vpop.f32.mrb[0].mxu0
        %v8458 = vpop.f32.mrb[0].mxu0
        %v8459 = vadd.f32 0.0, %v8458
        %v8460 = vpop.f32.mrb[0].mxu0
        %8461 = vmatprep.mubr.bf16.mxu0 0
        %8462 = vmatmul.mubr.bf16.gmra.mrb[0].mxu0 %v8320
        %v8463 = vpop.f32.mrb[0].mxu0
        %v8464 = vadd.f32 0.0, %v8463
        %v8465 = vpop.f32.mrb[0].mxu0
        %v8466 = vpop.f32.mrb[0].mxu0
        %v8467 = vadd.f32 0.0, %v8466
        %v8468 = vpop.f32.mrb[0].mxu0
        %8469 = vmatprep.mubr.bf16.mxu0 0
        %8470 = vmatmul.mubr.bf16.gmra.mrb[0].mxu0 %v8321
        %v8471 = vpop.f32.mrb[0].mxu0
        %v8472 = vadd.f32 0.0, %v8471
        %v8473 = vpop.f32.mrb[0].mxu0
        %v8474 = vpop.f32.mrb[0].mxu0
        %v8475 = vadd.f32 0.0, %v8474
        %v8476 = vpop.f32.mrb[0].mxu0
        %8477 = vmatprep.mubr.bf16.mxu0 0
        %8478 = vmatmul.mubr.bf16.gmra.mrb[0].mxu0 %v8322
        %v8479 = vpop.f32.mrb[0].mxu0
        %v8480 = vadd.f32 0.0, %v8479
        %v8481 = vpop.f32.mrb[0].mxu0
        %v8482 = vpop.f32.mrb[0].mxu0
        %v8483 = vadd.f32 0.0, %v8482
        %v8484 = vpop.f32.mrb[0].mxu0
        %8485 = vmatprep.mubr.bf16.mxu0 0
        %8486 = vmatmul.mubr.bf16.gmra.mrb[0].mxu0 %v8323
        %v8487 = vpop.f32.mrb[0].mxu0
        %v8488 = vadd.f32 0.0, %v8487
        %v8489 = vpop.f32.mrb[0].mxu0
        %v8490 = vpop.f32.mrb[0].mxu0
        %v8491 = vadd.f32 0.0, %v8490
        %v8492 = vpop.f32.mrb[0].mxu0
        %8493 = vmatprep.mubr.bf16.mxu0 0
        %8494 = vmatmul.mubr.bf16.gmra.mrb[0].mxu0 %v8324
        %v8495 = vpop.f32.mrb[0].mxu0
        %v8496 = vadd.f32 0.0, %v8495
        %v8497 = vpop.f32.mrb[0].mxu0
        %v8498 = vpop.f32.mrb[0].mxu0
        %v8499 = vadd.f32 0.0, %v8498
        %v8500 = vpop.f32.mrb[0].mxu0
        %8501 = vmatprep.mubr.bf16.mxu0 0
        %8502 = vmatmul.mubr.bf16.gmra.mrb[0].mxu0 %v8325
        %v8503 = vpop.f32.mrb[0].mxu0
        %v8504 = vadd.f32 0.0, %v8503
        %v8505 = vpop.f32.mrb[0].mxu0
        %v8506 = vpop.f32.mrb[0].mxu0
        %v8507 = vadd.f32 0.0, %v8506
        %v8508 = vpop.f32.mrb[0].mxu0
        %8509 = vmatprep.mubr.bf16.mxu0 0
        %8510 = vmatmul.mubr.bf16.gmra.mrb[0].mxu0 %v8326
        %v8511 = vpop.f32.mrb[0].mxu0
        %v8512 = vadd.f32 0.0, %v8511
        %v8513 = vpop.f32.mrb[0].mxu0
        %v8514 = vpop.f32.mrb[0].mxu0
        %v8515 = vadd.f32 0.0, %v8514
        %v8516 = vpop.f32.mrb[0].mxu0
        %8517 = vmatprep.mubr.bf16.mxu0 0
        %8518 = vmatmul.mubr.bf16.gmra.mrb[0].mxu0 %v8327
        %v8519 = vpop.f32.mrb[0].mxu0
        %v8520 = vadd.f32 0.0, %v8519
        %v8521 = vpop.f32.mrb[0].mxu0
        %v8522 = vpop.f32.mrb[0].mxu0
        %v8523 = vadd.f32 0.0, %v8522
        %v8524 = vpop.f32.mrb[0].mxu0
        %8525 = vmatprep.mubr.bf16.mxu0 0
        %8526 = vmatmul.mubr.bf16.gmra.mrb[0].mxu0 %v8328
        %v8527 = vpop.f32.mrb[0].mxu0
        %v8528 = vadd.f32 0.0, %v8527
        %v8529 = vpop.f32.mrb[0].mxu0
        %v8530 = vpop.f32.mrb[0].mxu0
        %v8531 = vadd.f32 0.0, %v8530
        %v8532 = vpop.f32.mrb[0].mxu0
        %8533 = vmatprep.mubr.bf16.mxu0 0
        %8534 = vmatmul.mubr.bf16.gmra.mrb[0].mxu0 %v8329
        %v8535 = vpop.f32.mrb[0].mxu0
        %v8536 = vadd.f32 0.0, %v8535
        %v8537 = vpop.f32.mrb[0].mxu0
        %v8538 = vpop.f32.mrb[0].mxu0
        %v8539 = vadd.f32 0.0, %v8538
        %v8540 = vpop.f32.mrb[0].mxu0
        %8541 = vmatprep.mubr.bf16.mxu0 0
        %8542 = vmatmul.mubr.bf16.gmra.mrb[0].mxu0 %v8330
        %v8543 = vpop.f32.mrb[0].mxu0
        %v8544 = vadd.f32 0.0, %v8543
        %v8545 = vpop.f32.mrb[0].mxu0
        %v8546 = vpop.f32.mrb[0].mxu0
        %v8547 = vadd.f32 0.0, %v8546
        %v8548 = vpop.f32.mrb[0].mxu0
        %8549 = vmatprep.mubr.bf16.mxu0 0
        %8550 = vmatmul.mubr.bf16.gmra.mrb[0].mxu0 %v8331
        %v8551 = vpop.f32.mrb[0].mxu0
        %v8552 = vadd.f32 0.0, %v8551
        %v8553 = vpop.f32.mrb[0].mxu0
        %v8554 = vpop.f32.mrb[0].mxu0
        %v8555 = vadd.f32 0.0, %v8554
        %v8556 = vpop.f32.mrb[0].mxu0
        %8557 = vdwg.mxu0
        %v8558 = vadd.f32 %v8252, %v8432
        %v8559 = vadd.f32 %v8253, %v8435
        %v8560 = vadd.f32 %v8254, %v8440
        %v8561 = vadd.f32 %v8255, %v8443
        %v8562 = vadd.f32 %v8256, %v8448
        %v8563 = vadd.f32 %v8257, %v8451
        %v8564 = vadd.f32 %v8258, %v8456
        %v8565 = vadd.f32 %v8259, %v8459
        %v8566 = vadd.f32 %v8260, %v8464
        %v8567 = vadd.f32 %v8261, %v8467
        %v8568 = vadd.f32 %v8262, %v8472
        %v8569 = vadd.f32 %v8263, %v8475
        %v8570 = vadd.f32 %v8264, %v8480
        %v8571 = vadd.f32 %v8265, %v8483
        %v8572 = vadd.f32 %v8266, %v8488
        %v8573 = vadd.f32 %v8267, %v8491
        %v8574 = vadd.f32 %v8268, %v8496
        %v8575 = vadd.f32 %v8269, %v8499
        %v8576 = vadd.f32 %v8270, %v8504
        %v8577 = vadd.f32 %v8271, %v8507
        %v8578 = vadd.f32 %v8272, %v8512
        %v8579 = vadd.f32 %v8273, %v8515
        %v8580 = vadd.f32 %v8274, %v8520
        %v8581 = vadd.f32 %v8275, %v8523
        %v8582 = vadd.f32 %v8276, %v8528
        %v8583 = vadd.f32 %v8277, %v8531
        %v8584 = vadd.f32 %v8278, %v8536
        %v8585 = vadd.f32 %v8279, %v8539
        %v8586 = vadd.f32 %v8280, %v8544
        %v8587 = vadd.f32 %v8281, %v8547
        %v8588 = vadd.f32 %v8282, %v8552
        %v8589 = vadd.f32 %v8283, %v8555
        %v8590 = vld [vmem:[%s2327 + $0x9] sm:$0xff]
        %v8591 = vld [vmem:[%s2327 + $0x11] sm:$0xff]
        %v8592 = vld [vmem:[%s2327 + $0x29] sm:$0xff]
        %v8593 = vld [vmem:[%s2327 + $0x31] sm:$0xff]
        %v8594 = vld [vmem:[%s2327 + $0x49] sm:$0xff]
        %v8595 = vld [vmem:[%s2327 + $0x51] sm:$0xff]
        %v8596 = vld [vmem:[%s2327 + $0x69] sm:$0xff]
        %v8597 = vld [vmem:[%s2327 + $0x71] sm:$0xff]
        %v8598 = vld [vmem:[%s2327 + $0x89] sm:$0xff]
        %v8599 = vld [vmem:[%s2327 + $0x91] sm:$0xff]
        %v8600 = vld [vmem:[%s2327 + $0xa9] sm:$0xff]
        %v8601 = vld [vmem:[%s2327 + $0xb1] sm:$0xff]
        %v8602 = vld [vmem:[%s2327 + $0xc9] sm:$0xff]
        %v8603 = vld [vmem:[%s2327 + $0xd1] sm:$0xff]
        %v8604 = vld [vmem:[%s2327 + $0xe9] sm:$0xff]
        %v8605 = vld [vmem:[%s2327 + $0xf1] sm:$0xff]
        %v8606 = vld [vmem:[%s2327 + $0x109] sm:$0xff]
        %v8607 = vld [vmem:[%s2327 + $0x111] sm:$0xff]
        %v8608 = vld [vmem:[%s2327 + $0x129] sm:$0xff]
        %v8609 = vld [vmem:[%s2327 + $0x131] sm:$0xff]
        %v8610 = vld [vmem:[%s2327 + $0x149] sm:$0xff]
        %v8611 = vld [vmem:[%s2327 + $0x151] sm:$0xff]
        %v8612 = vld [vmem:[%s2327 + $0x169] sm:$0xff]
        %v8613 = vld [vmem:[%s2327 + $0x171] sm:$0xff]
        %v8614 = vld [vmem:[%s2327 + $0x189] sm:$0xff]
        %v8615 = vld [vmem:[%s2327 + $0x191] sm:$0xff]
        %v8616 = vld [vmem:[%s2327 + $0x1a9] sm:$0xff]
        %v8617 = vld [vmem:[%s2327 + $0x1b1] sm:$0xff]
        %v8618 = vld [vmem:[%s2327 + $0x1c9] sm:$0xff]
        %v8619 = vld [vmem:[%s2327 + $0x1d1] sm:$0xff]
        %v8620 = vld [vmem:[%s2327 + $0x1e9] sm:$0xff]
        %v8621 = vld [vmem:[%s2327 + $0x1f1] sm:$0xff]
        %v8622 = vpack.c.bf16 %v8591, %v8590
        %v8623 = vpack.c.bf16 %v8593, %v8592
        %v8624 = vpack.c.bf16 %v8595, %v8594
        %v8625 = vpack.c.bf16 %v8597, %v8596
        %v8626 = vpack.c.bf16 %v8599, %v8598
        %v8627 = vpack.c.bf16 %v8601, %v8600
        %v8628 = vpack.c.bf16 %v8603, %v8602
        %v8629 = vpack.c.bf16 %v8605, %v8604
        %v8630 = vpack.c.bf16 %v8607, %v8606
        %v8631 = vpack.c.bf16 %v8609, %v8608
        %v8632 = vpack.c.bf16 %v8611, %v8610
        %v8633 = vpack.c.bf16 %v8613, %v8612
        %v8634 = vpack.c.bf16 %v8615, %v8614
        %v8635 = vpack.c.bf16 %v8617, %v8616
        %v8636 = vpack.c.bf16 %v8619, %v8618
        %v8637 = vpack.c.bf16 %v8621, %v8620
        %s8638 = scalar_lea.vmem [#allocation3], 512
        %v8639 = vld [vmem:[%s8638] sm:$0xf]
        %v8640 = vld [vmem:[%s8638 + $0x4] sm:$0xf]
        %v8641 = vld [vmem:[%s8638 + $0x8] sm:$0xf]
        %v8642 = vld [vmem:[%s8638 + $0xc] sm:$0xf]
        %v8643 = vld [vmem:[%s8638 + $0x10] sm:$0xf]
        %v8644 = vld [vmem:[%s8638 + $0x14] sm:$0xf]
        %v8645 = vld [vmem:[%s8638 + $0x18] sm:$0xf]
        %v8646 = vld [vmem:[%s8638 + $0x1c] sm:$0xf]
        %v8647 = vld [vmem:[%s8638 + $0x20] sm:$0xf]
        %v8648 = vld [vmem:[%s8638 + $0x24] sm:$0xf]
        %v8649 = vld [vmem:[%s8638 + $0x28] sm:$0xf]
        %v8650 = vld [vmem:[%s8638 + $0x2c] sm:$0xf]
        %v8651 = vld [vmem:[%s8638 + $0x30] sm:$0xf]
        %v8652 = vld [vmem:[%s8638 + $0x34] sm:$0xf]
        %v8653 = vld [vmem:[%s8638 + $0x38] sm:$0xf]
        %v8654 = vld [vmem:[%s8638 + $0x3c] sm:$0xf]
        %v8671 = vunpack.c.l.b16 %v8639
        %v8672 = vunpack.c.l.b16 %v8640
        %v8673 = vunpack.c.l.b16 %v8641
        %v8674 = vunpack.c.l.b16 %v8642
        %v8675 = vunpack.c.l.b16 %v8643
        %v8676 = vunpack.c.l.b16 %v8644
        %v8677 = vunpack.c.l.b16 %v8645
        %v8678 = vunpack.c.l.b16 %v8646
        %v8679 = vunpack.c.l.b16 %v8647
        %v8680 = vunpack.c.l.b16 %v8648
        %v8681 = vunpack.c.l.b16 %v8649
        %v8682 = vunpack.c.l.b16 %v8650
        %v8683 = vunpack.c.l.b16 %v8651
        %v8684 = vunpack.c.l.b16 %v8652
        %v8685 = vunpack.c.l.b16 %v8653
        %v8686 = vunpack.c.l.b16 %v8654
        %v8687 = vpack.c.b16 %v8672, %v8671
        %v8688 = vpack.c.b16 %v8674, %v8673
        %v8689 = vpack.c.b16 %v8676, %v8675
        %v8690 = vpack.c.b16 %v8678, %v8677
        %v8691 = vpack.c.b16 %v8680, %v8679
        %v8692 = vpack.c.b16 %v8682, %v8681
        %v8693 = vpack.c.b16 %v8684, %v8683
        %v8694 = vpack.c.b16 %v8686, %v8685
        %8703 = vmatprep.subr.bf16.mxu0 0
        %8704 = vmatpush1.bf16.msra.mxu0 %v8687
        %8705 = vmatprep.subr.bf16.mxu0 0
        %8706 = vmatpush1.bf16.msra.mxu0 %v8688
        %8707 = vmatprep.subr.bf16.mxu0 0
        %8708 = vmatpush1.bf16.msra.mxu0 %v8689
        %8709 = vmatprep.subr.bf16.mxu0 0
        %8710 = vmatpush1.bf16.msra.mxu0 %v8690
        %8711 = vmatprep.subr.bf16.mxu0 0
        %8712 = vmatpush1.bf16.msra.mxu0 %v8691
        %8713 = vmatprep.subr.bf16.mxu0 0
        %8714 = vmatpush1.bf16.msra.mxu0 %v8692
        %8715 = vmatprep.subr.bf16.mxu0 0
        %8716 = vmatpush1.bf16.msra.mxu0 %v8693
        %8717 = vmatprep.subr.bf16.mxu0 0
        %8718 = vmatpush1.bf16.msra.mxu0 %v8694
        %8719 = vmatprep.subr.bf16.mxu0 0
        %8720 = vmatpush1.bf16.msra.mxu0 0
        %8721 = vmatprep.subr.bf16.mxu0 0
        %8722 = vmatpush1.bf16.msra.mxu0 0
        %8723 = vmatprep.subr.bf16.mxu0 0
        %8724 = vmatpush1.bf16.msra.mxu0 0
        %8725 = vmatprep.subr.bf16.mxu0 0
        %8726 = vmatpush1.bf16.msra.mxu0 0
        %8727 = vmatprep.subr.bf16.mxu0 0
        %8728 = vmatpush1.bf16.msra.mxu0 0
        %8729 = vmatprep.subr.bf16.mxu0 0
        %8730 = vmatpush1.bf16.msra.mxu0 0
        %8731 = vmatprep.subr.bf16.mxu0 0
        %8732 = vmatpush1.bf16.msra.mxu0 0
        %8733 = vmatprep.subr.bf16.mxu0 0
        %8734 = vmatpush1.bf16.msra.mxu0 0
        %8735 = vmatprep.mubr.bf16.mxu0 0
        %8736 = vmatmul.mubr.bf16.gmra.mrb[0].mxu0 %v8622
        %v8737 = vpop.f32.mrb[0].mxu0
        %v8738 = vadd.f32 0.0, %v8737
        %v8739 = vpop.f32.mrb[0].mxu0
        %v8740 = vpop.f32.mrb[0].mxu0
        %v8741 = vadd.f32 0.0, %v8740
        %v8742 = vpop.f32.mrb[0].mxu0
        %8743 = vmatprep.mubr.bf16.mxu0 0
        %8744 = vmatmul.mubr.bf16.gmra.mrb[0].mxu0 %v8623
        %v8745 = vpop.f32.mrb[0].mxu0
        %v8746 = vadd.f32 0.0, %v8745
        %v8747 = vpop.f32.mrb[0].mxu0
        %v8748 = vpop.f32.mrb[0].mxu0
        %v8749 = vadd.f32 0.0, %v8748
        %v8750 = vpop.f32.mrb[0].mxu0
        %8751 = vmatprep.mubr.bf16.mxu0 0
        %8752 = vmatmul.mubr.bf16.gmra.mrb[0].mxu0 %v8624
        %v8753 = vpop.f32.mrb[0].mxu0
        %v8754 = vadd.f32 0.0, %v8753
        %v8755 = vpop.f32.mrb[0].mxu0
        %v8756 = vpop.f32.mrb[0].mxu0
        %v8757 = vadd.f32 0.0, %v8756
        %v8758 = vpop.f32.mrb[0].mxu0
        %8759 = vmatprep.mubr.bf16.mxu0 0
        %8760 = vmatmul.mubr.bf16.gmra.mrb[0].mxu0 %v8625
        %v8761 = vpop.f32.mrb[0].mxu0
        %v8762 = vadd.f32 0.0, %v8761
        %v8763 = vpop.f32.mrb[0].mxu0
        %v8764 = vpop.f32.mrb[0].mxu0
        %v8765 = vadd.f32 0.0, %v8764
        %v8766 = vpop.f32.mrb[0].mxu0
        %8767 = vmatprep.mubr.bf16.mxu0 0
        %8768 = vmatmul.mubr.bf16.gmra.mrb[0].mxu0 %v8626
        %v8769 = vpop.f32.mrb[0].mxu0
        %v8770 = vadd.f32 0.0, %v8769
        %v8771 = vpop.f32.mrb[0].mxu0
        %v8772 = vpop.f32.mrb[0].mxu0
        %v8773 = vadd.f32 0.0, %v8772
        %v8774 = vpop.f32.mrb[0].mxu0
        %8775 = vmatprep.mubr.bf16.mxu0 0
        %8776 = vmatmul.mubr.bf16.gmra.mrb[0].mxu0 %v8627
        %v8777 = vpop.f32.mrb[0].mxu0
        %v8778 = vadd.f32 0.0, %v8777
        %v8779 = vpop.f32.mrb[0].mxu0
        %v8780 = vpop.f32.mrb[0].mxu0
        %v8781 = vadd.f32 0.0, %v8780
        %v8782 = vpop.f32.mrb[0].mxu0
        %8783 = vmatprep.mubr.bf16.mxu0 0
        %8784 = vmatmul.mubr.bf16.gmra.mrb[0].mxu0 %v8628
        %v8785 = vpop.f32.mrb[0].mxu0
        %v8786 = vadd.f32 0.0, %v8785
        %v8787 = vpop.f32.mrb[0].mxu0
        %v8788 = vpop.f32.mrb[0].mxu0
        %v8789 = vadd.f32 0.0, %v8788
        %v8790 = vpop.f32.mrb[0].mxu0
        %8791 = vmatprep.mubr.bf16.mxu0 0
        %8792 = vmatmul.mubr.bf16.gmra.mrb[0].mxu0 %v8629
        %v8793 = vpop.f32.mrb[0].mxu0
        %v8794 = vadd.f32 0.0, %v8793
        %v8795 = vpop.f32.mrb[0].mxu0
        %v8796 = vpop.f32.mrb[0].mxu0
        %v8797 = vadd.f32 0.0, %v8796
        %v8798 = vpop.f32.mrb[0].mxu0
        %8799 = vmatprep.mubr.bf16.mxu0 0
        %8800 = vmatmul.mubr.bf16.gmra.mrb[0].mxu0 %v8630
        %v8801 = vpop.f32.mrb[0].mxu0
        %v8802 = vadd.f32 0.0, %v8801
        %v8803 = vpop.f32.mrb[0].mxu0
        %v8804 = vpop.f32.mrb[0].mxu0
        %v8805 = vadd.f32 0.0, %v8804
        %v8806 = vpop.f32.mrb[0].mxu0
        %8807 = vmatprep.mubr.bf16.mxu0 0
        %8808 = vmatmul.mubr.bf16.gmra.mrb[0].mxu0 %v8631
        %v8809 = vpop.f32.mrb[0].mxu0
        %v8810 = vadd.f32 0.0, %v8809
        %v8811 = vpop.f32.mrb[0].mxu0
        %v8812 = vpop.f32.mrb[0].mxu0
        %v8813 = vadd.f32 0.0, %v8812
        %v8814 = vpop.f32.mrb[0].mxu0
        %8815 = vmatprep.mubr.bf16.mxu0 0
        %8816 = vmatmul.mubr.bf16.gmra.mrb[0].mxu0 %v8632
        %v8817 = vpop.f32.mrb[0].mxu0
        %v8818 = vadd.f32 0.0, %v8817
        %v8819 = vpop.f32.mrb[0].mxu0
        %v8820 = vpop.f32.mrb[0].mxu0
        %v8821 = vadd.f32 0.0, %v8820
        %v8822 = vpop.f32.mrb[0].mxu0
        %8823 = vmatprep.mubr.bf16.mxu0 0
        %8824 = vmatmul.mubr.bf16.gmra.mrb[0].mxu0 %v8633
        %v8825 = vpop.f32.mrb[0].mxu0
        %v8826 = vadd.f32 0.0, %v8825
        %v8827 = vpop.f32.mrb[0].mxu0
        %v8828 = vpop.f32.mrb[0].mxu0
        %v8829 = vadd.f32 0.0, %v8828
        %v8830 = vpop.f32.mrb[0].mxu0
        %8831 = vmatprep.mubr.bf16.mxu0 0
        %8832 = vmatmul.mubr.bf16.gmra.mrb[0].mxu0 %v8634
        %v8833 = vpop.f32.mrb[0].mxu0
        %v8834 = vadd.f32 0.0, %v8833
        %v8835 = vpop.f32.mrb[0].mxu0
        %v8836 = vpop.f32.mrb[0].mxu0
        %v8837 = vadd.f32 0.0, %v8836
        %v8838 = vpop.f32.mrb[0].mxu0
        %8839 = vmatprep.mubr.bf16.mxu0 0
        %8840 = vmatmul.mubr.bf16.gmra.mrb[0].mxu0 %v8635
        %v8841 = vpop.f32.mrb[0].mxu0
        %v8842 = vadd.f32 0.0, %v8841
        %v8843 = vpop.f32.mrb[0].mxu0
        %v8844 = vpop.f32.mrb[0].mxu0
        %v8845 = vadd.f32 0.0, %v8844
        %v8846 = vpop.f32.mrb[0].mxu0
        %8847 = vmatprep.mubr.bf16.mxu0 0
        %8848 = vmatmul.mubr.bf16.gmra.mrb[0].mxu0 %v8636
        %v8849 = vpop.f32.mrb[0].mxu0
        %v8850 = vadd.f32 0.0, %v8849
        %v8851 = vpop.f32.mrb[0].mxu0
        %v8852 = vpop.f32.mrb[0].mxu0
        %v8853 = vadd.f32 0.0, %v8852
        %v8854 = vpop.f32.mrb[0].mxu0
        %8855 = vmatprep.mubr.bf16.mxu0 0
        %8856 = vmatmul.mubr.bf16.gmra.mrb[0].mxu0 %v8637
        %v8857 = vpop.f32.mrb[0].mxu0
        %v8858 = vadd.f32 0.0, %v8857
        %v8859 = vpop.f32.mrb[0].mxu0
        %v8860 = vpop.f32.mrb[0].mxu0
        %v8861 = vadd.f32 0.0, %v8860
        %v8862 = vpop.f32.mrb[0].mxu0
        %8863 = vdwg.mxu0
        %v8864 = vadd.f32 %v8558, %v8738
        %v8865 = vadd.f32 %v8559, %v8741
        %v8866 = vadd.f32 %v8560, %v8746
        %v8867 = vadd.f32 %v8561, %v8749
        %v8868 = vadd.f32 %v8562, %v8754
        %v8869 = vadd.f32 %v8563, %v8757
        %v8870 = vadd.f32 %v8564, %v8762
        %v8871 = vadd.f32 %v8565, %v8765
        %v8872 = vadd.f32 %v8566, %v8770
        %v8873 = vadd.f32 %v8567, %v8773
        %v8874 = vadd.f32 %v8568, %v8778
        %v8875 = vadd.f32 %v8569, %v8781
        %v8876 = vadd.f32 %v8570, %v8786
        %v8877 = vadd.f32 %v8571, %v8789
        %v8878 = vadd.f32 %v8572, %v8794
        %v8879 = vadd.f32 %v8573, %v8797
        %v8880 = vadd.f32 %v8574, %v8802
        %v8881 = vadd.f32 %v8575, %v8805
        %v8882 = vadd.f32 %v8576, %v8810
        %v8883 = vadd.f32 %v8577, %v8813
        %v8884 = vadd.f32 %v8578, %v8818
        %v8885 = vadd.f32 %v8579, %v8821
        %v8886 = vadd.f32 %v8580, %v8826
        %v8887 = vadd.f32 %v8581, %v8829
        %v8888 = vadd.f32 %v8582, %v8834
        %v8889 = vadd.f32 %v8583, %v8837
        %v8890 = vadd.f32 %v8584, %v8842
        %v8891 = vadd.f32 %v8585, %v8845
        %v8892 = vadd.f32 %v8586, %v8850
        %v8893 = vadd.f32 %v8587, %v8853
        %v8894 = vadd.f32 %v8588, %v8858
        %v8895 = vadd.f32 %v8589, %v8861
        %v8896 = vadd.f32 %v8864, %v3246
        %v8897 = vadd.f32 %v8865, %v3247
        %v8898 = vadd.f32 %v8866, %v3248
        %v8899 = vadd.f32 %v8867, %v3249
        %v8900 = vadd.f32 %v8868, %v3250
        %v8901 = vadd.f32 %v8869, %v3251
        %v8902 = vadd.f32 %v8870, %v3252
        %v8903 = vadd.f32 %v8871, %v3253
        %v8904 = vadd.f32 %v8872, %v3254
        %v8905 = vadd.f32 %v8873, %v3255
        %v8906 = vadd.f32 %v8874, %v3256
        %v8907 = vadd.f32 %v8875, %v3257
        %v8908 = vadd.f32 %v8876, %v3258
        %v8909 = vadd.f32 %v8877, %v3259
        %v8910 = vadd.f32 %v8878, %v3260
        %v8911 = vadd.f32 %v8879, %v3261
        %v8912 = vadd.f32 %v8880, %v3262
        %v8913 = vadd.f32 %v8881, %v3263
        %v8914 = vadd.f32 %v8882, %v3264
        %v8915 = vadd.f32 %v8883, %v3265
        %v8916 = vadd.f32 %v8884, %v3266
        %v8917 = vadd.f32 %v8885, %v3267
        %v8918 = vadd.f32 %v8886, %v3268
        %v8919 = vadd.f32 %v8887, %v3269
        %v8920 = vadd.f32 %v8888, %v3270
        %v8921 = vadd.f32 %v8889, %v3271
        %v8922 = vadd.f32 %v8890, %v3272
        %v8923 = vadd.f32 %v8891, %v3273
        %v8924 = vadd.f32 %v8892, %v3274
        %v8925 = vadd.f32 %v8893, %v3275
        %v8926 = vadd.f32 %v8894, %v3276
        %v8927 = vadd.f32 %v8895, %v3277
        %v8928 = vmax.f32 %v8896, 0.0
        %v8929 = vmax.f32 %v8897, 0.0
        %v8930 = vmax.f32 %v8898, 0.0
        %v8931 = vmax.f32 %v8899, 0.0
        %v8932 = vmax.f32 %v8900, 0.0
        %v8933 = vmax.f32 %v8901, 0.0
        %v8934 = vmax.f32 %v8902, 0.0
        %v8935 = vmax.f32 %v8903, 0.0
        %v8936 = vmax.f32 %v8904, 0.0
        %v8937 = vmax.f32 %v8905, 0.0
        %v8938 = vmax.f32 %v8906, 0.0
        %v8939 = vmax.f32 %v8907, 0.0
        %v8940 = vmax.f32 %v8908, 0.0
        %v8941 = vmax.f32 %v8909, 0.0
        %v8942 = vmax.f32 %v8910, 0.0
        %v8943 = vmax.f32 %v8911, 0.0
        %v8944 = vmax.f32 %v8912, 0.0
        %v8945 = vmax.f32 %v8913, 0.0
        %v8946 = vmax.f32 %v8914, 0.0
        %v8947 = vmax.f32 %v8915, 0.0
        %v8948 = vmax.f32 %v8916, 0.0
        %v8949 = vmax.f32 %v8917, 0.0
        %v8950 = vmax.f32 %v8918, 0.0
        %v8951 = vmax.f32 %v8919, 0.0
        %v8952 = vmax.f32 %v8920, 0.0
        %v8953 = vmax.f32 %v8921, 0.0
        %v8954 = vmax.f32 %v8922, 0.0
        %v8955 = vmax.f32 %v8923, 0.0
        %v8956 = vmax.f32 %v8924, 0.0
        %v8957 = vmax.f32 %v8925, 0.0
        %v8958 = vmax.f32 %v8926, 0.0
        %v8959 = vmax.f32 %v8927, 0.0
        %v8960 = vadd.f32 %v8928, %v8929
        %v8961 = vadd.f32 %v8960, %v8930
        %v8962 = vadd.f32 %v8961, %v8931
        %v8963 = vadd.f32 %v8962, %v8932
        %v8964 = vadd.f32 %v8963, %v8933
        %v8965 = vadd.f32 %v8964, %v8934
        %v8966 = vadd.f32 %v8965, %v8935
        %v8967 = vadd.f32 %v8966, %v8936
        %v8968 = vadd.f32 %v8967, %v8937
        %v8969 = vadd.f32 %v8968, %v8938
        %v8970 = vadd.f32 %v8969, %v8939
        %v8971 = vadd.f32 %v8970, %v8940
        %v8972 = vadd.f32 %v8971, %v8941
        %v8973 = vadd.f32 %v8972, %v8942
        %v8974 = vadd.f32 %v8973, %v8943
        %v8975 = vadd.f32 %v8974, %v8944
        %v8976 = vadd.f32 %v8975, %v8945
        %v8977 = vadd.f32 %v8976, %v8946
        %v8978 = vadd.f32 %v8977, %v8947
        %v8979 = vadd.f32 %v8978, %v8948
        %v8980 = vadd.f32 %v8979, %v8949
        %v8981 = vadd.f32 %v8980, %v8950
        %v8982 = vadd.f32 %v8981, %v8951
        %v8983 = vadd.f32 %v8982, %v8952
        %v8984 = vadd.f32 %v8983, %v8953
        %v8985 = vadd.f32 %v8984, %v8954
        %v8986 = vadd.f32 %v8985, %v8955
        %v8987 = vadd.f32 %v8986, %v8956
        %v8988 = vadd.f32 %v8987, %v8957
        %v8989 = vadd.f32 %v8988, %v8958
        %v8990 = vadd.f32 %v8989, %v8959
        %v8991 = vrot.slane %v8990, 4
        %v8992 = vadd.f32 %v8990, %v8991
        %v8993 = vrot.slane %v8992, 2
        %v8994 = vadd.f32 %v8992, %v8993
        %v8995 = vrot.slane %v8994, 1
        %v8996 = vadd.f32 %v8994, %v8995
        %v8997 = vrcp.pop 256.0
        %v8998 = vmul.f32 %v8996, %v8997
        %v8999 = vpack.c.bf16 %v8998, %v8998
        %v9000 = vld [vmem:[%s7] sm:$0xff]
        %v9001 = vld [vmem:[%s7 + $0x8] sm:$0xff]
        %v9002 = vld [vmem:[%s7 + $0x10] sm:$0xff]
        %v9003 = vld [vmem:[%s7 + $0x18] sm:$0xff]
        %v9004 = vld [vmem:[%s7 + $0x20] sm:$0xff]
        %v9005 = vld [vmem:[%s7 + $0x28] sm:$0xff]
        %v9006 = vld [vmem:[%s7 + $0x30] sm:$0xff]
        %v9007 = vld [vmem:[%s7 + $0x38] sm:$0xff]
        %v9008 = vld [vmem:[%s7 + $0x40] sm:$0xff]
        %v9009 = vld [vmem:[%s7 + $0x48] sm:$0xff]
        %v9010 = vld [vmem:[%s7 + $0x50] sm:$0xff]
        %v9011 = vld [vmem:[%s7 + $0x58] sm:$0xff]
        %v9012 = vld [vmem:[%s7 + $0x60] sm:$0xff]
        %v9013 = vld [vmem:[%s7 + $0x68] sm:$0xff]
        %v9014 = vld [vmem:[%s7 + $0x70] sm:$0xff]
        %v9015 = vld [vmem:[%s7 + $0x78] sm:$0xff]
        %v9016 = vld [vmem:[%s8] sm:$0x3]
        %v9033 = vunpack.c.l.b16 %v9000
        %v9034 = vunpack.c.h.b16 %v9000
        %v9035 = vunpack.c.l.b16 %v9001
        %v9036 = vunpack.c.h.b16 %v9001
        %v9037 = vunpack.c.l.b16 %v9002
        %v9038 = vunpack.c.h.b16 %v9002
        %v9039 = vunpack.c.l.b16 %v9003
        %v9040 = vunpack.c.h.b16 %v9003
        %v9041 = vunpack.c.l.b16 %v9004
        %v9042 = vunpack.c.h.b16 %v9004
        %v9043 = vunpack.c.l.b16 %v9005
        %v9044 = vunpack.c.h.b16 %v9005
        %v9045 = vunpack.c.l.b16 %v9006
        %v9046 = vunpack.c.h.b16 %v9006
        %v9047 = vunpack.c.l.b16 %v9007
        %v9048 = vunpack.c.h.b16 %v9007
        %v9049 = vunpack.c.l.b16 %v9008
        %v9050 = vunpack.c.h.b16 %v9008
        %v9051 = vunpack.c.l.b16 %v9009
        %v9052 = vunpack.c.h.b16 %v9009
        %v9053 = vunpack.c.l.b16 %v9010
        %v9054 = vunpack.c.h.b16 %v9010
        %v9055 = vunpack.c.l.b16 %v9011
        %v9056 = vunpack.c.h.b16 %v9011
        %v9057 = vunpack.c.l.b16 %v9012
        %v9058 = vunpack.c.h.b16 %v9012
        %v9059 = vunpack.c.l.b16 %v9013
        %v9060 = vunpack.c.h.b16 %v9013
        %v9061 = vunpack.c.l.b16 %v9014
        %v9062 = vunpack.c.h.b16 %v9014
        %v9063 = vunpack.c.l.b16 %v9015
        %v9064 = vunpack.c.h.b16 %v9015
        %v9065 = vpack.c.b16 %v9035, %v9033
        %v9066 = vpack.c.b16 %v9036, %v9034
        %v9067 = vpack.c.b16 %v9039, %v9037
        %v9068 = vpack.c.b16 %v9040, %v9038
        %v9069 = vpack.c.b16 %v9043, %v9041
        %v9070 = vpack.c.b16 %v9044, %v9042
        %v9071 = vpack.c.b16 %v9047, %v9045
        %v9072 = vpack.c.b16 %v9048, %v9046
        %v9073 = vpack.c.b16 %v9051, %v9049
        %v9074 = vpack.c.b16 %v9052, %v9050
        %v9075 = vpack.c.b16 %v9055, %v9053
        %v9076 = vpack.c.b16 %v9056, %v9054
        %v9077 = vpack.c.b16 %v9059, %v9057
        %v9078 = vpack.c.b16 %v9060, %v9058
        %v9079 = vpack.c.b16 %v9063, %v9061
        %v9080 = vpack.c.b16 %v9064, %v9062
        %v9098 = vlaneseq
        %v9099 = vshrl.u32 %v9098, 7
        %v9100 = vsub.s32 0, %v9099
        %v9101 = vrot.slane %v9016, %v9100
        %v9102 = vlaneseq
        %v9103 = vshrl.u32 %v9102, 7
        %v9104 = vsub.s32 1, %v9103
        %v9105 = vrot.slane %v9016, %v9104
        %9108 = vmatprep.subr.bf16.mxu0 %v9066
        %9109 = vmatpush1.bf16.msra.mxu0 %v9065
        %9110 = vmatprep.subr.bf16.mxu0 %v9068
        %9111 = vmatpush1.bf16.msra.mxu0 %v9067
        %9112 = vmatprep.subr.bf16.mxu0 %v9070
        %9113 = vmatpush1.bf16.msra.mxu0 %v9069
        %9114 = vmatprep.subr.bf16.mxu0 %v9072
        %9115 = vmatpush1.bf16.msra.mxu0 %v9071
        %9116 = vmatprep.subr.bf16.mxu0 %v9074
        %9117 = vmatpush1.bf16.msra.mxu0 %v9073
        %9118 = vmatprep.subr.bf16.mxu0 %v9076
        %9119 = vmatpush1.bf16.msra.mxu0 %v9075
        %9120 = vmatprep.subr.bf16.mxu0 %v9078
        %9121 = vmatpush1.bf16.msra.mxu0 %v9077
        %9122 = vmatprep.subr.bf16.mxu0 %v9080
        %9123 = vmatpush1.bf16.msra.mxu0 %v9079
        %9124 = vmatprep.subr.bf16.mxu0 0
        %9125 = vmatpush1.bf16.msra.mxu0 0
        %9126 = vmatprep.subr.bf16.mxu0 0
        %9127 = vmatpush1.bf16.msra.mxu0 0
        %9128 = vmatprep.subr.bf16.mxu0 0
        %9129 = vmatpush1.bf16.msra.mxu0 0
        %9130 = vmatprep.subr.bf16.mxu0 0
        %9131 = vmatpush1.bf16.msra.mxu0 0
        %9132 = vmatprep.subr.bf16.mxu0 0
        %9133 = vmatpush1.bf16.msra.mxu0 0
        %9134 = vmatprep.subr.bf16.mxu0 0
        %9135 = vmatpush1.bf16.msra.mxu0 0
        %9136 = vmatprep.subr.bf16.mxu0 0
        %9137 = vmatpush1.bf16.msra.mxu0 0
        %9138 = vmatprep.subr.bf16.mxu0 0
        %9139 = vmatpush1.bf16.msra.mxu0 0
        %9140 = vmatprep.mubr.bf16.mxu0 0
        %9141 = vmatmul.mubr.bf16.gmra.mrb[0].mxu0 %v8999
        %v9142 = vpop.f32.mrb[0].mxu0
        %v9143 = vadd.f32 %v9101, %v9142
        %v9144 = vpop.f32.mrb[0].mxu0
        %v9145 = vadd.f32 %v9105, %v9144
        %v9146 = vpop.f32.mrb[0].mxu0
        %v9147 = vpop.f32.mrb[0].mxu0
        %9148 = vdwg.mxu0
        %v9151 = vcombine.low %v9143, %v9145
        %v9153 = vunpack.c.l.s4 1966171168
        %v9154 = vunpack.c.0.s8 %v9153
        %v9155 = vlaneseq
        %v9156 = vshrl.u32 %v9155, 7
        %v9157 = vsub.s32 %v9154, %v9156
        %v9158 = vrot.slane %v9151, %v9157
        %v9160 = vunpack.c.l.s4 1966171168
        %v9161 = vunpack.c.0.s8 %v9160
        %v9162 = vlaneseq
        %v9163 = vshrl.u32 %v9162, 7
        %v9164 = vsub.s32 %v9161, %v9163
        %v9165 = vrot.slane %v9158, %v9164
        %v9167 = vlaneseq
        %vm9168 = vcmp.ge.s32.totalorder %v9167, 0
        %vm9169 = vcmp.lt.s32.totalorder %v9167, 256
        %vm9170 = vmand %vm9168, %vm9169
        %9171 = vst.msk [vmem:[%s345] sm:$0x3] %vm9170, %v9165
        %p9172 = scmp.lt.s32.totalorder %s21, 1
        %s9173 = scalar_select %p9172, %s21, 1
        %s9174 = smul.addr %s9173, 2
        %s9175 = scalar_lea.vmem %s9, %s9174
        // Predicated region
        $region61: #{train_model_forward.1} parent=55 // pred_check
          %p9176 = pneg %p233
        $region62: #{train_model_forward.1} parent=55 // pred_check_branch
          %9178 = sbr.rel (%p9176) target = $region64
        $region63: #{train_model_forward.1} parent=55 // pred_region
          _
        $region64: #{train_model_forward.1} parent=55 // pred_fallthru
          _
      $region56: #{train_model_forward.1} parent=5 // pred_fallthru
        _
      %p9179 = scmp.le.s32.totalorder 2, %s16
      // Predicated region
      $region65: #{train_model_forward.1} parent=5 // pred_check
        %p9180 = pneg %p9179
      $region66: #{train_model_forward.1} parent=5 // pred_check_branch
        %9182 = sbr.rel (%p9180) target = $region68
      $region67: #{train_model_forward.1} parent=5 // pred_region
        %s9183 = ssub.s32 %s16, 2
        // Predicated region
        $region69: #{train_model_forward.1} parent=67 // pred_check
          %p9184 = pneg %p239
        $region70: #{train_model_forward.1} parent=67 // pred_check_branch
          %9186 = sbr.rel (%p9184) target = $region72
        $region71: #{train_model_forward.1} parent=67 // pred_region
          %p9187 = scmp.lt.s32.totalorder %s22, 1
          %s9188 = scalar_select %p9187, %s22, 1
          %s9189 = smul.addr %s9188, 2
          %s9190 = scalar_lea.vmem %s9, %s9189
        $region72: #{train_model_forward.1} parent=67 // pred_fallthru
          _
      $region68: #{train_model_forward.1} parent=5 // pred_fallthru
        _
    $region6: #{train_model_forward.1} parent=1 // loop_footer
      %s20 = sadd.s32 1, %s16
    $region7: #{train_model_forward.1} parent=1 // loop_footer_branch
      %15 = sbr.rel target = $region3
    $region8: #{train_model_forward.1} parent=1 // loop_exit
      _
    %9191 = vsyncpa [#allocation4], 1
    %s9192 = scalar_lea.sflag [#allocation4], 1
    %9193 = vsyncpa %s9192, 1

</llo_original>
